<compile_context>
chip_gen: v5e
topology: v5e:2x2
jax: 0.10.0
libtpu: 0.0.40
codegen_flags: <defaults>
</compile_context>

<pallas_src>
import functools

import jax
import jax.numpy as jnp
from jax import lax
from jax.experimental import pallas as pl
from jax.experimental.pallas import tpu as pltpu


def _round_up(x, m):
    return (x + m - 1) // m * m


def _view_pooling_kernel(x_ref, w1_ref, b1_ref, w2_ref, b2_ref,
                         o_ref, feat_ref, mid_ref, z_ref,
                         *, c, w, wp, m1, ml):
    """Fused view-max-pooling + conv3x3(pad=1)+ReLU + conv3x3(pad=1)+ReLU.

    x_ref:    (Mp, 6*c)       bf16  zero-padded, row-flattened (pitch wp) input
    w1_ref:   (3, 4*c, 3*C2)  bf16  conv1 weights; row di, dj taps packed on N
    b1_ref:   (1, C2)         f32
    w2_ref:   (3, C2, 3*Co)   bf16  conv2 weights, same packing
    b2_ref:   (1, Co)         f32
    o_ref:    (m1, Co)        f32   conv2 output, rows m = y*wp + x (x>=W junk)
    feat_ref: (Mp, 4*c)       bf16  scratch: pooled features [al|lr|fb|tb]
    mid_ref:  (Mp, C2)        bf16  scratch: conv1 output in padded layout
    z_ref:    (ml, 3*C2)      f32   scratch: per-di merged-tap matmul result
    """
    c2 = w1_ref.shape[2] // 3
    co = w2_ref.shape[2] // 3
    mp = mid_ref.shape[0]

    # ---- view pooling: elementwise max over view groups ------------------
    xv = x_ref[...]                                     # (Mp, 6*c)
    v = [xv[:, i * c:(i + 1) * c] for i in range(6)]
    lr = jnp.maximum(v[0], v[2])
    fb = jnp.maximum(v[1], v[3])
    tb = jnp.maximum(v[4], v[5])
    al = jnp.maximum(jnp.maximum(lr, fb), tb)
    feat_ref[:, 0 * c:1 * c] = al
    feat_ref[:, 1 * c:2 * c] = lr
    feat_ref[:, 2 * c:3 * c] = fb
    feat_ref[:, 3 * c:4 * c] = tb

    # Interior-column mask, computed in-kernel: output row m covers flattened
    # column x = m % wp; only x < w are real pixels (x in {w, w+1} land on the
    # zero-padding ring that conv2 must see as zeros).
    xcol = lax.broadcasted_iota(jnp.int32, (m1, 1), 0) % wp
    keep = (xcol < w).astype(jnp.float32)               # (m1, 1)

    # ---- conv1: 3x3 / pad=1; dj taps merged along the MXU N dimension -----
    # z[r, dj*c2:(dj+1)*c2] = feat[di*wp + r] @ W1[di, dj]
    acc1 = jnp.zeros((m1, c2), jnp.float32)
    for di in range(3):
        z_ref[...] = jnp.dot(feat_ref[pl.ds(di * wp, ml), :], w1_ref[di],
                             preferred_element_type=jnp.float32)
        for dj in range(3):
            acc1 += z_ref[pl.ds(dj, m1), pl.ds(dj * c2, c2)]
    hid = (jnp.maximum(acc1 + b1_ref[...], 0.0) * keep).astype(mid_ref.dtype)

    # Store into padded layout (rows wp+1 .. wp+m1).  The top/bottom padding
    # bands (only rows conv2 actually reads) are re-zeroed each iteration; the
    # left/right padding columns inside the band were zeroed by `keep` above.
    bot = wp + 1 + m1
    mid_ref[pl.ds(0, wp + 1), :] = jnp.zeros((wp + 1, c2), mid_ref.dtype)
    mid_ref[pl.ds(bot, mp - bot), :] = jnp.zeros((mp - bot, c2), mid_ref.dtype)
    mid_ref[pl.ds(wp + 1, m1), :] = hid

    # ---- conv2: 3x3 / pad=1, same merged-tap structure ---------------------
    acc2 = jnp.zeros((m1, co), jnp.float32)
    for di in range(3):
        z_ref[:, 0:3 * co] = jnp.dot(mid_ref[pl.ds(di * wp, ml), :], w2_ref[di],
                                     preferred_element_type=jnp.float32)
        for dj in range(3):
            acc2 += z_ref[pl.ds(dj, m1), pl.ds(dj * co, co)]
    o_ref[...] = jnp.maximum(acc2 + b2_ref[...], 0.0).astype(o_ref.dtype)


def view_pooling_forward(x, w1, b1, w2, b2):
    """view_pooling.forward.

    x:  (N, 6, C, H, W) float32 (6 views, NCHW per view)
    w1: (2*C, 4*C, 3, 3), b1: (2*C,)
    w2: (C_out, 2*C, 3, 3), b2: (C_out,)
    returns (N, C_out, H, W) float32 (NCHW, matching the PyTorch module).
    """
    n, nv, c, h, w = x.shape
    assert nv == 6
    c4 = 4 * c
    c2, c4w, kh, kw = w1.shape
    co, c2w, _, _ = w2.shape
    assert (c4w, kh, kw) == (c4, 3, 3) and c2w == c2

    hp, wp = h + 2, w + 2
    m1 = h * wp                      # rows computed per conv (cols x>=W are junk)
    ml = m1 + 8                      # LHS rows per merged-tap matmul (covers dj<=2)
    mp = _round_up(hp * wp + 8, 8)   # padded-flat rows (+slack so tap slices stay in range)

    # -------- layout glue (plain JAX, outside the kernel) -----------------
    # channels-last, spatial zero pad, flatten (H+2, W+2) into rows of pitch wp.
    xt = jnp.transpose(x, (0, 3, 4, 1, 2)).reshape(n, h, w, 6 * c)
    xp = jnp.pad(xt, ((0, 0), (1, 1), (1, 1), (0, 0)))
    xf = jnp.pad(xp.reshape(n, hp * wp, 6 * c),
                 ((0, 0), (0, mp - hp * wp), (0, 0))).astype(jnp.bfloat16)

    # torch [O, I, 3, 3] -> [di, I, (dj, O)]: the 3 column taps of each kernel
    # row are packed along the matmul N dimension (bf16 MXU operands).
    w1_g = jnp.transpose(w1, (2, 1, 3, 0)).reshape(3, c4, 3 * c2).astype(jnp.bfloat16)
    w2_g = jnp.transpose(w2, (2, 1, 3, 0)).reshape(3, c2, 3 * co).astype(jnp.bfloat16)
    b1_t = b1.reshape(1, c2).astype(jnp.float32)
    b2_t = b2.reshape(1, co).astype(jnp.float32)

    kernel = functools.partial(_view_pooling_kernel,
                               c=c, w=w, wp=wp, m1=m1, ml=ml)

    flops = 2 * n * 9 * m1 * (c4 * c2 + c2 * co)
    bytes_accessed = (xf.size * 2 + w1_g.size * 2 + w2_g.size * 2
                      + (b1_t.size + b2_t.size) * 4 + n * m1 * co * 4)

    out = pl.pallas_call(
        kernel,
        out_shape=jax.ShapeDtypeStruct((n, m1, co), jnp.float32),
        grid_spec=pltpu.PrefetchScalarGridSpec(
            num_scalar_prefetch=0,
            grid=(n,),
            in_specs=[
                pl.BlockSpec((None, mp, 6 * c), lambda b: (b, 0, 0)),   # x (per batch)
                pl.BlockSpec((3, c4, 3 * c2), lambda b: (0, 0, 0)),     # w1 (row-grouped)
                pl.BlockSpec((1, c2), lambda b: (0, 0)),                # b1
                pl.BlockSpec((3, c2, 3 * co), lambda b: (0, 0, 0)),     # w2 (row-grouped)
                pl.BlockSpec((1, co), lambda b: (0, 0)),                # b2
            ],
            out_specs=pl.BlockSpec((None, m1, co), lambda b: (b, 0, 0)),
            scratch_shapes=[
                pltpu.VMEM((mp, c4), jnp.bfloat16),   # pooled features (padded layout)
                pltpu.VMEM((mp, c2), jnp.bfloat16),   # conv1 output (padded layout)
                pltpu.VMEM((ml, 3 * c2), jnp.float32),  # merged-tap matmul result
            ],
        ),
        compiler_params=pltpu.CompilerParams(
            dimension_semantics=("parallel",),
            vmem_limit_bytes=32 * 1024 * 1024),
        cost_estimate=pl.CostEstimate(flops=flops, transcendentals=0,
                                      bytes_accessed=bytes_accessed),
    )(xf, w1_g, b1_t, w2_g, b2_t)

    # (N, H*Wp, Co) -> NCHW, dropping the Wp-W junk columns.
    y = out.reshape(n, h, wp, co)[:, :, :w, :]
    # TODO(synk): callers that can consume NHWC should skip this final transpose.
    return jnp.transpose(y, (0, 3, 1, 2))


def _reference(x, w1, b1, w2, b2):
    """Pure-JAX reference mirroring the kernel's bf16 operand precision."""
    lr = jnp.maximum(x[:, 0], x[:, 2])
    fb = jnp.maximum(x[:, 1], x[:, 3])
    tb = jnp.maximum(x[:, 4], x[:, 5])
    al = jnp.max(x, axis=1)
    feat = jnp.concatenate([al, lr, fb, tb], axis=1).astype(jnp.bfloat16)

    def conv_relu(inp, wgt, bias):
        y = jax.lax.conv_general_dilated(
            inp, wgt.astype(jnp.bfloat16), (1, 1), ((1, 1), (1, 1)),
            dimension_numbers=("NCHW", "OIHW", "NCHW"),
            preferred_element_type=jnp.float32)
        return jnp.maximum(y + bias[None, :, None, None], 0.0)

    hid = conv_relu(feat, w1, b1).astype(jnp.bfloat16)
    return conv_relu(hid, w2, b2)


if __name__ == "__main__":
    key = jax.random.PRNGKey(0)
    k_x, k_w1, k_b1, k_w2, k_b2 = jax.random.split(key, 5)

    # Small shapes consistent with view_pooling: inchannel = out_channel = 4,
    # batch = 2, spatial = 16, 6 views (real model uses C=32, 64x64 spatial).
    N, C, H, W = 2, 4, 16, 16
    C4, C2, CO = 4 * C, 2 * C, C

    x = jax.random.normal(k_x, (N, 6, C, H, W), dtype=jnp.float32)
    w1 = jax.random.normal(k_w1, (C2, C4, 3, 3), jnp.float32) * (2.0 / (C4 * 9)) ** 0.5
    b1 = jax.random.normal(k_b1, (C2,), jnp.float32) * 0.1
    w2 = jax.random.normal(k_w2, (CO, C2, 3, 3), jnp.float32) * (2.0 / (C2 * 9)) ** 0.5
    b2 = jax.random.normal(k_b2, (CO,), jnp.float32) * 0.1

    fwd = jax.jit(view_pooling_forward)
    y = jax.block_until_ready(fwd(x, w1, b1, w2, b2))
    assert y.shape == (N, CO, H, W)

    ref = _reference(x, w1, b1, w2, b2)
    max_err = float(jnp.max(jnp.abs(y - ref)))
    assert jnp.allclose(y, ref, atol=2e-2, rtol=2e-2), f"max abs err = {max_err}"

    print("KERNEL_OK")
</pallas_src>

<mosaic_0001>
module attributes {stable_mosaic.version = 11 : i64} {
  func.func @_view_pooling_kernel(%arg0: i32, %arg1: memref<1x336x24xbf16, #tpu.memory_space<vmem>>, %arg2: memref<3x16x24xbf16, #tpu.memory_space<vmem>>, %arg3: memref<1x8xf32, #tpu.memory_space<vmem>>, %arg4: memref<3x8x12xbf16, #tpu.memory_space<vmem>>, %arg5: memref<1x4xf32, #tpu.memory_space<vmem>>, %arg6: memref<1x288x4xf32, #tpu.memory_space<vmem>>, %arg7: memref<336x16xbf16, #tpu.memory_space<vmem>>, %arg8: memref<336x8xbf16, #tpu.memory_space<vmem>>, %arg9: memref<296x24xf32, #tpu.memory_space<vmem>>) attributes {dimension_semantics = [#tpu.dimension_semantics<parallel>], iteration_bounds = array<i64: 2>, scalar_prefetch = 0 : i64, scratch_operands = 3 : i64, tpu.core_type = #tpu.core_type<tc>, window_params = [{transform_indices = @transform_0, window_bounds = array<i64: 1, 336, 24>}, {pipeline_mode = #tpu.pipeline_mode<synchronous>, transform_indices = @transform_1, window_bounds = array<i64: 3, 16, 24>}, {pipeline_mode = #tpu.pipeline_mode<synchronous>, transform_indices = @transform_2, window_bounds = array<i64: 1, 8>}, {pipeline_mode = #tpu.pipeline_mode<synchronous>, transform_indices = @transform_3, window_bounds = array<i64: 3, 8, 12>}, {pipeline_mode = #tpu.pipeline_mode<synchronous>, transform_indices = @transform_4, window_bounds = array<i64: 1, 4>}, {transform_indices = @transform_5, window_bounds = array<i64: 1, 288, 4>}]} {
    %c0 = arith.constant 0 : index
    %c0_0 = arith.constant 0 : index
    %c0_1 = arith.constant 0 : index
    %0 = vector.load %arg1[%c0, %c0_0, %c0_1] : memref<1x336x24xbf16, #tpu.memory_space<vmem>>, vector<1x336x24xbf16>
    %1 = vector.shape_cast %0 : vector<1x336x24xbf16> to vector<336x24xbf16>
    %2 = vector.extract_strided_slice %1 {offsets = [0, 0], sizes = [336, 4], strides = [1, 1]} : vector<336x24xbf16> to vector<336x4xbf16>
    %3 = vector.extract_strided_slice %1 {offsets = [0, 4], sizes = [336, 4], strides = [1, 1]} : vector<336x24xbf16> to vector<336x4xbf16>
    %4 = vector.extract_strided_slice %1 {offsets = [0, 8], sizes = [336, 4], strides = [1, 1]} : vector<336x24xbf16> to vector<336x4xbf16>
    %5 = vector.extract_strided_slice %1 {offsets = [0, 12], sizes = [336, 4], strides = [1, 1]} : vector<336x24xbf16> to vector<336x4xbf16>
    %6 = vector.extract_strided_slice %1 {offsets = [0, 16], sizes = [336, 4], strides = [1, 1]} : vector<336x24xbf16> to vector<336x4xbf16>
    %7 = vector.extract_strided_slice %1 {offsets = [0, 20], sizes = [336, 4], strides = [1, 1]} : vector<336x24xbf16> to vector<336x4xbf16>
    %8 = arith.maximumf %2, %4 : vector<336x4xbf16>
    %9 = arith.maximumf %3, %5 : vector<336x4xbf16>
    %10 = arith.maximumf %6, %7 : vector<336x4xbf16>
    %11 = arith.maximumf %8, %9 : vector<336x4xbf16>
    %12 = arith.maximumf %11, %10 : vector<336x4xbf16>
    %c0_2 = arith.constant 0 : index
    %c0_3 = arith.constant 0 : index
    %13 = vector.load %arg7[%c0_2, %c0_3] : memref<336x16xbf16, #tpu.memory_space<vmem>>, vector<336x4xbf16>
    tpu.vector_store %arg7[%c0_2, %c0_3], %12 {strides = array<i32>} : memref<336x16xbf16, #tpu.memory_space<vmem>>, vector<336x4xbf16>,
    %c0_4 = arith.constant 0 : index
    %c4 = arith.constant 4 : index
    %14 = vector.load %arg7[%c0_4, %c4] : memref<336x16xbf16, #tpu.memory_space<vmem>>, vector<336x4xbf16>
    tpu.vector_store %arg7[%c0_4, %c4], %8 {strides = array<i32>} : memref<336x16xbf16, #tpu.memory_space<vmem>>, vector<336x4xbf16>,
    %c0_5 = arith.constant 0 : index
    %c8 = arith.constant 8 : index
    %15 = vector.load %arg7[%c0_5, %c8] : memref<336x16xbf16, #tpu.memory_space<vmem>>, vector<336x4xbf16>
    tpu.vector_store %arg7[%c0_5, %c8], %9 {strides = array<i32>} : memref<336x16xbf16, #tpu.memory_space<vmem>>, vector<336x4xbf16>,
    %c0_6 = arith.constant 0 : index
    %c12 = arith.constant 12 : index
    %16 = vector.load %arg7[%c0_6, %c12] : memref<336x16xbf16, #tpu.memory_space<vmem>>, vector<336x4xbf16>
    tpu.vector_store %arg7[%c0_6, %c12], %10 {strides = array<i32>} : memref<336x16xbf16, #tpu.memory_space<vmem>>, vector<336x4xbf16>,
    %17 = tpu.iota {dimensions = array<i32: 0>} : vector<288x1xi32>
    %c18_i32 = arith.constant 18 : i32
    %c0_i32 = arith.constant 0 : i32
    %18 = arith.cmpi eq, %c18_i32, %c0_i32 : i32
    %c1_i32 = arith.constant 1 : i32
    %19 = arith.select %18, %c1_i32, %c18_i32 : i32
    %20 = vector.broadcast %19 : i32 to vector<288x1xi32>
    %21 = arith.remsi %17, %20 : vector<288x1xi32>
    %c0_i32_7 = arith.constant 0 : i32
    %22 = vector.broadcast %c0_i32_7 : i32 to vector<288x1xi32>
    %23 = arith.cmpi ne, %21, %22 : vector<288x1xi32>
    %c0_i32_8 = arith.constant 0 : i32
    %24 = vector.broadcast %c0_i32_8 : i32 to vector<288x1xi32>
    %25 = arith.cmpi slt, %21, %24 : vector<288x1xi32>
    %c0_i32_9 = arith.constant 0 : i32
    %26 = arith.cmpi slt, %19, %c0_i32_9 : i32
    %27 = vector.broadcast %26 : i1 to vector<288x1xi1>
    %28 = vector.broadcast %27 : vector<288x1xi1> to vector<288x1xi1>
    %29 = arith.xori %25, %28 : vector<288x1xi1>
    %30 = arith.andi %29, %23 : vector<288x1xi1>
    %31 = vector.broadcast %19 : i32 to vector<288x1xi32>
    %32 = arith.addi %21, %31 : vector<288x1xi32>
    %33 = arith.select %30, %32, %21 : vector<288x1xi1>, vector<288x1xi32>
    %c16_i32 = arith.constant 16 : i32
    %34 = vector.broadcast %c16_i32 : i32 to vector<288x1xi32>
    %35 = arith.cmpi slt, %33, %34 : vector<288x1xi32>
    %36 = arith.extui %35 : vector<288x1xi1> to vector<288x1xi32>
    %37 = arith.sitofp %36 : vector<288x1xi32> to vector<288x1xf32>
    %cst = arith.constant 0.000000e+00 : f32
    %38 = vector.broadcast %cst : f32 to vector<288x8xf32>
    %c0_10 = arith.constant 0 : index
    %c0_11 = arith.constant 0 : index
    %39 = vector.load %arg7[%c0_10, %c0_11] : memref<336x16xbf16, #tpu.memory_space<vmem>>, vector<296x16xbf16>
    %c0_12 = arith.constant 0 : index
    %c0_13 = arith.constant 0 : index
    %c0_14 = arith.constant 0 : index
    %40 = vector.load %arg2[%c0_12, %c0_13, %c0_14] : memref<3x16x24xbf16, #tpu.memory_space<vmem>>, vector<1x16x24xbf16>
    %41 = vector.shape_cast %40 : vector<1x16x24xbf16> to vector<16x24xbf16>
    %cst_15 = arith.constant dense<0.000000e+00> : vector<296x24xf32>
    %42 = tpu.matmul %39, %41, %cst_15 {dimension_numbers = #tpu.dot_dimension_numbers<[1], [0], [0], [1], [0, 0, 1, 1], [], []>} : vector<296x16xbf16>, vector<16x24xbf16>, vector<296x24xf32> -> vector<296x24xf32>
    %c0_16 = arith.constant 0 : index
    %c0_17 = arith.constant 0 : index
    %43 = vector.load %arg9[%c0_16, %c0_17] : memref<296x24xf32, #tpu.memory_space<vmem>>, vector<296x24xf32>
    tpu.vector_store %arg9[%c0_16, %c0_17], %42 {strides = array<i32>} : memref<296x24xf32, #tpu.memory_space<vmem>>, vector<296x24xf32>,
    %c0_18 = arith.constant 0 : index
    %c0_19 = arith.constant 0 : index
    %44 = vector.load %arg9[%c0_18, %c0_19] : memref<296x24xf32, #tpu.memory_space<vmem>>, vector<288x8xf32>
    %45 = arith.addf %38, %44 : vector<288x8xf32>
    %c1 = arith.constant 1 : index
    %c8_20 = arith.constant 8 : index
    %46 = vector.load %arg9[%c1, %c8_20] : memref<296x24xf32, #tpu.memory_space<vmem>>, vector<288x8xf32>
    %47 = arith.addf %45, %46 : vector<288x8xf32>
    %c2 = arith.constant 2 : index
    %c16 = arith.constant 16 : index
    %48 = vector.load %arg9[%c2, %c16] : memref<296x24xf32, #tpu.memory_space<vmem>>, vector<288x8xf32>
    %49 = arith.addf %47, %48 : vector<288x8xf32>
    %c18 = arith.constant 18 : index
    %c0_21 = arith.constant 0 : index
    %50 = vector.load %arg7[%c18, %c0_21] : memref<336x16xbf16, #tpu.memory_space<vmem>>, vector<296x16xbf16>
    %c1_22 = arith.constant 1 : index
    %c0_23 = arith.constant 0 : index
    %c0_24 = arith.constant 0 : index
    %51 = vector.load %arg2[%c1_22, %c0_23, %c0_24] : memref<3x16x24xbf16, #tpu.memory_space<vmem>>, vector<1x16x24xbf16>
    %52 = vector.shape_cast %51 : vector<1x16x24xbf16> to vector<16x24xbf16>
    %cst_25 = arith.constant dense<0.000000e+00> : vector<296x24xf32>
    %53 = tpu.matmul %50, %52, %cst_25 {dimension_numbers = #tpu.dot_dimension_numbers<[1], [0], [0], [1], [0, 0, 1, 1], [], []>} : vector<296x16xbf16>, vector<16x24xbf16>, vector<296x24xf32> -> vector<296x24xf32>
    %c0_26 = arith.constant 0 : index
    %c0_27 = arith.constant 0 : index
    %54 = vector.load %arg9[%c0_26, %c0_27] : memref<296x24xf32, #tpu.memory_space<vmem>>, vector<296x24xf32>
    tpu.vector_store %arg9[%c0_26, %c0_27], %53 {strides = array<i32>} : memref<296x24xf32, #tpu.memory_space<vmem>>, vector<296x24xf32>,
    %c0_28 = arith.constant 0 : index
    %c0_29 = arith.constant 0 : index
    %55 = vector.load %arg9[%c0_28, %c0_29] : memref<296x24xf32, #tpu.memory_space<vmem>>, vector<288x8xf32>
    %56 = arith.addf %49, %55 : vector<288x8xf32>
    %c1_30 = arith.constant 1 : index
    %c8_31 = arith.constant 8 : index
    %57 = vector.load %arg9[%c1_30, %c8_31] : memref<296x24xf32, #tpu.memory_space<vmem>>, vector<288x8xf32>
    %58 = arith.addf %56, %57 : vector<288x8xf32>
    %c2_32 = arith.constant 2 : index
    %c16_33 = arith.constant 16 : index
    %59 = vector.load %arg9[%c2_32, %c16_33] : memref<296x24xf32, #tpu.memory_space<vmem>>, vector<288x8xf32>
    %60 = arith.addf %58, %59 : vector<288x8xf32>
    %c36 = arith.constant 36 : index
    %c0_34 = arith.constant 0 : index
    %61 = vector.load %arg7[%c36, %c0_34] : memref<336x16xbf16, #tpu.memory_space<vmem>>, vector<296x16xbf16>
    %c2_35 = arith.constant 2 : index
    %c0_36 = arith.constant 0 : index
    %c0_37 = arith.constant 0 : index
    %62 = vector.load %arg2[%c2_35, %c0_36, %c0_37] : memref<3x16x24xbf16, #tpu.memory_space<vmem>>, vector<1x16x24xbf16>
    %63 = vector.shape_cast %62 : vector<1x16x24xbf16> to vector<16x24xbf16>
    %cst_38 = arith.constant dense<0.000000e+00> : vector<296x24xf32>
    %64 = tpu.matmul %61, %63, %cst_38 {dimension_numbers = #tpu.dot_dimension_numbers<[1], [0], [0], [1], [0, 0, 1, 1], [], []>} : vector<296x16xbf16>, vector<16x24xbf16>, vector<296x24xf32> -> vector<296x24xf32>
    %c0_39 = arith.constant 0 : index
    %c0_40 = arith.constant 0 : index
    %65 = vector.load %arg9[%c0_39, %c0_40] : memref<296x24xf32, #tpu.memory_space<vmem>>, vector<296x24xf32>
    tpu.vector_store %arg9[%c0_39, %c0_40], %64 {strides = array<i32>} : memref<296x24xf32, #tpu.memory_space<vmem>>, vector<296x24xf32>,
    %c0_41 = arith.constant 0 : index
    %c0_42 = arith.constant 0 : index
    %66 = vector.load %arg9[%c0_41, %c0_42] : memref<296x24xf32, #tpu.memory_space<vmem>>, vector<288x8xf32>
    %67 = arith.addf %60, %66 : vector<288x8xf32>
    %c1_43 = arith.constant 1 : index
    %c8_44 = arith.constant 8 : index
    %68 = vector.load %arg9[%c1_43, %c8_44] : memref<296x24xf32, #tpu.memory_space<vmem>>, vector<288x8xf32>
    %69 = arith.addf %67, %68 : vector<288x8xf32>
    %c2_45 = arith.constant 2 : index
    %c16_46 = arith.constant 16 : index
    %70 = vector.load %arg9[%c2_45, %c16_46] : memref<296x24xf32, #tpu.memory_space<vmem>>, vector<288x8xf32>
    %71 = arith.addf %69, %70 : vector<288x8xf32>
    %c0_47 = arith.constant 0 : index
    %c0_48 = arith.constant 0 : index
    %72 = vector.load %arg3[%c0_47, %c0_48] : memref<1x8xf32, #tpu.memory_space<vmem>>, vector<1x8xf32>
    %73 = vector.broadcast %72 : vector<1x8xf32> to vector<288x8xf32>
    %74 = arith.addf %71, %73 : vector<288x8xf32>
    %cst_49 = arith.constant 0.000000e+00 : f32
    %75 = vector.broadcast %cst_49 : f32 to vector<288x8xf32>
    %76 = arith.maximumf %74, %75 : vector<288x8xf32>
    %77 = vector.broadcast %37 : vector<288x1xf32> to vector<288x8xf32>
    %78 = arith.mulf %76, %77 : vector<288x8xf32>
    %79 = arith.truncf %78 : vector<288x8xf32> to vector<288x8xbf16>
    %cst_50 = arith.constant 0.000000e+00 : bf16
    %80 = vector.broadcast %cst_50 : bf16 to vector<19x8xbf16>
    %c0_51 = arith.constant 0 : index
    %c0_52 = arith.constant 0 : index
    %81 = vector.load %arg8[%c0_51, %c0_52] : memref<336x8xbf16, #tpu.memory_space<vmem>>, vector<19x8xbf16>
    tpu.vector_store %arg8[%c0_51, %c0_52], %80 {strides = array<i32>} : memref<336x8xbf16, #tpu.memory_space<vmem>>, vector<19x8xbf16>,
    %cst_53 = arith.constant 0.000000e+00 : bf16
    %82 = vector.broadcast %cst_53 : bf16 to vector<29x8xbf16>
    %c307 = arith.constant 307 : index
    %c0_54 = arith.constant 0 : index
    %83 = vector.load %arg8[%c307, %c0_54] : memref<336x8xbf16, #tpu.memory_space<vmem>>, vector<29x8xbf16>
    tpu.vector_store %arg8[%c307, %c0_54], %82 {strides = array<i32>} : memref<336x8xbf16, #tpu.memory_space<vmem>>, vector<29x8xbf16>,
    %c19 = arith.constant 19 : index
    %c0_55 = arith.constant 0 : index
    %84 = vector.load %arg8[%c19, %c0_55] : memref<336x8xbf16, #tpu.memory_space<vmem>>, vector<288x8xbf16>
    tpu.vector_store %arg8[%c19, %c0_55], %79 {strides = array<i32>} : memref<336x8xbf16, #tpu.memory_space<vmem>>, vector<288x8xbf16>,
    %cst_56 = arith.constant 0.000000e+00 : f32
    %85 = vector.broadcast %cst_56 : f32 to vector<288x4xf32>
    %c0_57 = arith.constant 0 : index
    %c0_58 = arith.constant 0 : index
    %86 = vector.load %arg8[%c0_57, %c0_58] : memref<336x8xbf16, #tpu.memory_space<vmem>>, vector<296x8xbf16>
    %c0_59 = arith.constant 0 : index
    %c0_60 = arith.constant 0 : index
    %c0_61 = arith.constant 0 : index
    %87 = vector.load %arg4[%c0_59, %c0_60, %c0_61] : memref<3x8x12xbf16, #tpu.memory_space<vmem>>, vector<1x8x12xbf16>
    %88 = vector.shape_cast %87 : vector<1x8x12xbf16> to vector<8x12xbf16>
    %cst_62 = arith.constant dense<0.000000e+00> : vector<296x12xf32>
    %89 = tpu.matmul %86, %88, %cst_62 {dimension_numbers = #tpu.dot_dimension_numbers<[1], [0], [0], [1], [0, 0, 1, 1], [], []>} : vector<296x8xbf16>, vector<8x12xbf16>, vector<296x12xf32> -> vector<296x12xf32>
    %c0_63 = arith.constant 0 : index
    %c0_64 = arith.constant 0 : index
    %90 = vector.load %arg9[%c0_63, %c0_64] : memref<296x24xf32, #tpu.memory_space<vmem>>, vector<296x12xf32>
    tpu.vector_store %arg9[%c0_63, %c0_64], %89 {strides = array<i32>} : memref<296x24xf32, #tpu.memory_space<vmem>>, vector<296x12xf32>,
    %c0_65 = arith.constant 0 : index
    %c0_66 = arith.constant 0 : index
    %91 = vector.load %arg9[%c0_65, %c0_66] : memref<296x24xf32, #tpu.memory_space<vmem>>, vector<288x4xf32>
    %92 = arith.addf %85, %91 : vector<288x4xf32>
    %c1_67 = arith.constant 1 : index
    %c4_68 = arith.constant 4 : index
    %93 = vector.load %arg9[%c1_67, %c4_68] : memref<296x24xf32, #tpu.memory_space<vmem>>, vector<288x4xf32>
    %94 = arith.addf %92, %93 : vector<288x4xf32>
    %c2_69 = arith.constant 2 : index
    %c8_70 = arith.constant 8 : index
    %95 = vector.load %arg9[%c2_69, %c8_70] : memref<296x24xf32, #tpu.memory_space<vmem>>, vector<288x4xf32>
    %96 = arith.addf %94, %95 : vector<288x4xf32>
    %c18_71 = arith.constant 18 : index
    %c0_72 = arith.constant 0 : index
    %97 = vector.load %arg8[%c18_71, %c0_72] : memref<336x8xbf16, #tpu.memory_space<vmem>>, vector<296x8xbf16>
    %c1_73 = arith.constant 1 : index
    %c0_74 = arith.constant 0 : index
    %c0_75 = arith.constant 0 : index
    %98 = vector.load %arg4[%c1_73, %c0_74, %c0_75] : memref<3x8x12xbf16, #tpu.memory_space<vmem>>, vector<1x8x12xbf16>
    %99 = vector.shape_cast %98 : vector<1x8x12xbf16> to vector<8x12xbf16>
    %cst_76 = arith.constant dense<0.000000e+00> : vector<296x12xf32>
    %100 = tpu.matmul %97, %99, %cst_76 {dimension_numbers = #tpu.dot_dimension_numbers<[1], [0], [0], [1], [0, 0, 1, 1], [], []>} : vector<296x8xbf16>, vector<8x12xbf16>, vector<296x12xf32> -> vector<296x12xf32>
    %c0_77 = arith.constant 0 : index
    %c0_78 = arith.constant 0 : index
    %101 = vector.load %arg9[%c0_77, %c0_78] : memref<296x24xf32, #tpu.memory_space<vmem>>, vector<296x12xf32>
    tpu.vector_store %arg9[%c0_77, %c0_78], %100 {strides = array<i32>} : memref<296x24xf32, #tpu.memory_space<vmem>>, vector<296x12xf32>,
    %c0_79 = arith.constant 0 : index
    %c0_80 = arith.constant 0 : index
    %102 = vector.load %arg9[%c0_79, %c0_80] : memref<296x24xf32, #tpu.memory_space<vmem>>, vector<288x4xf32>
    %103 = arith.addf %96, %102 : vector<288x4xf32>
    %c1_81 = arith.constant 1 : index
    %c4_82 = arith.constant 4 : index
    %104 = vector.load %arg9[%c1_81, %c4_82] : memref<296x24xf32, #tpu.memory_space<vmem>>, vector<288x4xf32>
    %105 = arith.addf %103, %104 : vector<288x4xf32>
    %c2_83 = arith.constant 2 : index
    %c8_84 = arith.constant 8 : index
    %106 = vector.load %arg9[%c2_83, %c8_84] : memref<296x24xf32, #tpu.memory_space<vmem>>, vector<288x4xf32>
    %107 = arith.addf %105, %106 : vector<288x4xf32>
    %c36_85 = arith.constant 36 : index
    %c0_86 = arith.constant 0 : index
    %108 = vector.load %arg8[%c36_85, %c0_86] : memref<336x8xbf16, #tpu.memory_space<vmem>>, vector<296x8xbf16>
    %c2_87 = arith.constant 2 : index
    %c0_88 = arith.constant 0 : index
    %c0_89 = arith.constant 0 : index
    %109 = vector.load %arg4[%c2_87, %c0_88, %c0_89] : memref<3x8x12xbf16, #tpu.memory_space<vmem>>, vector<1x8x12xbf16>
    %110 = vector.shape_cast %109 : vector<1x8x12xbf16> to vector<8x12xbf16>
    %cst_90 = arith.constant dense<0.000000e+00> : vector<296x12xf32>
    %111 = tpu.matmul %108, %110, %cst_90 {dimension_numbers = #tpu.dot_dimension_numbers<[1], [0], [0], [1], [0, 0, 1, 1], [], []>} : vector<296x8xbf16>, vector<8x12xbf16>, vector<296x12xf32> -> vector<296x12xf32>
    %c0_91 = arith.constant 0 : index
    %c0_92 = arith.constant 0 : index
    %112 = vector.load %arg9[%c0_91, %c0_92] : memref<296x24xf32, #tpu.memory_space<vmem>>, vector<296x12xf32>
    tpu.vector_store %arg9[%c0_91, %c0_92], %111 {strides = array<i32>} : memref<296x24xf32, #tpu.memory_space<vmem>>, vector<296x12xf32>,
    %c0_93 = arith.constant 0 : index
    %c0_94 = arith.constant 0 : index
    %113 = vector.load %arg9[%c0_93, %c0_94] : memref<296x24xf32, #tpu.memory_space<vmem>>, vector<288x4xf32>
    %114 = arith.addf %107, %113 : vector<288x4xf32>
    %c1_95 = arith.constant 1 : index
    %c4_96 = arith.constant 4 : index
    %115 = vector.load %arg9[%c1_95, %c4_96] : memref<296x24xf32, #tpu.memory_space<vmem>>, vector<288x4xf32>
    %116 = arith.addf %114, %115 : vector<288x4xf32>
    %c2_97 = arith.constant 2 : index
    %c8_98 = arith.constant 8 : index
    %117 = vector.load %arg9[%c2_97, %c8_98] : memref<296x24xf32, #tpu.memory_space<vmem>>, vector<288x4xf32>
    %118 = arith.addf %116, %117 : vector<288x4xf32>
    %c0_99 = arith.constant 0 : index
    %c0_100 = arith.constant 0 : index
    %119 = vector.load %arg5[%c0_99, %c0_100] : memref<1x4xf32, #tpu.memory_space<vmem>>, vector<1x4xf32>
    %120 = vector.broadcast %119 : vector<1x4xf32> to vector<288x4xf32>
    %121 = arith.addf %118, %120 : vector<288x4xf32>
    %cst_101 = arith.constant 0.000000e+00 : f32
    %122 = vector.broadcast %cst_101 : f32 to vector<288x4xf32>
    %123 = arith.maximumf %121, %122 : vector<288x4xf32>
    %c0_102 = arith.constant 0 : index
    %c0_103 = arith.constant 0 : index
    %c0_104 = arith.constant 0 : index
    %124 = vector.load %arg6[%c0_102, %c0_103, %c0_104] : memref<1x288x4xf32, #tpu.memory_space<vmem>>, vector<1x288x4xf32>
    %125 = vector.shape_cast %124 : vector<1x288x4xf32> to vector<288x4xf32>
    %126 = vector.shape_cast %123 : vector<288x4xf32> to vector<1x288x4xf32>
    tpu.vector_store %arg6[%c0_102, %c0_103, %c0_104], %126 {strides = array<i32>} : memref<1x288x4xf32, #tpu.memory_space<vmem>>, vector<1x288x4xf32>,
    return
  }
  func.func @transform_0(%arg0: i32) -> (i32, i32, i32) {
    %c0_i32 = arith.constant 0 : i32
    %c0_i32_0 = arith.constant 0 : i32
    %c0_i32_1 = arith.constant 0 : i32
    return %arg0, %c0_i32, %c0_i32_0 : i32, i32, i32
  }
  func.func @transform_1(%arg0: i32) -> (i32, i32, i32) {
    %c0_i32 = arith.constant 0 : i32
    %c0_i32_0 = arith.constant 0 : i32
    %c0_i32_1 = arith.constant 0 : i32
    %c0_i32_2 = arith.constant 0 : i32
    return %c0_i32, %c0_i32_0, %c0_i32_1 : i32, i32, i32
  }
  func.func @transform_2(%arg0: i32) -> (i32, i32) {
    %c0_i32 = arith.constant 0 : i32
    %c0_i32_0 = arith.constant 0 : i32
    %c0_i32_1 = arith.constant 0 : i32
    return %c0_i32, %c0_i32_0 : i32, i32
  }
  func.func @transform_3(%arg0: i32) -> (i32, i32, i32) {
    %c0_i32 = arith.constant 0 : i32
    %c0_i32_0 = arith.constant 0 : i32
    %c0_i32_1 = arith.constant 0 : i32
    %c0_i32_2 = arith.constant 0 : i32
    return %c0_i32, %c0_i32_0, %c0_i32_1 : i32, i32, i32
  }
  func.func @transform_4(%arg0: i32) -> (i32, i32) {
    %c0_i32 = arith.constant 0 : i32
    %c0_i32_0 = arith.constant 0 : i32
    %c0_i32_1 = arith.constant 0 : i32
    return %c0_i32, %c0_i32_0 : i32, i32
  }
  func.func @transform_5(%arg0: i32) -> (i32, i32, i32) {
    %c0_i32 = arith.constant 0 : i32
    %c0_i32_0 = arith.constant 0 : i32
    %c0_i32_1 = arith.constant 0 : i32
    return %arg0, %c0_i32, %c0_i32_0 : i32, i32, i32
  }
}

</mosaic_0001>

<llo_original>
// kernel: view_pooling_forward.1
$region0: #{view_pooling_forward.1}
  #allocation0 [shape = 'u32[]', space=smem, size = 0x4, offset = 0x4, fixed_abs, tag = 'smem constant byte address 0x4 - core index']
  #allocation1 [shape = 'u32[72,128]{1,0:T(1,128)}', space=vmem, size = 0x9000, scoped, tag = 'internal scratch']
  #allocation2 [shape = 'bf16[336,16]{1,0:T(8,128)(2,1)}', space=vmem, size = 0x15000, scoped, tag = 'scratch operand']
  #allocation3 [shape = 'bf16[336,8]{1,0:T(8,128)(2,1)}', space=vmem, size = 0x15000, scoped, tag = 'scratch operand']
  #allocation4 [shape = 'f32[296,24]{1,0:T(8,128)}', space=vmem, size = 0x25000, scoped, tag = 'scratch operand']
  %s0 = inlined_call_operand.vmem [shape: bf16[2,336,24], index: 0, kind: input, shape index: {}]
  %s1 = inlined_call_operand.vmem [shape: bf16[3,16,24], index: 1, kind: input, shape index: {}]
  %s2 = inlined_call_operand.vmem [shape: f32[1,8], index: 2, kind: input, shape index: {}]
  %s3 = inlined_call_operand.vmem [shape: bf16[3,8,12], index: 3, kind: input, shape index: {}]
  %s4 = inlined_call_operand.vmem [shape: f32[1,4], index: 4, kind: input, shape index: {}]
  %s5 = inlined_call_operand.vmem [shape: f32[2,288,4], index: 5, kind: output, shape index: {}]
  %s6 = sld [smem:[#allocation0]]
  $region53: #{view_pooling_forward.1} parent=0
    _
  %s8 = ssub.s32 1, %s6
  %s9 = scalar_select 0, %s8, %s6
  loop: start=0, step=1, limit=4
  $region2: #{view_pooling_forward.1} parent=0 // loop_pre_header
    _
  $region3: #{view_pooling_forward.1} parent=0 // loop_header
    %s11 = sphi 0, %s15
    %p12 = scmp.ge.s32.totalorder %s11, 4
    %s21 = sphi 0, %s23
    %s24 = sphi 0, %s21
    %s25 = sphi 0, %s24
    %s41 = sphi 0, %s25
    %s45 = sphi 0, %s45
    %s47 = sphi 0, %s45
    %s48 = sphi 0, %s47
    %s62 = sphi 0, %s48
    %s66 = sphi 0, %s66
    %s68 = sphi 0, %s66
    %s69 = sphi 0, %s68
    %s83 = sphi 0, %s69
    %s87 = sphi 0, %s87
    %s89 = sphi 0, %s87
    %s90 = sphi 0, %s89
    %s104 = sphi 0, %s90
    %s108 = sphi 0, %s108
    %s110 = sphi 0, %s108
    %s111 = sphi 0, %s110
    %s125 = sphi 0, %s111
    %s131 = sphi 0, %s133
    %s134 = sphi 0, %s131
    %s135 = sphi 0, %s134
    %s151 = sphi 0, %s135
  $region4: #{view_pooling_forward.1} parent=0 // loop_header_branch
    %14 = sbr.rel (%p12) target = $region8
  $region5: #{view_pooling_forward.1} parent=0 // loop_body
    %s16 = ssub.s32 %s11, 1
    %s17 = ssub.s32 %s11, 2
    %s18 = sadd.s32 %s11, 1
    %s19 = ssub.s32 %s11, %s18
    %p20 = scmp.eq.s32.totalorder %s19, 0
    %s22 = sadd.s32 %s21, 1
    %s23 = scalar_select %p20, %s21, %s22
    %p26 = pneg %p20
    %p27 = scmp.eq.s32.totalorder %s11, 1
    %p28 = por %p26, %p27
    %p29 = scmp.ne.s32.totalorder %s21, %s24
    %p30 = scmp.eq.s32.totalorder %s11, 0
    %p31 = por %p29, %p30
    %p32 = scmp.ne.s32.totalorder %s21, %s24
    %p33 = scmp.eq.s32.totalorder %s16, 1
    %p34 = por %p32, %p33
    %p35 = scmp.ne.s32.totalorder %s24, %s25
    %p36 = scmp.eq.s32.totalorder %s16, 0
    %p37 = por %p35, %p36
    %p38 = scmp.ne.s32.totalorder %s24, %s25
    %p39 = scmp.eq.s32.totalorder %s17, 1
    %p40 = por %p38, %p39
    %p42 = scmp.ne.s32.totalorder %s25, %s41
    %p43 = scmp.eq.s32.totalorder %s17, 0
    %p44 = por %p42, %p43
    %s46 = sadd.s32 %s45, 1
    %p49 = scmp.eq.s32.totalorder %s11, 1
    %p50 = scmp.ne.s32.totalorder %s45, %s47
    %p51 = scmp.eq.s32.totalorder %s11, 0
    %p52 = por %p50, %p51
    %p53 = scmp.ne.s32.totalorder %s45, %s47
    %p54 = scmp.eq.s32.totalorder %s16, 1
    %p55 = por %p53, %p54
    %p56 = scmp.ne.s32.totalorder %s47, %s48
    %p57 = scmp.eq.s32.totalorder %s16, 0
    %p58 = por %p56, %p57
    %p59 = scmp.ne.s32.totalorder %s47, %s48
    %p60 = scmp.eq.s32.totalorder %s17, 1
    %p61 = por %p59, %p60
    %p63 = scmp.ne.s32.totalorder %s48, %s62
    %p64 = scmp.eq.s32.totalorder %s17, 0
    %p65 = por %p63, %p64
    %s67 = sadd.s32 %s66, 1
    %p70 = scmp.eq.s32.totalorder %s11, 1
    %p71 = scmp.ne.s32.totalorder %s66, %s68
    %p72 = scmp.eq.s32.totalorder %s11, 0
    %p73 = por %p71, %p72
    %p74 = scmp.ne.s32.totalorder %s66, %s68
    %p75 = scmp.eq.s32.totalorder %s16, 1
    %p76 = por %p74, %p75
    %p77 = scmp.ne.s32.totalorder %s68, %s69
    %p78 = scmp.eq.s32.totalorder %s16, 0
    %p79 = por %p77, %p78
    %p80 = scmp.ne.s32.totalorder %s68, %s69
    %p81 = scmp.eq.s32.totalorder %s17, 1
    %p82 = por %p80, %p81
    %p84 = scmp.ne.s32.totalorder %s69, %s83
    %p85 = scmp.eq.s32.totalorder %s17, 0
    %p86 = por %p84, %p85
    %s88 = sadd.s32 %s87, 1
    %p91 = scmp.eq.s32.totalorder %s11, 1
    %p92 = scmp.ne.s32.totalorder %s87, %s89
    %p93 = scmp.eq.s32.totalorder %s11, 0
    %p94 = por %p92, %p93
    %p95 = scmp.ne.s32.totalorder %s87, %s89
    %p96 = scmp.eq.s32.totalorder %s16, 1
    %p97 = por %p95, %p96
    %p98 = scmp.ne.s32.totalorder %s89, %s90
    %p99 = scmp.eq.s32.totalorder %s16, 0
    %p100 = por %p98, %p99
    %p101 = scmp.ne.s32.totalorder %s89, %s90
    %p102 = scmp.eq.s32.totalorder %s17, 1
    %p103 = por %p101, %p102
    %p105 = scmp.ne.s32.totalorder %s90, %s104
    %p106 = scmp.eq.s32.totalorder %s17, 0
    %p107 = por %p105, %p106
    %s109 = sadd.s32 %s108, 1
    %p112 = scmp.eq.s32.totalorder %s11, 1
    %p113 = scmp.ne.s32.totalorder %s108, %s110
    %p114 = scmp.eq.s32.totalorder %s11, 0
    %p115 = por %p113, %p114
    %p116 = scmp.ne.s32.totalorder %s108, %s110
    %p117 = scmp.eq.s32.totalorder %s16, 1
    %p118 = por %p116, %p117
    %p119 = scmp.ne.s32.totalorder %s110, %s111
    %p120 = scmp.eq.s32.totalorder %s16, 0
    %p121 = por %p119, %p120
    %p122 = scmp.ne.s32.totalorder %s110, %s111
    %p123 = scmp.eq.s32.totalorder %s17, 1
    %p124 = por %p122, %p123
    %p126 = scmp.ne.s32.totalorder %s111, %s125
    %p127 = scmp.eq.s32.totalorder %s17, 0
    %p128 = por %p126, %p127
    %s129 = ssub.s32 %s11, %s18
    %p130 = scmp.eq.s32.totalorder %s129, 0
    %s132 = sadd.s32 %s131, 1
    %s133 = scalar_select %p130, %s131, %s132
    %p136 = pneg %p130
    %p137 = scmp.eq.s32.totalorder %s11, 1
    %p138 = por %p136, %p137
    %p139 = scmp.ne.s32.totalorder %s131, %s134
    %p140 = scmp.eq.s32.totalorder %s11, 0
    %p141 = por %p139, %p140
    %p142 = scmp.ne.s32.totalorder %s131, %s134
    %p143 = scmp.eq.s32.totalorder %s16, 1
    %p144 = por %p142, %p143
    %p145 = scmp.ne.s32.totalorder %s134, %s135
    %p146 = scmp.eq.s32.totalorder %s16, 0
    %p147 = por %p145, %p146
    %p148 = scmp.ne.s32.totalorder %s134, %s135
    %p149 = scmp.eq.s32.totalorder %s17, 1
    %p150 = por %p148, %p149
    %p152 = scmp.ne.s32.totalorder %s135, %s151
    %p153 = scmp.eq.s32.totalorder %s17, 0
    %p154 = por %p152, %p153
    %p155 = scmp.le.s32.totalorder 1, %s11
    %p156 = scmp.lt.s32.totalorder %s11, 3
    %p157 = pnand %p155, %p156
    %p158 = pneg %p157
    // Predicated region
    $region9: #{view_pooling_forward.1} parent=5 // pred_check
      _
    $region10: #{view_pooling_forward.1} parent=5 // pred_check_branch
      %160 = sbr.rel (%p157) target = $region12
    $region11: #{view_pooling_forward.1} parent=5 // pred_region
      %s161 = ssub.s32 %s11, 1
      // Predicated region
      $region13: #{view_pooling_forward.1} parent=11 // pred_check
        %p162 = pneg %p58
      $region14: #{view_pooling_forward.1} parent=11 // pred_check_branch
        %164 = sbr.rel (%p162) target = $region16
      $region15: #{view_pooling_forward.1} parent=11 // pred_region
        _
      $region16: #{view_pooling_forward.1} parent=11 // pred_fallthru
        _
      // Predicated region
      $region17: #{view_pooling_forward.1} parent=11 // pred_check
        %p165 = pneg %p79
      $region18: #{view_pooling_forward.1} parent=11 // pred_check_branch
        %167 = sbr.rel (%p165) target = $region20
      $region19: #{view_pooling_forward.1} parent=11 // pred_region
        _
      $region20: #{view_pooling_forward.1} parent=11 // pred_fallthru
        _
      // Predicated region
      $region21: #{view_pooling_forward.1} parent=11 // pred_check
        %p168 = pneg %p100
      $region22: #{view_pooling_forward.1} parent=11 // pred_check_branch
        %170 = sbr.rel (%p168) target = $region24
      $region23: #{view_pooling_forward.1} parent=11 // pred_region
        _
      $region24: #{view_pooling_forward.1} parent=11 // pred_fallthru
        _
      // Predicated region
      $region25: #{view_pooling_forward.1} parent=11 // pred_check
        %p171 = pneg %p121
      $region26: #{view_pooling_forward.1} parent=11 // pred_check_branch
        %173 = sbr.rel (%p171) target = $region28
      $region27: #{view_pooling_forward.1} parent=11 // pred_region
        _
      $region28: #{view_pooling_forward.1} parent=11 // pred_fallthru
        _
    $region12: #{view_pooling_forward.1} parent=5 // pred_fallthru
      _
    %p174 = scmp.lt.s32.totalorder %s11, 2
    // Predicated region
    $region29: #{view_pooling_forward.1} parent=5 // pred_check
      %p175 = pneg %p174
    $region30: #{view_pooling_forward.1} parent=5 // pred_check_branch
      %177 = sbr.rel (%p175) target = $region32
    $region31: #{view_pooling_forward.1} parent=5 // pred_region
      // Predicated region
      $region33: #{view_pooling_forward.1} parent=31 // pred_check
        %p178 = pneg %p31
      $region34: #{view_pooling_forward.1} parent=31 // pred_check_branch
        %180 = sbr.rel (%p178) target = $region36
      $region35: #{view_pooling_forward.1} parent=31 // pred_region
        %p181 = scmp.lt.s32.totalorder %s11, 1
        %s182 = scalar_select %p181, %s11, 1
        %s183 = smul.addr %s182, 42
        %s184 = smul.addr %s183, 4
        %s185 = scalar_lea.vmem %s0, %s184
      $region36: #{view_pooling_forward.1} parent=31 // pred_fallthru
        _
    $region32: #{view_pooling_forward.1} parent=5 // pred_fallthru
      _
    %p186 = scmp.le.s32.totalorder 1, %s11
    %p187 = scmp.lt.s32.totalorder %s11, 3
    %p188 = pnand %p186, %p187
    %p189 = pneg %p188
    // Predicated region
    $region37: #{view_pooling_forward.1} parent=5 // pred_check
      _
    $region38: #{view_pooling_forward.1} parent=5 // pred_check_branch
      %191 = sbr.rel (%p188) target = $region40
    $region39: #{view_pooling_forward.1} parent=5 // pred_region
      %s192 = ssub.s32 %s11, 1
      %p193 = scmp.lt.s32.totalorder %s16, 1
      %s194 = scalar_select %p193, %s16, 1
      %s195 = smul.addr %s194, 42
      %s196 = smul.addr %s195, 4
      %s197 = scalar_lea.vmem %s0, %s196
      %p198 = pneg %p37
      %p199 = pneg %p34
      %p200 = pneg %p58
      %p201 = pneg %p55
      %p202 = pneg %p79
      %p203 = pneg %p76
      %p204 = pneg %p100
      %p205 = pneg %p97
      %p206 = pneg %p121
      %p207 = pneg %p118
      %p208 = pneg %p147
      %p209 = pneg %p144
      %p210 = scmp.lt.s32.totalorder %s16, 1
      %s211 = scalar_select %p210, %s16, 1
      %s212 = smul.addr %s211, 36
      %s213 = smul.addr %s212, 8
      %s214 = scalar_lea.vmem %s5, %s213
      %p215 = scmp.lt.s32.totalorder %s16, 1
      %s216 = scalar_select %p215, %s16, 1
      %s217 = smul.addr %s216, 42
      %s218 = smul.addr %s217, 4
      %s219 = scalar_lea.vmem %s0, %s218
      %p220 = scmp.lt.s32.totalorder %s16, 1
      %s221 = scalar_select %p220, %s16, 1
      %s222 = smul.addr %s221, 36
      %s223 = smul.addr %s222, 8
      %s224 = scalar_lea.vmem %s5, %s223
      %v226 = vld [vmem:[%s219] sm:$0xf]
      %v227 = vld [vmem:[%s219 + $0x4] sm:$0xf]
      %v228 = vld [vmem:[%s219 + $0x8] sm:$0xf]
      %v229 = vld [vmem:[%s219 + $0xc] sm:$0xf]
      %v230 = vld [vmem:[%s219 + $0x10] sm:$0xf]
      %v231 = vld [vmem:[%s219 + $0x14] sm:$0xf]
      %v232 = vld [vmem:[%s219 + $0x18] sm:$0xf]
      %v233 = vld [vmem:[%s219 + $0x1c] sm:$0xf]
      %v234 = vld [vmem:[%s219 + $0x20] sm:$0xf]
      %v235 = vld [vmem:[%s219 + $0x24] sm:$0xf]
      %v236 = vld [vmem:[%s219 + $0x28] sm:$0xf]
      %v237 = vld [vmem:[%s219 + $0x2c] sm:$0xf]
      %v238 = vld [vmem:[%s219 + $0x30] sm:$0xf]
      %v239 = vld [vmem:[%s219 + $0x34] sm:$0xf]
      %v240 = vld [vmem:[%s219 + $0x38] sm:$0xf]
      %v241 = vld [vmem:[%s219 + $0x3c] sm:$0xf]
      %v242 = vld [vmem:[%s219 + $0x40] sm:$0xf]
      %v243 = vld [vmem:[%s219 + $0x44] sm:$0xf]
      %v244 = vld [vmem:[%s219 + $0x48] sm:$0xf]
      %v245 = vld [vmem:[%s219 + $0x4c] sm:$0xf]
      %v246 = vld [vmem:[%s219 + $0x50] sm:$0xf]
      %v247 = vld [vmem:[%s219 + $0x54] sm:$0xf]
      %v248 = vld [vmem:[%s219 + $0x58] sm:$0xf]
      %v249 = vld [vmem:[%s219 + $0x5c] sm:$0xf]
      %v250 = vld [vmem:[%s219 + $0x60] sm:$0xf]
      %v251 = vld [vmem:[%s219 + $0x64] sm:$0xf]
      %v252 = vld [vmem:[%s219 + $0x68] sm:$0xf]
      %v253 = vld [vmem:[%s219 + $0x6c] sm:$0xf]
      %v254 = vld [vmem:[%s219 + $0x70] sm:$0xf]
      %v255 = vld [vmem:[%s219 + $0x74] sm:$0xf]
      %v256 = vld [vmem:[%s219 + $0x78] sm:$0xf]
      %v257 = vld [vmem:[%s219 + $0x7c] sm:$0xf]
      %v258 = vld [vmem:[%s219 + $0x80] sm:$0xf]
      %v259 = vld [vmem:[%s219 + $0x84] sm:$0xf]
      %v260 = vld [vmem:[%s219 + $0x88] sm:$0xf]
      %v261 = vld [vmem:[%s219 + $0x8c] sm:$0xf]
      %v262 = vld [vmem:[%s219 + $0x90] sm:$0xf]
      %v263 = vld [vmem:[%s219 + $0x94] sm:$0xf]
      %v264 = vld [vmem:[%s219 + $0x98] sm:$0xf]
      %v265 = vld [vmem:[%s219 + $0x9c] sm:$0xf]
      %v266 = vld [vmem:[%s219 + $0xa0] sm:$0xf]
      %v267 = vld [vmem:[%s219 + $0xa4] sm:$0xf]
      %v268 = vunpack.c.l.bf16 %v226
      %v269 = vunpack.c.l.bf16 %v227
      %v270 = vunpack.c.l.bf16 %v228
      %v271 = vunpack.c.l.bf16 %v229
      %v272 = vunpack.c.l.bf16 %v230
      %v273 = vunpack.c.l.bf16 %v231
      %v274 = vunpack.c.l.bf16 %v232
      %v275 = vunpack.c.l.bf16 %v233
      %v276 = vunpack.c.l.bf16 %v234
      %v277 = vunpack.c.l.bf16 %v235
      %v278 = vunpack.c.l.bf16 %v236
      %v279 = vunpack.c.l.bf16 %v237
      %v280 = vunpack.c.l.bf16 %v238
      %v281 = vunpack.c.l.bf16 %v239
      %v282 = vunpack.c.l.bf16 %v240
      %v283 = vunpack.c.l.bf16 %v241
      %v284 = vunpack.c.l.bf16 %v242
      %v285 = vunpack.c.l.bf16 %v243
      %v286 = vunpack.c.l.bf16 %v244
      %v287 = vunpack.c.l.bf16 %v245
      %v288 = vunpack.c.l.bf16 %v246
      %v289 = vunpack.c.l.bf16 %v247
      %v290 = vunpack.c.l.bf16 %v248
      %v291 = vunpack.c.l.bf16 %v249
      %v292 = vunpack.c.l.bf16 %v250
      %v293 = vunpack.c.l.bf16 %v251
      %v294 = vunpack.c.l.bf16 %v252
      %v295 = vunpack.c.l.bf16 %v253
      %v296 = vunpack.c.l.bf16 %v254
      %v297 = vunpack.c.l.bf16 %v255
      %v298 = vunpack.c.l.bf16 %v256
      %v299 = vunpack.c.l.bf16 %v257
      %v300 = vunpack.c.l.bf16 %v258
      %v301 = vunpack.c.l.bf16 %v259
      %v302 = vunpack.c.l.bf16 %v260
      %v303 = vunpack.c.l.bf16 %v261
      %v304 = vunpack.c.l.bf16 %v262
      %v305 = vunpack.c.l.bf16 %v263
      %v306 = vunpack.c.l.bf16 %v264
      %v307 = vunpack.c.l.bf16 %v265
      %v308 = vunpack.c.l.bf16 %v266
      %v309 = vunpack.c.l.bf16 %v267
      %352 = vrot.lane.b32.xlu0 %v268, 120
      %v353 = vpop.permute.xlu0 %352
      %354 = vrot.lane.b32.xlu0 %v269, 120
      %v355 = vpop.permute.xlu0 %354
      %356 = vrot.lane.b32.xlu0 %v270, 120
      %v357 = vpop.permute.xlu0 %356
      %358 = vrot.lane.b32.xlu0 %v271, 120
      %v359 = vpop.permute.xlu0 %358
      %360 = vrot.lane.b32.xlu0 %v272, 120
      %v361 = vpop.permute.xlu0 %360
      %362 = vrot.lane.b32.xlu0 %v273, 120
      %v363 = vpop.permute.xlu0 %362
      %364 = vrot.lane.b32.xlu0 %v274, 120
      %v365 = vpop.permute.xlu0 %364
      %366 = vrot.lane.b32.xlu0 %v275, 120
      %v367 = vpop.permute.xlu0 %366
      %368 = vrot.lane.b32.xlu0 %v276, 120
      %v369 = vpop.permute.xlu0 %368
      %370 = vrot.lane.b32.xlu0 %v277, 120
      %v371 = vpop.permute.xlu0 %370
      %372 = vrot.lane.b32.xlu0 %v278, 120
      %v373 = vpop.permute.xlu0 %372
      %374 = vrot.lane.b32.xlu0 %v279, 120
      %v375 = vpop.permute.xlu0 %374
      %376 = vrot.lane.b32.xlu0 %v280, 120
      %v377 = vpop.permute.xlu0 %376
      %378 = vrot.lane.b32.xlu0 %v281, 120
      %v379 = vpop.permute.xlu0 %378
      %380 = vrot.lane.b32.xlu0 %v282, 120
      %v381 = vpop.permute.xlu0 %380
      %382 = vrot.lane.b32.xlu0 %v283, 120
      %v383 = vpop.permute.xlu0 %382
      %384 = vrot.lane.b32.xlu0 %v284, 120
      %v385 = vpop.permute.xlu0 %384
      %386 = vrot.lane.b32.xlu0 %v285, 120
      %v387 = vpop.permute.xlu0 %386
      %388 = vrot.lane.b32.xlu0 %v286, 120
      %v389 = vpop.permute.xlu0 %388
      %390 = vrot.lane.b32.xlu0 %v287, 120
      %v391 = vpop.permute.xlu0 %390
      %392 = vrot.lane.b32.xlu0 %v288, 120
      %v393 = vpop.permute.xlu0 %392
      %394 = vrot.lane.b32.xlu0 %v289, 120
      %v395 = vpop.permute.xlu0 %394
      %396 = vrot.lane.b32.xlu0 %v290, 120
      %v397 = vpop.permute.xlu0 %396
      %398 = vrot.lane.b32.xlu0 %v291, 120
      %v399 = vpop.permute.xlu0 %398
      %400 = vrot.lane.b32.xlu0 %v292, 120
      %v401 = vpop.permute.xlu0 %400
      %402 = vrot.lane.b32.xlu0 %v293, 120
      %v403 = vpop.permute.xlu0 %402
      %404 = vrot.lane.b32.xlu0 %v294, 120
      %v405 = vpop.permute.xlu0 %404
      %406 = vrot.lane.b32.xlu0 %v295, 120
      %v407 = vpop.permute.xlu0 %406
      %408 = vrot.lane.b32.xlu0 %v296, 120
      %v409 = vpop.permute.xlu0 %408
      %410 = vrot.lane.b32.xlu0 %v297, 120
      %v411 = vpop.permute.xlu0 %410
      %412 = vrot.lane.b32.xlu0 %v298, 120
      %v413 = vpop.permute.xlu0 %412
      %414 = vrot.lane.b32.xlu0 %v299, 120
      %v415 = vpop.permute.xlu0 %414
      %416 = vrot.lane.b32.xlu0 %v300, 120
      %v417 = vpop.permute.xlu0 %416
      %418 = vrot.lane.b32.xlu0 %v301, 120
      %v419 = vpop.permute.xlu0 %418
      %420 = vrot.lane.b32.xlu0 %v302, 120
      %v421 = vpop.permute.xlu0 %420
      %422 = vrot.lane.b32.xlu0 %v303, 120
      %v423 = vpop.permute.xlu0 %422
      %424 = vrot.lane.b32.xlu0 %v304, 120
      %v425 = vpop.permute.xlu0 %424
      %426 = vrot.lane.b32.xlu0 %v305, 120
      %v427 = vpop.permute.xlu0 %426
      %428 = vrot.lane.b32.xlu0 %v306, 120
      %v429 = vpop.permute.xlu0 %428
      %430 = vrot.lane.b32.xlu0 %v307, 120
      %v431 = vpop.permute.xlu0 %430
      %432 = vrot.lane.b32.xlu0 %v308, 120
      %v433 = vpop.permute.xlu0 %432
      %434 = vrot.lane.b32.xlu0 %v309, 120
      %v435 = vpop.permute.xlu0 %434
      %v478 = vmax.f32 %v268, %v353
      %v479 = vmax.f32 %v269, %v355
      %v480 = vmax.f32 %v270, %v357
      %v481 = vmax.f32 %v271, %v359
      %v482 = vmax.f32 %v272, %v361
      %v483 = vmax.f32 %v273, %v363
      %v484 = vmax.f32 %v274, %v365
      %v485 = vmax.f32 %v275, %v367
      %v486 = vmax.f32 %v276, %v369
      %v487 = vmax.f32 %v277, %v371
      %v488 = vmax.f32 %v278, %v373
      %v489 = vmax.f32 %v279, %v375
      %v490 = vmax.f32 %v280, %v377
      %v491 = vmax.f32 %v281, %v379
      %v492 = vmax.f32 %v282, %v381
      %v493 = vmax.f32 %v283, %v383
      %v494 = vmax.f32 %v284, %v385
      %v495 = vmax.f32 %v285, %v387
      %v496 = vmax.f32 %v286, %v389
      %v497 = vmax.f32 %v287, %v391
      %v498 = vmax.f32 %v288, %v393
      %v499 = vmax.f32 %v289, %v395
      %v500 = vmax.f32 %v290, %v397
      %v501 = vmax.f32 %v291, %v399
      %v502 = vmax.f32 %v292, %v401
      %v503 = vmax.f32 %v293, %v403
      %v504 = vmax.f32 %v294, %v405
      %v505 = vmax.f32 %v295, %v407
      %v506 = vmax.f32 %v296, %v409
      %v507 = vmax.f32 %v297, %v411
      %v508 = vmax.f32 %v298, %v413
      %v509 = vmax.f32 %v299, %v415
      %v510 = vmax.f32 %v300, %v417
      %v511 = vmax.f32 %v301, %v419
      %v512 = vmax.f32 %v302, %v421
      %v513 = vmax.f32 %v303, %v423
      %v514 = vmax.f32 %v304, %v425
      %v515 = vmax.f32 %v305, %v427
      %v516 = vmax.f32 %v306, %v429
      %v517 = vmax.f32 %v307, %v431
      %v518 = vmax.f32 %v308, %v433
      %v519 = vmax.f32 %v309, %v435
      %v520 = vpack.c.bf16 %v478, %v478
      %v521 = vpack.c.bf16 %v479, %v479
      %v522 = vpack.c.bf16 %v480, %v480
      %v523 = vpack.c.bf16 %v481, %v481
      %v524 = vpack.c.bf16 %v482, %v482
      %v525 = vpack.c.bf16 %v483, %v483
      %v526 = vpack.c.bf16 %v484, %v484
      %v527 = vpack.c.bf16 %v485, %v485
      %v528 = vpack.c.bf16 %v486, %v486
      %v529 = vpack.c.bf16 %v487, %v487
      %v530 = vpack.c.bf16 %v488, %v488
      %v531 = vpack.c.bf16 %v489, %v489
      %v532 = vpack.c.bf16 %v490, %v490
      %v533 = vpack.c.bf16 %v491, %v491
      %v534 = vpack.c.bf16 %v492, %v492
      %v535 = vpack.c.bf16 %v493, %v493
      %v536 = vpack.c.bf16 %v494, %v494
      %v537 = vpack.c.bf16 %v495, %v495
      %v538 = vpack.c.bf16 %v496, %v496
      %v539 = vpack.c.bf16 %v497, %v497
      %v540 = vpack.c.bf16 %v498, %v498
      %v541 = vpack.c.bf16 %v499, %v499
      %v542 = vpack.c.bf16 %v500, %v500
      %v543 = vpack.c.bf16 %v501, %v501
      %v544 = vpack.c.bf16 %v502, %v502
      %v545 = vpack.c.bf16 %v503, %v503
      %v546 = vpack.c.bf16 %v504, %v504
      %v547 = vpack.c.bf16 %v505, %v505
      %v548 = vpack.c.bf16 %v506, %v506
      %v549 = vpack.c.bf16 %v507, %v507
      %v550 = vpack.c.bf16 %v508, %v508
      %v551 = vpack.c.bf16 %v509, %v509
      %v552 = vpack.c.bf16 %v510, %v510
      %v553 = vpack.c.bf16 %v511, %v511
      %v554 = vpack.c.bf16 %v512, %v512
      %v555 = vpack.c.bf16 %v513, %v513
      %v556 = vpack.c.bf16 %v514, %v514
      %v557 = vpack.c.bf16 %v515, %v515
      %v558 = vpack.c.bf16 %v516, %v516
      %v559 = vpack.c.bf16 %v517, %v517
      %v560 = vpack.c.bf16 %v518, %v518
      %v561 = vpack.c.bf16 %v519, %v519
      %562 = vrot.lane.b32.xlu0 %v268, 124
      %v563 = vpop.permute.xlu0 %562
      %564 = vrot.lane.b32.xlu0 %v269, 124
      %v565 = vpop.permute.xlu0 %564
      %566 = vrot.lane.b32.xlu0 %v270, 124
      %v567 = vpop.permute.xlu0 %566
      %568 = vrot.lane.b32.xlu0 %v271, 124
      %v569 = vpop.permute.xlu0 %568
      %570 = vrot.lane.b32.xlu0 %v272, 124
      %v571 = vpop.permute.xlu0 %570
      %572 = vrot.lane.b32.xlu0 %v273, 124
      %v573 = vpop.permute.xlu0 %572
      %574 = vrot.lane.b32.xlu0 %v274, 124
      %v575 = vpop.permute.xlu0 %574
      %576 = vrot.lane.b32.xlu0 %v275, 124
      %v577 = vpop.permute.xlu0 %576
      %578 = vrot.lane.b32.xlu0 %v276, 124
      %v579 = vpop.permute.xlu0 %578
      %580 = vrot.lane.b32.xlu0 %v277, 124
      %v581 = vpop.permute.xlu0 %580
      %582 = vrot.lane.b32.xlu0 %v278, 124
      %v583 = vpop.permute.xlu0 %582
      %584 = vrot.lane.b32.xlu0 %v279, 124
      %v585 = vpop.permute.xlu0 %584
      %586 = vrot.lane.b32.xlu0 %v280, 124
      %v587 = vpop.permute.xlu0 %586
      %588 = vrot.lane.b32.xlu0 %v281, 124
      %v589 = vpop.permute.xlu0 %588
      %590 = vrot.lane.b32.xlu0 %v282, 124
      %v591 = vpop.permute.xlu0 %590
      %592 = vrot.lane.b32.xlu0 %v283, 124
      %v593 = vpop.permute.xlu0 %592
      %594 = vrot.lane.b32.xlu0 %v284, 124
      %v595 = vpop.permute.xlu0 %594
      %596 = vrot.lane.b32.xlu0 %v285, 124
      %v597 = vpop.permute.xlu0 %596
      %598 = vrot.lane.b32.xlu0 %v286, 124
      %v599 = vpop.permute.xlu0 %598
      %600 = vrot.lane.b32.xlu0 %v287, 124
      %v601 = vpop.permute.xlu0 %600
      %602 = vrot.lane.b32.xlu0 %v288, 124
      %v603 = vpop.permute.xlu0 %602
      %604 = vrot.lane.b32.xlu0 %v289, 124
      %v605 = vpop.permute.xlu0 %604
      %606 = vrot.lane.b32.xlu0 %v290, 124
      %v607 = vpop.permute.xlu0 %606
      %608 = vrot.lane.b32.xlu0 %v291, 124
      %v609 = vpop.permute.xlu0 %608
      %610 = vrot.lane.b32.xlu0 %v292, 124
      %v611 = vpop.permute.xlu0 %610
      %612 = vrot.lane.b32.xlu0 %v293, 124
      %v613 = vpop.permute.xlu0 %612
      %614 = vrot.lane.b32.xlu0 %v294, 124
      %v615 = vpop.permute.xlu0 %614
      %616 = vrot.lane.b32.xlu0 %v295, 124
      %v617 = vpop.permute.xlu0 %616
      %618 = vrot.lane.b32.xlu0 %v296, 124
      %v619 = vpop.permute.xlu0 %618
      %620 = vrot.lane.b32.xlu0 %v297, 124
      %v621 = vpop.permute.xlu0 %620
      %622 = vrot.lane.b32.xlu0 %v298, 124
      %v623 = vpop.permute.xlu0 %622
      %624 = vrot.lane.b32.xlu0 %v299, 124
      %v625 = vpop.permute.xlu0 %624
      %626 = vrot.lane.b32.xlu0 %v300, 124
      %v627 = vpop.permute.xlu0 %626
      %628 = vrot.lane.b32.xlu0 %v301, 124
      %v629 = vpop.permute.xlu0 %628
      %630 = vrot.lane.b32.xlu0 %v302, 124
      %v631 = vpop.permute.xlu0 %630
      %632 = vrot.lane.b32.xlu0 %v303, 124
      %v633 = vpop.permute.xlu0 %632
      %634 = vrot.lane.b32.xlu0 %v304, 124
      %v635 = vpop.permute.xlu0 %634
      %636 = vrot.lane.b32.xlu0 %v305, 124
      %v637 = vpop.permute.xlu0 %636
      %638 = vrot.lane.b32.xlu0 %v306, 124
      %v639 = vpop.permute.xlu0 %638
      %640 = vrot.lane.b32.xlu0 %v307, 124
      %v641 = vpop.permute.xlu0 %640
      %642 = vrot.lane.b32.xlu0 %v308, 124
      %v643 = vpop.permute.xlu0 %642
      %644 = vrot.lane.b32.xlu0 %v309, 124
      %v645 = vpop.permute.xlu0 %644
      %v688 = vmax.f32 %v268, %v563
      %v689 = vmax.f32 %v269, %v565
      %v690 = vmax.f32 %v270, %v567
      %v691 = vmax.f32 %v271, %v569
      %v692 = vmax.f32 %v272, %v571
      %v693 = vmax.f32 %v273, %v573
      %v694 = vmax.f32 %v274, %v575
      %v695 = vmax.f32 %v275, %v577
      %v696 = vmax.f32 %v276, %v579
      %v697 = vmax.f32 %v277, %v581
      %v698 = vmax.f32 %v278, %v583
      %v699 = vmax.f32 %v279, %v585
      %v700 = vmax.f32 %v280, %v587
      %v701 = vmax.f32 %v281, %v589
      %v702 = vmax.f32 %v282, %v591
      %v703 = vmax.f32 %v283, %v593
      %v704 = vmax.f32 %v284, %v595
      %v705 = vmax.f32 %v285, %v597
      %v706 = vmax.f32 %v286, %v599
      %v707 = vmax.f32 %v287, %v601
      %v708 = vmax.f32 %v288, %v603
      %v709 = vmax.f32 %v289, %v605
      %v710 = vmax.f32 %v290, %v607
      %v711 = vmax.f32 %v291, %v609
      %v712 = vmax.f32 %v292, %v611
      %v713 = vmax.f32 %v293, %v613
      %v714 = vmax.f32 %v294, %v615
      %v715 = vmax.f32 %v295, %v617
      %v716 = vmax.f32 %v296, %v619
      %v717 = vmax.f32 %v297, %v621
      %v718 = vmax.f32 %v298, %v623
      %v719 = vmax.f32 %v299, %v625
      %v720 = vmax.f32 %v300, %v627
      %v721 = vmax.f32 %v301, %v629
      %v722 = vmax.f32 %v302, %v631
      %v723 = vmax.f32 %v303, %v633
      %v724 = vmax.f32 %v304, %v635
      %v725 = vmax.f32 %v305, %v637
      %v726 = vmax.f32 %v306, %v639
      %v727 = vmax.f32 %v307, %v641
      %v728 = vmax.f32 %v308, %v643
      %v729 = vmax.f32 %v309, %v645
      %v730 = vpack.c.bf16 %v688, %v688
      %v731 = vpack.c.bf16 %v689, %v689
      %v732 = vpack.c.bf16 %v690, %v690
      %v733 = vpack.c.bf16 %v691, %v691
      %v734 = vpack.c.bf16 %v692, %v692
      %v735 = vpack.c.bf16 %v693, %v693
      %v736 = vpack.c.bf16 %v694, %v694
      %v737 = vpack.c.bf16 %v695, %v695
      %v738 = vpack.c.bf16 %v696, %v696
      %v739 = vpack.c.bf16 %v697, %v697
      %v740 = vpack.c.bf16 %v698, %v698
      %v741 = vpack.c.bf16 %v699, %v699
      %v742 = vpack.c.bf16 %v700, %v700
      %v743 = vpack.c.bf16 %v701, %v701
      %v744 = vpack.c.bf16 %v702, %v702
      %v745 = vpack.c.bf16 %v703, %v703
      %v746 = vpack.c.bf16 %v704, %v704
      %v747 = vpack.c.bf16 %v705, %v705
      %v748 = vpack.c.bf16 %v706, %v706
      %v749 = vpack.c.bf16 %v707, %v707
      %v750 = vpack.c.bf16 %v708, %v708
      %v751 = vpack.c.bf16 %v709, %v709
      %v752 = vpack.c.bf16 %v710, %v710
      %v753 = vpack.c.bf16 %v711, %v711
      %v754 = vpack.c.bf16 %v712, %v712
      %v755 = vpack.c.bf16 %v713, %v713
      %v756 = vpack.c.bf16 %v714, %v714
      %v757 = vpack.c.bf16 %v715, %v715
      %v758 = vpack.c.bf16 %v716, %v716
      %v759 = vpack.c.bf16 %v717, %v717
      %v760 = vpack.c.bf16 %v718, %v718
      %v761 = vpack.c.bf16 %v719, %v719
      %v762 = vpack.c.bf16 %v720, %v720
      %v763 = vpack.c.bf16 %v721, %v721
      %v764 = vpack.c.bf16 %v722, %v722
      %v765 = vpack.c.bf16 %v723, %v723
      %v766 = vpack.c.bf16 %v724, %v724
      %v767 = vpack.c.bf16 %v725, %v725
      %v768 = vpack.c.bf16 %v726, %v726
      %v769 = vpack.c.bf16 %v727, %v727
      %v770 = vpack.c.bf16 %v728, %v728
      %v771 = vpack.c.bf16 %v729, %v729
      %v772 = vunpack.c.l.bf16 %v520
      %v773 = vunpack.c.l.bf16 %v521
      %v774 = vunpack.c.l.bf16 %v522
      %v775 = vunpack.c.l.bf16 %v523
      %v776 = vunpack.c.l.bf16 %v524
      %v777 = vunpack.c.l.bf16 %v525
      %v778 = vunpack.c.l.bf16 %v526
      %v779 = vunpack.c.l.bf16 %v527
      %v780 = vunpack.c.l.bf16 %v528
      %v781 = vunpack.c.l.bf16 %v529
      %v782 = vunpack.c.l.bf16 %v530
      %v783 = vunpack.c.l.bf16 %v531
      %v784 = vunpack.c.l.bf16 %v532
      %v785 = vunpack.c.l.bf16 %v533
      %v786 = vunpack.c.l.bf16 %v534
      %v787 = vunpack.c.l.bf16 %v535
      %v788 = vunpack.c.l.bf16 %v536
      %v789 = vunpack.c.l.bf16 %v537
      %v790 = vunpack.c.l.bf16 %v538
      %v791 = vunpack.c.l.bf16 %v539
      %v792 = vunpack.c.l.bf16 %v540
      %v793 = vunpack.c.l.bf16 %v541
      %v794 = vunpack.c.l.bf16 %v542
      %v795 = vunpack.c.l.bf16 %v543
      %v796 = vunpack.c.l.bf16 %v544
      %v797 = vunpack.c.l.bf16 %v545
      %v798 = vunpack.c.l.bf16 %v546
      %v799 = vunpack.c.l.bf16 %v547
      %v800 = vunpack.c.l.bf16 %v548
      %v801 = vunpack.c.l.bf16 %v549
      %v802 = vunpack.c.l.bf16 %v550
      %v803 = vunpack.c.l.bf16 %v551
      %v804 = vunpack.c.l.bf16 %v552
      %v805 = vunpack.c.l.bf16 %v553
      %v806 = vunpack.c.l.bf16 %v554
      %v807 = vunpack.c.l.bf16 %v555
      %v808 = vunpack.c.l.bf16 %v556
      %v809 = vunpack.c.l.bf16 %v557
      %v810 = vunpack.c.l.bf16 %v558
      %v811 = vunpack.c.l.bf16 %v559
      %v812 = vunpack.c.l.bf16 %v560
      %v813 = vunpack.c.l.bf16 %v561
      %856 = vrot.lane.b32.xlu0 %v772, 124
      %v857 = vpop.permute.xlu0 %856
      %858 = vrot.lane.b32.xlu0 %v773, 124
      %v859 = vpop.permute.xlu0 %858
      %860 = vrot.lane.b32.xlu0 %v774, 124
      %v861 = vpop.permute.xlu0 %860
      %862 = vrot.lane.b32.xlu0 %v775, 124
      %v863 = vpop.permute.xlu0 %862
      %864 = vrot.lane.b32.xlu0 %v776, 124
      %v865 = vpop.permute.xlu0 %864
      %866 = vrot.lane.b32.xlu0 %v777, 124
      %v867 = vpop.permute.xlu0 %866
      %868 = vrot.lane.b32.xlu0 %v778, 124
      %v869 = vpop.permute.xlu0 %868
      %870 = vrot.lane.b32.xlu0 %v779, 124
      %v871 = vpop.permute.xlu0 %870
      %872 = vrot.lane.b32.xlu0 %v780, 124
      %v873 = vpop.permute.xlu0 %872
      %874 = vrot.lane.b32.xlu0 %v781, 124
      %v875 = vpop.permute.xlu0 %874
      %876 = vrot.lane.b32.xlu0 %v782, 124
      %v877 = vpop.permute.xlu0 %876
      %878 = vrot.lane.b32.xlu0 %v783, 124
      %v879 = vpop.permute.xlu0 %878
      %880 = vrot.lane.b32.xlu0 %v784, 124
      %v881 = vpop.permute.xlu0 %880
      %882 = vrot.lane.b32.xlu0 %v785, 124
      %v883 = vpop.permute.xlu0 %882
      %884 = vrot.lane.b32.xlu0 %v786, 124
      %v885 = vpop.permute.xlu0 %884
      %886 = vrot.lane.b32.xlu0 %v787, 124
      %v887 = vpop.permute.xlu0 %886
      %888 = vrot.lane.b32.xlu0 %v788, 124
      %v889 = vpop.permute.xlu0 %888
      %890 = vrot.lane.b32.xlu0 %v789, 124
      %v891 = vpop.permute.xlu0 %890
      %892 = vrot.lane.b32.xlu0 %v790, 124
      %v893 = vpop.permute.xlu0 %892
      %894 = vrot.lane.b32.xlu0 %v791, 124
      %v895 = vpop.permute.xlu0 %894
      %896 = vrot.lane.b32.xlu0 %v792, 124
      %v897 = vpop.permute.xlu0 %896
      %898 = vrot.lane.b32.xlu0 %v793, 124
      %v899 = vpop.permute.xlu0 %898
      %900 = vrot.lane.b32.xlu0 %v794, 124
      %v901 = vpop.permute.xlu0 %900
      %902 = vrot.lane.b32.xlu0 %v795, 124
      %v903 = vpop.permute.xlu0 %902
      %904 = vrot.lane.b32.xlu0 %v796, 124
      %v905 = vpop.permute.xlu0 %904
      %906 = vrot.lane.b32.xlu0 %v797, 124
      %v907 = vpop.permute.xlu0 %906
      %908 = vrot.lane.b32.xlu0 %v798, 124
      %v909 = vpop.permute.xlu0 %908
      %910 = vrot.lane.b32.xlu0 %v799, 124
      %v911 = vpop.permute.xlu0 %910
      %912 = vrot.lane.b32.xlu0 %v800, 124
      %v913 = vpop.permute.xlu0 %912
      %914 = vrot.lane.b32.xlu0 %v801, 124
      %v915 = vpop.permute.xlu0 %914
      %916 = vrot.lane.b32.xlu0 %v802, 124
      %v917 = vpop.permute.xlu0 %916
      %918 = vrot.lane.b32.xlu0 %v803, 124
      %v919 = vpop.permute.xlu0 %918
      %920 = vrot.lane.b32.xlu0 %v804, 124
      %v921 = vpop.permute.xlu0 %920
      %922 = vrot.lane.b32.xlu0 %v805, 124
      %v923 = vpop.permute.xlu0 %922
      %924 = vrot.lane.b32.xlu0 %v806, 124
      %v925 = vpop.permute.xlu0 %924
      %926 = vrot.lane.b32.xlu0 %v807, 124
      %v927 = vpop.permute.xlu0 %926
      %928 = vrot.lane.b32.xlu0 %v808, 124
      %v929 = vpop.permute.xlu0 %928
      %930 = vrot.lane.b32.xlu0 %v809, 124
      %v931 = vpop.permute.xlu0 %930
      %932 = vrot.lane.b32.xlu0 %v810, 124
      %v933 = vpop.permute.xlu0 %932
      %934 = vrot.lane.b32.xlu0 %v811, 124
      %v935 = vpop.permute.xlu0 %934
      %936 = vrot.lane.b32.xlu0 %v812, 124
      %v937 = vpop.permute.xlu0 %936
      %938 = vrot.lane.b32.xlu0 %v813, 124
      %v939 = vpop.permute.xlu0 %938
      %v982 = vmax.f32 %v772, %v857
      %v983 = vmax.f32 %v773, %v859
      %v984 = vmax.f32 %v774, %v861
      %v985 = vmax.f32 %v775, %v863
      %v986 = vmax.f32 %v776, %v865
      %v987 = vmax.f32 %v777, %v867
      %v988 = vmax.f32 %v778, %v869
      %v989 = vmax.f32 %v779, %v871
      %v990 = vmax.f32 %v780, %v873
      %v991 = vmax.f32 %v781, %v875
      %v992 = vmax.f32 %v782, %v877
      %v993 = vmax.f32 %v783, %v879
      %v994 = vmax.f32 %v784, %v881
      %v995 = vmax.f32 %v785, %v883
      %v996 = vmax.f32 %v786, %v885
      %v997 = vmax.f32 %v787, %v887
      %v998 = vmax.f32 %v788, %v889
      %v999 = vmax.f32 %v789, %v891
      %v1000 = vmax.f32 %v790, %v893
      %v1001 = vmax.f32 %v791, %v895
      %v1002 = vmax.f32 %v792, %v897
      %v1003 = vmax.f32 %v793, %v899
      %v1004 = vmax.f32 %v794, %v901
      %v1005 = vmax.f32 %v795, %v903
      %v1006 = vmax.f32 %v796, %v905
      %v1007 = vmax.f32 %v797, %v907
      %v1008 = vmax.f32 %v798, %v909
      %v1009 = vmax.f32 %v799, %v911
      %v1010 = vmax.f32 %v800, %v913
      %v1011 = vmax.f32 %v801, %v915
      %v1012 = vmax.f32 %v802, %v917
      %v1013 = vmax.f32 %v803, %v919
      %v1014 = vmax.f32 %v804, %v921
      %v1015 = vmax.f32 %v805, %v923
      %v1016 = vmax.f32 %v806, %v925
      %v1017 = vmax.f32 %v807, %v927
      %v1018 = vmax.f32 %v808, %v929
      %v1019 = vmax.f32 %v809, %v931
      %v1020 = vmax.f32 %v810, %v933
      %v1021 = vmax.f32 %v811, %v935
      %v1022 = vmax.f32 %v812, %v937
      %v1023 = vmax.f32 %v813, %v939
      %v1024 = vpack.c.bf16 %v982, %v982
      %v1025 = vpack.c.bf16 %v983, %v983
      %v1026 = vpack.c.bf16 %v984, %v984
      %v1027 = vpack.c.bf16 %v985, %v985
      %v1028 = vpack.c.bf16 %v986, %v986
      %v1029 = vpack.c.bf16 %v987, %v987
      %v1030 = vpack.c.bf16 %v988, %v988
      %v1031 = vpack.c.bf16 %v989, %v989
      %v1032 = vpack.c.bf16 %v990, %v990
      %v1033 = vpack.c.bf16 %v991, %v991
      %v1034 = vpack.c.bf16 %v992, %v992
      %v1035 = vpack.c.bf16 %v993, %v993
      %v1036 = vpack.c.bf16 %v994, %v994
      %v1037 = vpack.c.bf16 %v995, %v995
      %v1038 = vpack.c.bf16 %v996, %v996
      %v1039 = vpack.c.bf16 %v997, %v997
      %v1040 = vpack.c.bf16 %v998, %v998
      %v1041 = vpack.c.bf16 %v999, %v999
      %v1042 = vpack.c.bf16 %v1000, %v1000
      %v1043 = vpack.c.bf16 %v1001, %v1001
      %v1044 = vpack.c.bf16 %v1002, %v1002
      %v1045 = vpack.c.bf16 %v1003, %v1003
      %v1046 = vpack.c.bf16 %v1004, %v1004
      %v1047 = vpack.c.bf16 %v1005, %v1005
      %v1048 = vpack.c.bf16 %v1006, %v1006
      %v1049 = vpack.c.bf16 %v1007, %v1007
      %v1050 = vpack.c.bf16 %v1008, %v1008
      %v1051 = vpack.c.bf16 %v1009, %v1009
      %v1052 = vpack.c.bf16 %v1010, %v1010
      %v1053 = vpack.c.bf16 %v1011, %v1011
      %v1054 = vpack.c.bf16 %v1012, %v1012
      %v1055 = vpack.c.bf16 %v1013, %v1013
      %v1056 = vpack.c.bf16 %v1014, %v1014
      %v1057 = vpack.c.bf16 %v1015, %v1015
      %v1058 = vpack.c.bf16 %v1016, %v1016
      %v1059 = vpack.c.bf16 %v1017, %v1017
      %v1060 = vpack.c.bf16 %v1018, %v1018
      %v1061 = vpack.c.bf16 %v1019, %v1019
      %v1062 = vpack.c.bf16 %v1020, %v1020
      %v1063 = vpack.c.bf16 %v1021, %v1021
      %v1064 = vpack.c.bf16 %v1022, %v1022
      %v1065 = vpack.c.bf16 %v1023, %v1023
      %v1066 = vunpack.c.l.bf16 %v1024
      %v1067 = vunpack.c.l.bf16 %v1025
      %v1068 = vunpack.c.l.bf16 %v1026
      %v1069 = vunpack.c.l.bf16 %v1027
      %v1070 = vunpack.c.l.bf16 %v1028
      %v1071 = vunpack.c.l.bf16 %v1029
      %v1072 = vunpack.c.l.bf16 %v1030
      %v1073 = vunpack.c.l.bf16 %v1031
      %v1074 = vunpack.c.l.bf16 %v1032
      %v1075 = vunpack.c.l.bf16 %v1033
      %v1076 = vunpack.c.l.bf16 %v1034
      %v1077 = vunpack.c.l.bf16 %v1035
      %v1078 = vunpack.c.l.bf16 %v1036
      %v1079 = vunpack.c.l.bf16 %v1037
      %v1080 = vunpack.c.l.bf16 %v1038
      %v1081 = vunpack.c.l.bf16 %v1039
      %v1082 = vunpack.c.l.bf16 %v1040
      %v1083 = vunpack.c.l.bf16 %v1041
      %v1084 = vunpack.c.l.bf16 %v1042
      %v1085 = vunpack.c.l.bf16 %v1043
      %v1086 = vunpack.c.l.bf16 %v1044
      %v1087 = vunpack.c.l.bf16 %v1045
      %v1088 = vunpack.c.l.bf16 %v1046
      %v1089 = vunpack.c.l.bf16 %v1047
      %v1090 = vunpack.c.l.bf16 %v1048
      %v1091 = vunpack.c.l.bf16 %v1049
      %v1092 = vunpack.c.l.bf16 %v1050
      %v1093 = vunpack.c.l.bf16 %v1051
      %v1094 = vunpack.c.l.bf16 %v1052
      %v1095 = vunpack.c.l.bf16 %v1053
      %v1096 = vunpack.c.l.bf16 %v1054
      %v1097 = vunpack.c.l.bf16 %v1055
      %v1098 = vunpack.c.l.bf16 %v1056
      %v1099 = vunpack.c.l.bf16 %v1057
      %v1100 = vunpack.c.l.bf16 %v1058
      %v1101 = vunpack.c.l.bf16 %v1059
      %v1102 = vunpack.c.l.bf16 %v1060
      %v1103 = vunpack.c.l.bf16 %v1061
      %v1104 = vunpack.c.l.bf16 %v1062
      %v1105 = vunpack.c.l.bf16 %v1063
      %v1106 = vunpack.c.l.bf16 %v1064
      %v1107 = vunpack.c.l.bf16 %v1065
      %v1108 = vunpack.c.l.bf16 %v730
      %v1109 = vunpack.c.l.bf16 %v731
      %v1110 = vunpack.c.l.bf16 %v732
      %v1111 = vunpack.c.l.bf16 %v733
      %v1112 = vunpack.c.l.bf16 %v734
      %v1113 = vunpack.c.l.bf16 %v735
      %v1114 = vunpack.c.l.bf16 %v736
      %v1115 = vunpack.c.l.bf16 %v737
      %v1116 = vunpack.c.l.bf16 %v738
      %v1117 = vunpack.c.l.bf16 %v739
      %v1118 = vunpack.c.l.bf16 %v740
      %v1119 = vunpack.c.l.bf16 %v741
      %v1120 = vunpack.c.l.bf16 %v742
      %v1121 = vunpack.c.l.bf16 %v743
      %v1122 = vunpack.c.l.bf16 %v744
      %v1123 = vunpack.c.l.bf16 %v745
      %v1124 = vunpack.c.l.bf16 %v746
      %v1125 = vunpack.c.l.bf16 %v747
      %v1126 = vunpack.c.l.bf16 %v748
      %v1127 = vunpack.c.l.bf16 %v749
      %v1128 = vunpack.c.l.bf16 %v750
      %v1129 = vunpack.c.l.bf16 %v751
      %v1130 = vunpack.c.l.bf16 %v752
      %v1131 = vunpack.c.l.bf16 %v753
      %v1132 = vunpack.c.l.bf16 %v754
      %v1133 = vunpack.c.l.bf16 %v755
      %v1134 = vunpack.c.l.bf16 %v756
      %v1135 = vunpack.c.l.bf16 %v757
      %v1136 = vunpack.c.l.bf16 %v758
      %v1137 = vunpack.c.l.bf16 %v759
      %v1138 = vunpack.c.l.bf16 %v760
      %v1139 = vunpack.c.l.bf16 %v761
      %v1140 = vunpack.c.l.bf16 %v762
      %v1141 = vunpack.c.l.bf16 %v763
      %v1142 = vunpack.c.l.bf16 %v764
      %v1143 = vunpack.c.l.bf16 %v765
      %v1144 = vunpack.c.l.bf16 %v766
      %v1145 = vunpack.c.l.bf16 %v767
      %v1146 = vunpack.c.l.bf16 %v768
      %v1147 = vunpack.c.l.bf16 %v769
      %v1148 = vunpack.c.l.bf16 %v770
      %v1149 = vunpack.c.l.bf16 %v771
      %1192 = vrot.lane.b32.xlu0 %v1108, 112
      %v1193 = vpop.permute.xlu0 %1192
      %1194 = vrot.lane.b32.xlu0 %v1109, 112
      %v1195 = vpop.permute.xlu0 %1194
      %1196 = vrot.lane.b32.xlu0 %v1110, 112
      %v1197 = vpop.permute.xlu0 %1196
      %1198 = vrot.lane.b32.xlu0 %v1111, 112
      %v1199 = vpop.permute.xlu0 %1198
      %1200 = vrot.lane.b32.xlu0 %v1112, 112
      %v1201 = vpop.permute.xlu0 %1200
      %1202 = vrot.lane.b32.xlu0 %v1113, 112
      %v1203 = vpop.permute.xlu0 %1202
      %1204 = vrot.lane.b32.xlu0 %v1114, 112
      %v1205 = vpop.permute.xlu0 %1204
      %1206 = vrot.lane.b32.xlu0 %v1115, 112
      %v1207 = vpop.permute.xlu0 %1206
      %1208 = vrot.lane.b32.xlu0 %v1116, 112
      %v1209 = vpop.permute.xlu0 %1208
      %1210 = vrot.lane.b32.xlu0 %v1117, 112
      %v1211 = vpop.permute.xlu0 %1210
      %1212 = vrot.lane.b32.xlu0 %v1118, 112
      %v1213 = vpop.permute.xlu0 %1212
      %1214 = vrot.lane.b32.xlu0 %v1119, 112
      %v1215 = vpop.permute.xlu0 %1214
      %1216 = vrot.lane.b32.xlu0 %v1120, 112
      %v1217 = vpop.permute.xlu0 %1216
      %1218 = vrot.lane.b32.xlu0 %v1121, 112
      %v1219 = vpop.permute.xlu0 %1218
      %1220 = vrot.lane.b32.xlu0 %v1122, 112
      %v1221 = vpop.permute.xlu0 %1220
      %1222 = vrot.lane.b32.xlu0 %v1123, 112
      %v1223 = vpop.permute.xlu0 %1222
      %1224 = vrot.lane.b32.xlu0 %v1124, 112
      %v1225 = vpop.permute.xlu0 %1224
      %1226 = vrot.lane.b32.xlu0 %v1125, 112
      %v1227 = vpop.permute.xlu0 %1226
      %1228 = vrot.lane.b32.xlu0 %v1126, 112
      %v1229 = vpop.permute.xlu0 %1228
      %1230 = vrot.lane.b32.xlu0 %v1127, 112
      %v1231 = vpop.permute.xlu0 %1230
      %1232 = vrot.lane.b32.xlu0 %v1128, 112
      %v1233 = vpop.permute.xlu0 %1232
      %1234 = vrot.lane.b32.xlu0 %v1129, 112
      %v1235 = vpop.permute.xlu0 %1234
      %1236 = vrot.lane.b32.xlu0 %v1130, 112
      %v1237 = vpop.permute.xlu0 %1236
      %1238 = vrot.lane.b32.xlu0 %v1131, 112
      %v1239 = vpop.permute.xlu0 %1238
      %1240 = vrot.lane.b32.xlu0 %v1132, 112
      %v1241 = vpop.permute.xlu0 %1240
      %1242 = vrot.lane.b32.xlu0 %v1133, 112
      %v1243 = vpop.permute.xlu0 %1242
      %1244 = vrot.lane.b32.xlu0 %v1134, 112
      %v1245 = vpop.permute.xlu0 %1244
      %1246 = vrot.lane.b32.xlu0 %v1135, 112
      %v1247 = vpop.permute.xlu0 %1246
      %1248 = vrot.lane.b32.xlu0 %v1136, 112
      %v1249 = vpop.permute.xlu0 %1248
      %1250 = vrot.lane.b32.xlu0 %v1137, 112
      %v1251 = vpop.permute.xlu0 %1250
      %1252 = vrot.lane.b32.xlu0 %v1138, 112
      %v1253 = vpop.permute.xlu0 %1252
      %1254 = vrot.lane.b32.xlu0 %v1139, 112
      %v1255 = vpop.permute.xlu0 %1254
      %1256 = vrot.lane.b32.xlu0 %v1140, 112
      %v1257 = vpop.permute.xlu0 %1256
      %1258 = vrot.lane.b32.xlu0 %v1141, 112
      %v1259 = vpop.permute.xlu0 %1258
      %1260 = vrot.lane.b32.xlu0 %v1142, 112
      %v1261 = vpop.permute.xlu0 %1260
      %1262 = vrot.lane.b32.xlu0 %v1143, 112
      %v1263 = vpop.permute.xlu0 %1262
      %1264 = vrot.lane.b32.xlu0 %v1144, 112
      %v1265 = vpop.permute.xlu0 %1264
      %1266 = vrot.lane.b32.xlu0 %v1145, 112
      %v1267 = vpop.permute.xlu0 %1266
      %1268 = vrot.lane.b32.xlu0 %v1146, 112
      %v1269 = vpop.permute.xlu0 %1268
      %1270 = vrot.lane.b32.xlu0 %v1147, 112
      %v1271 = vpop.permute.xlu0 %1270
      %1272 = vrot.lane.b32.xlu0 %v1148, 112
      %v1273 = vpop.permute.xlu0 %1272
      %1274 = vrot.lane.b32.xlu0 %v1149, 112
      %v1275 = vpop.permute.xlu0 %1274
      %v1318 = vmax.f32 %v1066, %v1193
      %v1319 = vmax.f32 %v1067, %v1195
      %v1320 = vmax.f32 %v1068, %v1197
      %v1321 = vmax.f32 %v1069, %v1199
      %v1322 = vmax.f32 %v1070, %v1201
      %v1323 = vmax.f32 %v1071, %v1203
      %v1324 = vmax.f32 %v1072, %v1205
      %v1325 = vmax.f32 %v1073, %v1207
      %v1326 = vmax.f32 %v1074, %v1209
      %v1327 = vmax.f32 %v1075, %v1211
      %v1328 = vmax.f32 %v1076, %v1213
      %v1329 = vmax.f32 %v1077, %v1215
      %v1330 = vmax.f32 %v1078, %v1217
      %v1331 = vmax.f32 %v1079, %v1219
      %v1332 = vmax.f32 %v1080, %v1221
      %v1333 = vmax.f32 %v1081, %v1223
      %v1334 = vmax.f32 %v1082, %v1225
      %v1335 = vmax.f32 %v1083, %v1227
      %v1336 = vmax.f32 %v1084, %v1229
      %v1337 = vmax.f32 %v1085, %v1231
      %v1338 = vmax.f32 %v1086, %v1233
      %v1339 = vmax.f32 %v1087, %v1235
      %v1340 = vmax.f32 %v1088, %v1237
      %v1341 = vmax.f32 %v1089, %v1239
      %v1342 = vmax.f32 %v1090, %v1241
      %v1343 = vmax.f32 %v1091, %v1243
      %v1344 = vmax.f32 %v1092, %v1245
      %v1345 = vmax.f32 %v1093, %v1247
      %v1346 = vmax.f32 %v1094, %v1249
      %v1347 = vmax.f32 %v1095, %v1251
      %v1348 = vmax.f32 %v1096, %v1253
      %v1349 = vmax.f32 %v1097, %v1255
      %v1350 = vmax.f32 %v1098, %v1257
      %v1351 = vmax.f32 %v1099, %v1259
      %v1352 = vmax.f32 %v1100, %v1261
      %v1353 = vmax.f32 %v1101, %v1263
      %v1354 = vmax.f32 %v1102, %v1265
      %v1355 = vmax.f32 %v1103, %v1267
      %v1356 = vmax.f32 %v1104, %v1269
      %v1357 = vmax.f32 %v1105, %v1271
      %v1358 = vmax.f32 %v1106, %v1273
      %v1359 = vmax.f32 %v1107, %v1275
      %v1360 = vpack.c.bf16 %v1318, %v1318
      %v1361 = vpack.c.bf16 %v1319, %v1319
      %v1362 = vpack.c.bf16 %v1320, %v1320
      %v1363 = vpack.c.bf16 %v1321, %v1321
      %v1364 = vpack.c.bf16 %v1322, %v1322
      %v1365 = vpack.c.bf16 %v1323, %v1323
      %v1366 = vpack.c.bf16 %v1324, %v1324
      %v1367 = vpack.c.bf16 %v1325, %v1325
      %v1368 = vpack.c.bf16 %v1326, %v1326
      %v1369 = vpack.c.bf16 %v1327, %v1327
      %v1370 = vpack.c.bf16 %v1328, %v1328
      %v1371 = vpack.c.bf16 %v1329, %v1329
      %v1372 = vpack.c.bf16 %v1330, %v1330
      %v1373 = vpack.c.bf16 %v1331, %v1331
      %v1374 = vpack.c.bf16 %v1332, %v1332
      %v1375 = vpack.c.bf16 %v1333, %v1333
      %v1376 = vpack.c.bf16 %v1334, %v1334
      %v1377 = vpack.c.bf16 %v1335, %v1335
      %v1378 = vpack.c.bf16 %v1336, %v1336
      %v1379 = vpack.c.bf16 %v1337, %v1337
      %v1380 = vpack.c.bf16 %v1338, %v1338
      %v1381 = vpack.c.bf16 %v1339, %v1339
      %v1382 = vpack.c.bf16 %v1340, %v1340
      %v1383 = vpack.c.bf16 %v1341, %v1341
      %v1384 = vpack.c.bf16 %v1342, %v1342
      %v1385 = vpack.c.bf16 %v1343, %v1343
      %v1386 = vpack.c.bf16 %v1344, %v1344
      %v1387 = vpack.c.bf16 %v1345, %v1345
      %v1388 = vpack.c.bf16 %v1346, %v1346
      %v1389 = vpack.c.bf16 %v1347, %v1347
      %v1390 = vpack.c.bf16 %v1348, %v1348
      %v1391 = vpack.c.bf16 %v1349, %v1349
      %v1392 = vpack.c.bf16 %v1350, %v1350
      %v1393 = vpack.c.bf16 %v1351, %v1351
      %v1394 = vpack.c.bf16 %v1352, %v1352
      %v1395 = vpack.c.bf16 %v1353, %v1353
      %v1396 = vpack.c.bf16 %v1354, %v1354
      %v1397 = vpack.c.bf16 %v1355, %v1355
      %v1398 = vpack.c.bf16 %v1356, %v1356
      %v1399 = vpack.c.bf16 %v1357, %v1357
      %v1400 = vpack.c.bf16 %v1358, %v1358
      %v1401 = vpack.c.bf16 %v1359, %v1359
      %vm1402 = vcmask 27648
      %1403 = vst.msk [vmem:[#allocation2] sm:$0xf] %vm1402, %v1360
      %1404 = vst.msk [vmem:[#allocation2 + $0x4] sm:$0xf] %vm1402, %v1361
      %1405 = vst.msk [vmem:[#allocation2 + $0x8] sm:$0xf] %vm1402, %v1362
      %1406 = vst.msk [vmem:[#allocation2 + $0xc] sm:$0xf] %vm1402, %v1363
      %1407 = vst.msk [vmem:[#allocation2 + $0x10] sm:$0xf] %vm1402, %v1364
      %1408 = vst.msk [vmem:[#allocation2 + $0x14] sm:$0xf] %vm1402, %v1365
      %1409 = vst.msk [vmem:[#allocation2 + $0x18] sm:$0xf] %vm1402, %v1366
      %1410 = vst.msk [vmem:[#allocation2 + $0x1c] sm:$0xf] %vm1402, %v1367
      %1411 = vst.msk [vmem:[#allocation2 + $0x20] sm:$0xf] %vm1402, %v1368
      %1412 = vst.msk [vmem:[#allocation2 + $0x24] sm:$0xf] %vm1402, %v1369
      %1413 = vst.msk [vmem:[#allocation2 + $0x28] sm:$0xf] %vm1402, %v1370
      %1414 = vst.msk [vmem:[#allocation2 + $0x2c] sm:$0xf] %vm1402, %v1371
      %1415 = vst.msk [vmem:[#allocation2 + $0x30] sm:$0xf] %vm1402, %v1372
      %1416 = vst.msk [vmem:[#allocation2 + $0x34] sm:$0xf] %vm1402, %v1373
      %1417 = vst.msk [vmem:[#allocation2 + $0x38] sm:$0xf] %vm1402, %v1374
      %1418 = vst.msk [vmem:[#allocation2 + $0x3c] sm:$0xf] %vm1402, %v1375
      %1419 = vst.msk [vmem:[#allocation2 + $0x40] sm:$0xf] %vm1402, %v1376
      %1420 = vst.msk [vmem:[#allocation2 + $0x44] sm:$0xf] %vm1402, %v1377
      %1421 = vst.msk [vmem:[#allocation2 + $0x48] sm:$0xf] %vm1402, %v1378
      %1422 = vst.msk [vmem:[#allocation2 + $0x4c] sm:$0xf] %vm1402, %v1379
      %1423 = vst.msk [vmem:[#allocation2 + $0x50] sm:$0xf] %vm1402, %v1380
      %1424 = vst.msk [vmem:[#allocation2 + $0x54] sm:$0xf] %vm1402, %v1381
      %1425 = vst.msk [vmem:[#allocation2 + $0x58] sm:$0xf] %vm1402, %v1382
      %1426 = vst.msk [vmem:[#allocation2 + $0x5c] sm:$0xf] %vm1402, %v1383
      %1427 = vst.msk [vmem:[#allocation2 + $0x60] sm:$0xf] %vm1402, %v1384
      %1428 = vst.msk [vmem:[#allocation2 + $0x64] sm:$0xf] %vm1402, %v1385
      %1429 = vst.msk [vmem:[#allocation2 + $0x68] sm:$0xf] %vm1402, %v1386
      %1430 = vst.msk [vmem:[#allocation2 + $0x6c] sm:$0xf] %vm1402, %v1387
      %1431 = vst.msk [vmem:[#allocation2 + $0x70] sm:$0xf] %vm1402, %v1388
      %1432 = vst.msk [vmem:[#allocation2 + $0x74] sm:$0xf] %vm1402, %v1389
      %1433 = vst.msk [vmem:[#allocation2 + $0x78] sm:$0xf] %vm1402, %v1390
      %1434 = vst.msk [vmem:[#allocation2 + $0x7c] sm:$0xf] %vm1402, %v1391
      %1435 = vst.msk [vmem:[#allocation2 + $0x80] sm:$0xf] %vm1402, %v1392
      %1436 = vst.msk [vmem:[#allocation2 + $0x84] sm:$0xf] %vm1402, %v1393
      %1437 = vst.msk [vmem:[#allocation2 + $0x88] sm:$0xf] %vm1402, %v1394
      %1438 = vst.msk [vmem:[#allocation2 + $0x8c] sm:$0xf] %vm1402, %v1395
      %1439 = vst.msk [vmem:[#allocation2 + $0x90] sm:$0xf] %vm1402, %v1396
      %1440 = vst.msk [vmem:[#allocation2 + $0x94] sm:$0xf] %vm1402, %v1397
      %1441 = vst.msk [vmem:[#allocation2 + $0x98] sm:$0xf] %vm1402, %v1398
      %1442 = vst.msk [vmem:[#allocation2 + $0x9c] sm:$0xf] %vm1402, %v1399
      %1443 = vst.msk [vmem:[#allocation2 + $0xa0] sm:$0xf] %vm1402, %v1400
      %1444 = vst.msk [vmem:[#allocation2 + $0xa4] sm:$0xf] %vm1402, %v1401
      %1487 = vrot.lane.b32.xlu0 %v520, 4
      %v1488 = vpop.permute.xlu0 %1487
      %1489 = vrot.lane.b32.xlu0 %v521, 4
      %v1490 = vpop.permute.xlu0 %1489
      %1491 = vrot.lane.b32.xlu0 %v522, 4
      %v1492 = vpop.permute.xlu0 %1491
      %1493 = vrot.lane.b32.xlu0 %v523, 4
      %v1494 = vpop.permute.xlu0 %1493
      %1495 = vrot.lane.b32.xlu0 %v524, 4
      %v1496 = vpop.permute.xlu0 %1495
      %1497 = vrot.lane.b32.xlu0 %v525, 4
      %v1498 = vpop.permute.xlu0 %1497
      %1499 = vrot.lane.b32.xlu0 %v526, 4
      %v1500 = vpop.permute.xlu0 %1499
      %1501 = vrot.lane.b32.xlu0 %v527, 4
      %v1502 = vpop.permute.xlu0 %1501
      %1503 = vrot.lane.b32.xlu0 %v528, 4
      %v1504 = vpop.permute.xlu0 %1503
      %1505 = vrot.lane.b32.xlu0 %v529, 4
      %v1506 = vpop.permute.xlu0 %1505
      %1507 = vrot.lane.b32.xlu0 %v530, 4
      %v1508 = vpop.permute.xlu0 %1507
      %1509 = vrot.lane.b32.xlu0 %v531, 4
      %v1510 = vpop.permute.xlu0 %1509
      %1511 = vrot.lane.b32.xlu0 %v532, 4
      %v1512 = vpop.permute.xlu0 %1511
      %1513 = vrot.lane.b32.xlu0 %v533, 4
      %v1514 = vpop.permute.xlu0 %1513
      %1515 = vrot.lane.b32.xlu0 %v534, 4
      %v1516 = vpop.permute.xlu0 %1515
      %1517 = vrot.lane.b32.xlu0 %v535, 4
      %v1518 = vpop.permute.xlu0 %1517
      %1519 = vrot.lane.b32.xlu0 %v536, 4
      %v1520 = vpop.permute.xlu0 %1519
      %1521 = vrot.lane.b32.xlu0 %v537, 4
      %v1522 = vpop.permute.xlu0 %1521
      %1523 = vrot.lane.b32.xlu0 %v538, 4
      %v1524 = vpop.permute.xlu0 %1523
      %1525 = vrot.lane.b32.xlu0 %v539, 4
      %v1526 = vpop.permute.xlu0 %1525
      %1527 = vrot.lane.b32.xlu0 %v540, 4
      %v1528 = vpop.permute.xlu0 %1527
      %1529 = vrot.lane.b32.xlu0 %v541, 4
      %v1530 = vpop.permute.xlu0 %1529
      %1531 = vrot.lane.b32.xlu0 %v542, 4
      %v1532 = vpop.permute.xlu0 %1531
      %1533 = vrot.lane.b32.xlu0 %v543, 4
      %v1534 = vpop.permute.xlu0 %1533
      %1535 = vrot.lane.b32.xlu0 %v544, 4
      %v1536 = vpop.permute.xlu0 %1535
      %1537 = vrot.lane.b32.xlu0 %v545, 4
      %v1538 = vpop.permute.xlu0 %1537
      %1539 = vrot.lane.b32.xlu0 %v546, 4
      %v1540 = vpop.permute.xlu0 %1539
      %1541 = vrot.lane.b32.xlu0 %v547, 4
      %v1542 = vpop.permute.xlu0 %1541
      %1543 = vrot.lane.b32.xlu0 %v548, 4
      %v1544 = vpop.permute.xlu0 %1543
      %1545 = vrot.lane.b32.xlu0 %v549, 4
      %v1546 = vpop.permute.xlu0 %1545
      %1547 = vrot.lane.b32.xlu0 %v550, 4
      %v1548 = vpop.permute.xlu0 %1547
      %1549 = vrot.lane.b32.xlu0 %v551, 4
      %v1550 = vpop.permute.xlu0 %1549
      %1551 = vrot.lane.b32.xlu0 %v552, 4
      %v1552 = vpop.permute.xlu0 %1551
      %1553 = vrot.lane.b32.xlu0 %v553, 4
      %v1554 = vpop.permute.xlu0 %1553
      %1555 = vrot.lane.b32.xlu0 %v554, 4
      %v1556 = vpop.permute.xlu0 %1555
      %1557 = vrot.lane.b32.xlu0 %v555, 4
      %v1558 = vpop.permute.xlu0 %1557
      %1559 = vrot.lane.b32.xlu0 %v556, 4
      %v1560 = vpop.permute.xlu0 %1559
      %1561 = vrot.lane.b32.xlu0 %v557, 4
      %v1562 = vpop.permute.xlu0 %1561
      %1563 = vrot.lane.b32.xlu0 %v558, 4
      %v1564 = vpop.permute.xlu0 %1563
      %1565 = vrot.lane.b32.xlu0 %v559, 4
      %v1566 = vpop.permute.xlu0 %1565
      %1567 = vrot.lane.b32.xlu0 %v560, 4
      %v1568 = vpop.permute.xlu0 %1567
      %1569 = vrot.lane.b32.xlu0 %v561, 4
      %v1570 = vpop.permute.xlu0 %1569
      %vm1613 = vcmask 60448
      %1614 = vst.msk [vmem:[#allocation2] sm:$0xf] %vm1613, %v1488
      %1615 = vst.msk [vmem:[#allocation2 + $0x4] sm:$0xf] %vm1613, %v1490
      %1616 = vst.msk [vmem:[#allocation2 + $0x8] sm:$0xf] %vm1613, %v1492
      %1617 = vst.msk [vmem:[#allocation2 + $0xc] sm:$0xf] %vm1613, %v1494
      %1618 = vst.msk [vmem:[#allocation2 + $0x10] sm:$0xf] %vm1613, %v1496
      %1619 = vst.msk [vmem:[#allocation2 + $0x14] sm:$0xf] %vm1613, %v1498
      %1620 = vst.msk [vmem:[#allocation2 + $0x18] sm:$0xf] %vm1613, %v1500
      %1621 = vst.msk [vmem:[#allocation2 + $0x1c] sm:$0xf] %vm1613, %v1502
      %1622 = vst.msk [vmem:[#allocation2 + $0x20] sm:$0xf] %vm1613, %v1504
      %1623 = vst.msk [vmem:[#allocation2 + $0x24] sm:$0xf] %vm1613, %v1506
      %1624 = vst.msk [vmem:[#allocation2 + $0x28] sm:$0xf] %vm1613, %v1508
      %1625 = vst.msk [vmem:[#allocation2 + $0x2c] sm:$0xf] %vm1613, %v1510
      %1626 = vst.msk [vmem:[#allocation2 + $0x30] sm:$0xf] %vm1613, %v1512
      %1627 = vst.msk [vmem:[#allocation2 + $0x34] sm:$0xf] %vm1613, %v1514
      %1628 = vst.msk [vmem:[#allocation2 + $0x38] sm:$0xf] %vm1613, %v1516
      %1629 = vst.msk [vmem:[#allocation2 + $0x3c] sm:$0xf] %vm1613, %v1518
      %1630 = vst.msk [vmem:[#allocation2 + $0x40] sm:$0xf] %vm1613, %v1520
      %1631 = vst.msk [vmem:[#allocation2 + $0x44] sm:$0xf] %vm1613, %v1522
      %1632 = vst.msk [vmem:[#allocation2 + $0x48] sm:$0xf] %vm1613, %v1524
      %1633 = vst.msk [vmem:[#allocation2 + $0x4c] sm:$0xf] %vm1613, %v1526
      %1634 = vst.msk [vmem:[#allocation2 + $0x50] sm:$0xf] %vm1613, %v1528
      %1635 = vst.msk [vmem:[#allocation2 + $0x54] sm:$0xf] %vm1613, %v1530
      %1636 = vst.msk [vmem:[#allocation2 + $0x58] sm:$0xf] %vm1613, %v1532
      %1637 = vst.msk [vmem:[#allocation2 + $0x5c] sm:$0xf] %vm1613, %v1534
      %1638 = vst.msk [vmem:[#allocation2 + $0x60] sm:$0xf] %vm1613, %v1536
      %1639 = vst.msk [vmem:[#allocation2 + $0x64] sm:$0xf] %vm1613, %v1538
      %1640 = vst.msk [vmem:[#allocation2 + $0x68] sm:$0xf] %vm1613, %v1540
      %1641 = vst.msk [vmem:[#allocation2 + $0x6c] sm:$0xf] %vm1613, %v1542
      %1642 = vst.msk [vmem:[#allocation2 + $0x70] sm:$0xf] %vm1613, %v1544
      %1643 = vst.msk [vmem:[#allocation2 + $0x74] sm:$0xf] %vm1613, %v1546
      %1644 = vst.msk [vmem:[#allocation2 + $0x78] sm:$0xf] %vm1613, %v1548
      %1645 = vst.msk [vmem:[#allocation2 + $0x7c] sm:$0xf] %vm1613, %v1550
      %1646 = vst.msk [vmem:[#allocation2 + $0x80] sm:$0xf] %vm1613, %v1552
      %1647 = vst.msk [vmem:[#allocation2 + $0x84] sm:$0xf] %vm1613, %v1554
      %1648 = vst.msk [vmem:[#allocation2 + $0x88] sm:$0xf] %vm1613, %v1556
      %1649 = vst.msk [vmem:[#allocation2 + $0x8c] sm:$0xf] %vm1613, %v1558
      %1650 = vst.msk [vmem:[#allocation2 + $0x90] sm:$0xf] %vm1613, %v1560
      %1651 = vst.msk [vmem:[#allocation2 + $0x94] sm:$0xf] %vm1613, %v1562
      %1652 = vst.msk [vmem:[#allocation2 + $0x98] sm:$0xf] %vm1613, %v1564
      %1653 = vst.msk [vmem:[#allocation2 + $0x9c] sm:$0xf] %vm1613, %v1566
      %1654 = vst.msk [vmem:[#allocation2 + $0xa0] sm:$0xf] %vm1613, %v1568
      %1655 = vst.msk [vmem:[#allocation2 + $0xa4] sm:$0xf] %vm1613, %v1570
      %vm1656 = vcmask 93248
      %1657 = vst.msk [vmem:[#allocation2] sm:$0xf] %vm1656, %v1488
      %1658 = vst.msk [vmem:[#allocation2 + $0x4] sm:$0xf] %vm1656, %v1490
      %1659 = vst.msk [vmem:[#allocation2 + $0x8] sm:$0xf] %vm1656, %v1492
      %1660 = vst.msk [vmem:[#allocation2 + $0xc] sm:$0xf] %vm1656, %v1494
      %1661 = vst.msk [vmem:[#allocation2 + $0x10] sm:$0xf] %vm1656, %v1496
      %1662 = vst.msk [vmem:[#allocation2 + $0x14] sm:$0xf] %vm1656, %v1498
      %1663 = vst.msk [vmem:[#allocation2 + $0x18] sm:$0xf] %vm1656, %v1500
      %1664 = vst.msk [vmem:[#allocation2 + $0x1c] sm:$0xf] %vm1656, %v1502
      %1665 = vst.msk [vmem:[#allocation2 + $0x20] sm:$0xf] %vm1656, %v1504
      %1666 = vst.msk [vmem:[#allocation2 + $0x24] sm:$0xf] %vm1656, %v1506
      %1667 = vst.msk [vmem:[#allocation2 + $0x28] sm:$0xf] %vm1656, %v1508
      %1668 = vst.msk [vmem:[#allocation2 + $0x2c] sm:$0xf] %vm1656, %v1510
      %1669 = vst.msk [vmem:[#allocation2 + $0x30] sm:$0xf] %vm1656, %v1512
      %1670 = vst.msk [vmem:[#allocation2 + $0x34] sm:$0xf] %vm1656, %v1514
      %1671 = vst.msk [vmem:[#allocation2 + $0x38] sm:$0xf] %vm1656, %v1516
      %1672 = vst.msk [vmem:[#allocation2 + $0x3c] sm:$0xf] %vm1656, %v1518
      %1673 = vst.msk [vmem:[#allocation2 + $0x40] sm:$0xf] %vm1656, %v1520
      %1674 = vst.msk [vmem:[#allocation2 + $0x44] sm:$0xf] %vm1656, %v1522
      %1675 = vst.msk [vmem:[#allocation2 + $0x48] sm:$0xf] %vm1656, %v1524
      %1676 = vst.msk [vmem:[#allocation2 + $0x4c] sm:$0xf] %vm1656, %v1526
      %1677 = vst.msk [vmem:[#allocation2 + $0x50] sm:$0xf] %vm1656, %v1528
      %1678 = vst.msk [vmem:[#allocation2 + $0x54] sm:$0xf] %vm1656, %v1530
      %1679 = vst.msk [vmem:[#allocation2 + $0x58] sm:$0xf] %vm1656, %v1532
      %1680 = vst.msk [vmem:[#allocation2 + $0x5c] sm:$0xf] %vm1656, %v1534
      %1681 = vst.msk [vmem:[#allocation2 + $0x60] sm:$0xf] %vm1656, %v1536
      %1682 = vst.msk [vmem:[#allocation2 + $0x64] sm:$0xf] %vm1656, %v1538
      %1683 = vst.msk [vmem:[#allocation2 + $0x68] sm:$0xf] %vm1656, %v1540
      %1684 = vst.msk [vmem:[#allocation2 + $0x6c] sm:$0xf] %vm1656, %v1542
      %1685 = vst.msk [vmem:[#allocation2 + $0x70] sm:$0xf] %vm1656, %v1544
      %1686 = vst.msk [vmem:[#allocation2 + $0x74] sm:$0xf] %vm1656, %v1546
      %1687 = vst.msk [vmem:[#allocation2 + $0x78] sm:$0xf] %vm1656, %v1548
      %1688 = vst.msk [vmem:[#allocation2 + $0x7c] sm:$0xf] %vm1656, %v1550
      %1689 = vst.msk [vmem:[#allocation2 + $0x80] sm:$0xf] %vm1656, %v1552
      %1690 = vst.msk [vmem:[#allocation2 + $0x84] sm:$0xf] %vm1656, %v1554
      %1691 = vst.msk [vmem:[#allocation2 + $0x88] sm:$0xf] %vm1656, %v1556
      %1692 = vst.msk [vmem:[#allocation2 + $0x8c] sm:$0xf] %vm1656, %v1558
      %1693 = vst.msk [vmem:[#allocation2 + $0x90] sm:$0xf] %vm1656, %v1560
      %1694 = vst.msk [vmem:[#allocation2 + $0x94] sm:$0xf] %vm1656, %v1562
      %1695 = vst.msk [vmem:[#allocation2 + $0x98] sm:$0xf] %vm1656, %v1564
      %1696 = vst.msk [vmem:[#allocation2 + $0x9c] sm:$0xf] %vm1656, %v1566
      %1697 = vst.msk [vmem:[#allocation2 + $0xa0] sm:$0xf] %vm1656, %v1568
      %1698 = vst.msk [vmem:[#allocation2 + $0xa4] sm:$0xf] %vm1656, %v1570
      %1741 = vrot.lane.b32.xlu0 %v730, 124
      %v1742 = vpop.permute.xlu0 %1741
      %1743 = vrot.lane.b32.xlu0 %v731, 124
      %v1744 = vpop.permute.xlu0 %1743
      %1745 = vrot.lane.b32.xlu0 %v732, 124
      %v1746 = vpop.permute.xlu0 %1745
      %1747 = vrot.lane.b32.xlu0 %v733, 124
      %v1748 = vpop.permute.xlu0 %1747
      %1749 = vrot.lane.b32.xlu0 %v734, 124
      %v1750 = vpop.permute.xlu0 %1749
      %1751 = vrot.lane.b32.xlu0 %v735, 124
      %v1752 = vpop.permute.xlu0 %1751
      %1753 = vrot.lane.b32.xlu0 %v736, 124
      %v1754 = vpop.permute.xlu0 %1753
      %1755 = vrot.lane.b32.xlu0 %v737, 124
      %v1756 = vpop.permute.xlu0 %1755
      %1757 = vrot.lane.b32.xlu0 %v738, 124
      %v1758 = vpop.permute.xlu0 %1757
      %1759 = vrot.lane.b32.xlu0 %v739, 124
      %v1760 = vpop.permute.xlu0 %1759
      %1761 = vrot.lane.b32.xlu0 %v740, 124
      %v1762 = vpop.permute.xlu0 %1761
      %1763 = vrot.lane.b32.xlu0 %v741, 124
      %v1764 = vpop.permute.xlu0 %1763
      %1765 = vrot.lane.b32.xlu0 %v742, 124
      %v1766 = vpop.permute.xlu0 %1765
      %1767 = vrot.lane.b32.xlu0 %v743, 124
      %v1768 = vpop.permute.xlu0 %1767
      %1769 = vrot.lane.b32.xlu0 %v744, 124
      %v1770 = vpop.permute.xlu0 %1769
      %1771 = vrot.lane.b32.xlu0 %v745, 124
      %v1772 = vpop.permute.xlu0 %1771
      %1773 = vrot.lane.b32.xlu0 %v746, 124
      %v1774 = vpop.permute.xlu0 %1773
      %1775 = vrot.lane.b32.xlu0 %v747, 124
      %v1776 = vpop.permute.xlu0 %1775
      %1777 = vrot.lane.b32.xlu0 %v748, 124
      %v1778 = vpop.permute.xlu0 %1777
      %1779 = vrot.lane.b32.xlu0 %v749, 124
      %v1780 = vpop.permute.xlu0 %1779
      %1781 = vrot.lane.b32.xlu0 %v750, 124
      %v1782 = vpop.permute.xlu0 %1781
      %1783 = vrot.lane.b32.xlu0 %v751, 124
      %v1784 = vpop.permute.xlu0 %1783
      %1785 = vrot.lane.b32.xlu0 %v752, 124
      %v1786 = vpop.permute.xlu0 %1785
      %1787 = vrot.lane.b32.xlu0 %v753, 124
      %v1788 = vpop.permute.xlu0 %1787
      %1789 = vrot.lane.b32.xlu0 %v754, 124
      %v1790 = vpop.permute.xlu0 %1789
      %1791 = vrot.lane.b32.xlu0 %v755, 124
      %v1792 = vpop.permute.xlu0 %1791
      %1793 = vrot.lane.b32.xlu0 %v756, 124
      %v1794 = vpop.permute.xlu0 %1793
      %1795 = vrot.lane.b32.xlu0 %v757, 124
      %v1796 = vpop.permute.xlu0 %1795
      %1797 = vrot.lane.b32.xlu0 %v758, 124
      %v1798 = vpop.permute.xlu0 %1797
      %1799 = vrot.lane.b32.xlu0 %v759, 124
      %v1800 = vpop.permute.xlu0 %1799
      %1801 = vrot.lane.b32.xlu0 %v760, 124
      %v1802 = vpop.permute.xlu0 %1801
      %1803 = vrot.lane.b32.xlu0 %v761, 124
      %v1804 = vpop.permute.xlu0 %1803
      %1805 = vrot.lane.b32.xlu0 %v762, 124
      %v1806 = vpop.permute.xlu0 %1805
      %1807 = vrot.lane.b32.xlu0 %v763, 124
      %v1808 = vpop.permute.xlu0 %1807
      %1809 = vrot.lane.b32.xlu0 %v764, 124
      %v1810 = vpop.permute.xlu0 %1809
      %1811 = vrot.lane.b32.xlu0 %v765, 124
      %v1812 = vpop.permute.xlu0 %1811
      %1813 = vrot.lane.b32.xlu0 %v766, 124
      %v1814 = vpop.permute.xlu0 %1813
      %1815 = vrot.lane.b32.xlu0 %v767, 124
      %v1816 = vpop.permute.xlu0 %1815
      %1817 = vrot.lane.b32.xlu0 %v768, 124
      %v1818 = vpop.permute.xlu0 %1817
      %1819 = vrot.lane.b32.xlu0 %v769, 124
      %v1820 = vpop.permute.xlu0 %1819
      %1821 = vrot.lane.b32.xlu0 %v770, 124
      %v1822 = vpop.permute.xlu0 %1821
      %1823 = vrot.lane.b32.xlu0 %v771, 124
      %v1824 = vpop.permute.xlu0 %1823
      %vm1867 = vcmask 126048
      %1868 = vst.msk [vmem:[#allocation2] sm:$0xf] %vm1867, %v1742
      %1869 = vst.msk [vmem:[#allocation2 + $0x4] sm:$0xf] %vm1867, %v1744
      %1870 = vst.msk [vmem:[#allocation2 + $0x8] sm:$0xf] %vm1867, %v1746
      %1871 = vst.msk [vmem:[#allocation2 + $0xc] sm:$0xf] %vm1867, %v1748
      %1872 = vst.msk [vmem:[#allocation2 + $0x10] sm:$0xf] %vm1867, %v1750
      %1873 = vst.msk [vmem:[#allocation2 + $0x14] sm:$0xf] %vm1867, %v1752
      %1874 = vst.msk [vmem:[#allocation2 + $0x18] sm:$0xf] %vm1867, %v1754
      %1875 = vst.msk [vmem:[#allocation2 + $0x1c] sm:$0xf] %vm1867, %v1756
      %1876 = vst.msk [vmem:[#allocation2 + $0x20] sm:$0xf] %vm1867, %v1758
      %1877 = vst.msk [vmem:[#allocation2 + $0x24] sm:$0xf] %vm1867, %v1760
      %1878 = vst.msk [vmem:[#allocation2 + $0x28] sm:$0xf] %vm1867, %v1762
      %1879 = vst.msk [vmem:[#allocation2 + $0x2c] sm:$0xf] %vm1867, %v1764
      %1880 = vst.msk [vmem:[#allocation2 + $0x30] sm:$0xf] %vm1867, %v1766
      %1881 = vst.msk [vmem:[#allocation2 + $0x34] sm:$0xf] %vm1867, %v1768
      %1882 = vst.msk [vmem:[#allocation2 + $0x38] sm:$0xf] %vm1867, %v1770
      %1883 = vst.msk [vmem:[#allocation2 + $0x3c] sm:$0xf] %vm1867, %v1772
      %1884 = vst.msk [vmem:[#allocation2 + $0x40] sm:$0xf] %vm1867, %v1774
      %1885 = vst.msk [vmem:[#allocation2 + $0x44] sm:$0xf] %vm1867, %v1776
      %1886 = vst.msk [vmem:[#allocation2 + $0x48] sm:$0xf] %vm1867, %v1778
      %1887 = vst.msk [vmem:[#allocation2 + $0x4c] sm:$0xf] %vm1867, %v1780
      %1888 = vst.msk [vmem:[#allocation2 + $0x50] sm:$0xf] %vm1867, %v1782
      %1889 = vst.msk [vmem:[#allocation2 + $0x54] sm:$0xf] %vm1867, %v1784
      %1890 = vst.msk [vmem:[#allocation2 + $0x58] sm:$0xf] %vm1867, %v1786
      %1891 = vst.msk [vmem:[#allocation2 + $0x5c] sm:$0xf] %vm1867, %v1788
      %1892 = vst.msk [vmem:[#allocation2 + $0x60] sm:$0xf] %vm1867, %v1790
      %1893 = vst.msk [vmem:[#allocation2 + $0x64] sm:$0xf] %vm1867, %v1792
      %1894 = vst.msk [vmem:[#allocation2 + $0x68] sm:$0xf] %vm1867, %v1794
      %1895 = vst.msk [vmem:[#allocation2 + $0x6c] sm:$0xf] %vm1867, %v1796
      %1896 = vst.msk [vmem:[#allocation2 + $0x70] sm:$0xf] %vm1867, %v1798
      %1897 = vst.msk [vmem:[#allocation2 + $0x74] sm:$0xf] %vm1867, %v1800
      %1898 = vst.msk [vmem:[#allocation2 + $0x78] sm:$0xf] %vm1867, %v1802
      %1899 = vst.msk [vmem:[#allocation2 + $0x7c] sm:$0xf] %vm1867, %v1804
      %1900 = vst.msk [vmem:[#allocation2 + $0x80] sm:$0xf] %vm1867, %v1806
      %1901 = vst.msk [vmem:[#allocation2 + $0x84] sm:$0xf] %vm1867, %v1808
      %1902 = vst.msk [vmem:[#allocation2 + $0x88] sm:$0xf] %vm1867, %v1810
      %1903 = vst.msk [vmem:[#allocation2 + $0x8c] sm:$0xf] %vm1867, %v1812
      %1904 = vst.msk [vmem:[#allocation2 + $0x90] sm:$0xf] %vm1867, %v1814
      %1905 = vst.msk [vmem:[#allocation2 + $0x94] sm:$0xf] %vm1867, %v1816
      %1906 = vst.msk [vmem:[#allocation2 + $0x98] sm:$0xf] %vm1867, %v1818
      %1907 = vst.msk [vmem:[#allocation2 + $0x9c] sm:$0xf] %vm1867, %v1820
      %1908 = vst.msk [vmem:[#allocation2 + $0xa0] sm:$0xf] %vm1867, %v1822
      %1909 = vst.msk [vmem:[#allocation2 + $0xa4] sm:$0xf] %vm1867, %v1824
      %v1910 = vlaneseq
      %v1911 = vshrl.u32 %v1910, 7
      %v1912 = vadd.s32 %v1911, 8
      %v1913 = vadd.s32 %v1911, 16
      %v1914 = vadd.s32 %v1911, 24
      %v1915 = vadd.s32 %v1911, 32
      %v1916 = vadd.s32 %v1911, 40
      %v1917 = vadd.s32 %v1911, 48
      %v1918 = vadd.s32 %v1911, 56
      %v1919 = vadd.s32 %v1911, 64
      %v1920 = vadd.s32 %v1911, 72
      %v1921 = vadd.s32 %v1911, 80
      %v1922 = vadd.s32 %v1911, 88
      %v1923 = vadd.s32 %v1911, 96
      %v1924 = vadd.s32 %v1911, 104
      %v1925 = vadd.s32 %v1911, 112
      %v1926 = vadd.s32 %v1911, 120
      %v1927 = vadd.s32 %v1911, 128
      %v1928 = vadd.s32 %v1911, 136
      %v1929 = vadd.s32 %v1911, 144
      %v1930 = vadd.s32 %v1911, 152
      %v1931 = vadd.s32 %v1911, 160
      %v1932 = vadd.s32 %v1911, 168
      %v1933 = vadd.s32 %v1911, 176
      %v1934 = vadd.s32 %v1911, 184
      %v1935 = vadd.s32 %v1911, 192
      %v1936 = vadd.s32 %v1911, 200
      %v1937 = vadd.s32 %v1911, 208
      %v1938 = vadd.s32 %v1911, 216
      %v1939 = vadd.s32 %v1911, 224
      %v1940 = vadd.s32 %v1911, 232
      %v1941 = vadd.s32 %v1911, 240
      %v1942 = vadd.s32 %v1911, 248
      %v1943 = vadd.s32 %v1911, 256
      %v1944 = vadd.s32 %v1911, 264
      %v1945 = vadd.s32 %v1911, 272
      %v1946 = vadd.s32 %v1911, 280
      %vm1947 = vcmp.lt.s32.totalorder %v1911, 0
      %v1948 = vsub.s32 0, %v1911
      %v1949 = vsel %vm1947, %v1948, %v1911
      %v1950 = vand.u32 %v1949, 65535
      %v1951 = vshrl.u32 %v1949, 16
      %v1953 = vmul.u32 %v1950, 14564
      %v1954 = vmul.u32 %v1950, 58254
      %v1955 = vmul.u32 %v1951, 14564
      %v1956 = vmul.u32 %v1951, 58254
      %v1957 = vshll.u32 %v1954, 16
      %v1958 = vshrl.u32 %v1954, 16
      %v1959 = vshll.u32 %v1955, 16
      %v1960 = vshrl.u32 %v1955, 16
      %vm1961 = vc.u32 %v1953, %v1957
      %v1962 = vsel %vm1961, 1, 0
      %v1963 = vadd.s32 %v1953, %v1957
      %v1964 = vadd.s32 %v1956, %v1962
      %vm1965 = vc.u32 %v1963, %v1959
      %v1966 = vsel %vm1965, 1, 0
      %v1967 = vadd.s32 %v1963, %v1959
      %v1968 = vadd.s32 %v1964, %v1966
      %v1969 = vadd.s32 %v1968, %v1958
      %v1970 = vadd.s32 %v1969, %v1960
      %v1971 = vshrl.u32 %v1970, 4
      %v1972 = vmul.u32 %v1971, 18
      %v1973 = vsub.s32 %v1949, %v1972
      %v1974 = vsub.s32 0, %v1973
      %v1975 = vsel %vm1947, %v1974, %v1973
      %vm1976 = vcmp.lt.s32.totalorder %v1912, 0
      %v1977 = vsub.s32 0, %v1912
      %v1978 = vsel %vm1976, %v1977, %v1912
      %v1979 = vand.u32 %v1978, 65535
      %v1980 = vshrl.u32 %v1978, 16
      %v1982 = vmul.u32 %v1979, 14564
      %v1983 = vmul.u32 %v1979, 58254
      %v1984 = vmul.u32 %v1980, 14564
      %v1985 = vmul.u32 %v1980, 58254
      %v1986 = vshll.u32 %v1983, 16
      %v1987 = vshrl.u32 %v1983, 16
      %v1988 = vshll.u32 %v1984, 16
      %v1989 = vshrl.u32 %v1984, 16
      %vm1990 = vc.u32 %v1982, %v1986
      %v1991 = vsel %vm1990, 1, 0
      %v1992 = vadd.s32 %v1982, %v1986
      %v1993 = vadd.s32 %v1985, %v1991
      %vm1994 = vc.u32 %v1992, %v1988
      %v1995 = vsel %vm1994, 1, 0
      %v1996 = vadd.s32 %v1992, %v1988
      %v1997 = vadd.s32 %v1993, %v1995
      %v1998 = vadd.s32 %v1997, %v1987
      %v1999 = vadd.s32 %v1998, %v1989
      %v2000 = vshrl.u32 %v1999, 4
      %v2001 = vmul.u32 %v2000, 18
      %v2002 = vsub.s32 %v1978, %v2001
      %v2003 = vsub.s32 0, %v2002
      %v2004 = vsel %vm1976, %v2003, %v2002
      %vm2005 = vcmp.lt.s32.totalorder %v1913, 0
      %v2006 = vsub.s32 0, %v1913
      %v2007 = vsel %vm2005, %v2006, %v1913
      %v2008 = vand.u32 %v2007, 65535
      %v2009 = vshrl.u32 %v2007, 16
      %v2011 = vmul.u32 %v2008, 14564
      %v2012 = vmul.u32 %v2008, 58254
      %v2013 = vmul.u32 %v2009, 14564
      %v2014 = vmul.u32 %v2009, 58254
      %v2015 = vshll.u32 %v2012, 16
      %v2016 = vshrl.u32 %v2012, 16
      %v2017 = vshll.u32 %v2013, 16
      %v2018 = vshrl.u32 %v2013, 16
      %vm2019 = vc.u32 %v2011, %v2015
      %v2020 = vsel %vm2019, 1, 0
      %v2021 = vadd.s32 %v2011, %v2015
      %v2022 = vadd.s32 %v2014, %v2020
      %vm2023 = vc.u32 %v2021, %v2017
      %v2024 = vsel %vm2023, 1, 0
      %v2025 = vadd.s32 %v2021, %v2017
      %v2026 = vadd.s32 %v2022, %v2024
      %v2027 = vadd.s32 %v2026, %v2016
      %v2028 = vadd.s32 %v2027, %v2018
      %v2029 = vshrl.u32 %v2028, 4
      %v2030 = vmul.u32 %v2029, 18
      %v2031 = vsub.s32 %v2007, %v2030
      %v2032 = vsub.s32 0, %v2031
      %v2033 = vsel %vm2005, %v2032, %v2031
      %vm2034 = vcmp.lt.s32.totalorder %v1914, 0
      %v2035 = vsub.s32 0, %v1914
      %v2036 = vsel %vm2034, %v2035, %v1914
      %v2037 = vand.u32 %v2036, 65535
      %v2038 = vshrl.u32 %v2036, 16
      %v2040 = vmul.u32 %v2037, 14564
      %v2041 = vmul.u32 %v2037, 58254
      %v2042 = vmul.u32 %v2038, 14564
      %v2043 = vmul.u32 %v2038, 58254
      %v2044 = vshll.u32 %v2041, 16
      %v2045 = vshrl.u32 %v2041, 16
      %v2046 = vshll.u32 %v2042, 16
      %v2047 = vshrl.u32 %v2042, 16
      %vm2048 = vc.u32 %v2040, %v2044
      %v2049 = vsel %vm2048, 1, 0
      %v2050 = vadd.s32 %v2040, %v2044
      %v2051 = vadd.s32 %v2043, %v2049
      %vm2052 = vc.u32 %v2050, %v2046
      %v2053 = vsel %vm2052, 1, 0
      %v2054 = vadd.s32 %v2050, %v2046
      %v2055 = vadd.s32 %v2051, %v2053
      %v2056 = vadd.s32 %v2055, %v2045
      %v2057 = vadd.s32 %v2056, %v2047
      %v2058 = vshrl.u32 %v2057, 4
      %v2059 = vmul.u32 %v2058, 18
      %v2060 = vsub.s32 %v2036, %v2059
      %v2061 = vsub.s32 0, %v2060
      %v2062 = vsel %vm2034, %v2061, %v2060
      %vm2063 = vcmp.lt.s32.totalorder %v1915, 0
      %v2064 = vsub.s32 0, %v1915
      %v2065 = vsel %vm2063, %v2064, %v1915
      %v2066 = vand.u32 %v2065, 65535
      %v2067 = vshrl.u32 %v2065, 16
      %v2069 = vmul.u32 %v2066, 14564
      %v2070 = vmul.u32 %v2066, 58254
      %v2071 = vmul.u32 %v2067, 14564
      %v2072 = vmul.u32 %v2067, 58254
      %v2073 = vshll.u32 %v2070, 16
      %v2074 = vshrl.u32 %v2070, 16
      %v2075 = vshll.u32 %v2071, 16
      %v2076 = vshrl.u32 %v2071, 16
      %vm2077 = vc.u32 %v2069, %v2073
      %v2078 = vsel %vm2077, 1, 0
      %v2079 = vadd.s32 %v2069, %v2073
      %v2080 = vadd.s32 %v2072, %v2078
      %vm2081 = vc.u32 %v2079, %v2075
      %v2082 = vsel %vm2081, 1, 0
      %v2083 = vadd.s32 %v2079, %v2075
      %v2084 = vadd.s32 %v2080, %v2082
      %v2085 = vadd.s32 %v2084, %v2074
      %v2086 = vadd.s32 %v2085, %v2076
      %v2087 = vshrl.u32 %v2086, 4
      %v2088 = vmul.u32 %v2087, 18
      %v2089 = vsub.s32 %v2065, %v2088
      %v2090 = vsub.s32 0, %v2089
      %v2091 = vsel %vm2063, %v2090, %v2089
      %vm2092 = vcmp.lt.s32.totalorder %v1916, 0
      %v2093 = vsub.s32 0, %v1916
      %v2094 = vsel %vm2092, %v2093, %v1916
      %v2095 = vand.u32 %v2094, 65535
      %v2096 = vshrl.u32 %v2094, 16
      %v2098 = vmul.u32 %v2095, 14564
      %v2099 = vmul.u32 %v2095, 58254
      %v2100 = vmul.u32 %v2096, 14564
      %v2101 = vmul.u32 %v2096, 58254
      %v2102 = vshll.u32 %v2099, 16
      %v2103 = vshrl.u32 %v2099, 16
      %v2104 = vshll.u32 %v2100, 16
      %v2105 = vshrl.u32 %v2100, 16
      %vm2106 = vc.u32 %v2098, %v2102
      %v2107 = vsel %vm2106, 1, 0
      %v2108 = vadd.s32 %v2098, %v2102
      %v2109 = vadd.s32 %v2101, %v2107
      %vm2110 = vc.u32 %v2108, %v2104
      %v2111 = vsel %vm2110, 1, 0
      %v2112 = vadd.s32 %v2108, %v2104
      %v2113 = vadd.s32 %v2109, %v2111
      %v2114 = vadd.s32 %v2113, %v2103
      %v2115 = vadd.s32 %v2114, %v2105
      %v2116 = vshrl.u32 %v2115, 4
      %v2117 = vmul.u32 %v2116, 18
      %v2118 = vsub.s32 %v2094, %v2117
      %v2119 = vsub.s32 0, %v2118
      %v2120 = vsel %vm2092, %v2119, %v2118
      %vm2121 = vcmp.lt.s32.totalorder %v1917, 0
      %v2122 = vsub.s32 0, %v1917
      %v2123 = vsel %vm2121, %v2122, %v1917
      %v2124 = vand.u32 %v2123, 65535
      %v2125 = vshrl.u32 %v2123, 16
      %v2127 = vmul.u32 %v2124, 14564
      %v2128 = vmul.u32 %v2124, 58254
      %v2129 = vmul.u32 %v2125, 14564
      %v2130 = vmul.u32 %v2125, 58254
      %v2131 = vshll.u32 %v2128, 16
      %v2132 = vshrl.u32 %v2128, 16
      %v2133 = vshll.u32 %v2129, 16
      %v2134 = vshrl.u32 %v2129, 16
      %vm2135 = vc.u32 %v2127, %v2131
      %v2136 = vsel %vm2135, 1, 0
      %v2137 = vadd.s32 %v2127, %v2131
      %v2138 = vadd.s32 %v2130, %v2136
      %vm2139 = vc.u32 %v2137, %v2133
      %v2140 = vsel %vm2139, 1, 0
      %v2141 = vadd.s32 %v2137, %v2133
      %v2142 = vadd.s32 %v2138, %v2140
      %v2143 = vadd.s32 %v2142, %v2132
      %v2144 = vadd.s32 %v2143, %v2134
      %v2145 = vshrl.u32 %v2144, 4
      %v2146 = vmul.u32 %v2145, 18
      %v2147 = vsub.s32 %v2123, %v2146
      %v2148 = vsub.s32 0, %v2147
      %v2149 = vsel %vm2121, %v2148, %v2147
      %vm2150 = vcmp.lt.s32.totalorder %v1918, 0
      %v2151 = vsub.s32 0, %v1918
      %v2152 = vsel %vm2150, %v2151, %v1918
      %v2153 = vand.u32 %v2152, 65535
      %v2154 = vshrl.u32 %v2152, 16
      %v2156 = vmul.u32 %v2153, 14564
      %v2157 = vmul.u32 %v2153, 58254
      %v2158 = vmul.u32 %v2154, 14564
      %v2159 = vmul.u32 %v2154, 58254
      %v2160 = vshll.u32 %v2157, 16
      %v2161 = vshrl.u32 %v2157, 16
      %v2162 = vshll.u32 %v2158, 16
      %v2163 = vshrl.u32 %v2158, 16
      %vm2164 = vc.u32 %v2156, %v2160
      %v2165 = vsel %vm2164, 1, 0
      %v2166 = vadd.s32 %v2156, %v2160
      %v2167 = vadd.s32 %v2159, %v2165
      %vm2168 = vc.u32 %v2166, %v2162
      %v2169 = vsel %vm2168, 1, 0
      %v2170 = vadd.s32 %v2166, %v2162
      %v2171 = vadd.s32 %v2167, %v2169
      %v2172 = vadd.s32 %v2171, %v2161
      %v2173 = vadd.s32 %v2172, %v2163
      %v2174 = vshrl.u32 %v2173, 4
      %v2175 = vmul.u32 %v2174, 18
      %v2176 = vsub.s32 %v2152, %v2175
      %v2177 = vsub.s32 0, %v2176
      %v2178 = vsel %vm2150, %v2177, %v2176
      %vm2179 = vcmp.lt.s32.totalorder %v1919, 0
      %v2180 = vsub.s32 0, %v1919
      %v2181 = vsel %vm2179, %v2180, %v1919
      %v2182 = vand.u32 %v2181, 65535
      %v2183 = vshrl.u32 %v2181, 16
      %v2185 = vmul.u32 %v2182, 14564
      %v2186 = vmul.u32 %v2182, 58254
      %v2187 = vmul.u32 %v2183, 14564
      %v2188 = vmul.u32 %v2183, 58254
      %v2189 = vshll.u32 %v2186, 16
      %v2190 = vshrl.u32 %v2186, 16
      %v2191 = vshll.u32 %v2187, 16
      %v2192 = vshrl.u32 %v2187, 16
      %vm2193 = vc.u32 %v2185, %v2189
      %v2194 = vsel %vm2193, 1, 0
      %v2195 = vadd.s32 %v2185, %v2189
      %v2196 = vadd.s32 %v2188, %v2194
      %vm2197 = vc.u32 %v2195, %v2191
      %v2198 = vsel %vm2197, 1, 0
      %v2199 = vadd.s32 %v2195, %v2191
      %v2200 = vadd.s32 %v2196, %v2198
      %v2201 = vadd.s32 %v2200, %v2190
      %v2202 = vadd.s32 %v2201, %v2192
      %v2203 = vshrl.u32 %v2202, 4
      %v2204 = vmul.u32 %v2203, 18
      %v2205 = vsub.s32 %v2181, %v2204
      %v2206 = vsub.s32 0, %v2205
      %v2207 = vsel %vm2179, %v2206, %v2205
      %vm2208 = vcmp.lt.s32.totalorder %v1920, 0
      %v2209 = vsub.s32 0, %v1920
      %v2210 = vsel %vm2208, %v2209, %v1920
      %v2211 = vand.u32 %v2210, 65535
      %v2212 = vshrl.u32 %v2210, 16
      %v2214 = vmul.u32 %v2211, 14564
      %v2215 = vmul.u32 %v2211, 58254
      %v2216 = vmul.u32 %v2212, 14564
      %v2217 = vmul.u32 %v2212, 58254
      %v2218 = vshll.u32 %v2215, 16
      %v2219 = vshrl.u32 %v2215, 16
      %v2220 = vshll.u32 %v2216, 16
      %v2221 = vshrl.u32 %v2216, 16
      %vm2222 = vc.u32 %v2214, %v2218
      %v2223 = vsel %vm2222, 1, 0
      %v2224 = vadd.s32 %v2214, %v2218
      %v2225 = vadd.s32 %v2217, %v2223
      %vm2226 = vc.u32 %v2224, %v2220
      %v2227 = vsel %vm2226, 1, 0
      %v2228 = vadd.s32 %v2224, %v2220
      %v2229 = vadd.s32 %v2225, %v2227
      %v2230 = vadd.s32 %v2229, %v2219
      %v2231 = vadd.s32 %v2230, %v2221
      %v2232 = vshrl.u32 %v2231, 4
      %v2233 = vmul.u32 %v2232, 18
      %v2234 = vsub.s32 %v2210, %v2233
      %v2235 = vsub.s32 0, %v2234
      %v2236 = vsel %vm2208, %v2235, %v2234
      %vm2237 = vcmp.lt.s32.totalorder %v1921, 0
      %v2238 = vsub.s32 0, %v1921
      %v2239 = vsel %vm2237, %v2238, %v1921
      %v2240 = vand.u32 %v2239, 65535
      %v2241 = vshrl.u32 %v2239, 16
      %v2243 = vmul.u32 %v2240, 14564
      %v2244 = vmul.u32 %v2240, 58254
      %v2245 = vmul.u32 %v2241, 14564
      %v2246 = vmul.u32 %v2241, 58254
      %v2247 = vshll.u32 %v2244, 16
      %v2248 = vshrl.u32 %v2244, 16
      %v2249 = vshll.u32 %v2245, 16
      %v2250 = vshrl.u32 %v2245, 16
      %vm2251 = vc.u32 %v2243, %v2247
      %v2252 = vsel %vm2251, 1, 0
      %v2253 = vadd.s32 %v2243, %v2247
      %v2254 = vadd.s32 %v2246, %v2252
      %vm2255 = vc.u32 %v2253, %v2249
      %v2256 = vsel %vm2255, 1, 0
      %v2257 = vadd.s32 %v2253, %v2249
      %v2258 = vadd.s32 %v2254, %v2256
      %v2259 = vadd.s32 %v2258, %v2248
      %v2260 = vadd.s32 %v2259, %v2250
      %v2261 = vshrl.u32 %v2260, 4
      %v2262 = vmul.u32 %v2261, 18
      %v2263 = vsub.s32 %v2239, %v2262
      %v2264 = vsub.s32 0, %v2263
      %v2265 = vsel %vm2237, %v2264, %v2263
      %vm2266 = vcmp.lt.s32.totalorder %v1922, 0
      %v2267 = vsub.s32 0, %v1922
      %v2268 = vsel %vm2266, %v2267, %v1922
      %v2269 = vand.u32 %v2268, 65535
      %v2270 = vshrl.u32 %v2268, 16
      %v2272 = vmul.u32 %v2269, 14564
      %v2273 = vmul.u32 %v2269, 58254
      %v2274 = vmul.u32 %v2270, 14564
      %v2275 = vmul.u32 %v2270, 58254
      %v2276 = vshll.u32 %v2273, 16
      %v2277 = vshrl.u32 %v2273, 16
      %v2278 = vshll.u32 %v2274, 16
      %v2279 = vshrl.u32 %v2274, 16
      %vm2280 = vc.u32 %v2272, %v2276
      %v2281 = vsel %vm2280, 1, 0
      %v2282 = vadd.s32 %v2272, %v2276
      %v2283 = vadd.s32 %v2275, %v2281
      %vm2284 = vc.u32 %v2282, %v2278
      %v2285 = vsel %vm2284, 1, 0
      %v2286 = vadd.s32 %v2282, %v2278
      %v2287 = vadd.s32 %v2283, %v2285
      %v2288 = vadd.s32 %v2287, %v2277
      %v2289 = vadd.s32 %v2288, %v2279
      %v2290 = vshrl.u32 %v2289, 4
      %v2291 = vmul.u32 %v2290, 18
      %v2292 = vsub.s32 %v2268, %v2291
      %v2293 = vsub.s32 0, %v2292
      %v2294 = vsel %vm2266, %v2293, %v2292
      %vm2295 = vcmp.lt.s32.totalorder %v1923, 0
      %v2296 = vsub.s32 0, %v1923
      %v2297 = vsel %vm2295, %v2296, %v1923
      %v2298 = vand.u32 %v2297, 65535
      %v2299 = vshrl.u32 %v2297, 16
      %v2301 = vmul.u32 %v2298, 14564
      %v2302 = vmul.u32 %v2298, 58254
      %v2303 = vmul.u32 %v2299, 14564
      %v2304 = vmul.u32 %v2299, 58254
      %v2305 = vshll.u32 %v2302, 16
      %v2306 = vshrl.u32 %v2302, 16
      %v2307 = vshll.u32 %v2303, 16
      %v2308 = vshrl.u32 %v2303, 16
      %vm2309 = vc.u32 %v2301, %v2305
      %v2310 = vsel %vm2309, 1, 0
      %v2311 = vadd.s32 %v2301, %v2305
      %v2312 = vadd.s32 %v2304, %v2310
      %vm2313 = vc.u32 %v2311, %v2307
      %v2314 = vsel %vm2313, 1, 0
      %v2315 = vadd.s32 %v2311, %v2307
      %v2316 = vadd.s32 %v2312, %v2314
      %v2317 = vadd.s32 %v2316, %v2306
      %v2318 = vadd.s32 %v2317, %v2308
      %v2319 = vshrl.u32 %v2318, 4
      %v2320 = vmul.u32 %v2319, 18
      %v2321 = vsub.s32 %v2297, %v2320
      %v2322 = vsub.s32 0, %v2321
      %v2323 = vsel %vm2295, %v2322, %v2321
      %vm2324 = vcmp.lt.s32.totalorder %v1924, 0
      %v2325 = vsub.s32 0, %v1924
      %v2326 = vsel %vm2324, %v2325, %v1924
      %v2327 = vand.u32 %v2326, 65535
      %v2328 = vshrl.u32 %v2326, 16
      %v2330 = vmul.u32 %v2327, 14564
      %v2331 = vmul.u32 %v2327, 58254
      %v2332 = vmul.u32 %v2328, 14564
      %v2333 = vmul.u32 %v2328, 58254
      %v2334 = vshll.u32 %v2331, 16
      %v2335 = vshrl.u32 %v2331, 16
      %v2336 = vshll.u32 %v2332, 16
      %v2337 = vshrl.u32 %v2332, 16
      %vm2338 = vc.u32 %v2330, %v2334
      %v2339 = vsel %vm2338, 1, 0
      %v2340 = vadd.s32 %v2330, %v2334
      %v2341 = vadd.s32 %v2333, %v2339
      %vm2342 = vc.u32 %v2340, %v2336
      %v2343 = vsel %vm2342, 1, 0
      %v2344 = vadd.s32 %v2340, %v2336
      %v2345 = vadd.s32 %v2341, %v2343
      %v2346 = vadd.s32 %v2345, %v2335
      %v2347 = vadd.s32 %v2346, %v2337
      %v2348 = vshrl.u32 %v2347, 4
      %v2349 = vmul.u32 %v2348, 18
      %v2350 = vsub.s32 %v2326, %v2349
      %v2351 = vsub.s32 0, %v2350
      %v2352 = vsel %vm2324, %v2351, %v2350
      %vm2353 = vcmp.lt.s32.totalorder %v1925, 0
      %v2354 = vsub.s32 0, %v1925
      %v2355 = vsel %vm2353, %v2354, %v1925
      %v2356 = vand.u32 %v2355, 65535
      %v2357 = vshrl.u32 %v2355, 16
      %v2359 = vmul.u32 %v2356, 14564
      %v2360 = vmul.u32 %v2356, 58254
      %v2361 = vmul.u32 %v2357, 14564
      %v2362 = vmul.u32 %v2357, 58254
      %v2363 = vshll.u32 %v2360, 16
      %v2364 = vshrl.u32 %v2360, 16
      %v2365 = vshll.u32 %v2361, 16
      %v2366 = vshrl.u32 %v2361, 16
      %vm2367 = vc.u32 %v2359, %v2363
      %v2368 = vsel %vm2367, 1, 0
      %v2369 = vadd.s32 %v2359, %v2363
      %v2370 = vadd.s32 %v2362, %v2368
      %vm2371 = vc.u32 %v2369, %v2365
      %v2372 = vsel %vm2371, 1, 0
      %v2373 = vadd.s32 %v2369, %v2365
      %v2374 = vadd.s32 %v2370, %v2372
      %v2375 = vadd.s32 %v2374, %v2364
      %v2376 = vadd.s32 %v2375, %v2366
      %v2377 = vshrl.u32 %v2376, 4
      %v2378 = vmul.u32 %v2377, 18
      %v2379 = vsub.s32 %v2355, %v2378
      %v2380 = vsub.s32 0, %v2379
      %v2381 = vsel %vm2353, %v2380, %v2379
      %vm2382 = vcmp.lt.s32.totalorder %v1926, 0
      %v2383 = vsub.s32 0, %v1926
      %v2384 = vsel %vm2382, %v2383, %v1926
      %v2385 = vand.u32 %v2384, 65535
      %v2386 = vshrl.u32 %v2384, 16
      %v2388 = vmul.u32 %v2385, 14564
      %v2389 = vmul.u32 %v2385, 58254
      %v2390 = vmul.u32 %v2386, 14564
      %v2391 = vmul.u32 %v2386, 58254
      %v2392 = vshll.u32 %v2389, 16
      %v2393 = vshrl.u32 %v2389, 16
      %v2394 = vshll.u32 %v2390, 16
      %v2395 = vshrl.u32 %v2390, 16
      %vm2396 = vc.u32 %v2388, %v2392
      %v2397 = vsel %vm2396, 1, 0
      %v2398 = vadd.s32 %v2388, %v2392
      %v2399 = vadd.s32 %v2391, %v2397
      %vm2400 = vc.u32 %v2398, %v2394
      %v2401 = vsel %vm2400, 1, 0
      %v2402 = vadd.s32 %v2398, %v2394
      %v2403 = vadd.s32 %v2399, %v2401
      %v2404 = vadd.s32 %v2403, %v2393
      %v2405 = vadd.s32 %v2404, %v2395
      %v2406 = vshrl.u32 %v2405, 4
      %v2407 = vmul.u32 %v2406, 18
      %v2408 = vsub.s32 %v2384, %v2407
      %v2409 = vsub.s32 0, %v2408
      %v2410 = vsel %vm2382, %v2409, %v2408
      %vm2411 = vcmp.lt.s32.totalorder %v1927, 0
      %v2412 = vsub.s32 0, %v1927
      %v2413 = vsel %vm2411, %v2412, %v1927
      %v2414 = vand.u32 %v2413, 65535
      %v2415 = vshrl.u32 %v2413, 16
      %v2417 = vmul.u32 %v2414, 14564
      %v2418 = vmul.u32 %v2414, 58254
      %v2419 = vmul.u32 %v2415, 14564
      %v2420 = vmul.u32 %v2415, 58254
      %v2421 = vshll.u32 %v2418, 16
      %v2422 = vshrl.u32 %v2418, 16
      %v2423 = vshll.u32 %v2419, 16
      %v2424 = vshrl.u32 %v2419, 16
      %vm2425 = vc.u32 %v2417, %v2421
      %v2426 = vsel %vm2425, 1, 0
      %v2427 = vadd.s32 %v2417, %v2421
      %v2428 = vadd.s32 %v2420, %v2426
      %vm2429 = vc.u32 %v2427, %v2423
      %v2430 = vsel %vm2429, 1, 0
      %v2431 = vadd.s32 %v2427, %v2423
      %v2432 = vadd.s32 %v2428, %v2430
      %v2433 = vadd.s32 %v2432, %v2422
      %v2434 = vadd.s32 %v2433, %v2424
      %v2435 = vshrl.u32 %v2434, 4
      %v2436 = vmul.u32 %v2435, 18
      %v2437 = vsub.s32 %v2413, %v2436
      %v2438 = vsub.s32 0, %v2437
      %v2439 = vsel %vm2411, %v2438, %v2437
      %vm2440 = vcmp.lt.s32.totalorder %v1928, 0
      %v2441 = vsub.s32 0, %v1928
      %v2442 = vsel %vm2440, %v2441, %v1928
      %v2443 = vand.u32 %v2442, 65535
      %v2444 = vshrl.u32 %v2442, 16
      %v2446 = vmul.u32 %v2443, 14564
      %v2447 = vmul.u32 %v2443, 58254
      %v2448 = vmul.u32 %v2444, 14564
      %v2449 = vmul.u32 %v2444, 58254
      %v2450 = vshll.u32 %v2447, 16
      %v2451 = vshrl.u32 %v2447, 16
      %v2452 = vshll.u32 %v2448, 16
      %v2453 = vshrl.u32 %v2448, 16
      %vm2454 = vc.u32 %v2446, %v2450
      %v2455 = vsel %vm2454, 1, 0
      %v2456 = vadd.s32 %v2446, %v2450
      %v2457 = vadd.s32 %v2449, %v2455
      %vm2458 = vc.u32 %v2456, %v2452
      %v2459 = vsel %vm2458, 1, 0
      %v2460 = vadd.s32 %v2456, %v2452
      %v2461 = vadd.s32 %v2457, %v2459
      %v2462 = vadd.s32 %v2461, %v2451
      %v2463 = vadd.s32 %v2462, %v2453
      %v2464 = vshrl.u32 %v2463, 4
      %v2465 = vmul.u32 %v2464, 18
      %v2466 = vsub.s32 %v2442, %v2465
      %v2467 = vsub.s32 0, %v2466
      %v2468 = vsel %vm2440, %v2467, %v2466
      %vm2469 = vcmp.lt.s32.totalorder %v1929, 0
      %v2470 = vsub.s32 0, %v1929
      %v2471 = vsel %vm2469, %v2470, %v1929
      %v2472 = vand.u32 %v2471, 65535
      %v2473 = vshrl.u32 %v2471, 16
      %v2475 = vmul.u32 %v2472, 14564
      %v2476 = vmul.u32 %v2472, 58254
      %v2477 = vmul.u32 %v2473, 14564
      %v2478 = vmul.u32 %v2473, 58254
      %v2479 = vshll.u32 %v2476, 16
      %v2480 = vshrl.u32 %v2476, 16
      %v2481 = vshll.u32 %v2477, 16
      %v2482 = vshrl.u32 %v2477, 16
      %vm2483 = vc.u32 %v2475, %v2479
      %v2484 = vsel %vm2483, 1, 0
      %v2485 = vadd.s32 %v2475, %v2479
      %v2486 = vadd.s32 %v2478, %v2484
      %vm2487 = vc.u32 %v2485, %v2481
      %v2488 = vsel %vm2487, 1, 0
      %v2489 = vadd.s32 %v2485, %v2481
      %v2490 = vadd.s32 %v2486, %v2488
      %v2491 = vadd.s32 %v2490, %v2480
      %v2492 = vadd.s32 %v2491, %v2482
      %v2493 = vshrl.u32 %v2492, 4
      %v2494 = vmul.u32 %v2493, 18
      %v2495 = vsub.s32 %v2471, %v2494
      %v2496 = vsub.s32 0, %v2495
      %v2497 = vsel %vm2469, %v2496, %v2495
      %vm2498 = vcmp.lt.s32.totalorder %v1930, 0
      %v2499 = vsub.s32 0, %v1930
      %v2500 = vsel %vm2498, %v2499, %v1930
      %v2501 = vand.u32 %v2500, 65535
      %v2502 = vshrl.u32 %v2500, 16
      %v2504 = vmul.u32 %v2501, 14564
      %v2505 = vmul.u32 %v2501, 58254
      %v2506 = vmul.u32 %v2502, 14564
      %v2507 = vmul.u32 %v2502, 58254
      %v2508 = vshll.u32 %v2505, 16
      %v2509 = vshrl.u32 %v2505, 16
      %v2510 = vshll.u32 %v2506, 16
      %v2511 = vshrl.u32 %v2506, 16
      %vm2512 = vc.u32 %v2504, %v2508
      %v2513 = vsel %vm2512, 1, 0
      %v2514 = vadd.s32 %v2504, %v2508
      %v2515 = vadd.s32 %v2507, %v2513
      %vm2516 = vc.u32 %v2514, %v2510
      %v2517 = vsel %vm2516, 1, 0
      %v2518 = vadd.s32 %v2514, %v2510
      %v2519 = vadd.s32 %v2515, %v2517
      %v2520 = vadd.s32 %v2519, %v2509
      %v2521 = vadd.s32 %v2520, %v2511
      %v2522 = vshrl.u32 %v2521, 4
      %v2523 = vmul.u32 %v2522, 18
      %v2524 = vsub.s32 %v2500, %v2523
      %v2525 = vsub.s32 0, %v2524
      %v2526 = vsel %vm2498, %v2525, %v2524
      %vm2527 = vcmp.lt.s32.totalorder %v1931, 0
      %v2528 = vsub.s32 0, %v1931
      %v2529 = vsel %vm2527, %v2528, %v1931
      %v2530 = vand.u32 %v2529, 65535
      %v2531 = vshrl.u32 %v2529, 16
      %v2533 = vmul.u32 %v2530, 14564
      %v2534 = vmul.u32 %v2530, 58254
      %v2535 = vmul.u32 %v2531, 14564
      %v2536 = vmul.u32 %v2531, 58254
      %v2537 = vshll.u32 %v2534, 16
      %v2538 = vshrl.u32 %v2534, 16
      %v2539 = vshll.u32 %v2535, 16
      %v2540 = vshrl.u32 %v2535, 16
      %vm2541 = vc.u32 %v2533, %v2537
      %v2542 = vsel %vm2541, 1, 0
      %v2543 = vadd.s32 %v2533, %v2537
      %v2544 = vadd.s32 %v2536, %v2542
      %vm2545 = vc.u32 %v2543, %v2539
      %v2546 = vsel %vm2545, 1, 0
      %v2547 = vadd.s32 %v2543, %v2539
      %v2548 = vadd.s32 %v2544, %v2546
      %v2549 = vadd.s32 %v2548, %v2538
      %v2550 = vadd.s32 %v2549, %v2540
      %v2551 = vshrl.u32 %v2550, 4
      %v2552 = vmul.u32 %v2551, 18
      %v2553 = vsub.s32 %v2529, %v2552
      %v2554 = vsub.s32 0, %v2553
      %v2555 = vsel %vm2527, %v2554, %v2553
      %vm2556 = vcmp.lt.s32.totalorder %v1932, 0
      %v2557 = vsub.s32 0, %v1932
      %v2558 = vsel %vm2556, %v2557, %v1932
      %v2559 = vand.u32 %v2558, 65535
      %v2560 = vshrl.u32 %v2558, 16
      %v2562 = vmul.u32 %v2559, 14564
      %v2563 = vmul.u32 %v2559, 58254
      %v2564 = vmul.u32 %v2560, 14564
      %v2565 = vmul.u32 %v2560, 58254
      %v2566 = vshll.u32 %v2563, 16
      %v2567 = vshrl.u32 %v2563, 16
      %v2568 = vshll.u32 %v2564, 16
      %v2569 = vshrl.u32 %v2564, 16
      %vm2570 = vc.u32 %v2562, %v2566
      %v2571 = vsel %vm2570, 1, 0
      %v2572 = vadd.s32 %v2562, %v2566
      %v2573 = vadd.s32 %v2565, %v2571
      %vm2574 = vc.u32 %v2572, %v2568
      %v2575 = vsel %vm2574, 1, 0
      %v2576 = vadd.s32 %v2572, %v2568
      %v2577 = vadd.s32 %v2573, %v2575
      %v2578 = vadd.s32 %v2577, %v2567
      %v2579 = vadd.s32 %v2578, %v2569
      %v2580 = vshrl.u32 %v2579, 4
      %v2581 = vmul.u32 %v2580, 18
      %v2582 = vsub.s32 %v2558, %v2581
      %v2583 = vsub.s32 0, %v2582
      %v2584 = vsel %vm2556, %v2583, %v2582
      %vm2585 = vcmp.lt.s32.totalorder %v1933, 0
      %v2586 = vsub.s32 0, %v1933
      %v2587 = vsel %vm2585, %v2586, %v1933
      %v2588 = vand.u32 %v2587, 65535
      %v2589 = vshrl.u32 %v2587, 16
      %v2591 = vmul.u32 %v2588, 14564
      %v2592 = vmul.u32 %v2588, 58254
      %v2593 = vmul.u32 %v2589, 14564
      %v2594 = vmul.u32 %v2589, 58254
      %v2595 = vshll.u32 %v2592, 16
      %v2596 = vshrl.u32 %v2592, 16
      %v2597 = vshll.u32 %v2593, 16
      %v2598 = vshrl.u32 %v2593, 16
      %vm2599 = vc.u32 %v2591, %v2595
      %v2600 = vsel %vm2599, 1, 0
      %v2601 = vadd.s32 %v2591, %v2595
      %v2602 = vadd.s32 %v2594, %v2600
      %vm2603 = vc.u32 %v2601, %v2597
      %v2604 = vsel %vm2603, 1, 0
      %v2605 = vadd.s32 %v2601, %v2597
      %v2606 = vadd.s32 %v2602, %v2604
      %v2607 = vadd.s32 %v2606, %v2596
      %v2608 = vadd.s32 %v2607, %v2598
      %v2609 = vshrl.u32 %v2608, 4
      %v2610 = vmul.u32 %v2609, 18
      %v2611 = vsub.s32 %v2587, %v2610
      %v2612 = vsub.s32 0, %v2611
      %v2613 = vsel %vm2585, %v2612, %v2611
      %vm2614 = vcmp.lt.s32.totalorder %v1934, 0
      %v2615 = vsub.s32 0, %v1934
      %v2616 = vsel %vm2614, %v2615, %v1934
      %v2617 = vand.u32 %v2616, 65535
      %v2618 = vshrl.u32 %v2616, 16
      %v2620 = vmul.u32 %v2617, 14564
      %v2621 = vmul.u32 %v2617, 58254
      %v2622 = vmul.u32 %v2618, 14564
      %v2623 = vmul.u32 %v2618, 58254
      %v2624 = vshll.u32 %v2621, 16
      %v2625 = vshrl.u32 %v2621, 16
      %v2626 = vshll.u32 %v2622, 16
      %v2627 = vshrl.u32 %v2622, 16
      %vm2628 = vc.u32 %v2620, %v2624
      %v2629 = vsel %vm2628, 1, 0
      %v2630 = vadd.s32 %v2620, %v2624
      %v2631 = vadd.s32 %v2623, %v2629
      %vm2632 = vc.u32 %v2630, %v2626
      %v2633 = vsel %vm2632, 1, 0
      %v2634 = vadd.s32 %v2630, %v2626
      %v2635 = vadd.s32 %v2631, %v2633
      %v2636 = vadd.s32 %v2635, %v2625
      %v2637 = vadd.s32 %v2636, %v2627
      %v2638 = vshrl.u32 %v2637, 4
      %v2639 = vmul.u32 %v2638, 18
      %v2640 = vsub.s32 %v2616, %v2639
      %v2641 = vsub.s32 0, %v2640
      %v2642 = vsel %vm2614, %v2641, %v2640
      %vm2643 = vcmp.lt.s32.totalorder %v1935, 0
      %v2644 = vsub.s32 0, %v1935
      %v2645 = vsel %vm2643, %v2644, %v1935
      %v2646 = vand.u32 %v2645, 65535
      %v2647 = vshrl.u32 %v2645, 16
      %v2649 = vmul.u32 %v2646, 14564
      %v2650 = vmul.u32 %v2646, 58254
      %v2651 = vmul.u32 %v2647, 14564
      %v2652 = vmul.u32 %v2647, 58254
      %v2653 = vshll.u32 %v2650, 16
      %v2654 = vshrl.u32 %v2650, 16
      %v2655 = vshll.u32 %v2651, 16
      %v2656 = vshrl.u32 %v2651, 16
      %vm2657 = vc.u32 %v2649, %v2653
      %v2658 = vsel %vm2657, 1, 0
      %v2659 = vadd.s32 %v2649, %v2653
      %v2660 = vadd.s32 %v2652, %v2658
      %vm2661 = vc.u32 %v2659, %v2655
      %v2662 = vsel %vm2661, 1, 0
      %v2663 = vadd.s32 %v2659, %v2655
      %v2664 = vadd.s32 %v2660, %v2662
      %v2665 = vadd.s32 %v2664, %v2654
      %v2666 = vadd.s32 %v2665, %v2656
      %v2667 = vshrl.u32 %v2666, 4
      %v2668 = vmul.u32 %v2667, 18
      %v2669 = vsub.s32 %v2645, %v2668
      %v2670 = vsub.s32 0, %v2669
      %v2671 = vsel %vm2643, %v2670, %v2669
      %vm2672 = vcmp.lt.s32.totalorder %v1936, 0
      %v2673 = vsub.s32 0, %v1936
      %v2674 = vsel %vm2672, %v2673, %v1936
      %v2675 = vand.u32 %v2674, 65535
      %v2676 = vshrl.u32 %v2674, 16
      %v2678 = vmul.u32 %v2675, 14564
      %v2679 = vmul.u32 %v2675, 58254
      %v2680 = vmul.u32 %v2676, 14564
      %v2681 = vmul.u32 %v2676, 58254
      %v2682 = vshll.u32 %v2679, 16
      %v2683 = vshrl.u32 %v2679, 16
      %v2684 = vshll.u32 %v2680, 16
      %v2685 = vshrl.u32 %v2680, 16
      %vm2686 = vc.u32 %v2678, %v2682
      %v2687 = vsel %vm2686, 1, 0
      %v2688 = vadd.s32 %v2678, %v2682
      %v2689 = vadd.s32 %v2681, %v2687
      %vm2690 = vc.u32 %v2688, %v2684
      %v2691 = vsel %vm2690, 1, 0
      %v2692 = vadd.s32 %v2688, %v2684
      %v2693 = vadd.s32 %v2689, %v2691
      %v2694 = vadd.s32 %v2693, %v2683
      %v2695 = vadd.s32 %v2694, %v2685
      %v2696 = vshrl.u32 %v2695, 4
      %v2697 = vmul.u32 %v2696, 18
      %v2698 = vsub.s32 %v2674, %v2697
      %v2699 = vsub.s32 0, %v2698
      %v2700 = vsel %vm2672, %v2699, %v2698
      %vm2701 = vcmp.lt.s32.totalorder %v1937, 0
      %v2702 = vsub.s32 0, %v1937
      %v2703 = vsel %vm2701, %v2702, %v1937
      %v2704 = vand.u32 %v2703, 65535
      %v2705 = vshrl.u32 %v2703, 16
      %v2707 = vmul.u32 %v2704, 14564
      %v2708 = vmul.u32 %v2704, 58254
      %v2709 = vmul.u32 %v2705, 14564
      %v2710 = vmul.u32 %v2705, 58254
      %v2711 = vshll.u32 %v2708, 16
      %v2712 = vshrl.u32 %v2708, 16
      %v2713 = vshll.u32 %v2709, 16
      %v2714 = vshrl.u32 %v2709, 16
      %vm2715 = vc.u32 %v2707, %v2711
      %v2716 = vsel %vm2715, 1, 0
      %v2717 = vadd.s32 %v2707, %v2711
      %v2718 = vadd.s32 %v2710, %v2716
      %vm2719 = vc.u32 %v2717, %v2713
      %v2720 = vsel %vm2719, 1, 0
      %v2721 = vadd.s32 %v2717, %v2713
      %v2722 = vadd.s32 %v2718, %v2720
      %v2723 = vadd.s32 %v2722, %v2712
      %v2724 = vadd.s32 %v2723, %v2714
      %v2725 = vshrl.u32 %v2724, 4
      %v2726 = vmul.u32 %v2725, 18
      %v2727 = vsub.s32 %v2703, %v2726
      %v2728 = vsub.s32 0, %v2727
      %v2729 = vsel %vm2701, %v2728, %v2727
      %vm2730 = vcmp.lt.s32.totalorder %v1938, 0
      %v2731 = vsub.s32 0, %v1938
      %v2732 = vsel %vm2730, %v2731, %v1938
      %v2733 = vand.u32 %v2732, 65535
      %v2734 = vshrl.u32 %v2732, 16
      %v2736 = vmul.u32 %v2733, 14564
      %v2737 = vmul.u32 %v2733, 58254
      %v2738 = vmul.u32 %v2734, 14564
      %v2739 = vmul.u32 %v2734, 58254
      %v2740 = vshll.u32 %v2737, 16
      %v2741 = vshrl.u32 %v2737, 16
      %v2742 = vshll.u32 %v2738, 16
      %v2743 = vshrl.u32 %v2738, 16
      %vm2744 = vc.u32 %v2736, %v2740
      %v2745 = vsel %vm2744, 1, 0
      %v2746 = vadd.s32 %v2736, %v2740
      %v2747 = vadd.s32 %v2739, %v2745
      %vm2748 = vc.u32 %v2746, %v2742
      %v2749 = vsel %vm2748, 1, 0
      %v2750 = vadd.s32 %v2746, %v2742
      %v2751 = vadd.s32 %v2747, %v2749
      %v2752 = vadd.s32 %v2751, %v2741
      %v2753 = vadd.s32 %v2752, %v2743
      %v2754 = vshrl.u32 %v2753, 4
      %v2755 = vmul.u32 %v2754, 18
      %v2756 = vsub.s32 %v2732, %v2755
      %v2757 = vsub.s32 0, %v2756
      %v2758 = vsel %vm2730, %v2757, %v2756
      %vm2759 = vcmp.lt.s32.totalorder %v1939, 0
      %v2760 = vsub.s32 0, %v1939
      %v2761 = vsel %vm2759, %v2760, %v1939
      %v2762 = vand.u32 %v2761, 65535
      %v2763 = vshrl.u32 %v2761, 16
      %v2765 = vmul.u32 %v2762, 14564
      %v2766 = vmul.u32 %v2762, 58254
      %v2767 = vmul.u32 %v2763, 14564
      %v2768 = vmul.u32 %v2763, 58254
      %v2769 = vshll.u32 %v2766, 16
      %v2770 = vshrl.u32 %v2766, 16
      %v2771 = vshll.u32 %v2767, 16
      %v2772 = vshrl.u32 %v2767, 16
      %vm2773 = vc.u32 %v2765, %v2769
      %v2774 = vsel %vm2773, 1, 0
      %v2775 = vadd.s32 %v2765, %v2769
      %v2776 = vadd.s32 %v2768, %v2774
      %vm2777 = vc.u32 %v2775, %v2771
      %v2778 = vsel %vm2777, 1, 0
      %v2779 = vadd.s32 %v2775, %v2771
      %v2780 = vadd.s32 %v2776, %v2778
      %v2781 = vadd.s32 %v2780, %v2770
      %v2782 = vadd.s32 %v2781, %v2772
      %v2783 = vshrl.u32 %v2782, 4
      %v2784 = vmul.u32 %v2783, 18
      %v2785 = vsub.s32 %v2761, %v2784
      %v2786 = vsub.s32 0, %v2785
      %v2787 = vsel %vm2759, %v2786, %v2785
      %vm2788 = vcmp.lt.s32.totalorder %v1940, 0
      %v2789 = vsub.s32 0, %v1940
      %v2790 = vsel %vm2788, %v2789, %v1940
      %v2791 = vand.u32 %v2790, 65535
      %v2792 = vshrl.u32 %v2790, 16
      %v2794 = vmul.u32 %v2791, 14564
      %v2795 = vmul.u32 %v2791, 58254
      %v2796 = vmul.u32 %v2792, 14564
      %v2797 = vmul.u32 %v2792, 58254
      %v2798 = vshll.u32 %v2795, 16
      %v2799 = vshrl.u32 %v2795, 16
      %v2800 = vshll.u32 %v2796, 16
      %v2801 = vshrl.u32 %v2796, 16
      %vm2802 = vc.u32 %v2794, %v2798
      %v2803 = vsel %vm2802, 1, 0
      %v2804 = vadd.s32 %v2794, %v2798
      %v2805 = vadd.s32 %v2797, %v2803
      %vm2806 = vc.u32 %v2804, %v2800
      %v2807 = vsel %vm2806, 1, 0
      %v2808 = vadd.s32 %v2804, %v2800
      %v2809 = vadd.s32 %v2805, %v2807
      %v2810 = vadd.s32 %v2809, %v2799
      %v2811 = vadd.s32 %v2810, %v2801
      %v2812 = vshrl.u32 %v2811, 4
      %v2813 = vmul.u32 %v2812, 18
      %v2814 = vsub.s32 %v2790, %v2813
      %v2815 = vsub.s32 0, %v2814
      %v2816 = vsel %vm2788, %v2815, %v2814
      %vm2817 = vcmp.lt.s32.totalorder %v1941, 0
      %v2818 = vsub.s32 0, %v1941
      %v2819 = vsel %vm2817, %v2818, %v1941
      %v2820 = vand.u32 %v2819, 65535
      %v2821 = vshrl.u32 %v2819, 16
      %v2823 = vmul.u32 %v2820, 14564
      %v2824 = vmul.u32 %v2820, 58254
      %v2825 = vmul.u32 %v2821, 14564
      %v2826 = vmul.u32 %v2821, 58254
      %v2827 = vshll.u32 %v2824, 16
      %v2828 = vshrl.u32 %v2824, 16
      %v2829 = vshll.u32 %v2825, 16
      %v2830 = vshrl.u32 %v2825, 16
      %vm2831 = vc.u32 %v2823, %v2827
      %v2832 = vsel %vm2831, 1, 0
      %v2833 = vadd.s32 %v2823, %v2827
      %v2834 = vadd.s32 %v2826, %v2832
      %vm2835 = vc.u32 %v2833, %v2829
      %v2836 = vsel %vm2835, 1, 0
      %v2837 = vadd.s32 %v2833, %v2829
      %v2838 = vadd.s32 %v2834, %v2836
      %v2839 = vadd.s32 %v2838, %v2828
      %v2840 = vadd.s32 %v2839, %v2830
      %v2841 = vshrl.u32 %v2840, 4
      %v2842 = vmul.u32 %v2841, 18
      %v2843 = vsub.s32 %v2819, %v2842
      %v2844 = vsub.s32 0, %v2843
      %v2845 = vsel %vm2817, %v2844, %v2843
      %vm2846 = vcmp.lt.s32.totalorder %v1942, 0
      %v2847 = vsub.s32 0, %v1942
      %v2848 = vsel %vm2846, %v2847, %v1942
      %v2849 = vand.u32 %v2848, 65535
      %v2850 = vshrl.u32 %v2848, 16
      %v2852 = vmul.u32 %v2849, 14564
      %v2853 = vmul.u32 %v2849, 58254
      %v2854 = vmul.u32 %v2850, 14564
      %v2855 = vmul.u32 %v2850, 58254
      %v2856 = vshll.u32 %v2853, 16
      %v2857 = vshrl.u32 %v2853, 16
      %v2858 = vshll.u32 %v2854, 16
      %v2859 = vshrl.u32 %v2854, 16
      %vm2860 = vc.u32 %v2852, %v2856
      %v2861 = vsel %vm2860, 1, 0
      %v2862 = vadd.s32 %v2852, %v2856
      %v2863 = vadd.s32 %v2855, %v2861
      %vm2864 = vc.u32 %v2862, %v2858
      %v2865 = vsel %vm2864, 1, 0
      %v2866 = vadd.s32 %v2862, %v2858
      %v2867 = vadd.s32 %v2863, %v2865
      %v2868 = vadd.s32 %v2867, %v2857
      %v2869 = vadd.s32 %v2868, %v2859
      %v2870 = vshrl.u32 %v2869, 4
      %v2871 = vmul.u32 %v2870, 18
      %v2872 = vsub.s32 %v2848, %v2871
      %v2873 = vsub.s32 0, %v2872
      %v2874 = vsel %vm2846, %v2873, %v2872
      %vm2875 = vcmp.lt.s32.totalorder %v1943, 0
      %v2876 = vsub.s32 0, %v1943
      %v2877 = vsel %vm2875, %v2876, %v1943
      %v2878 = vand.u32 %v2877, 65535
      %v2879 = vshrl.u32 %v2877, 16
      %v2881 = vmul.u32 %v2878, 14564
      %v2882 = vmul.u32 %v2878, 58254
      %v2883 = vmul.u32 %v2879, 14564
      %v2884 = vmul.u32 %v2879, 58254
      %v2885 = vshll.u32 %v2882, 16
      %v2886 = vshrl.u32 %v2882, 16
      %v2887 = vshll.u32 %v2883, 16
      %v2888 = vshrl.u32 %v2883, 16
      %vm2889 = vc.u32 %v2881, %v2885
      %v2890 = vsel %vm2889, 1, 0
      %v2891 = vadd.s32 %v2881, %v2885
      %v2892 = vadd.s32 %v2884, %v2890
      %vm2893 = vc.u32 %v2891, %v2887
      %v2894 = vsel %vm2893, 1, 0
      %v2895 = vadd.s32 %v2891, %v2887
      %v2896 = vadd.s32 %v2892, %v2894
      %v2897 = vadd.s32 %v2896, %v2886
      %v2898 = vadd.s32 %v2897, %v2888
      %v2899 = vshrl.u32 %v2898, 4
      %v2900 = vmul.u32 %v2899, 18
      %v2901 = vsub.s32 %v2877, %v2900
      %v2902 = vsub.s32 0, %v2901
      %v2903 = vsel %vm2875, %v2902, %v2901
      %vm2904 = vcmp.lt.s32.totalorder %v1944, 0
      %v2905 = vsub.s32 0, %v1944
      %v2906 = vsel %vm2904, %v2905, %v1944
      %v2907 = vand.u32 %v2906, 65535
      %v2908 = vshrl.u32 %v2906, 16
      %v2910 = vmul.u32 %v2907, 14564
      %v2911 = vmul.u32 %v2907, 58254
      %v2912 = vmul.u32 %v2908, 14564
      %v2913 = vmul.u32 %v2908, 58254
      %v2914 = vshll.u32 %v2911, 16
      %v2915 = vshrl.u32 %v2911, 16
      %v2916 = vshll.u32 %v2912, 16
      %v2917 = vshrl.u32 %v2912, 16
      %vm2918 = vc.u32 %v2910, %v2914
      %v2919 = vsel %vm2918, 1, 0
      %v2920 = vadd.s32 %v2910, %v2914
      %v2921 = vadd.s32 %v2913, %v2919
      %vm2922 = vc.u32 %v2920, %v2916
      %v2923 = vsel %vm2922, 1, 0
      %v2924 = vadd.s32 %v2920, %v2916
      %v2925 = vadd.s32 %v2921, %v2923
      %v2926 = vadd.s32 %v2925, %v2915
      %v2927 = vadd.s32 %v2926, %v2917
      %v2928 = vshrl.u32 %v2927, 4
      %v2929 = vmul.u32 %v2928, 18
      %v2930 = vsub.s32 %v2906, %v2929
      %v2931 = vsub.s32 0, %v2930
      %v2932 = vsel %vm2904, %v2931, %v2930
      %vm2933 = vcmp.lt.s32.totalorder %v1945, 0
      %v2934 = vsub.s32 0, %v1945
      %v2935 = vsel %vm2933, %v2934, %v1945
      %v2936 = vand.u32 %v2935, 65535
      %v2937 = vshrl.u32 %v2935, 16
      %v2939 = vmul.u32 %v2936, 14564
      %v2940 = vmul.u32 %v2936, 58254
      %v2941 = vmul.u32 %v2937, 14564
      %v2942 = vmul.u32 %v2937, 58254
      %v2943 = vshll.u32 %v2940, 16
      %v2944 = vshrl.u32 %v2940, 16
      %v2945 = vshll.u32 %v2941, 16
      %v2946 = vshrl.u32 %v2941, 16
      %vm2947 = vc.u32 %v2939, %v2943
      %v2948 = vsel %vm2947, 1, 0
      %v2949 = vadd.s32 %v2939, %v2943
      %v2950 = vadd.s32 %v2942, %v2948
      %vm2951 = vc.u32 %v2949, %v2945
      %v2952 = vsel %vm2951, 1, 0
      %v2953 = vadd.s32 %v2949, %v2945
      %v2954 = vadd.s32 %v2950, %v2952
      %v2955 = vadd.s32 %v2954, %v2944
      %v2956 = vadd.s32 %v2955, %v2946
      %v2957 = vshrl.u32 %v2956, 4
      %v2958 = vmul.u32 %v2957, 18
      %v2959 = vsub.s32 %v2935, %v2958
      %v2960 = vsub.s32 0, %v2959
      %v2961 = vsel %vm2933, %v2960, %v2959
      %vm2962 = vcmp.lt.s32.totalorder %v1946, 0
      %v2963 = vsub.s32 0, %v1946
      %v2964 = vsel %vm2962, %v2963, %v1946
      %v2965 = vand.u32 %v2964, 65535
      %v2966 = vshrl.u32 %v2964, 16
      %v2968 = vmul.u32 %v2965, 14564
      %v2969 = vmul.u32 %v2965, 58254
      %v2970 = vmul.u32 %v2966, 14564
      %v2971 = vmul.u32 %v2966, 58254
      %v2972 = vshll.u32 %v2969, 16
      %v2973 = vshrl.u32 %v2969, 16
      %v2974 = vshll.u32 %v2970, 16
      %v2975 = vshrl.u32 %v2970, 16
      %vm2976 = vc.u32 %v2968, %v2972
      %v2977 = vsel %vm2976, 1, 0
      %v2978 = vadd.s32 %v2968, %v2972
      %v2979 = vadd.s32 %v2971, %v2977
      %vm2980 = vc.u32 %v2978, %v2974
      %v2981 = vsel %vm2980, 1, 0
      %v2982 = vadd.s32 %v2978, %v2974
      %v2983 = vadd.s32 %v2979, %v2981
      %v2984 = vadd.s32 %v2983, %v2973
      %v2985 = vadd.s32 %v2984, %v2975
      %v2986 = vshrl.u32 %v2985, 4
      %v2987 = vmul.u32 %v2986, 18
      %v2988 = vsub.s32 %v2964, %v2987
      %v2989 = vsub.s32 0, %v2988
      %v2990 = vsel %vm2962, %v2989, %v2988
      %vm2991 = vcmp.ne.s32.totalorder %v1975, 0
      %vm2992 = vcmp.ne.s32.totalorder %v2004, 0
      %vm2993 = vcmp.ne.s32.totalorder %v2033, 0
      %vm2994 = vcmp.ne.s32.totalorder %v2062, 0
      %vm2995 = vcmp.ne.s32.totalorder %v2091, 0
      %vm2996 = vcmp.ne.s32.totalorder %v2120, 0
      %vm2997 = vcmp.ne.s32.totalorder %v2149, 0
      %vm2998 = vcmp.ne.s32.totalorder %v2178, 0
      %vm2999 = vcmp.ne.s32.totalorder %v2207, 0
      %vm3000 = vcmp.ne.s32.totalorder %v2236, 0
      %vm3001 = vcmp.ne.s32.totalorder %v2265, 0
      %vm3002 = vcmp.ne.s32.totalorder %v2294, 0
      %vm3003 = vcmp.ne.s32.totalorder %v2323, 0
      %vm3004 = vcmp.ne.s32.totalorder %v2352, 0
      %vm3005 = vcmp.ne.s32.totalorder %v2381, 0
      %vm3006 = vcmp.ne.s32.totalorder %v2410, 0
      %vm3007 = vcmp.ne.s32.totalorder %v2439, 0
      %vm3008 = vcmp.ne.s32.totalorder %v2468, 0
      %vm3009 = vcmp.ne.s32.totalorder %v2497, 0
      %vm3010 = vcmp.ne.s32.totalorder %v2526, 0
      %vm3011 = vcmp.ne.s32.totalorder %v2555, 0
      %vm3012 = vcmp.ne.s32.totalorder %v2584, 0
      %vm3013 = vcmp.ne.s32.totalorder %v2613, 0
      %vm3014 = vcmp.ne.s32.totalorder %v2642, 0
      %vm3015 = vcmp.ne.s32.totalorder %v2671, 0
      %vm3016 = vcmp.ne.s32.totalorder %v2700, 0
      %vm3017 = vcmp.ne.s32.totalorder %v2729, 0
      %vm3018 = vcmp.ne.s32.totalorder %v2758, 0
      %vm3019 = vcmp.ne.s32.totalorder %v2787, 0
      %vm3020 = vcmp.ne.s32.totalorder %v2816, 0
      %vm3021 = vcmp.ne.s32.totalorder %v2845, 0
      %vm3022 = vcmp.ne.s32.totalorder %v2874, 0
      %vm3023 = vcmp.ne.s32.totalorder %v2903, 0
      %vm3024 = vcmp.ne.s32.totalorder %v2932, 0
      %vm3025 = vcmp.ne.s32.totalorder %v2961, 0
      %vm3026 = vcmp.ne.s32.totalorder %v2990, 0
      %vm3027 = vcmp.lt.s32.totalorder %v1975, 0
      %vm3028 = vcmp.lt.s32.totalorder %v2004, 0
      %vm3029 = vcmp.lt.s32.totalorder %v2033, 0
      %vm3030 = vcmp.lt.s32.totalorder %v2062, 0
      %vm3031 = vcmp.lt.s32.totalorder %v2091, 0
      %vm3032 = vcmp.lt.s32.totalorder %v2120, 0
      %vm3033 = vcmp.lt.s32.totalorder %v2149, 0
      %vm3034 = vcmp.lt.s32.totalorder %v2178, 0
      %vm3035 = vcmp.lt.s32.totalorder %v2207, 0
      %vm3036 = vcmp.lt.s32.totalorder %v2236, 0
      %vm3037 = vcmp.lt.s32.totalorder %v2265, 0
      %vm3038 = vcmp.lt.s32.totalorder %v2294, 0
      %vm3039 = vcmp.lt.s32.totalorder %v2323, 0
      %vm3040 = vcmp.lt.s32.totalorder %v2352, 0
      %vm3041 = vcmp.lt.s32.totalorder %v2381, 0
      %vm3042 = vcmp.lt.s32.totalorder %v2410, 0
      %vm3043 = vcmp.lt.s32.totalorder %v2439, 0
      %vm3044 = vcmp.lt.s32.totalorder %v2468, 0
      %vm3045 = vcmp.lt.s32.totalorder %v2497, 0
      %vm3046 = vcmp.lt.s32.totalorder %v2526, 0
      %vm3047 = vcmp.lt.s32.totalorder %v2555, 0
      %vm3048 = vcmp.lt.s32.totalorder %v2584, 0
      %vm3049 = vcmp.lt.s32.totalorder %v2613, 0
      %vm3050 = vcmp.lt.s32.totalorder %v2642, 0
      %vm3051 = vcmp.lt.s32.totalorder %v2671, 0
      %vm3052 = vcmp.lt.s32.totalorder %v2700, 0
      %vm3053 = vcmp.lt.s32.totalorder %v2729, 0
      %vm3054 = vcmp.lt.s32.totalorder %v2758, 0
      %vm3055 = vcmp.lt.s32.totalorder %v2787, 0
      %vm3056 = vcmp.lt.s32.totalorder %v2816, 0
      %vm3057 = vcmp.lt.s32.totalorder %v2845, 0
      %vm3058 = vcmp.lt.s32.totalorder %v2874, 0
      %vm3059 = vcmp.lt.s32.totalorder %v2903, 0
      %vm3060 = vcmp.lt.s32.totalorder %v2932, 0
      %vm3061 = vcmp.lt.s32.totalorder %v2961, 0
      %vm3062 = vcmp.lt.s32.totalorder %v2990, 0
      %vm3063 = vmand %vm3027, %vm2991
      %vm3064 = vmand %vm3028, %vm2992
      %vm3065 = vmand %vm3029, %vm2993
      %vm3066 = vmand %vm3030, %vm2994
      %vm3067 = vmand %vm3031, %vm2995
      %vm3068 = vmand %vm3032, %vm2996
      %vm3069 = vmand %vm3033, %vm2997
      %vm3070 = vmand %vm3034, %vm2998
      %vm3071 = vmand %vm3035, %vm2999
      %vm3072 = vmand %vm3036, %vm3000
      %vm3073 = vmand %vm3037, %vm3001
      %vm3074 = vmand %vm3038, %vm3002
      %vm3075 = vmand %vm3039, %vm3003
      %vm3076 = vmand %vm3040, %vm3004
      %vm3077 = vmand %vm3041, %vm3005
      %vm3078 = vmand %vm3042, %vm3006
      %vm3079 = vmand %vm3043, %vm3007
      %vm3080 = vmand %vm3044, %vm3008
      %vm3081 = vmand %vm3045, %vm3009
      %vm3082 = vmand %vm3046, %vm3010
      %vm3083 = vmand %vm3047, %vm3011
      %vm3084 = vmand %vm3048, %vm3012
      %vm3085 = vmand %vm3049, %vm3013
      %vm3086 = vmand %vm3050, %vm3014
      %vm3087 = vmand %vm3051, %vm3015
      %vm3088 = vmand %vm3052, %vm3016
      %vm3089 = vmand %vm3053, %vm3017
      %vm3090 = vmand %vm3054, %vm3018
      %vm3091 = vmand %vm3055, %vm3019
      %vm3092 = vmand %vm3056, %vm3020
      %vm3093 = vmand %vm3057, %vm3021
      %vm3094 = vmand %vm3058, %vm3022
      %vm3095 = vmand %vm3059, %vm3023
      %vm3096 = vmand %vm3060, %vm3024
      %vm3097 = vmand %vm3061, %vm3025
      %vm3098 = vmand %vm3062, %vm3026
      %v3099 = vadd.s32 %v1975, 18
      %v3100 = vadd.s32 %v2004, 18
      %v3101 = vadd.s32 %v2033, 18
      %v3102 = vadd.s32 %v2062, 18
      %v3103 = vadd.s32 %v2091, 18
      %v3104 = vadd.s32 %v2120, 18
      %v3105 = vadd.s32 %v2149, 18
      %v3106 = vadd.s32 %v2178, 18
      %v3107 = vadd.s32 %v2207, 18
      %v3108 = vadd.s32 %v2236, 18
      %v3109 = vadd.s32 %v2265, 18
      %v3110 = vadd.s32 %v2294, 18
      %v3111 = vadd.s32 %v2323, 18
      %v3112 = vadd.s32 %v2352, 18
      %v3113 = vadd.s32 %v2381, 18
      %v3114 = vadd.s32 %v2410, 18
      %v3115 = vadd.s32 %v2439, 18
      %v3116 = vadd.s32 %v2468, 18
      %v3117 = vadd.s32 %v2497, 18
      %v3118 = vadd.s32 %v2526, 18
      %v3119 = vadd.s32 %v2555, 18
      %v3120 = vadd.s32 %v2584, 18
      %v3121 = vadd.s32 %v2613, 18
      %v3122 = vadd.s32 %v2642, 18
      %v3123 = vadd.s32 %v2671, 18
      %v3124 = vadd.s32 %v2700, 18
      %v3125 = vadd.s32 %v2729, 18
      %v3126 = vadd.s32 %v2758, 18
      %v3127 = vadd.s32 %v2787, 18
      %v3128 = vadd.s32 %v2816, 18
      %v3129 = vadd.s32 %v2845, 18
      %v3130 = vadd.s32 %v2874, 18
      %v3131 = vadd.s32 %v2903, 18
      %v3132 = vadd.s32 %v2932, 18
      %v3133 = vadd.s32 %v2961, 18
      %v3134 = vadd.s32 %v2990, 18
      %v3135 = vsel %vm3063, %v3099, %v1975
      %v3136 = vsel %vm3064, %v3100, %v2004
      %v3137 = vsel %vm3065, %v3101, %v2033
      %v3138 = vsel %vm3066, %v3102, %v2062
      %v3139 = vsel %vm3067, %v3103, %v2091
      %v3140 = vsel %vm3068, %v3104, %v2120
      %v3141 = vsel %vm3069, %v3105, %v2149
      %v3142 = vsel %vm3070, %v3106, %v2178
      %v3143 = vsel %vm3071, %v3107, %v2207
      %v3144 = vsel %vm3072, %v3108, %v2236
      %v3145 = vsel %vm3073, %v3109, %v2265
      %v3146 = vsel %vm3074, %v3110, %v2294
      %v3147 = vsel %vm3075, %v3111, %v2323
      %v3148 = vsel %vm3076, %v3112, %v2352
      %v3149 = vsel %vm3077, %v3113, %v2381
      %v3150 = vsel %vm3078, %v3114, %v2410
      %v3151 = vsel %vm3079, %v3115, %v2439
      %v3152 = vsel %vm3080, %v3116, %v2468
      %v3153 = vsel %vm3081, %v3117, %v2497
      %v3154 = vsel %vm3082, %v3118, %v2526
      %v3155 = vsel %vm3083, %v3119, %v2555
      %v3156 = vsel %vm3084, %v3120, %v2584
      %v3157 = vsel %vm3085, %v3121, %v2613
      %v3158 = vsel %vm3086, %v3122, %v2642
      %v3159 = vsel %vm3087, %v3123, %v2671
      %v3160 = vsel %vm3088, %v3124, %v2700
      %v3161 = vsel %vm3089, %v3125, %v2729
      %v3162 = vsel %vm3090, %v3126, %v2758
      %v3163 = vsel %vm3091, %v3127, %v2787
      %v3164 = vsel %vm3092, %v3128, %v2816
      %v3165 = vsel %vm3093, %v3129, %v2845
      %v3166 = vsel %vm3094, %v3130, %v2874
      %v3167 = vsel %vm3095, %v3131, %v2903
      %v3168 = vsel %vm3096, %v3132, %v2932
      %v3169 = vsel %vm3097, %v3133, %v2961
      %v3170 = vsel %vm3098, %v3134, %v2990
      %vm3171 = vcmp.lt.s32.totalorder %v3135, 16
      %vm3172 = vcmp.lt.s32.totalorder %v3136, 16
      %vm3173 = vcmp.lt.s32.totalorder %v3137, 16
      %vm3174 = vcmp.lt.s32.totalorder %v3138, 16
      %vm3175 = vcmp.lt.s32.totalorder %v3139, 16
      %vm3176 = vcmp.lt.s32.totalorder %v3140, 16
      %vm3177 = vcmp.lt.s32.totalorder %v3141, 16
      %vm3178 = vcmp.lt.s32.totalorder %v3142, 16
      %vm3179 = vcmp.lt.s32.totalorder %v3143, 16
      %vm3180 = vcmp.lt.s32.totalorder %v3144, 16
      %vm3181 = vcmp.lt.s32.totalorder %v3145, 16
      %vm3182 = vcmp.lt.s32.totalorder %v3146, 16
      %vm3183 = vcmp.lt.s32.totalorder %v3147, 16
      %vm3184 = vcmp.lt.s32.totalorder %v3148, 16
      %vm3185 = vcmp.lt.s32.totalorder %v3149, 16
      %vm3186 = vcmp.lt.s32.totalorder %v3150, 16
      %vm3187 = vcmp.lt.s32.totalorder %v3151, 16
      %vm3188 = vcmp.lt.s32.totalorder %v3152, 16
      %vm3189 = vcmp.lt.s32.totalorder %v3153, 16
      %vm3190 = vcmp.lt.s32.totalorder %v3154, 16
      %vm3191 = vcmp.lt.s32.totalorder %v3155, 16
      %vm3192 = vcmp.lt.s32.totalorder %v3156, 16
      %vm3193 = vcmp.lt.s32.totalorder %v3157, 16
      %vm3194 = vcmp.lt.s32.totalorder %v3158, 16
      %vm3195 = vcmp.lt.s32.totalorder %v3159, 16
      %vm3196 = vcmp.lt.s32.totalorder %v3160, 16
      %vm3197 = vcmp.lt.s32.totalorder %v3161, 16
      %vm3198 = vcmp.lt.s32.totalorder %v3162, 16
      %vm3199 = vcmp.lt.s32.totalorder %v3163, 16
      %vm3200 = vcmp.lt.s32.totalorder %v3164, 16
      %vm3201 = vcmp.lt.s32.totalorder %v3165, 16
      %vm3202 = vcmp.lt.s32.totalorder %v3166, 16
      %vm3203 = vcmp.lt.s32.totalorder %v3167, 16
      %vm3204 = vcmp.lt.s32.totalorder %v3168, 16
      %vm3205 = vcmp.lt.s32.totalorder %v3169, 16
      %vm3206 = vcmp.lt.s32.totalorder %v3170, 16
      %v3207 = vsel %vm3171, 1, 0
      %v3208 = vsel %vm3172, 1, 0
      %v3209 = vsel %vm3173, 1, 0
      %v3210 = vsel %vm3174, 1, 0
      %v3211 = vsel %vm3175, 1, 0
      %v3212 = vsel %vm3176, 1, 0
      %v3213 = vsel %vm3177, 1, 0
      %v3214 = vsel %vm3178, 1, 0
      %v3215 = vsel %vm3179, 1, 0
      %v3216 = vsel %vm3180, 1, 0
      %v3217 = vsel %vm3181, 1, 0
      %v3218 = vsel %vm3182, 1, 0
      %v3219 = vsel %vm3183, 1, 0
      %v3220 = vsel %vm3184, 1, 0
      %v3221 = vsel %vm3185, 1, 0
      %v3222 = vsel %vm3186, 1, 0
      %v3223 = vsel %vm3187, 1, 0
      %v3224 = vsel %vm3188, 1, 0
      %v3225 = vsel %vm3189, 1, 0
      %v3226 = vsel %vm3190, 1, 0
      %v3227 = vsel %vm3191, 1, 0
      %v3228 = vsel %vm3192, 1, 0
      %v3229 = vsel %vm3193, 1, 0
      %v3230 = vsel %vm3194, 1, 0
      %v3231 = vsel %vm3195, 1, 0
      %v3232 = vsel %vm3196, 1, 0
      %v3233 = vsel %vm3197, 1, 0
      %v3234 = vsel %vm3198, 1, 0
      %v3235 = vsel %vm3199, 1, 0
      %v3236 = vsel %vm3200, 1, 0
      %v3237 = vsel %vm3201, 1, 0
      %v3238 = vsel %vm3202, 1, 0
      %v3239 = vsel %vm3203, 1, 0
      %v3240 = vsel %vm3204, 1, 0
      %v3241 = vsel %vm3205, 1, 0
      %v3242 = vsel %vm3206, 1, 0
      %v3243 = vcvt.s32.f32 %v3207
      %v3244 = vcvt.s32.f32 %v3208
      %v3245 = vcvt.s32.f32 %v3209
      %v3246 = vcvt.s32.f32 %v3210
      %v3247 = vcvt.s32.f32 %v3211
      %v3248 = vcvt.s32.f32 %v3212
      %v3249 = vcvt.s32.f32 %v3213
      %v3250 = vcvt.s32.f32 %v3214
      %v3251 = vcvt.s32.f32 %v3215
      %v3252 = vcvt.s32.f32 %v3216
      %v3253 = vcvt.s32.f32 %v3217
      %v3254 = vcvt.s32.f32 %v3218
      %v3255 = vcvt.s32.f32 %v3219
      %v3256 = vcvt.s32.f32 %v3220
      %v3257 = vcvt.s32.f32 %v3221
      %v3258 = vcvt.s32.f32 %v3222
      %v3259 = vcvt.s32.f32 %v3223
      %v3260 = vcvt.s32.f32 %v3224
      %v3261 = vcvt.s32.f32 %v3225
      %v3262 = vcvt.s32.f32 %v3226
      %v3263 = vcvt.s32.f32 %v3227
      %v3264 = vcvt.s32.f32 %v3228
      %v3265 = vcvt.s32.f32 %v3229
      %v3266 = vcvt.s32.f32 %v3230
      %v3267 = vcvt.s32.f32 %v3231
      %v3268 = vcvt.s32.f32 %v3232
      %v3269 = vcvt.s32.f32 %v3233
      %v3270 = vcvt.s32.f32 %v3234
      %v3271 = vcvt.s32.f32 %v3235
      %v3272 = vcvt.s32.f32 %v3236
      %v3273 = vcvt.s32.f32 %v3237
      %v3274 = vcvt.s32.f32 %v3238
      %v3275 = vcvt.s32.f32 %v3239
      %v3276 = vcvt.s32.f32 %v3240
      %v3277 = vcvt.s32.f32 %v3241
      %v3278 = vcvt.s32.f32 %v3242
      %v3279 = vld [vmem:[#allocation2] sm:$0xf]
      %v3280 = vld [vmem:[#allocation2 + $0x4] sm:$0xf]
      %v3281 = vld [vmem:[#allocation2 + $0x8] sm:$0xf]
      %v3282 = vld [vmem:[#allocation2 + $0xc] sm:$0xf]
      %v3283 = vld [vmem:[#allocation2 + $0x10] sm:$0xf]
      %v3284 = vld [vmem:[#allocation2 + $0x14] sm:$0xf]
      %v3285 = vld [vmem:[#allocation2 + $0x18] sm:$0xf]
      %v3286 = vld [vmem:[#allocation2 + $0x1c] sm:$0xf]
      %v3287 = vld [vmem:[#allocation2 + $0x20] sm:$0xf]
      %v3288 = vld [vmem:[#allocation2 + $0x24] sm:$0xf]
      %v3289 = vld [vmem:[#allocation2 + $0x28] sm:$0xf]
      %v3290 = vld [vmem:[#allocation2 + $0x2c] sm:$0xf]
      %v3291 = vld [vmem:[#allocation2 + $0x30] sm:$0xf]
      %v3292 = vld [vmem:[#allocation2 + $0x34] sm:$0xf]
      %v3293 = vld [vmem:[#allocation2 + $0x38] sm:$0xf]
      %v3294 = vld [vmem:[#allocation2 + $0x3c] sm:$0xf]
      %v3295 = vld [vmem:[#allocation2 + $0x40] sm:$0xf]
      %v3296 = vld [vmem:[#allocation2 + $0x44] sm:$0xf]
      %v3297 = vld [vmem:[#allocation2 + $0x48] sm:$0xf]
      %v3298 = vld [vmem:[#allocation2 + $0x4c] sm:$0xf]
      %v3299 = vld [vmem:[#allocation2 + $0x50] sm:$0xf]
      %v3300 = vld [vmem:[#allocation2 + $0x54] sm:$0xf]
      %v3301 = vld [vmem:[#allocation2 + $0x58] sm:$0xf]
      %v3302 = vld [vmem:[#allocation2 + $0x5c] sm:$0xf]
      %v3303 = vld [vmem:[#allocation2 + $0x60] sm:$0xf]
      %v3304 = vld [vmem:[#allocation2 + $0x64] sm:$0xf]
      %v3305 = vld [vmem:[#allocation2 + $0x68] sm:$0xf]
      %v3306 = vld [vmem:[#allocation2 + $0x6c] sm:$0xf]
      %v3307 = vld [vmem:[#allocation2 + $0x70] sm:$0xf]
      %v3308 = vld [vmem:[#allocation2 + $0x74] sm:$0xf]
      %v3309 = vld [vmem:[#allocation2 + $0x78] sm:$0xf]
      %v3310 = vld [vmem:[#allocation2 + $0x7c] sm:$0xf]
      %v3311 = vld [vmem:[#allocation2 + $0x80] sm:$0xf]
      %v3312 = vld [vmem:[#allocation2 + $0x84] sm:$0xf]
      %v3313 = vld [vmem:[#allocation2 + $0x88] sm:$0xf]
      %v3314 = vld [vmem:[#allocation2 + $0x8c] sm:$0xf]
      %v3315 = vld [vmem:[#allocation2 + $0x90] sm:$0xf]
      %v3316 = vld [vmem:[%s1] sm:$0xf]
      %v3317 = vld [vmem:[%s1 + $0x4] sm:$0xf]
      %v3355 = vunpack.c.l.b16 %v3279
      %v3356 = vunpack.c.l.b16 %v3280
      %v3357 = vunpack.c.l.b16 %v3281
      %v3358 = vunpack.c.l.b16 %v3282
      %v3359 = vunpack.c.l.b16 %v3283
      %v3360 = vunpack.c.l.b16 %v3284
      %v3361 = vunpack.c.l.b16 %v3285
      %v3362 = vunpack.c.l.b16 %v3286
      %v3363 = vunpack.c.l.b16 %v3287
      %v3364 = vunpack.c.l.b16 %v3288
      %v3365 = vunpack.c.l.b16 %v3289
      %v3366 = vunpack.c.l.b16 %v3290
      %v3367 = vunpack.c.l.b16 %v3291
      %v3368 = vunpack.c.l.b16 %v3292
      %v3369 = vunpack.c.l.b16 %v3293
      %v3370 = vunpack.c.l.b16 %v3294
      %v3371 = vunpack.c.l.b16 %v3295
      %v3372 = vunpack.c.l.b16 %v3296
      %v3373 = vunpack.c.l.b16 %v3297
      %v3374 = vunpack.c.l.b16 %v3298
      %v3375 = vunpack.c.l.b16 %v3299
      %v3376 = vunpack.c.l.b16 %v3300
      %v3377 = vunpack.c.l.b16 %v3301
      %v3378 = vunpack.c.l.b16 %v3302
      %v3379 = vunpack.c.l.b16 %v3303
      %v3380 = vunpack.c.l.b16 %v3304
      %v3381 = vunpack.c.l.b16 %v3305
      %v3382 = vunpack.c.l.b16 %v3306
      %v3383 = vunpack.c.l.b16 %v3307
      %v3384 = vunpack.c.l.b16 %v3308
      %v3385 = vunpack.c.l.b16 %v3309
      %v3386 = vunpack.c.l.b16 %v3310
      %v3387 = vunpack.c.l.b16 %v3311
      %v3388 = vunpack.c.l.b16 %v3312
      %v3389 = vunpack.c.l.b16 %v3313
      %v3390 = vunpack.c.l.b16 %v3314
      %v3391 = vunpack.c.l.b16 %v3315
      %v3392 = vpack.c.b16 %v3356, %v3355
      %v3393 = vpack.c.b16 %v3358, %v3357
      %v3394 = vpack.c.b16 %v3360, %v3359
      %v3395 = vpack.c.b16 %v3362, %v3361
      %v3396 = vpack.c.b16 %v3364, %v3363
      %v3397 = vpack.c.b16 %v3366, %v3365
      %v3398 = vpack.c.b16 %v3368, %v3367
      %v3399 = vpack.c.b16 %v3370, %v3369
      %v3400 = vpack.c.b16 %v3372, %v3371
      %v3401 = vpack.c.b16 %v3374, %v3373
      %v3402 = vpack.c.b16 %v3376, %v3375
      %v3403 = vpack.c.b16 %v3378, %v3377
      %v3404 = vpack.c.b16 %v3380, %v3379
      %v3405 = vpack.c.b16 %v3382, %v3381
      %v3406 = vpack.c.b16 %v3384, %v3383
      %v3407 = vpack.c.b16 %v3386, %v3385
      %v3408 = vpack.c.b16 %v3388, %v3387
      %v3409 = vpack.c.b16 %v3390, %v3389
      %v3410 = vpack.c.b16 %v3391, %v3391
      %v3413 = vunpack.c.l.b16 %v3316
      %v3414 = vunpack.c.l.b16 %v3317
      %v3415 = vpack.c.b16 %v3414, %v3413
      %vm3417 = vcmask 130048
      %v3419 = vsel %vm3417, %v3392, 0
      %v3422 = vsel %vm3417, %v3393, 0
      %v3425 = vsel %vm3417, %v3394, 0
      %v3428 = vsel %vm3417, %v3395, 0
      %v3431 = vsel %vm3417, %v3396, 0
      %v3434 = vsel %vm3417, %v3397, 0
      %v3437 = vsel %vm3417, %v3398, 0
      %v3440 = vsel %vm3417, %v3399, 0
      %v3443 = vsel %vm3417, %v3400, 0
      %v3446 = vsel %vm3417, %v3401, 0
      %v3449 = vsel %vm3417, %v3402, 0
      %v3452 = vsel %vm3417, %v3403, 0
      %v3455 = vsel %vm3417, %v3404, 0
      %v3458 = vsel %vm3417, %v3405, 0
      %v3461 = vsel %vm3417, %v3406, 0
      %v3464 = vsel %vm3417, %v3407, 0
      %v3467 = vsel %vm3417, %v3408, 0
      %v3470 = vsel %vm3417, %v3409, 0
      %v3473 = vsel %vm3417, %v3410, 0
      %3475 = vmatpush.bf16.msra.mxu0 0
      %3476 = vmatpush.bf16.msra.mxu0 0
      %3477 = vmatpush.bf16.msra.mxu0 0
      %3478 = vmatpush.bf16.msra.mxu0 0
      %3479 = vmatpush.bf16.msra.mxu0 0
      %3480 = vmatpush.bf16.msra.mxu0 0
      %3481 = vmatpush.bf16.msra.mxu0 0
      %3482 = vmatpush.bf16.msra.mxu0 %v3415
      %3483 = vmatmul.bf16.gmra.mxu0 %v3419
      %v3484 = vpop.f32.mrf.mxu0
      %v3485 = vadd.f32 0.0, %v3484
      %v3486 = vpop.f32.mrf.mxu0
      %v3487 = vadd.f32 0.0, %v3486
      %3488 = vmatmul.bf16.gmra.mxu0 %v3422
      %v3489 = vpop.f32.mrf.mxu0
      %v3490 = vadd.f32 0.0, %v3489
      %v3491 = vpop.f32.mrf.mxu0
      %v3492 = vadd.f32 0.0, %v3491
      %3493 = vmatmul.bf16.gmra.mxu0 %v3425
      %v3494 = vpop.f32.mrf.mxu0
      %v3495 = vadd.f32 0.0, %v3494
      %v3496 = vpop.f32.mrf.mxu0
      %v3497 = vadd.f32 0.0, %v3496
      %3498 = vmatmul.bf16.gmra.mxu0 %v3428
      %v3499 = vpop.f32.mrf.mxu0
      %v3500 = vadd.f32 0.0, %v3499
      %v3501 = vpop.f32.mrf.mxu0
      %v3502 = vadd.f32 0.0, %v3501
      %3503 = vmatmul.bf16.gmra.mxu0 %v3431
      %v3504 = vpop.f32.mrf.mxu0
      %v3505 = vadd.f32 0.0, %v3504
      %v3506 = vpop.f32.mrf.mxu0
      %v3507 = vadd.f32 0.0, %v3506
      %3508 = vmatmul.bf16.gmra.mxu0 %v3434
      %v3509 = vpop.f32.mrf.mxu0
      %v3510 = vadd.f32 0.0, %v3509
      %v3511 = vpop.f32.mrf.mxu0
      %v3512 = vadd.f32 0.0, %v3511
      %3513 = vmatmul.bf16.gmra.mxu0 %v3437
      %v3514 = vpop.f32.mrf.mxu0
      %v3515 = vadd.f32 0.0, %v3514
      %v3516 = vpop.f32.mrf.mxu0
      %v3517 = vadd.f32 0.0, %v3516
      %3518 = vmatmul.bf16.gmra.mxu0 %v3440
      %v3519 = vpop.f32.mrf.mxu0
      %v3520 = vadd.f32 0.0, %v3519
      %v3521 = vpop.f32.mrf.mxu0
      %v3522 = vadd.f32 0.0, %v3521
      %3523 = vmatmul.bf16.gmra.mxu0 %v3443
      %v3524 = vpop.f32.mrf.mxu0
      %v3525 = vadd.f32 0.0, %v3524
      %v3526 = vpop.f32.mrf.mxu0
      %v3527 = vadd.f32 0.0, %v3526
      %3528 = vmatmul.bf16.gmra.mxu0 %v3446
      %v3529 = vpop.f32.mrf.mxu0
      %v3530 = vadd.f32 0.0, %v3529
      %v3531 = vpop.f32.mrf.mxu0
      %v3532 = vadd.f32 0.0, %v3531
      %3533 = vmatmul.bf16.gmra.mxu0 %v3449
      %v3534 = vpop.f32.mrf.mxu0
      %v3535 = vadd.f32 0.0, %v3534
      %v3536 = vpop.f32.mrf.mxu0
      %v3537 = vadd.f32 0.0, %v3536
      %3538 = vmatmul.bf16.gmra.mxu0 %v3452
      %v3539 = vpop.f32.mrf.mxu0
      %v3540 = vadd.f32 0.0, %v3539
      %v3541 = vpop.f32.mrf.mxu0
      %v3542 = vadd.f32 0.0, %v3541
      %3543 = vmatmul.bf16.gmra.mxu0 %v3455
      %v3544 = vpop.f32.mrf.mxu0
      %v3545 = vadd.f32 0.0, %v3544
      %v3546 = vpop.f32.mrf.mxu0
      %v3547 = vadd.f32 0.0, %v3546
      %3548 = vmatmul.bf16.gmra.mxu0 %v3458
      %v3549 = vpop.f32.mrf.mxu0
      %v3550 = vadd.f32 0.0, %v3549
      %v3551 = vpop.f32.mrf.mxu0
      %v3552 = vadd.f32 0.0, %v3551
      %3553 = vmatmul.bf16.gmra.mxu0 %v3461
      %v3554 = vpop.f32.mrf.mxu0
      %v3555 = vadd.f32 0.0, %v3554
      %v3556 = vpop.f32.mrf.mxu0
      %v3557 = vadd.f32 0.0, %v3556
      %3558 = vmatmul.bf16.gmra.mxu0 %v3464
      %v3559 = vpop.f32.mrf.mxu0
      %v3560 = vadd.f32 0.0, %v3559
      %v3561 = vpop.f32.mrf.mxu0
      %v3562 = vadd.f32 0.0, %v3561
      %3563 = vmatmul.bf16.gmra.mxu0 %v3467
      %v3564 = vpop.f32.mrf.mxu0
      %v3565 = vadd.f32 0.0, %v3564
      %v3566 = vpop.f32.mrf.mxu0
      %v3567 = vadd.f32 0.0, %v3566
      %3568 = vmatmul.bf16.gmra.mxu0 %v3470
      %v3569 = vpop.f32.mrf.mxu0
      %v3570 = vadd.f32 0.0, %v3569
      %v3571 = vpop.f32.mrf.mxu0
      %v3572 = vadd.f32 0.0, %v3571
      %3573 = vmatmul.bf16.gmra.mxu0 %v3473
      %v3574 = vpop.f32.mrf.mxu0
      %v3575 = vadd.f32 0.0, %v3574
      %v3576 = vpop.f32.mrf.mxu0
      %3577 = vdwg.mxu0
      %vm3578 = vcmask 195584
      %3579 = vst.msk [vmem:[#allocation4] sm:$0xff] %vm3578, %v3485
      %3580 = vst.msk [vmem:[#allocation4 + $0x8] sm:$0xff] %vm3578, %v3487
      %3581 = vst.msk [vmem:[#allocation4 + $0x10] sm:$0xff] %vm3578, %v3490
      %3582 = vst.msk [vmem:[#allocation4 + $0x18] sm:$0xff] %vm3578, %v3492
      %3583 = vst.msk [vmem:[#allocation4 + $0x20] sm:$0xff] %vm3578, %v3495
      %3584 = vst.msk [vmem:[#allocation4 + $0x28] sm:$0xff] %vm3578, %v3497
      %3585 = vst.msk [vmem:[#allocation4 + $0x30] sm:$0xff] %vm3578, %v3500
      %3586 = vst.msk [vmem:[#allocation4 + $0x38] sm:$0xff] %vm3578, %v3502
      %3587 = vst.msk [vmem:[#allocation4 + $0x40] sm:$0xff] %vm3578, %v3505
      %3588 = vst.msk [vmem:[#allocation4 + $0x48] sm:$0xff] %vm3578, %v3507
      %3589 = vst.msk [vmem:[#allocation4 + $0x50] sm:$0xff] %vm3578, %v3510
      %3590 = vst.msk [vmem:[#allocation4 + $0x58] sm:$0xff] %vm3578, %v3512
      %3591 = vst.msk [vmem:[#allocation4 + $0x60] sm:$0xff] %vm3578, %v3515
      %3592 = vst.msk [vmem:[#allocation4 + $0x68] sm:$0xff] %vm3578, %v3517
      %3593 = vst.msk [vmem:[#allocation4 + $0x70] sm:$0xff] %vm3578, %v3520
      %3594 = vst.msk [vmem:[#allocation4 + $0x78] sm:$0xff] %vm3578, %v3522
      %3595 = vst.msk [vmem:[#allocation4 + $0x80] sm:$0xff] %vm3578, %v3525
      %3596 = vst.msk [vmem:[#allocation4 + $0x88] sm:$0xff] %vm3578, %v3527
      %3597 = vst.msk [vmem:[#allocation4 + $0x90] sm:$0xff] %vm3578, %v3530
      %3598 = vst.msk [vmem:[#allocation4 + $0x98] sm:$0xff] %vm3578, %v3532
      %3599 = vst.msk [vmem:[#allocation4 + $0xa0] sm:$0xff] %vm3578, %v3535
      %3600 = vst.msk [vmem:[#allocation4 + $0xa8] sm:$0xff] %vm3578, %v3537
      %3601 = vst.msk [vmem:[#allocation4 + $0xb0] sm:$0xff] %vm3578, %v3540
      %3602 = vst.msk [vmem:[#allocation4 + $0xb8] sm:$0xff] %vm3578, %v3542
      %3603 = vst.msk [vmem:[#allocation4 + $0xc0] sm:$0xff] %vm3578, %v3545
      %3604 = vst.msk [vmem:[#allocation4 + $0xc8] sm:$0xff] %vm3578, %v3547
      %3605 = vst.msk [vmem:[#allocation4 + $0xd0] sm:$0xff] %vm3578, %v3550
      %3606 = vst.msk [vmem:[#allocation4 + $0xd8] sm:$0xff] %vm3578, %v3552
      %3607 = vst.msk [vmem:[#allocation4 + $0xe0] sm:$0xff] %vm3578, %v3555
      %3608 = vst.msk [vmem:[#allocation4 + $0xe8] sm:$0xff] %vm3578, %v3557
      %3609 = vst.msk [vmem:[#allocation4 + $0xf0] sm:$0xff] %vm3578, %v3560
      %3610 = vst.msk [vmem:[#allocation4 + $0xf8] sm:$0xff] %vm3578, %v3562
      %3611 = vst.msk [vmem:[#allocation4 + $0x100] sm:$0xff] %vm3578, %v3565
      %3612 = vst.msk [vmem:[#allocation4 + $0x108] sm:$0xff] %vm3578, %v3567
      %3613 = vst.msk [vmem:[#allocation4 + $0x110] sm:$0xff] %vm3578, %v3570
      %3614 = vst.msk [vmem:[#allocation4 + $0x118] sm:$0xff] %vm3578, %v3572
      %3615 = vst.msk [vmem:[#allocation4 + $0x120] sm:$0xff] %vm3578, %v3575
      %v3616 = vld [vmem:[#allocation4] sm:$0xff]
      %v3617 = vld [vmem:[#allocation4 + $0x8] sm:$0xff]
      %v3618 = vld [vmem:[#allocation4 + $0x10] sm:$0xff]
      %v3619 = vld [vmem:[#allocation4 + $0x18] sm:$0xff]
      %v3620 = vld [vmem:[#allocation4 + $0x20] sm:$0xff]
      %v3621 = vld [vmem:[#allocation4 + $0x28] sm:$0xff]
      %v3622 = vld [vmem:[#allocation4 + $0x30] sm:$0xff]
      %v3623 = vld [vmem:[#allocation4 + $0x38] sm:$0xff]
      %v3624 = vld [vmem:[#allocation4 + $0x40] sm:$0xff]
      %v3625 = vld [vmem:[#allocation4 + $0x48] sm:$0xff]
      %v3626 = vld [vmem:[#allocation4 + $0x50] sm:$0xff]
      %v3627 = vld [vmem:[#allocation4 + $0x58] sm:$0xff]
      %v3628 = vld [vmem:[#allocation4 + $0x60] sm:$0xff]
      %v3629 = vld [vmem:[#allocation4 + $0x68] sm:$0xff]
      %v3630 = vld [vmem:[#allocation4 + $0x70] sm:$0xff]
      %v3631 = vld [vmem:[#allocation4 + $0x78] sm:$0xff]
      %v3632 = vld [vmem:[#allocation4 + $0x80] sm:$0xff]
      %v3633 = vld [vmem:[#allocation4 + $0x88] sm:$0xff]
      %v3634 = vld [vmem:[#allocation4 + $0x90] sm:$0xff]
      %v3635 = vld [vmem:[#allocation4 + $0x98] sm:$0xff]
      %v3636 = vld [vmem:[#allocation4 + $0xa0] sm:$0xff]
      %v3637 = vld [vmem:[#allocation4 + $0xa8] sm:$0xff]
      %v3638 = vld [vmem:[#allocation4 + $0xb0] sm:$0xff]
      %v3639 = vld [vmem:[#allocation4 + $0xb8] sm:$0xff]
      %v3640 = vld [vmem:[#allocation4 + $0xc0] sm:$0xff]
      %v3641 = vld [vmem:[#allocation4 + $0xc8] sm:$0xff]
      %v3642 = vld [vmem:[#allocation4 + $0xd0] sm:$0xff]
      %v3643 = vld [vmem:[#allocation4 + $0xd8] sm:$0xff]
      %v3644 = vld [vmem:[#allocation4 + $0xe0] sm:$0xff]
      %v3645 = vld [vmem:[#allocation4 + $0xe8] sm:$0xff]
      %v3646 = vld [vmem:[#allocation4 + $0xf0] sm:$0xff]
      %v3647 = vld [vmem:[#allocation4 + $0xf8] sm:$0xff]
      %v3648 = vld [vmem:[#allocation4 + $0x100] sm:$0xff]
      %v3649 = vld [vmem:[#allocation4 + $0x108] sm:$0xff]
      %v3650 = vld [vmem:[#allocation4 + $0x110] sm:$0xff]
      %v3651 = vld [vmem:[#allocation4 + $0x118] sm:$0xff]
      %v3652 = vadd.f32 %v3616, 0.0
      %v3653 = vadd.f32 %v3617, 0.0
      %v3654 = vadd.f32 %v3618, 0.0
      %v3655 = vadd.f32 %v3619, 0.0
      %v3656 = vadd.f32 %v3620, 0.0
      %v3657 = vadd.f32 %v3621, 0.0
      %v3658 = vadd.f32 %v3622, 0.0
      %v3659 = vadd.f32 %v3623, 0.0
      %v3660 = vadd.f32 %v3624, 0.0
      %v3661 = vadd.f32 %v3625, 0.0
      %v3662 = vadd.f32 %v3626, 0.0
      %v3663 = vadd.f32 %v3627, 0.0
      %v3664 = vadd.f32 %v3628, 0.0
      %v3665 = vadd.f32 %v3629, 0.0
      %v3666 = vadd.f32 %v3630, 0.0
      %v3667 = vadd.f32 %v3631, 0.0
      %v3668 = vadd.f32 %v3632, 0.0
      %v3669 = vadd.f32 %v3633, 0.0
      %v3670 = vadd.f32 %v3634, 0.0
      %v3671 = vadd.f32 %v3635, 0.0
      %v3672 = vadd.f32 %v3636, 0.0
      %v3673 = vadd.f32 %v3637, 0.0
      %v3674 = vadd.f32 %v3638, 0.0
      %v3675 = vadd.f32 %v3639, 0.0
      %v3676 = vadd.f32 %v3640, 0.0
      %v3677 = vadd.f32 %v3641, 0.0
      %v3678 = vadd.f32 %v3642, 0.0
      %v3679 = vadd.f32 %v3643, 0.0
      %v3680 = vadd.f32 %v3644, 0.0
      %v3681 = vadd.f32 %v3645, 0.0
      %v3682 = vadd.f32 %v3646, 0.0
      %v3683 = vadd.f32 %v3647, 0.0
      %v3684 = vadd.f32 %v3648, 0.0
      %v3685 = vadd.f32 %v3649, 0.0
      %v3686 = vadd.f32 %v3650, 0.0
      %v3687 = vadd.f32 %v3651, 0.0
      %v3688 = vld [vmem:[#allocation4 + $0x1] sm:$0xff]
      %v3689 = vld [vmem:[#allocation4 + $0x9] sm:$0xff]
      %v3690 = vld [vmem:[#allocation4 + $0x11] sm:$0xff]
      %v3691 = vld [vmem:[#allocation4 + $0x19] sm:$0xff]
      %v3692 = vld [vmem:[#allocation4 + $0x21] sm:$0xff]
      %v3693 = vld [vmem:[#allocation4 + $0x29] sm:$0xff]
      %v3694 = vld [vmem:[#allocation4 + $0x31] sm:$0xff]
      %v3695 = vld [vmem:[#allocation4 + $0x39] sm:$0xff]
      %v3696 = vld [vmem:[#allocation4 + $0x41] sm:$0xff]
      %v3697 = vld [vmem:[#allocation4 + $0x49] sm:$0xff]
      %v3698 = vld [vmem:[#allocation4 + $0x51] sm:$0xff]
      %v3699 = vld [vmem:[#allocation4 + $0x59] sm:$0xff]
      %v3700 = vld [vmem:[#allocation4 + $0x61] sm:$0xff]
      %v3701 = vld [vmem:[#allocation4 + $0x69] sm:$0xff]
      %v3702 = vld [vmem:[#allocation4 + $0x71] sm:$0xff]
      %v3703 = vld [vmem:[#allocation4 + $0x79] sm:$0xff]
      %v3704 = vld [vmem:[#allocation4 + $0x81] sm:$0xff]
      %v3705 = vld [vmem:[#allocation4 + $0x89] sm:$0xff]
      %v3706 = vld [vmem:[#allocation4 + $0x91] sm:$0xff]
      %v3707 = vld [vmem:[#allocation4 + $0x99] sm:$0xff]
      %v3708 = vld [vmem:[#allocation4 + $0xa1] sm:$0xff]
      %v3709 = vld [vmem:[#allocation4 + $0xa9] sm:$0xff]
      %v3710 = vld [vmem:[#allocation4 + $0xb1] sm:$0xff]
      %v3711 = vld [vmem:[#allocation4 + $0xb9] sm:$0xff]
      %v3712 = vld [vmem:[#allocation4 + $0xc1] sm:$0xff]
      %v3713 = vld [vmem:[#allocation4 + $0xc9] sm:$0xff]
      %v3714 = vld [vmem:[#allocation4 + $0xd1] sm:$0xff]
      %v3715 = vld [vmem:[#allocation4 + $0xd9] sm:$0xff]
      %v3716 = vld [vmem:[#allocation4 + $0xe1] sm:$0xff]
      %v3717 = vld [vmem:[#allocation4 + $0xe9] sm:$0xff]
      %v3718 = vld [vmem:[#allocation4 + $0xf1] sm:$0xff]
      %v3719 = vld [vmem:[#allocation4 + $0xf9] sm:$0xff]
      %v3720 = vld [vmem:[#allocation4 + $0x101] sm:$0xff]
      %v3721 = vld [vmem:[#allocation4 + $0x109] sm:$0xff]
      %v3722 = vld [vmem:[#allocation4 + $0x111] sm:$0xff]
      %v3723 = vld [vmem:[#allocation4 + $0x119] sm:$0xff]
      %3760 = vrot.lane.b32.xlu0 %v3688, 120
      %v3761 = vpop.permute.xlu0 %3760
      %3762 = vrot.lane.b32.xlu0 %v3689, 120
      %v3763 = vpop.permute.xlu0 %3762
      %3764 = vrot.lane.b32.xlu0 %v3690, 120
      %v3765 = vpop.permute.xlu0 %3764
      %3766 = vrot.lane.b32.xlu0 %v3691, 120
      %v3767 = vpop.permute.xlu0 %3766
      %3768 = vrot.lane.b32.xlu0 %v3692, 120
      %v3769 = vpop.permute.xlu0 %3768
      %3770 = vrot.lane.b32.xlu0 %v3693, 120
      %v3771 = vpop.permute.xlu0 %3770
      %3772 = vrot.lane.b32.xlu0 %v3694, 120
      %v3773 = vpop.permute.xlu0 %3772
      %3774 = vrot.lane.b32.xlu0 %v3695, 120
      %v3775 = vpop.permute.xlu0 %3774
      %3776 = vrot.lane.b32.xlu0 %v3696, 120
      %v3777 = vpop.permute.xlu0 %3776
      %3778 = vrot.lane.b32.xlu0 %v3697, 120
      %v3779 = vpop.permute.xlu0 %3778
      %3780 = vrot.lane.b32.xlu0 %v3698, 120
      %v3781 = vpop.permute.xlu0 %3780
      %3782 = vrot.lane.b32.xlu0 %v3699, 120
      %v3783 = vpop.permute.xlu0 %3782
      %3784 = vrot.lane.b32.xlu0 %v3700, 120
      %v3785 = vpop.permute.xlu0 %3784
      %3786 = vrot.lane.b32.xlu0 %v3701, 120
      %v3787 = vpop.permute.xlu0 %3786
      %3788 = vrot.lane.b32.xlu0 %v3702, 120
      %v3789 = vpop.permute.xlu0 %3788
      %3790 = vrot.lane.b32.xlu0 %v3703, 120
      %v3791 = vpop.permute.xlu0 %3790
      %3792 = vrot.lane.b32.xlu0 %v3704, 120
      %v3793 = vpop.permute.xlu0 %3792
      %3794 = vrot.lane.b32.xlu0 %v3705, 120
      %v3795 = vpop.permute.xlu0 %3794
      %3796 = vrot.lane.b32.xlu0 %v3706, 120
      %v3797 = vpop.permute.xlu0 %3796
      %3798 = vrot.lane.b32.xlu0 %v3707, 120
      %v3799 = vpop.permute.xlu0 %3798
      %3800 = vrot.lane.b32.xlu0 %v3708, 120
      %v3801 = vpop.permute.xlu0 %3800
      %3802 = vrot.lane.b32.xlu0 %v3709, 120
      %v3803 = vpop.permute.xlu0 %3802
      %3804 = vrot.lane.b32.xlu0 %v3710, 120
      %v3805 = vpop.permute.xlu0 %3804
      %3806 = vrot.lane.b32.xlu0 %v3711, 120
      %v3807 = vpop.permute.xlu0 %3806
      %3808 = vrot.lane.b32.xlu0 %v3712, 120
      %v3809 = vpop.permute.xlu0 %3808
      %3810 = vrot.lane.b32.xlu0 %v3713, 120
      %v3811 = vpop.permute.xlu0 %3810
      %3812 = vrot.lane.b32.xlu0 %v3714, 120
      %v3813 = vpop.permute.xlu0 %3812
      %3814 = vrot.lane.b32.xlu0 %v3715, 120
      %v3815 = vpop.permute.xlu0 %3814
      %3816 = vrot.lane.b32.xlu0 %v3716, 120
      %v3817 = vpop.permute.xlu0 %3816
      %3818 = vrot.lane.b32.xlu0 %v3717, 120
      %v3819 = vpop.permute.xlu0 %3818
      %3820 = vrot.lane.b32.xlu0 %v3718, 120
      %v3821 = vpop.permute.xlu0 %3820
      %3822 = vrot.lane.b32.xlu0 %v3719, 120
      %v3823 = vpop.permute.xlu0 %3822
      %3824 = vrot.lane.b32.xlu0 %v3720, 120
      %v3825 = vpop.permute.xlu0 %3824
      %3826 = vrot.lane.b32.xlu0 %v3721, 120
      %v3827 = vpop.permute.xlu0 %3826
      %3828 = vrot.lane.b32.xlu0 %v3722, 120
      %v3829 = vpop.permute.xlu0 %3828
      %3830 = vrot.lane.b32.xlu0 %v3723, 120
      %v3831 = vpop.permute.xlu0 %3830
      %v3868 = vadd.f32 %v3652, %v3761
      %v3869 = vadd.f32 %v3653, %v3763
      %v3870 = vadd.f32 %v3654, %v3765
      %v3871 = vadd.f32 %v3655, %v3767
      %v3872 = vadd.f32 %v3656, %v3769
      %v3873 = vadd.f32 %v3657, %v3771
      %v3874 = vadd.f32 %v3658, %v3773
      %v3875 = vadd.f32 %v3659, %v3775
      %v3876 = vadd.f32 %v3660, %v3777
      %v3877 = vadd.f32 %v3661, %v3779
      %v3878 = vadd.f32 %v3662, %v3781
      %v3879 = vadd.f32 %v3663, %v3783
      %v3880 = vadd.f32 %v3664, %v3785
      %v3881 = vadd.f32 %v3665, %v3787
      %v3882 = vadd.f32 %v3666, %v3789
      %v3883 = vadd.f32 %v3667, %v3791
      %v3884 = vadd.f32 %v3668, %v3793
      %v3885 = vadd.f32 %v3669, %v3795
      %v3886 = vadd.f32 %v3670, %v3797
      %v3887 = vadd.f32 %v3671, %v3799
      %v3888 = vadd.f32 %v3672, %v3801
      %v3889 = vadd.f32 %v3673, %v3803
      %v3890 = vadd.f32 %v3674, %v3805
      %v3891 = vadd.f32 %v3675, %v3807
      %v3892 = vadd.f32 %v3676, %v3809
      %v3893 = vadd.f32 %v3677, %v3811
      %v3894 = vadd.f32 %v3678, %v3813
      %v3895 = vadd.f32 %v3679, %v3815
      %v3896 = vadd.f32 %v3680, %v3817
      %v3897 = vadd.f32 %v3681, %v3819
      %v3898 = vadd.f32 %v3682, %v3821
      %v3899 = vadd.f32 %v3683, %v3823
      %v3900 = vadd.f32 %v3684, %v3825
      %v3901 = vadd.f32 %v3685, %v3827
      %v3902 = vadd.f32 %v3686, %v3829
      %v3903 = vadd.f32 %v3687, %v3831
      %v3904 = vld [vmem:[#allocation4 + $0x2] sm:$0xff]
      %v3905 = vld [vmem:[#allocation4 + $0xa] sm:$0xff]
      %v3906 = vld [vmem:[#allocation4 + $0x12] sm:$0xff]
      %v3907 = vld [vmem:[#allocation4 + $0x1a] sm:$0xff]
      %v3908 = vld [vmem:[#allocation4 + $0x22] sm:$0xff]
      %v3909 = vld [vmem:[#allocation4 + $0x2a] sm:$0xff]
      %v3910 = vld [vmem:[#allocation4 + $0x32] sm:$0xff]
      %v3911 = vld [vmem:[#allocation4 + $0x3a] sm:$0xff]
      %v3912 = vld [vmem:[#allocation4 + $0x42] sm:$0xff]
      %v3913 = vld [vmem:[#allocation4 + $0x4a] sm:$0xff]
      %v3914 = vld [vmem:[#allocation4 + $0x52] sm:$0xff]
      %v3915 = vld [vmem:[#allocation4 + $0x5a] sm:$0xff]
      %v3916 = vld [vmem:[#allocation4 + $0x62] sm:$0xff]
      %v3917 = vld [vmem:[#allocation4 + $0x6a] sm:$0xff]
      %v3918 = vld [vmem:[#allocation4 + $0x72] sm:$0xff]
      %v3919 = vld [vmem:[#allocation4 + $0x7a] sm:$0xff]
      %v3920 = vld [vmem:[#allocation4 + $0x82] sm:$0xff]
      %v3921 = vld [vmem:[#allocation4 + $0x8a] sm:$0xff]
      %v3922 = vld [vmem:[#allocation4 + $0x92] sm:$0xff]
      %v3923 = vld [vmem:[#allocation4 + $0x9a] sm:$0xff]
      %v3924 = vld [vmem:[#allocation4 + $0xa2] sm:$0xff]
      %v3925 = vld [vmem:[#allocation4 + $0xaa] sm:$0xff]
      %v3926 = vld [vmem:[#allocation4 + $0xb2] sm:$0xff]
      %v3927 = vld [vmem:[#allocation4 + $0xba] sm:$0xff]
      %v3928 = vld [vmem:[#allocation4 + $0xc2] sm:$0xff]
      %v3929 = vld [vmem:[#allocation4 + $0xca] sm:$0xff]
      %v3930 = vld [vmem:[#allocation4 + $0xd2] sm:$0xff]
      %v3931 = vld [vmem:[#allocation4 + $0xda] sm:$0xff]
      %v3932 = vld [vmem:[#allocation4 + $0xe2] sm:$0xff]
      %v3933 = vld [vmem:[#allocation4 + $0xea] sm:$0xff]
      %v3934 = vld [vmem:[#allocation4 + $0xf2] sm:$0xff]
      %v3935 = vld [vmem:[#allocation4 + $0xfa] sm:$0xff]
      %v3936 = vld [vmem:[#allocation4 + $0x102] sm:$0xff]
      %v3937 = vld [vmem:[#allocation4 + $0x10a] sm:$0xff]
      %v3938 = vld [vmem:[#allocation4 + $0x112] sm:$0xff]
      %v3939 = vld [vmem:[#allocation4 + $0x11a] sm:$0xff]
      %3976 = vrot.lane.b32.xlu0 %v3904, 112
      %v3977 = vpop.permute.xlu0 %3976
      %3978 = vrot.lane.b32.xlu0 %v3905, 112
      %v3979 = vpop.permute.xlu0 %3978
      %3980 = vrot.lane.b32.xlu0 %v3906, 112
      %v3981 = vpop.permute.xlu0 %3980
      %3982 = vrot.lane.b32.xlu0 %v3907, 112
      %v3983 = vpop.permute.xlu0 %3982
      %3984 = vrot.lane.b32.xlu0 %v3908, 112
      %v3985 = vpop.permute.xlu0 %3984
      %3986 = vrot.lane.b32.xlu0 %v3909, 112
      %v3987 = vpop.permute.xlu0 %3986
      %3988 = vrot.lane.b32.xlu0 %v3910, 112
      %v3989 = vpop.permute.xlu0 %3988
      %3990 = vrot.lane.b32.xlu0 %v3911, 112
      %v3991 = vpop.permute.xlu0 %3990
      %3992 = vrot.lane.b32.xlu0 %v3912, 112
      %v3993 = vpop.permute.xlu0 %3992
      %3994 = vrot.lane.b32.xlu0 %v3913, 112
      %v3995 = vpop.permute.xlu0 %3994
      %3996 = vrot.lane.b32.xlu0 %v3914, 112
      %v3997 = vpop.permute.xlu0 %3996
      %3998 = vrot.lane.b32.xlu0 %v3915, 112
      %v3999 = vpop.permute.xlu0 %3998
      %4000 = vrot.lane.b32.xlu0 %v3916, 112
      %v4001 = vpop.permute.xlu0 %4000
      %4002 = vrot.lane.b32.xlu0 %v3917, 112
      %v4003 = vpop.permute.xlu0 %4002
      %4004 = vrot.lane.b32.xlu0 %v3918, 112
      %v4005 = vpop.permute.xlu0 %4004
      %4006 = vrot.lane.b32.xlu0 %v3919, 112
      %v4007 = vpop.permute.xlu0 %4006
      %4008 = vrot.lane.b32.xlu0 %v3920, 112
      %v4009 = vpop.permute.xlu0 %4008
      %4010 = vrot.lane.b32.xlu0 %v3921, 112
      %v4011 = vpop.permute.xlu0 %4010
      %4012 = vrot.lane.b32.xlu0 %v3922, 112
      %v4013 = vpop.permute.xlu0 %4012
      %4014 = vrot.lane.b32.xlu0 %v3923, 112
      %v4015 = vpop.permute.xlu0 %4014
      %4016 = vrot.lane.b32.xlu0 %v3924, 112
      %v4017 = vpop.permute.xlu0 %4016
      %4018 = vrot.lane.b32.xlu0 %v3925, 112
      %v4019 = vpop.permute.xlu0 %4018
      %4020 = vrot.lane.b32.xlu0 %v3926, 112
      %v4021 = vpop.permute.xlu0 %4020
      %4022 = vrot.lane.b32.xlu0 %v3927, 112
      %v4023 = vpop.permute.xlu0 %4022
      %4024 = vrot.lane.b32.xlu0 %v3928, 112
      %v4025 = vpop.permute.xlu0 %4024
      %4026 = vrot.lane.b32.xlu0 %v3929, 112
      %v4027 = vpop.permute.xlu0 %4026
      %4028 = vrot.lane.b32.xlu0 %v3930, 112
      %v4029 = vpop.permute.xlu0 %4028
      %4030 = vrot.lane.b32.xlu0 %v3931, 112
      %v4031 = vpop.permute.xlu0 %4030
      %4032 = vrot.lane.b32.xlu0 %v3932, 112
      %v4033 = vpop.permute.xlu0 %4032
      %4034 = vrot.lane.b32.xlu0 %v3933, 112
      %v4035 = vpop.permute.xlu0 %4034
      %4036 = vrot.lane.b32.xlu0 %v3934, 112
      %v4037 = vpop.permute.xlu0 %4036
      %4038 = vrot.lane.b32.xlu0 %v3935, 112
      %v4039 = vpop.permute.xlu0 %4038
      %4040 = vrot.lane.b32.xlu0 %v3936, 112
      %v4041 = vpop.permute.xlu0 %4040
      %4042 = vrot.lane.b32.xlu0 %v3937, 112
      %v4043 = vpop.permute.xlu0 %4042
      %4044 = vrot.lane.b32.xlu0 %v3938, 112
      %v4045 = vpop.permute.xlu0 %4044
      %4046 = vrot.lane.b32.xlu0 %v3939, 112
      %v4047 = vpop.permute.xlu0 %4046
      %v4084 = vadd.f32 %v3868, %v3977
      %v4085 = vadd.f32 %v3869, %v3979
      %v4086 = vadd.f32 %v3870, %v3981
      %v4087 = vadd.f32 %v3871, %v3983
      %v4088 = vadd.f32 %v3872, %v3985
      %v4089 = vadd.f32 %v3873, %v3987
      %v4090 = vadd.f32 %v3874, %v3989
      %v4091 = vadd.f32 %v3875, %v3991
      %v4092 = vadd.f32 %v3876, %v3993
      %v4093 = vadd.f32 %v3877, %v3995
      %v4094 = vadd.f32 %v3878, %v3997
      %v4095 = vadd.f32 %v3879, %v3999
      %v4096 = vadd.f32 %v3880, %v4001
      %v4097 = vadd.f32 %v3881, %v4003
      %v4098 = vadd.f32 %v3882, %v4005
      %v4099 = vadd.f32 %v3883, %v4007
      %v4100 = vadd.f32 %v3884, %v4009
      %v4101 = vadd.f32 %v3885, %v4011
      %v4102 = vadd.f32 %v3886, %v4013
      %v4103 = vadd.f32 %v3887, %v4015
      %v4104 = vadd.f32 %v3888, %v4017
      %v4105 = vadd.f32 %v3889, %v4019
      %v4106 = vadd.f32 %v3890, %v4021
      %v4107 = vadd.f32 %v3891, %v4023
      %v4108 = vadd.f32 %v3892, %v4025
      %v4109 = vadd.f32 %v3893, %v4027
      %v4110 = vadd.f32 %v3894, %v4029
      %v4111 = vadd.f32 %v3895, %v4031
      %v4112 = vadd.f32 %v3896, %v4033
      %v4113 = vadd.f32 %v3897, %v4035
      %v4114 = vadd.f32 %v3898, %v4037
      %v4115 = vadd.f32 %v3899, %v4039
      %v4116 = vadd.f32 %v3900, %v4041
      %v4117 = vadd.f32 %v3901, %v4043
      %v4118 = vadd.f32 %v3902, %v4045
      %v4119 = vadd.f32 %v3903, %v4047
      %v4120 = vld [vmem:[#allocation2 + $0x8] sm:$0xe]
      %v4121 = vld [vmem:[#allocation2 + $0xc] sm:$0xf]
      %v4122 = vld [vmem:[#allocation2 + $0x10] sm:$0xf]
      %v4123 = vld [vmem:[#allocation2 + $0x14] sm:$0xf]
      %v4124 = vld [vmem:[#allocation2 + $0x18] sm:$0xf]
      %v4125 = vld [vmem:[#allocation2 + $0x1c] sm:$0xf]
      %v4126 = vld [vmem:[#allocation2 + $0x20] sm:$0xf]
      %v4127 = vld [vmem:[#allocation2 + $0x24] sm:$0xf]
      %v4128 = vld [vmem:[#allocation2 + $0x28] sm:$0xf]
      %v4129 = vld [vmem:[#allocation2 + $0x2c] sm:$0xf]
      %v4130 = vld [vmem:[#allocation2 + $0x30] sm:$0xf]
      %v4131 = vld [vmem:[#allocation2 + $0x34] sm:$0xf]
      %v4132 = vld [vmem:[#allocation2 + $0x38] sm:$0xf]
      %v4133 = vld [vmem:[#allocation2 + $0x3c] sm:$0xf]
      %v4134 = vld [vmem:[#allocation2 + $0x40] sm:$0xf]
      %v4135 = vld [vmem:[#allocation2 + $0x44] sm:$0xf]
      %v4136 = vld [vmem:[#allocation2 + $0x48] sm:$0xf]
      %v4137 = vld [vmem:[#allocation2 + $0x4c] sm:$0xf]
      %v4138 = vld [vmem:[#allocation2 + $0x50] sm:$0xf]
      %v4139 = vld [vmem:[#allocation2 + $0x54] sm:$0xf]
      %v4140 = vld [vmem:[#allocation2 + $0x58] sm:$0xf]
      %v4141 = vld [vmem:[#allocation2 + $0x5c] sm:$0xf]
      %v4142 = vld [vmem:[#allocation2 + $0x60] sm:$0xf]
      %v4143 = vld [vmem:[#allocation2 + $0x64] sm:$0xf]
      %v4144 = vld [vmem:[#allocation2 + $0x68] sm:$0xf]
      %v4145 = vld [vmem:[#allocation2 + $0x6c] sm:$0xf]
      %v4146 = vld [vmem:[#allocation2 + $0x70] sm:$0xf]
      %v4147 = vld [vmem:[#allocation2 + $0x74] sm:$0xf]
      %v4148 = vld [vmem:[#allocation2 + $0x78] sm:$0xf]
      %v4149 = vld [vmem:[#allocation2 + $0x7c] sm:$0xf]
      %v4150 = vld [vmem:[#allocation2 + $0x80] sm:$0xf]
      %v4151 = vld [vmem:[#allocation2 + $0x84] sm:$0xf]
      %v4152 = vld [vmem:[#allocation2 + $0x88] sm:$0xf]
      %v4153 = vld [vmem:[#allocation2 + $0x8c] sm:$0xf]
      %v4154 = vld [vmem:[#allocation2 + $0x90] sm:$0xf]
      %v4155 = vld [vmem:[#allocation2 + $0x94] sm:$0xf]
      %v4156 = vld [vmem:[#allocation2 + $0x98] sm:$0xf]
      %v4157 = vld [vmem:[#allocation2 + $0x9c] sm:$0x1]
      %s4158 = scalar_lea.vmem %s1, 8
      %v4159 = vld [vmem:[%s4158] sm:$0xf]
      %v4160 = vld [vmem:[%s4158 + $0x4] sm:$0xf]
      %v4199 = vunpack.c.l.b16 %v4120
      %v4200 = vunpack.c.l.b16 %v4121
      %v4201 = vunpack.c.l.b16 %v4122
      %v4202 = vunpack.c.l.b16 %v4123
      %v4203 = vunpack.c.l.b16 %v4124
      %v4204 = vunpack.c.l.b16 %v4125
      %v4205 = vunpack.c.l.b16 %v4126
      %v4206 = vunpack.c.l.b16 %v4127
      %v4207 = vunpack.c.l.b16 %v4128
      %v4208 = vunpack.c.l.b16 %v4129
      %v4209 = vunpack.c.l.b16 %v4130
      %v4210 = vunpack.c.l.b16 %v4131
      %v4211 = vunpack.c.l.b16 %v4132
      %v4212 = vunpack.c.l.b16 %v4133
      %v4213 = vunpack.c.l.b16 %v4134
      %v4214 = vunpack.c.l.b16 %v4135
      %v4215 = vunpack.c.l.b16 %v4136
      %v4216 = vunpack.c.l.b16 %v4137
      %v4217 = vunpack.c.l.b16 %v4138
      %v4218 = vunpack.c.l.b16 %v4139
      %v4219 = vunpack.c.l.b16 %v4140
      %v4220 = vunpack.c.l.b16 %v4141
      %v4221 = vunpack.c.l.b16 %v4142
      %v4222 = vunpack.c.l.b16 %v4143
      %v4223 = vunpack.c.l.b16 %v4144
      %v4224 = vunpack.c.l.b16 %v4145
      %v4225 = vunpack.c.l.b16 %v4146
      %v4226 = vunpack.c.l.b16 %v4147
      %v4227 = vunpack.c.l.b16 %v4148
      %v4228 = vunpack.c.l.b16 %v4149
      %v4229 = vunpack.c.l.b16 %v4150
      %v4230 = vunpack.c.l.b16 %v4151
      %v4231 = vunpack.c.l.b16 %v4152
      %v4232 = vunpack.c.l.b16 %v4153
      %v4233 = vunpack.c.l.b16 %v4154
      %v4234 = vunpack.c.l.b16 %v4155
      %v4235 = vunpack.c.l.b16 %v4156
      %v4236 = vunpack.c.l.b16 %v4157
      %v4237 = vpack.c.b16 %v4200, %v4199
      %v4238 = vpack.c.b16 %v4202, %v4201
      %v4239 = vpack.c.b16 %v4204, %v4203
      %v4240 = vpack.c.b16 %v4206, %v4205
      %v4241 = vpack.c.b16 %v4208, %v4207
      %v4242 = vpack.c.b16 %v4210, %v4209
      %v4243 = vpack.c.b16 %v4212, %v4211
      %v4244 = vpack.c.b16 %v4214, %v4213
      %v4245 = vpack.c.b16 %v4216, %v4215
      %v4246 = vpack.c.b16 %v4218, %v4217
      %v4247 = vpack.c.b16 %v4220, %v4219
      %v4248 = vpack.c.b16 %v4222, %v4221
      %v4249 = vpack.c.b16 %v4224, %v4223
      %v4250 = vpack.c.b16 %v4226, %v4225
      %v4251 = vpack.c.b16 %v4228, %v4227
      %v4252 = vpack.c.b16 %v4230, %v4229
      %v4253 = vpack.c.b16 %v4232, %v4231
      %v4254 = vpack.c.b16 %v4234, %v4233
      %v4255 = vpack.c.b16 %v4236, %v4235
      %vm4256 = vcmask 1046528
      %v4257 = vrot.slane %v4237, 1
      %v4258 = vrot.slane %v4238, 1
      %v4259 = vsel %vm4256, %v4257, %v4258
      %v4260 = vrot.slane %v4239, 1
      %v4261 = vsel %vm4256, %v4258, %v4260
      %v4262 = vrot.slane %v4240, 1
      %v4263 = vsel %vm4256, %v4260, %v4262
      %v4264 = vrot.slane %v4241, 1
      %v4265 = vsel %vm4256, %v4262, %v4264
      %v4266 = vrot.slane %v4242, 1
      %v4267 = vsel %vm4256, %v4264, %v4266
      %v4268 = vrot.slane %v4243, 1
      %v4269 = vsel %vm4256, %v4266, %v4268
      %v4270 = vrot.slane %v4244, 1
      %v4271 = vsel %vm4256, %v4268, %v4270
      %v4272 = vrot.slane %v4245, 1
      %v4273 = vsel %vm4256, %v4270, %v4272
      %v4274 = vrot.slane %v4246, 1
      %v4275 = vsel %vm4256, %v4272, %v4274
      %v4276 = vrot.slane %v4247, 1
      %v4277 = vsel %vm4256, %v4274, %v4276
      %v4278 = vrot.slane %v4248, 1
      %v4279 = vsel %vm4256, %v4276, %v4278
      %v4280 = vrot.slane %v4249, 1
      %v4281 = vsel %vm4256, %v4278, %v4280
      %v4282 = vrot.slane %v4250, 1
      %v4283 = vsel %vm4256, %v4280, %v4282
      %v4284 = vrot.slane %v4251, 1
      %v4285 = vsel %vm4256, %v4282, %v4284
      %v4286 = vrot.slane %v4252, 1
      %v4287 = vsel %vm4256, %v4284, %v4286
      %v4288 = vrot.slane %v4253, 1
      %v4289 = vsel %vm4256, %v4286, %v4288
      %v4290 = vrot.slane %v4254, 1
      %v4291 = vsel %vm4256, %v4288, %v4290
      %v4292 = vrot.slane %v4255, 1
      %v4293 = vsel %vm4256, %v4290, %v4292
      %v4296 = vunpack.c.l.b16 %v4159
      %v4297 = vunpack.c.l.b16 %v4160
      %v4298 = vpack.c.b16 %v4297, %v4296
      %v4301 = vsel %vm3417, %v4259, 0
      %v4304 = vsel %vm3417, %v4261, 0
      %v4307 = vsel %vm3417, %v4263, 0
      %v4310 = vsel %vm3417, %v4265, 0
      %v4313 = vsel %vm3417, %v4267, 0
      %v4316 = vsel %vm3417, %v4269, 0
      %v4319 = vsel %vm3417, %v4271, 0
      %v4322 = vsel %vm3417, %v4273, 0
      %v4325 = vsel %vm3417, %v4275, 0
      %v4328 = vsel %vm3417, %v4277, 0
      %v4331 = vsel %vm3417, %v4279, 0
      %v4334 = vsel %vm3417, %v4281, 0
      %v4337 = vsel %vm3417, %v4283, 0
      %v4340 = vsel %vm3417, %v4285, 0
      %v4343 = vsel %vm3417, %v4287, 0
      %v4346 = vsel %vm3417, %v4289, 0
      %v4349 = vsel %vm3417, %v4291, 0
      %v4352 = vsel %vm3417, %v4293, 0
      %v4355 = vsel %vm3417, %v4292, 0
      %4357 = vmatpush.bf16.msra.mxu0 0
      %4358 = vmatpush.bf16.msra.mxu0 0
      %4359 = vmatpush.bf16.msra.mxu0 0
      %4360 = vmatpush.bf16.msra.mxu0 0
      %4361 = vmatpush.bf16.msra.mxu0 0
      %4362 = vmatpush.bf16.msra.mxu0 0
      %4363 = vmatpush.bf16.msra.mxu0 0
      %4364 = vmatpush.bf16.msra.mxu0 %v4298
      %4365 = vmatmul.bf16.gmra.mxu0 %v4301
      %v4366 = vpop.f32.mrf.mxu0
      %v4367 = vadd.f32 0.0, %v4366
      %v4368 = vpop.f32.mrf.mxu0
      %v4369 = vadd.f32 0.0, %v4368
      %4370 = vmatmul.bf16.gmra.mxu0 %v4304
      %v4371 = vpop.f32.mrf.mxu0
      %v4372 = vadd.f32 0.0, %v4371
      %v4373 = vpop.f32.mrf.mxu0
      %v4374 = vadd.f32 0.0, %v4373
      %4375 = vmatmul.bf16.gmra.mxu0 %v4307
      %v4376 = vpop.f32.mrf.mxu0
      %v4377 = vadd.f32 0.0, %v4376
      %v4378 = vpop.f32.mrf.mxu0
      %v4379 = vadd.f32 0.0, %v4378
      %4380 = vmatmul.bf16.gmra.mxu0 %v4310
      %v4381 = vpop.f32.mrf.mxu0
      %v4382 = vadd.f32 0.0, %v4381
      %v4383 = vpop.f32.mrf.mxu0
      %v4384 = vadd.f32 0.0, %v4383
      %4385 = vmatmul.bf16.gmra.mxu0 %v4313
      %v4386 = vpop.f32.mrf.mxu0
      %v4387 = vadd.f32 0.0, %v4386
      %v4388 = vpop.f32.mrf.mxu0
      %v4389 = vadd.f32 0.0, %v4388
      %4390 = vmatmul.bf16.gmra.mxu0 %v4316
      %v4391 = vpop.f32.mrf.mxu0
      %v4392 = vadd.f32 0.0, %v4391
      %v4393 = vpop.f32.mrf.mxu0
      %v4394 = vadd.f32 0.0, %v4393
      %4395 = vmatmul.bf16.gmra.mxu0 %v4319
      %v4396 = vpop.f32.mrf.mxu0
      %v4397 = vadd.f32 0.0, %v4396
      %v4398 = vpop.f32.mrf.mxu0
      %v4399 = vadd.f32 0.0, %v4398
      %4400 = vmatmul.bf16.gmra.mxu0 %v4322
      %v4401 = vpop.f32.mrf.mxu0
      %v4402 = vadd.f32 0.0, %v4401
      %v4403 = vpop.f32.mrf.mxu0
      %v4404 = vadd.f32 0.0, %v4403
      %4405 = vmatmul.bf16.gmra.mxu0 %v4325
      %v4406 = vpop.f32.mrf.mxu0
      %v4407 = vadd.f32 0.0, %v4406
      %v4408 = vpop.f32.mrf.mxu0
      %v4409 = vadd.f32 0.0, %v4408
      %4410 = vmatmul.bf16.gmra.mxu0 %v4328
      %v4411 = vpop.f32.mrf.mxu0
      %v4412 = vadd.f32 0.0, %v4411
      %v4413 = vpop.f32.mrf.mxu0
      %v4414 = vadd.f32 0.0, %v4413
      %4415 = vmatmul.bf16.gmra.mxu0 %v4331
      %v4416 = vpop.f32.mrf.mxu0
      %v4417 = vadd.f32 0.0, %v4416
      %v4418 = vpop.f32.mrf.mxu0
      %v4419 = vadd.f32 0.0, %v4418
      %4420 = vmatmul.bf16.gmra.mxu0 %v4334
      %v4421 = vpop.f32.mrf.mxu0
      %v4422 = vadd.f32 0.0, %v4421
      %v4423 = vpop.f32.mrf.mxu0
      %v4424 = vadd.f32 0.0, %v4423
      %4425 = vmatmul.bf16.gmra.mxu0 %v4337
      %v4426 = vpop.f32.mrf.mxu0
      %v4427 = vadd.f32 0.0, %v4426
      %v4428 = vpop.f32.mrf.mxu0
      %v4429 = vadd.f32 0.0, %v4428
      %4430 = vmatmul.bf16.gmra.mxu0 %v4340
      %v4431 = vpop.f32.mrf.mxu0
      %v4432 = vadd.f32 0.0, %v4431
      %v4433 = vpop.f32.mrf.mxu0
      %v4434 = vadd.f32 0.0, %v4433
      %4435 = vmatmul.bf16.gmra.mxu0 %v4343
      %v4436 = vpop.f32.mrf.mxu0
      %v4437 = vadd.f32 0.0, %v4436
      %v4438 = vpop.f32.mrf.mxu0
      %v4439 = vadd.f32 0.0, %v4438
      %4440 = vmatmul.bf16.gmra.mxu0 %v4346
      %v4441 = vpop.f32.mrf.mxu0
      %v4442 = vadd.f32 0.0, %v4441
      %v4443 = vpop.f32.mrf.mxu0
      %v4444 = vadd.f32 0.0, %v4443
      %4445 = vmatmul.bf16.gmra.mxu0 %v4349
      %v4446 = vpop.f32.mrf.mxu0
      %v4447 = vadd.f32 0.0, %v4446
      %v4448 = vpop.f32.mrf.mxu0
      %v4449 = vadd.f32 0.0, %v4448
      %4450 = vmatmul.bf16.gmra.mxu0 %v4352
      %v4451 = vpop.f32.mrf.mxu0
      %v4452 = vadd.f32 0.0, %v4451
      %v4453 = vpop.f32.mrf.mxu0
      %v4454 = vadd.f32 0.0, %v4453
      %4455 = vmatmul.bf16.gmra.mxu0 %v4355
      %v4456 = vpop.f32.mrf.mxu0
      %v4457 = vadd.f32 0.0, %v4456
      %v4458 = vpop.f32.mrf.mxu0
      %4459 = vdwg.mxu0
      %4460 = vst.msk [vmem:[#allocation4] sm:$0xff] %vm3578, %v4367
      %4461 = vst.msk [vmem:[#allocation4 + $0x8] sm:$0xff] %vm3578, %v4369
      %4462 = vst.msk [vmem:[#allocation4 + $0x10] sm:$0xff] %vm3578, %v4372
      %4463 = vst.msk [vmem:[#allocation4 + $0x18] sm:$0xff] %vm3578, %v4374
      %4464 = vst.msk [vmem:[#allocation4 + $0x20] sm:$0xff] %vm3578, %v4377
      %4465 = vst.msk [vmem:[#allocation4 + $0x28] sm:$0xff] %vm3578, %v4379
      %4466 = vst.msk [vmem:[#allocation4 + $0x30] sm:$0xff] %vm3578, %v4382
      %4467 = vst.msk [vmem:[#allocation4 + $0x38] sm:$0xff] %vm3578, %v4384
      %4468 = vst.msk [vmem:[#allocation4 + $0x40] sm:$0xff] %vm3578, %v4387
      %4469 = vst.msk [vmem:[#allocation4 + $0x48] sm:$0xff] %vm3578, %v4389
      %4470 = vst.msk [vmem:[#allocation4 + $0x50] sm:$0xff] %vm3578, %v4392
      %4471 = vst.msk [vmem:[#allocation4 + $0x58] sm:$0xff] %vm3578, %v4394
      %4472 = vst.msk [vmem:[#allocation4 + $0x60] sm:$0xff] %vm3578, %v4397
      %4473 = vst.msk [vmem:[#allocation4 + $0x68] sm:$0xff] %vm3578, %v4399
      %4474 = vst.msk [vmem:[#allocation4 + $0x70] sm:$0xff] %vm3578, %v4402
      %4475 = vst.msk [vmem:[#allocation4 + $0x78] sm:$0xff] %vm3578, %v4404
      %4476 = vst.msk [vmem:[#allocation4 + $0x80] sm:$0xff] %vm3578, %v4407
      %4477 = vst.msk [vmem:[#allocation4 + $0x88] sm:$0xff] %vm3578, %v4409
      %4478 = vst.msk [vmem:[#allocation4 + $0x90] sm:$0xff] %vm3578, %v4412
      %4479 = vst.msk [vmem:[#allocation4 + $0x98] sm:$0xff] %vm3578, %v4414
      %4480 = vst.msk [vmem:[#allocation4 + $0xa0] sm:$0xff] %vm3578, %v4417
      %4481 = vst.msk [vmem:[#allocation4 + $0xa8] sm:$0xff] %vm3578, %v4419
      %4482 = vst.msk [vmem:[#allocation4 + $0xb0] sm:$0xff] %vm3578, %v4422
      %4483 = vst.msk [vmem:[#allocation4 + $0xb8] sm:$0xff] %vm3578, %v4424
      %4484 = vst.msk [vmem:[#allocation4 + $0xc0] sm:$0xff] %vm3578, %v4427
      %4485 = vst.msk [vmem:[#allocation4 + $0xc8] sm:$0xff] %vm3578, %v4429
      %4486 = vst.msk [vmem:[#allocation4 + $0xd0] sm:$0xff] %vm3578, %v4432
      %4487 = vst.msk [vmem:[#allocation4 + $0xd8] sm:$0xff] %vm3578, %v4434
      %4488 = vst.msk [vmem:[#allocation4 + $0xe0] sm:$0xff] %vm3578, %v4437
      %4489 = vst.msk [vmem:[#allocation4 + $0xe8] sm:$0xff] %vm3578, %v4439
      %4490 = vst.msk [vmem:[#allocation4 + $0xf0] sm:$0xff] %vm3578, %v4442
      %4491 = vst.msk [vmem:[#allocation4 + $0xf8] sm:$0xff] %vm3578, %v4444
      %4492 = vst.msk [vmem:[#allocation4 + $0x100] sm:$0xff] %vm3578, %v4447
      %4493 = vst.msk [vmem:[#allocation4 + $0x108] sm:$0xff] %vm3578, %v4449
      %4494 = vst.msk [vmem:[#allocation4 + $0x110] sm:$0xff] %vm3578, %v4452
      %4495 = vst.msk [vmem:[#allocation4 + $0x118] sm:$0xff] %vm3578, %v4454
      %4496 = vst.msk [vmem:[#allocation4 + $0x120] sm:$0xff] %vm3578, %v4457
      %v4497 = vld [vmem:[#allocation4] sm:$0xff]
      %v4498 = vld [vmem:[#allocation4 + $0x8] sm:$0xff]
      %v4499 = vld [vmem:[#allocation4 + $0x10] sm:$0xff]
      %v4500 = vld [vmem:[#allocation4 + $0x18] sm:$0xff]
      %v4501 = vld [vmem:[#allocation4 + $0x20] sm:$0xff]
      %v4502 = vld [vmem:[#allocation4 + $0x28] sm:$0xff]
      %v4503 = vld [vmem:[#allocation4 + $0x30] sm:$0xff]
      %v4504 = vld [vmem:[#allocation4 + $0x38] sm:$0xff]
      %v4505 = vld [vmem:[#allocation4 + $0x40] sm:$0xff]
      %v4506 = vld [vmem:[#allocation4 + $0x48] sm:$0xff]
      %v4507 = vld [vmem:[#allocation4 + $0x50] sm:$0xff]
      %v4508 = vld [vmem:[#allocation4 + $0x58] sm:$0xff]
      %v4509 = vld [vmem:[#allocation4 + $0x60] sm:$0xff]
      %v4510 = vld [vmem:[#allocation4 + $0x68] sm:$0xff]
      %v4511 = vld [vmem:[#allocation4 + $0x70] sm:$0xff]
      %v4512 = vld [vmem:[#allocation4 + $0x78] sm:$0xff]
      %v4513 = vld [vmem:[#allocation4 + $0x80] sm:$0xff]
      %v4514 = vld [vmem:[#allocation4 + $0x88] sm:$0xff]
      %v4515 = vld [vmem:[#allocation4 + $0x90] sm:$0xff]
      %v4516 = vld [vmem:[#allocation4 + $0x98] sm:$0xff]
      %v4517 = vld [vmem:[#allocation4 + $0xa0] sm:$0xff]
      %v4518 = vld [vmem:[#allocation4 + $0xa8] sm:$0xff]
      %v4519 = vld [vmem:[#allocation4 + $0xb0] sm:$0xff]
      %v4520 = vld [vmem:[#allocation4 + $0xb8] sm:$0xff]
      %v4521 = vld [vmem:[#allocation4 + $0xc0] sm:$0xff]
      %v4522 = vld [vmem:[#allocation4 + $0xc8] sm:$0xff]
      %v4523 = vld [vmem:[#allocation4 + $0xd0] sm:$0xff]
      %v4524 = vld [vmem:[#allocation4 + $0xd8] sm:$0xff]
      %v4525 = vld [vmem:[#allocation4 + $0xe0] sm:$0xff]
      %v4526 = vld [vmem:[#allocation4 + $0xe8] sm:$0xff]
      %v4527 = vld [vmem:[#allocation4 + $0xf0] sm:$0xff]
      %v4528 = vld [vmem:[#allocation4 + $0xf8] sm:$0xff]
      %v4529 = vld [vmem:[#allocation4 + $0x100] sm:$0xff]
      %v4530 = vld [vmem:[#allocation4 + $0x108] sm:$0xff]
      %v4531 = vld [vmem:[#allocation4 + $0x110] sm:$0xff]
      %v4532 = vld [vmem:[#allocation4 + $0x118] sm:$0xff]
      %v4533 = vadd.f32 %v4084, %v4497
      %v4534 = vadd.f32 %v4085, %v4498
      %v4535 = vadd.f32 %v4086, %v4499
      %v4536 = vadd.f32 %v4087, %v4500
      %v4537 = vadd.f32 %v4088, %v4501
      %v4538 = vadd.f32 %v4089, %v4502
      %v4539 = vadd.f32 %v4090, %v4503
      %v4540 = vadd.f32 %v4091, %v4504
      %v4541 = vadd.f32 %v4092, %v4505
      %v4542 = vadd.f32 %v4093, %v4506
      %v4543 = vadd.f32 %v4094, %v4507
      %v4544 = vadd.f32 %v4095, %v4508
      %v4545 = vadd.f32 %v4096, %v4509
      %v4546 = vadd.f32 %v4097, %v4510
      %v4547 = vadd.f32 %v4098, %v4511
      %v4548 = vadd.f32 %v4099, %v4512
      %v4549 = vadd.f32 %v4100, %v4513
      %v4550 = vadd.f32 %v4101, %v4514
      %v4551 = vadd.f32 %v4102, %v4515
      %v4552 = vadd.f32 %v4103, %v4516
      %v4553 = vadd.f32 %v4104, %v4517
      %v4554 = vadd.f32 %v4105, %v4518
      %v4555 = vadd.f32 %v4106, %v4519
      %v4556 = vadd.f32 %v4107, %v4520
      %v4557 = vadd.f32 %v4108, %v4521
      %v4558 = vadd.f32 %v4109, %v4522
      %v4559 = vadd.f32 %v4110, %v4523
      %v4560 = vadd.f32 %v4111, %v4524
      %v4561 = vadd.f32 %v4112, %v4525
      %v4562 = vadd.f32 %v4113, %v4526
      %v4563 = vadd.f32 %v4114, %v4527
      %v4564 = vadd.f32 %v4115, %v4528
      %v4565 = vadd.f32 %v4116, %v4529
      %v4566 = vadd.f32 %v4117, %v4530
      %v4567 = vadd.f32 %v4118, %v4531
      %v4568 = vadd.f32 %v4119, %v4532
      %v4569 = vld [vmem:[#allocation4 + $0x1] sm:$0xff]
      %v4570 = vld [vmem:[#allocation4 + $0x9] sm:$0xff]
      %v4571 = vld [vmem:[#allocation4 + $0x11] sm:$0xff]
      %v4572 = vld [vmem:[#allocation4 + $0x19] sm:$0xff]
      %v4573 = vld [vmem:[#allocation4 + $0x21] sm:$0xff]
      %v4574 = vld [vmem:[#allocation4 + $0x29] sm:$0xff]
      %v4575 = vld [vmem:[#allocation4 + $0x31] sm:$0xff]
      %v4576 = vld [vmem:[#allocation4 + $0x39] sm:$0xff]
      %v4577 = vld [vmem:[#allocation4 + $0x41] sm:$0xff]
      %v4578 = vld [vmem:[#allocation4 + $0x49] sm:$0xff]
      %v4579 = vld [vmem:[#allocation4 + $0x51] sm:$0xff]
      %v4580 = vld [vmem:[#allocation4 + $0x59] sm:$0xff]
      %v4581 = vld [vmem:[#allocation4 + $0x61] sm:$0xff]
      %v4582 = vld [vmem:[#allocation4 + $0x69] sm:$0xff]
      %v4583 = vld [vmem:[#allocation4 + $0x71] sm:$0xff]
      %v4584 = vld [vmem:[#allocation4 + $0x79] sm:$0xff]
      %v4585 = vld [vmem:[#allocation4 + $0x81] sm:$0xff]
      %v4586 = vld [vmem:[#allocation4 + $0x89] sm:$0xff]
      %v4587 = vld [vmem:[#allocation4 + $0x91] sm:$0xff]
      %v4588 = vld [vmem:[#allocation4 + $0x99] sm:$0xff]
      %v4589 = vld [vmem:[#allocation4 + $0xa1] sm:$0xff]
      %v4590 = vld [vmem:[#allocation4 + $0xa9] sm:$0xff]
      %v4591 = vld [vmem:[#allocation4 + $0xb1] sm:$0xff]
      %v4592 = vld [vmem:[#allocation4 + $0xb9] sm:$0xff]
      %v4593 = vld [vmem:[#allocation4 + $0xc1] sm:$0xff]
      %v4594 = vld [vmem:[#allocation4 + $0xc9] sm:$0xff]
      %v4595 = vld [vmem:[#allocation4 + $0xd1] sm:$0xff]
      %v4596 = vld [vmem:[#allocation4 + $0xd9] sm:$0xff]
      %v4597 = vld [vmem:[#allocation4 + $0xe1] sm:$0xff]
      %v4598 = vld [vmem:[#allocation4 + $0xe9] sm:$0xff]
      %v4599 = vld [vmem:[#allocation4 + $0xf1] sm:$0xff]
      %v4600 = vld [vmem:[#allocation4 + $0xf9] sm:$0xff]
      %v4601 = vld [vmem:[#allocation4 + $0x101] sm:$0xff]
      %v4602 = vld [vmem:[#allocation4 + $0x109] sm:$0xff]
      %v4603 = vld [vmem:[#allocation4 + $0x111] sm:$0xff]
      %v4604 = vld [vmem:[#allocation4 + $0x119] sm:$0xff]
      %4641 = vrot.lane.b32.xlu0 %v4569, 120
      %v4642 = vpop.permute.xlu0 %4641
      %4643 = vrot.lane.b32.xlu0 %v4570, 120
      %v4644 = vpop.permute.xlu0 %4643
      %4645 = vrot.lane.b32.xlu0 %v4571, 120
      %v4646 = vpop.permute.xlu0 %4645
      %4647 = vrot.lane.b32.xlu0 %v4572, 120
      %v4648 = vpop.permute.xlu0 %4647
      %4649 = vrot.lane.b32.xlu0 %v4573, 120
      %v4650 = vpop.permute.xlu0 %4649
      %4651 = vrot.lane.b32.xlu0 %v4574, 120
      %v4652 = vpop.permute.xlu0 %4651
      %4653 = vrot.lane.b32.xlu0 %v4575, 120
      %v4654 = vpop.permute.xlu0 %4653
      %4655 = vrot.lane.b32.xlu0 %v4576, 120
      %v4656 = vpop.permute.xlu0 %4655
      %4657 = vrot.lane.b32.xlu0 %v4577, 120
      %v4658 = vpop.permute.xlu0 %4657
      %4659 = vrot.lane.b32.xlu0 %v4578, 120
      %v4660 = vpop.permute.xlu0 %4659
      %4661 = vrot.lane.b32.xlu0 %v4579, 120
      %v4662 = vpop.permute.xlu0 %4661
      %4663 = vrot.lane.b32.xlu0 %v4580, 120
      %v4664 = vpop.permute.xlu0 %4663
      %4665 = vrot.lane.b32.xlu0 %v4581, 120
      %v4666 = vpop.permute.xlu0 %4665
      %4667 = vrot.lane.b32.xlu0 %v4582, 120
      %v4668 = vpop.permute.xlu0 %4667
      %4669 = vrot.lane.b32.xlu0 %v4583, 120
      %v4670 = vpop.permute.xlu0 %4669
      %4671 = vrot.lane.b32.xlu0 %v4584, 120
      %v4672 = vpop.permute.xlu0 %4671
      %4673 = vrot.lane.b32.xlu0 %v4585, 120
      %v4674 = vpop.permute.xlu0 %4673
      %4675 = vrot.lane.b32.xlu0 %v4586, 120
      %v4676 = vpop.permute.xlu0 %4675
      %4677 = vrot.lane.b32.xlu0 %v4587, 120
      %v4678 = vpop.permute.xlu0 %4677
      %4679 = vrot.lane.b32.xlu0 %v4588, 120
      %v4680 = vpop.permute.xlu0 %4679
      %4681 = vrot.lane.b32.xlu0 %v4589, 120
      %v4682 = vpop.permute.xlu0 %4681
      %4683 = vrot.lane.b32.xlu0 %v4590, 120
      %v4684 = vpop.permute.xlu0 %4683
      %4685 = vrot.lane.b32.xlu0 %v4591, 120
      %v4686 = vpop.permute.xlu0 %4685
      %4687 = vrot.lane.b32.xlu0 %v4592, 120
      %v4688 = vpop.permute.xlu0 %4687
      %4689 = vrot.lane.b32.xlu0 %v4593, 120
      %v4690 = vpop.permute.xlu0 %4689
      %4691 = vrot.lane.b32.xlu0 %v4594, 120
      %v4692 = vpop.permute.xlu0 %4691
      %4693 = vrot.lane.b32.xlu0 %v4595, 120
      %v4694 = vpop.permute.xlu0 %4693
      %4695 = vrot.lane.b32.xlu0 %v4596, 120
      %v4696 = vpop.permute.xlu0 %4695
      %4697 = vrot.lane.b32.xlu0 %v4597, 120
      %v4698 = vpop.permute.xlu0 %4697
      %4699 = vrot.lane.b32.xlu0 %v4598, 120
      %v4700 = vpop.permute.xlu0 %4699
      %4701 = vrot.lane.b32.xlu0 %v4599, 120
      %v4702 = vpop.permute.xlu0 %4701
      %4703 = vrot.lane.b32.xlu0 %v4600, 120
      %v4704 = vpop.permute.xlu0 %4703
      %4705 = vrot.lane.b32.xlu0 %v4601, 120
      %v4706 = vpop.permute.xlu0 %4705
      %4707 = vrot.lane.b32.xlu0 %v4602, 120
      %v4708 = vpop.permute.xlu0 %4707
      %4709 = vrot.lane.b32.xlu0 %v4603, 120
      %v4710 = vpop.permute.xlu0 %4709
      %4711 = vrot.lane.b32.xlu0 %v4604, 120
      %v4712 = vpop.permute.xlu0 %4711
      %v4749 = vadd.f32 %v4533, %v4642
      %v4750 = vadd.f32 %v4534, %v4644
      %v4751 = vadd.f32 %v4535, %v4646
      %v4752 = vadd.f32 %v4536, %v4648
      %v4753 = vadd.f32 %v4537, %v4650
      %v4754 = vadd.f32 %v4538, %v4652
      %v4755 = vadd.f32 %v4539, %v4654
      %v4756 = vadd.f32 %v4540, %v4656
      %v4757 = vadd.f32 %v4541, %v4658
      %v4758 = vadd.f32 %v4542, %v4660
      %v4759 = vadd.f32 %v4543, %v4662
      %v4760 = vadd.f32 %v4544, %v4664
      %v4761 = vadd.f32 %v4545, %v4666
      %v4762 = vadd.f32 %v4546, %v4668
      %v4763 = vadd.f32 %v4547, %v4670
      %v4764 = vadd.f32 %v4548, %v4672
      %v4765 = vadd.f32 %v4549, %v4674
      %v4766 = vadd.f32 %v4550, %v4676
      %v4767 = vadd.f32 %v4551, %v4678
      %v4768 = vadd.f32 %v4552, %v4680
      %v4769 = vadd.f32 %v4553, %v4682
      %v4770 = vadd.f32 %v4554, %v4684
      %v4771 = vadd.f32 %v4555, %v4686
      %v4772 = vadd.f32 %v4556, %v4688
      %v4773 = vadd.f32 %v4557, %v4690
      %v4774 = vadd.f32 %v4558, %v4692
      %v4775 = vadd.f32 %v4559, %v4694
      %v4776 = vadd.f32 %v4560, %v4696
      %v4777 = vadd.f32 %v4561, %v4698
      %v4778 = vadd.f32 %v4562, %v4700
      %v4779 = vadd.f32 %v4563, %v4702
      %v4780 = vadd.f32 %v4564, %v4704
      %v4781 = vadd.f32 %v4565, %v4706
      %v4782 = vadd.f32 %v4566, %v4708
      %v4783 = vadd.f32 %v4567, %v4710
      %v4784 = vadd.f32 %v4568, %v4712
      %v4785 = vld [vmem:[#allocation4 + $0x2] sm:$0xff]
      %v4786 = vld [vmem:[#allocation4 + $0xa] sm:$0xff]
      %v4787 = vld [vmem:[#allocation4 + $0x12] sm:$0xff]
      %v4788 = vld [vmem:[#allocation4 + $0x1a] sm:$0xff]
      %v4789 = vld [vmem:[#allocation4 + $0x22] sm:$0xff]
      %v4790 = vld [vmem:[#allocation4 + $0x2a] sm:$0xff]
      %v4791 = vld [vmem:[#allocation4 + $0x32] sm:$0xff]
      %v4792 = vld [vmem:[#allocation4 + $0x3a] sm:$0xff]
      %v4793 = vld [vmem:[#allocation4 + $0x42] sm:$0xff]
      %v4794 = vld [vmem:[#allocation4 + $0x4a] sm:$0xff]
      %v4795 = vld [vmem:[#allocation4 + $0x52] sm:$0xff]
      %v4796 = vld [vmem:[#allocation4 + $0x5a] sm:$0xff]
      %v4797 = vld [vmem:[#allocation4 + $0x62] sm:$0xff]
      %v4798 = vld [vmem:[#allocation4 + $0x6a] sm:$0xff]
      %v4799 = vld [vmem:[#allocation4 + $0x72] sm:$0xff]
      %v4800 = vld [vmem:[#allocation4 + $0x7a] sm:$0xff]
      %v4801 = vld [vmem:[#allocation4 + $0x82] sm:$0xff]
      %v4802 = vld [vmem:[#allocation4 + $0x8a] sm:$0xff]
      %v4803 = vld [vmem:[#allocation4 + $0x92] sm:$0xff]
      %v4804 = vld [vmem:[#allocation4 + $0x9a] sm:$0xff]
      %v4805 = vld [vmem:[#allocation4 + $0xa2] sm:$0xff]
      %v4806 = vld [vmem:[#allocation4 + $0xaa] sm:$0xff]
      %v4807 = vld [vmem:[#allocation4 + $0xb2] sm:$0xff]
      %v4808 = vld [vmem:[#allocation4 + $0xba] sm:$0xff]
      %v4809 = vld [vmem:[#allocation4 + $0xc2] sm:$0xff]
      %v4810 = vld [vmem:[#allocation4 + $0xca] sm:$0xff]
      %v4811 = vld [vmem:[#allocation4 + $0xd2] sm:$0xff]
      %v4812 = vld [vmem:[#allocation4 + $0xda] sm:$0xff]
      %v4813 = vld [vmem:[#allocation4 + $0xe2] sm:$0xff]
      %v4814 = vld [vmem:[#allocation4 + $0xea] sm:$0xff]
      %v4815 = vld [vmem:[#allocation4 + $0xf2] sm:$0xff]
      %v4816 = vld [vmem:[#allocation4 + $0xfa] sm:$0xff]
      %v4817 = vld [vmem:[#allocation4 + $0x102] sm:$0xff]
      %v4818 = vld [vmem:[#allocation4 + $0x10a] sm:$0xff]
      %v4819 = vld [vmem:[#allocation4 + $0x112] sm:$0xff]
      %v4820 = vld [vmem:[#allocation4 + $0x11a] sm:$0xff]
      %4857 = vrot.lane.b32.xlu0 %v4785, 112
      %v4858 = vpop.permute.xlu0 %4857
      %4859 = vrot.lane.b32.xlu0 %v4786, 112
      %v4860 = vpop.permute.xlu0 %4859
      %4861 = vrot.lane.b32.xlu0 %v4787, 112
      %v4862 = vpop.permute.xlu0 %4861
      %4863 = vrot.lane.b32.xlu0 %v4788, 112
      %v4864 = vpop.permute.xlu0 %4863
      %4865 = vrot.lane.b32.xlu0 %v4789, 112
      %v4866 = vpop.permute.xlu0 %4865
      %4867 = vrot.lane.b32.xlu0 %v4790, 112
      %v4868 = vpop.permute.xlu0 %4867
      %4869 = vrot.lane.b32.xlu0 %v4791, 112
      %v4870 = vpop.permute.xlu0 %4869
      %4871 = vrot.lane.b32.xlu0 %v4792, 112
      %v4872 = vpop.permute.xlu0 %4871
      %4873 = vrot.lane.b32.xlu0 %v4793, 112
      %v4874 = vpop.permute.xlu0 %4873
      %4875 = vrot.lane.b32.xlu0 %v4794, 112
      %v4876 = vpop.permute.xlu0 %4875
      %4877 = vrot.lane.b32.xlu0 %v4795, 112
      %v4878 = vpop.permute.xlu0 %4877
      %4879 = vrot.lane.b32.xlu0 %v4796, 112
      %v4880 = vpop.permute.xlu0 %4879
      %4881 = vrot.lane.b32.xlu0 %v4797, 112
      %v4882 = vpop.permute.xlu0 %4881
      %4883 = vrot.lane.b32.xlu0 %v4798, 112
      %v4884 = vpop.permute.xlu0 %4883
      %4885 = vrot.lane.b32.xlu0 %v4799, 112
      %v4886 = vpop.permute.xlu0 %4885
      %4887 = vrot.lane.b32.xlu0 %v4800, 112
      %v4888 = vpop.permute.xlu0 %4887
      %4889 = vrot.lane.b32.xlu0 %v4801, 112
      %v4890 = vpop.permute.xlu0 %4889
      %4891 = vrot.lane.b32.xlu0 %v4802, 112
      %v4892 = vpop.permute.xlu0 %4891
      %4893 = vrot.lane.b32.xlu0 %v4803, 112
      %v4894 = vpop.permute.xlu0 %4893
      %4895 = vrot.lane.b32.xlu0 %v4804, 112
      %v4896 = vpop.permute.xlu0 %4895
      %4897 = vrot.lane.b32.xlu0 %v4805, 112
      %v4898 = vpop.permute.xlu0 %4897
      %4899 = vrot.lane.b32.xlu0 %v4806, 112
      %v4900 = vpop.permute.xlu0 %4899
      %4901 = vrot.lane.b32.xlu0 %v4807, 112
      %v4902 = vpop.permute.xlu0 %4901
      %4903 = vrot.lane.b32.xlu0 %v4808, 112
      %v4904 = vpop.permute.xlu0 %4903
      %4905 = vrot.lane.b32.xlu0 %v4809, 112
      %v4906 = vpop.permute.xlu0 %4905
      %4907 = vrot.lane.b32.xlu0 %v4810, 112
      %v4908 = vpop.permute.xlu0 %4907
      %4909 = vrot.lane.b32.xlu0 %v4811, 112
      %v4910 = vpop.permute.xlu0 %4909
      %4911 = vrot.lane.b32.xlu0 %v4812, 112
      %v4912 = vpop.permute.xlu0 %4911
      %4913 = vrot.lane.b32.xlu0 %v4813, 112
      %v4914 = vpop.permute.xlu0 %4913
      %4915 = vrot.lane.b32.xlu0 %v4814, 112
      %v4916 = vpop.permute.xlu0 %4915
      %4917 = vrot.lane.b32.xlu0 %v4815, 112
      %v4918 = vpop.permute.xlu0 %4917
      %4919 = vrot.lane.b32.xlu0 %v4816, 112
      %v4920 = vpop.permute.xlu0 %4919
      %4921 = vrot.lane.b32.xlu0 %v4817, 112
      %v4922 = vpop.permute.xlu0 %4921
      %4923 = vrot.lane.b32.xlu0 %v4818, 112
      %v4924 = vpop.permute.xlu0 %4923
      %4925 = vrot.lane.b32.xlu0 %v4819, 112
      %v4926 = vpop.permute.xlu0 %4925
      %4927 = vrot.lane.b32.xlu0 %v4820, 112
      %v4928 = vpop.permute.xlu0 %4927
      %v4965 = vadd.f32 %v4749, %v4858
      %v4966 = vadd.f32 %v4750, %v4860
      %v4967 = vadd.f32 %v4751, %v4862
      %v4968 = vadd.f32 %v4752, %v4864
      %v4969 = vadd.f32 %v4753, %v4866
      %v4970 = vadd.f32 %v4754, %v4868
      %v4971 = vadd.f32 %v4755, %v4870
      %v4972 = vadd.f32 %v4756, %v4872
      %v4973 = vadd.f32 %v4757, %v4874
      %v4974 = vadd.f32 %v4758, %v4876
      %v4975 = vadd.f32 %v4759, %v4878
      %v4976 = vadd.f32 %v4760, %v4880
      %v4977 = vadd.f32 %v4761, %v4882
      %v4978 = vadd.f32 %v4762, %v4884
      %v4979 = vadd.f32 %v4763, %v4886
      %v4980 = vadd.f32 %v4764, %v4888
      %v4981 = vadd.f32 %v4765, %v4890
      %v4982 = vadd.f32 %v4766, %v4892
      %v4983 = vadd.f32 %v4767, %v4894
      %v4984 = vadd.f32 %v4768, %v4896
      %v4985 = vadd.f32 %v4769, %v4898
      %v4986 = vadd.f32 %v4770, %v4900
      %v4987 = vadd.f32 %v4771, %v4902
      %v4988 = vadd.f32 %v4772, %v4904
      %v4989 = vadd.f32 %v4773, %v4906
      %v4990 = vadd.f32 %v4774, %v4908
      %v4991 = vadd.f32 %v4775, %v4910
      %v4992 = vadd.f32 %v4776, %v4912
      %v4993 = vadd.f32 %v4777, %v4914
      %v4994 = vadd.f32 %v4778, %v4916
      %v4995 = vadd.f32 %v4779, %v4918
      %v4996 = vadd.f32 %v4780, %v4920
      %v4997 = vadd.f32 %v4781, %v4922
      %v4998 = vadd.f32 %v4782, %v4924
      %v4999 = vadd.f32 %v4783, %v4926
      %v5000 = vadd.f32 %v4784, %v4928
      %v5001 = vld [vmem:[#allocation2 + $0x10] sm:$0xc]
      %v5002 = vld [vmem:[#allocation2 + $0x14] sm:$0xf]
      %v5003 = vld [vmem:[#allocation2 + $0x18] sm:$0xf]
      %v5004 = vld [vmem:[#allocation2 + $0x1c] sm:$0xf]
      %v5005 = vld [vmem:[#allocation2 + $0x20] sm:$0xf]
      %v5006 = vld [vmem:[#allocation2 + $0x24] sm:$0xf]
      %v5007 = vld [vmem:[#allocation2 + $0x28] sm:$0xf]
      %v5008 = vld [vmem:[#allocation2 + $0x2c] sm:$0xf]
      %v5009 = vld [vmem:[#allocation2 + $0x30] sm:$0xf]
      %v5010 = vld [vmem:[#allocation2 + $0x34] sm:$0xf]
      %v5011 = vld [vmem:[#allocation2 + $0x38] sm:$0xf]
      %v5012 = vld [vmem:[#allocation2 + $0x3c] sm:$0xf]
      %v5013 = vld [vmem:[#allocation2 + $0x40] sm:$0xf]
      %v5014 = vld [vmem:[#allocation2 + $0x44] sm:$0xf]
      %v5015 = vld [vmem:[#allocation2 + $0x48] sm:$0xf]
      %v5016 = vld [vmem:[#allocation2 + $0x4c] sm:$0xf]
      %v5017 = vld [vmem:[#allocation2 + $0x50] sm:$0xf]
      %v5018 = vld [vmem:[#allocation2 + $0x54] sm:$0xf]
      %v5019 = vld [vmem:[#allocation2 + $0x58] sm:$0xf]
      %v5020 = vld [vmem:[#allocation2 + $0x5c] sm:$0xf]
      %v5021 = vld [vmem:[#allocation2 + $0x60] sm:$0xf]
      %v5022 = vld [vmem:[#allocation2 + $0x64] sm:$0xf]
      %v5023 = vld [vmem:[#allocation2 + $0x68] sm:$0xf]
      %v5024 = vld [vmem:[#allocation2 + $0x6c] sm:$0xf]
      %v5025 = vld [vmem:[#allocation2 + $0x70] sm:$0xf]
      %v5026 = vld [vmem:[#allocation2 + $0x74] sm:$0xf]
      %v5027 = vld [vmem:[#allocation2 + $0x78] sm:$0xf]
      %v5028 = vld [vmem:[#allocation2 + $0x7c] sm:$0xf]
      %v5029 = vld [vmem:[#allocation2 + $0x80] sm:$0xf]
      %v5030 = vld [vmem:[#allocation2 + $0x84] sm:$0xf]
      %v5031 = vld [vmem:[#allocation2 + $0x88] sm:$0xf]
      %v5032 = vld [vmem:[#allocation2 + $0x8c] sm:$0xf]
      %v5033 = vld [vmem:[#allocation2 + $0x90] sm:$0xf]
      %v5034 = vld [vmem:[#allocation2 + $0x94] sm:$0xf]
      %v5035 = vld [vmem:[#allocation2 + $0x98] sm:$0xf]
      %v5036 = vld [vmem:[#allocation2 + $0x9c] sm:$0xf]
      %v5037 = vld [vmem:[#allocation2 + $0xa0] sm:$0xf]
      %v5038 = vld [vmem:[#allocation2 + $0xa4] sm:$0x3]
      %s5039 = scalar_lea.vmem %s1, 16
      %v5040 = vld [vmem:[%s5039] sm:$0xf]
      %v5041 = vld [vmem:[%s5039 + $0x4] sm:$0xf]
      %v5080 = vunpack.c.l.b16 %v5001
      %v5081 = vunpack.c.l.b16 %v5002
      %v5082 = vunpack.c.l.b16 %v5003
      %v5083 = vunpack.c.l.b16 %v5004
      %v5084 = vunpack.c.l.b16 %v5005
      %v5085 = vunpack.c.l.b16 %v5006
      %v5086 = vunpack.c.l.b16 %v5007
      %v5087 = vunpack.c.l.b16 %v5008
      %v5088 = vunpack.c.l.b16 %v5009
      %v5089 = vunpack.c.l.b16 %v5010
      %v5090 = vunpack.c.l.b16 %v5011
      %v5091 = vunpack.c.l.b16 %v5012
      %v5092 = vunpack.c.l.b16 %v5013
      %v5093 = vunpack.c.l.b16 %v5014
      %v5094 = vunpack.c.l.b16 %v5015
      %v5095 = vunpack.c.l.b16 %v5016
      %v5096 = vunpack.c.l.b16 %v5017
      %v5097 = vunpack.c.l.b16 %v5018
      %v5098 = vunpack.c.l.b16 %v5019
      %v5099 = vunpack.c.l.b16 %v5020
      %v5100 = vunpack.c.l.b16 %v5021
      %v5101 = vunpack.c.l.b16 %v5022
      %v5102 = vunpack.c.l.b16 %v5023
      %v5103 = vunpack.c.l.b16 %v5024
      %v5104 = vunpack.c.l.b16 %v5025
      %v5105 = vunpack.c.l.b16 %v5026
      %v5106 = vunpack.c.l.b16 %v5027
      %v5107 = vunpack.c.l.b16 %v5028
      %v5108 = vunpack.c.l.b16 %v5029
      %v5109 = vunpack.c.l.b16 %v5030
      %v5110 = vunpack.c.l.b16 %v5031
      %v5111 = vunpack.c.l.b16 %v5032
      %v5112 = vunpack.c.l.b16 %v5033
      %v5113 = vunpack.c.l.b16 %v5034
      %v5114 = vunpack.c.l.b16 %v5035
      %v5115 = vunpack.c.l.b16 %v5036
      %v5116 = vunpack.c.l.b16 %v5037
      %v5117 = vunpack.c.l.b16 %v5038
      %v5118 = vpack.c.b16 %v5081, %v5080
      %v5119 = vpack.c.b16 %v5083, %v5082
      %v5120 = vpack.c.b16 %v5085, %v5084
      %v5121 = vpack.c.b16 %v5087, %v5086
      %v5122 = vpack.c.b16 %v5089, %v5088
      %v5123 = vpack.c.b16 %v5091, %v5090
      %v5124 = vpack.c.b16 %v5093, %v5092
      %v5125 = vpack.c.b16 %v5095, %v5094
      %v5126 = vpack.c.b16 %v5097, %v5096
      %v5127 = vpack.c.b16 %v5099, %v5098
      %v5128 = vpack.c.b16 %v5101, %v5100
      %v5129 = vpack.c.b16 %v5103, %v5102
      %v5130 = vpack.c.b16 %v5105, %v5104
      %v5131 = vpack.c.b16 %v5107, %v5106
      %v5132 = vpack.c.b16 %v5109, %v5108
      %v5133 = vpack.c.b16 %v5111, %v5110
      %v5134 = vpack.c.b16 %v5113, %v5112
      %v5135 = vpack.c.b16 %v5115, %v5114
      %v5136 = vpack.c.b16 %v5117, %v5116
      %vm5137 = vcmask 1045504
      %v5138 = vrot.slane %v5118, 2
      %v5139 = vrot.slane %v5119, 2
      %v5140 = vsel %vm5137, %v5138, %v5139
      %v5141 = vrot.slane %v5120, 2
      %v5142 = vsel %vm5137, %v5139, %v5141
      %v5143 = vrot.slane %v5121, 2
      %v5144 = vsel %vm5137, %v5141, %v5143
      %v5145 = vrot.slane %v5122, 2
      %v5146 = vsel %vm5137, %v5143, %v5145
      %v5147 = vrot.slane %v5123, 2
      %v5148 = vsel %vm5137, %v5145, %v5147
      %v5149 = vrot.slane %v5124, 2
      %v5150 = vsel %vm5137, %v5147, %v5149
      %v5151 = vrot.slane %v5125, 2
      %v5152 = vsel %vm5137, %v5149, %v5151
      %v5153 = vrot.slane %v5126, 2
      %v5154 = vsel %vm5137, %v5151, %v5153
      %v5155 = vrot.slane %v5127, 2
      %v5156 = vsel %vm5137, %v5153, %v5155
      %v5157 = vrot.slane %v5128, 2
      %v5158 = vsel %vm5137, %v5155, %v5157
      %v5159 = vrot.slane %v5129, 2
      %v5160 = vsel %vm5137, %v5157, %v5159
      %v5161 = vrot.slane %v5130, 2
      %v5162 = vsel %vm5137, %v5159, %v5161
      %v5163 = vrot.slane %v5131, 2
      %v5164 = vsel %vm5137, %v5161, %v5163
      %v5165 = vrot.slane %v5132, 2
      %v5166 = vsel %vm5137, %v5163, %v5165
      %v5167 = vrot.slane %v5133, 2
      %v5168 = vsel %vm5137, %v5165, %v5167
      %v5169 = vrot.slane %v5134, 2
      %v5170 = vsel %vm5137, %v5167, %v5169
      %v5171 = vrot.slane %v5135, 2
      %v5172 = vsel %vm5137, %v5169, %v5171
      %v5173 = vrot.slane %v5136, 2
      %v5174 = vsel %vm5137, %v5171, %v5173
      %v5177 = vunpack.c.l.b16 %v5040
      %v5178 = vunpack.c.l.b16 %v5041
      %v5179 = vpack.c.b16 %v5178, %v5177
      %v5182 = vsel %vm3417, %v5140, 0
      %v5185 = vsel %vm3417, %v5142, 0
      %v5188 = vsel %vm3417, %v5144, 0
      %v5191 = vsel %vm3417, %v5146, 0
      %v5194 = vsel %vm3417, %v5148, 0
      %v5197 = vsel %vm3417, %v5150, 0
      %v5200 = vsel %vm3417, %v5152, 0
      %v5203 = vsel %vm3417, %v5154, 0
      %v5206 = vsel %vm3417, %v5156, 0
      %v5209 = vsel %vm3417, %v5158, 0
      %v5212 = vsel %vm3417, %v5160, 0
      %v5215 = vsel %vm3417, %v5162, 0
      %v5218 = vsel %vm3417, %v5164, 0
      %v5221 = vsel %vm3417, %v5166, 0
      %v5224 = vsel %vm3417, %v5168, 0
      %v5227 = vsel %vm3417, %v5170, 0
      %v5230 = vsel %vm3417, %v5172, 0
      %v5233 = vsel %vm3417, %v5174, 0
      %v5236 = vsel %vm3417, %v5173, 0
      %5238 = vmatpush.bf16.msra.mxu0 0
      %5239 = vmatpush.bf16.msra.mxu0 0
      %5240 = vmatpush.bf16.msra.mxu0 0
      %5241 = vmatpush.bf16.msra.mxu0 0
      %5242 = vmatpush.bf16.msra.mxu0 0
      %5243 = vmatpush.bf16.msra.mxu0 0
      %5244 = vmatpush.bf16.msra.mxu0 0
      %5245 = vmatpush.bf16.msra.mxu0 %v5179
      %5246 = vmatmul.bf16.gmra.mxu0 %v5182
      %v5247 = vpop.f32.mrf.mxu0
      %v5248 = vadd.f32 0.0, %v5247
      %v5249 = vpop.f32.mrf.mxu0
      %v5250 = vadd.f32 0.0, %v5249
      %5251 = vmatmul.bf16.gmra.mxu0 %v5185
      %v5252 = vpop.f32.mrf.mxu0
      %v5253 = vadd.f32 0.0, %v5252
      %v5254 = vpop.f32.mrf.mxu0
      %v5255 = vadd.f32 0.0, %v5254
      %5256 = vmatmul.bf16.gmra.mxu0 %v5188
      %v5257 = vpop.f32.mrf.mxu0
      %v5258 = vadd.f32 0.0, %v5257
      %v5259 = vpop.f32.mrf.mxu0
      %v5260 = vadd.f32 0.0, %v5259
      %5261 = vmatmul.bf16.gmra.mxu0 %v5191
      %v5262 = vpop.f32.mrf.mxu0
      %v5263 = vadd.f32 0.0, %v5262
      %v5264 = vpop.f32.mrf.mxu0
      %v5265 = vadd.f32 0.0, %v5264
      %5266 = vmatmul.bf16.gmra.mxu0 %v5194
      %v5267 = vpop.f32.mrf.mxu0
      %v5268 = vadd.f32 0.0, %v5267
      %v5269 = vpop.f32.mrf.mxu0
      %v5270 = vadd.f32 0.0, %v5269
      %5271 = vmatmul.bf16.gmra.mxu0 %v5197
      %v5272 = vpop.f32.mrf.mxu0
      %v5273 = vadd.f32 0.0, %v5272
      %v5274 = vpop.f32.mrf.mxu0
      %v5275 = vadd.f32 0.0, %v5274
      %5276 = vmatmul.bf16.gmra.mxu0 %v5200
      %v5277 = vpop.f32.mrf.mxu0
      %v5278 = vadd.f32 0.0, %v5277
      %v5279 = vpop.f32.mrf.mxu0
      %v5280 = vadd.f32 0.0, %v5279
      %5281 = vmatmul.bf16.gmra.mxu0 %v5203
      %v5282 = vpop.f32.mrf.mxu0
      %v5283 = vadd.f32 0.0, %v5282
      %v5284 = vpop.f32.mrf.mxu0
      %v5285 = vadd.f32 0.0, %v5284
      %5286 = vmatmul.bf16.gmra.mxu0 %v5206
      %v5287 = vpop.f32.mrf.mxu0
      %v5288 = vadd.f32 0.0, %v5287
      %v5289 = vpop.f32.mrf.mxu0
      %v5290 = vadd.f32 0.0, %v5289
      %5291 = vmatmul.bf16.gmra.mxu0 %v5209
      %v5292 = vpop.f32.mrf.mxu0
      %v5293 = vadd.f32 0.0, %v5292
      %v5294 = vpop.f32.mrf.mxu0
      %v5295 = vadd.f32 0.0, %v5294
      %5296 = vmatmul.bf16.gmra.mxu0 %v5212
      %v5297 = vpop.f32.mrf.mxu0
      %v5298 = vadd.f32 0.0, %v5297
      %v5299 = vpop.f32.mrf.mxu0
      %v5300 = vadd.f32 0.0, %v5299
      %5301 = vmatmul.bf16.gmra.mxu0 %v5215
      %v5302 = vpop.f32.mrf.mxu0
      %v5303 = vadd.f32 0.0, %v5302
      %v5304 = vpop.f32.mrf.mxu0
      %v5305 = vadd.f32 0.0, %v5304
      %5306 = vmatmul.bf16.gmra.mxu0 %v5218
      %v5307 = vpop.f32.mrf.mxu0
      %v5308 = vadd.f32 0.0, %v5307
      %v5309 = vpop.f32.mrf.mxu0
      %v5310 = vadd.f32 0.0, %v5309
      %5311 = vmatmul.bf16.gmra.mxu0 %v5221
      %v5312 = vpop.f32.mrf.mxu0
      %v5313 = vadd.f32 0.0, %v5312
      %v5314 = vpop.f32.mrf.mxu0
      %v5315 = vadd.f32 0.0, %v5314
      %5316 = vmatmul.bf16.gmra.mxu0 %v5224
      %v5317 = vpop.f32.mrf.mxu0
      %v5318 = vadd.f32 0.0, %v5317
      %v5319 = vpop.f32.mrf.mxu0
      %v5320 = vadd.f32 0.0, %v5319
      %5321 = vmatmul.bf16.gmra.mxu0 %v5227
      %v5322 = vpop.f32.mrf.mxu0
      %v5323 = vadd.f32 0.0, %v5322
      %v5324 = vpop.f32.mrf.mxu0
      %v5325 = vadd.f32 0.0, %v5324
      %5326 = vmatmul.bf16.gmra.mxu0 %v5230
      %v5327 = vpop.f32.mrf.mxu0
      %v5328 = vadd.f32 0.0, %v5327
      %v5329 = vpop.f32.mrf.mxu0
      %v5330 = vadd.f32 0.0, %v5329
      %5331 = vmatmul.bf16.gmra.mxu0 %v5233
      %v5332 = vpop.f32.mrf.mxu0
      %v5333 = vadd.f32 0.0, %v5332
      %v5334 = vpop.f32.mrf.mxu0
      %v5335 = vadd.f32 0.0, %v5334
      %5336 = vmatmul.bf16.gmra.mxu0 %v5236
      %v5337 = vpop.f32.mrf.mxu0
      %v5338 = vadd.f32 0.0, %v5337
      %v5339 = vpop.f32.mrf.mxu0
      %5340 = vdwg.mxu0
      %5341 = vst.msk [vmem:[#allocation4] sm:$0xff] %vm3578, %v5248
      %5342 = vst.msk [vmem:[#allocation4 + $0x8] sm:$0xff] %vm3578, %v5250
      %5343 = vst.msk [vmem:[#allocation4 + $0x10] sm:$0xff] %vm3578, %v5253
      %5344 = vst.msk [vmem:[#allocation4 + $0x18] sm:$0xff] %vm3578, %v5255
      %5345 = vst.msk [vmem:[#allocation4 + $0x20] sm:$0xff] %vm3578, %v5258
      %5346 = vst.msk [vmem:[#allocation4 + $0x28] sm:$0xff] %vm3578, %v5260
      %5347 = vst.msk [vmem:[#allocation4 + $0x30] sm:$0xff] %vm3578, %v5263
      %5348 = vst.msk [vmem:[#allocation4 + $0x38] sm:$0xff] %vm3578, %v5265
      %5349 = vst.msk [vmem:[#allocation4 + $0x40] sm:$0xff] %vm3578, %v5268
      %5350 = vst.msk [vmem:[#allocation4 + $0x48] sm:$0xff] %vm3578, %v5270
      %5351 = vst.msk [vmem:[#allocation4 + $0x50] sm:$0xff] %vm3578, %v5273
      %5352 = vst.msk [vmem:[#allocation4 + $0x58] sm:$0xff] %vm3578, %v5275
      %5353 = vst.msk [vmem:[#allocation4 + $0x60] sm:$0xff] %vm3578, %v5278
      %5354 = vst.msk [vmem:[#allocation4 + $0x68] sm:$0xff] %vm3578, %v5280
      %5355 = vst.msk [vmem:[#allocation4 + $0x70] sm:$0xff] %vm3578, %v5283
      %5356 = vst.msk [vmem:[#allocation4 + $0x78] sm:$0xff] %vm3578, %v5285
      %5357 = vst.msk [vmem:[#allocation4 + $0x80] sm:$0xff] %vm3578, %v5288
      %5358 = vst.msk [vmem:[#allocation4 + $0x88] sm:$0xff] %vm3578, %v5290
      %5359 = vst.msk [vmem:[#allocation4 + $0x90] sm:$0xff] %vm3578, %v5293
      %5360 = vst.msk [vmem:[#allocation4 + $0x98] sm:$0xff] %vm3578, %v5295
      %5361 = vst.msk [vmem:[#allocation4 + $0xa0] sm:$0xff] %vm3578, %v5298
      %5362 = vst.msk [vmem:[#allocation4 + $0xa8] sm:$0xff] %vm3578, %v5300
      %5363 = vst.msk [vmem:[#allocation4 + $0xb0] sm:$0xff] %vm3578, %v5303
      %5364 = vst.msk [vmem:[#allocation4 + $0xb8] sm:$0xff] %vm3578, %v5305
      %5365 = vst.msk [vmem:[#allocation4 + $0xc0] sm:$0xff] %vm3578, %v5308
      %5366 = vst.msk [vmem:[#allocation4 + $0xc8] sm:$0xff] %vm3578, %v5310
      %5367 = vst.msk [vmem:[#allocation4 + $0xd0] sm:$0xff] %vm3578, %v5313
      %5368 = vst.msk [vmem:[#allocation4 + $0xd8] sm:$0xff] %vm3578, %v5315
      %5369 = vst.msk [vmem:[#allocation4 + $0xe0] sm:$0xff] %vm3578, %v5318
      %5370 = vst.msk [vmem:[#allocation4 + $0xe8] sm:$0xff] %vm3578, %v5320
      %5371 = vst.msk [vmem:[#allocation4 + $0xf0] sm:$0xff] %vm3578, %v5323
      %5372 = vst.msk [vmem:[#allocation4 + $0xf8] sm:$0xff] %vm3578, %v5325
      %5373 = vst.msk [vmem:[#allocation4 + $0x100] sm:$0xff] %vm3578, %v5328
      %5374 = vst.msk [vmem:[#allocation4 + $0x108] sm:$0xff] %vm3578, %v5330
      %5375 = vst.msk [vmem:[#allocation4 + $0x110] sm:$0xff] %vm3578, %v5333
      %5376 = vst.msk [vmem:[#allocation4 + $0x118] sm:$0xff] %vm3578, %v5335
      %5377 = vst.msk [vmem:[#allocation4 + $0x120] sm:$0xff] %vm3578, %v5338
      %v5378 = vld [vmem:[#allocation4] sm:$0xff]
      %v5379 = vld [vmem:[#allocation4 + $0x8] sm:$0xff]
      %v5380 = vld [vmem:[#allocation4 + $0x10] sm:$0xff]
      %v5381 = vld [vmem:[#allocation4 + $0x18] sm:$0xff]
      %v5382 = vld [vmem:[#allocation4 + $0x20] sm:$0xff]
      %v5383 = vld [vmem:[#allocation4 + $0x28] sm:$0xff]
      %v5384 = vld [vmem:[#allocation4 + $0x30] sm:$0xff]
      %v5385 = vld [vmem:[#allocation4 + $0x38] sm:$0xff]
      %v5386 = vld [vmem:[#allocation4 + $0x40] sm:$0xff]
      %v5387 = vld [vmem:[#allocation4 + $0x48] sm:$0xff]
      %v5388 = vld [vmem:[#allocation4 + $0x50] sm:$0xff]
      %v5389 = vld [vmem:[#allocation4 + $0x58] sm:$0xff]
      %v5390 = vld [vmem:[#allocation4 + $0x60] sm:$0xff]
      %v5391 = vld [vmem:[#allocation4 + $0x68] sm:$0xff]
      %v5392 = vld [vmem:[#allocation4 + $0x70] sm:$0xff]
      %v5393 = vld [vmem:[#allocation4 + $0x78] sm:$0xff]
      %v5394 = vld [vmem:[#allocation4 + $0x80] sm:$0xff]
      %v5395 = vld [vmem:[#allocation4 + $0x88] sm:$0xff]
      %v5396 = vld [vmem:[#allocation4 + $0x90] sm:$0xff]
      %v5397 = vld [vmem:[#allocation4 + $0x98] sm:$0xff]
      %v5398 = vld [vmem:[#allocation4 + $0xa0] sm:$0xff]
      %v5399 = vld [vmem:[#allocation4 + $0xa8] sm:$0xff]
      %v5400 = vld [vmem:[#allocation4 + $0xb0] sm:$0xff]
      %v5401 = vld [vmem:[#allocation4 + $0xb8] sm:$0xff]
      %v5402 = vld [vmem:[#allocation4 + $0xc0] sm:$0xff]
      %v5403 = vld [vmem:[#allocation4 + $0xc8] sm:$0xff]
      %v5404 = vld [vmem:[#allocation4 + $0xd0] sm:$0xff]
      %v5405 = vld [vmem:[#allocation4 + $0xd8] sm:$0xff]
      %v5406 = vld [vmem:[#allocation4 + $0xe0] sm:$0xff]
      %v5407 = vld [vmem:[#allocation4 + $0xe8] sm:$0xff]
      %v5408 = vld [vmem:[#allocation4 + $0xf0] sm:$0xff]
      %v5409 = vld [vmem:[#allocation4 + $0xf8] sm:$0xff]
      %v5410 = vld [vmem:[#allocation4 + $0x100] sm:$0xff]
      %v5411 = vld [vmem:[#allocation4 + $0x108] sm:$0xff]
      %v5412 = vld [vmem:[#allocation4 + $0x110] sm:$0xff]
      %v5413 = vld [vmem:[#allocation4 + $0x118] sm:$0xff]
      %v5414 = vadd.f32 %v4965, %v5378
      %v5415 = vadd.f32 %v4966, %v5379
      %v5416 = vadd.f32 %v4967, %v5380
      %v5417 = vadd.f32 %v4968, %v5381
      %v5418 = vadd.f32 %v4969, %v5382
      %v5419 = vadd.f32 %v4970, %v5383
      %v5420 = vadd.f32 %v4971, %v5384
      %v5421 = vadd.f32 %v4972, %v5385
      %v5422 = vadd.f32 %v4973, %v5386
      %v5423 = vadd.f32 %v4974, %v5387
      %v5424 = vadd.f32 %v4975, %v5388
      %v5425 = vadd.f32 %v4976, %v5389
      %v5426 = vadd.f32 %v4977, %v5390
      %v5427 = vadd.f32 %v4978, %v5391
      %v5428 = vadd.f32 %v4979, %v5392
      %v5429 = vadd.f32 %v4980, %v5393
      %v5430 = vadd.f32 %v4981, %v5394
      %v5431 = vadd.f32 %v4982, %v5395
      %v5432 = vadd.f32 %v4983, %v5396
      %v5433 = vadd.f32 %v4984, %v5397
      %v5434 = vadd.f32 %v4985, %v5398
      %v5435 = vadd.f32 %v4986, %v5399
      %v5436 = vadd.f32 %v4987, %v5400
      %v5437 = vadd.f32 %v4988, %v5401
      %v5438 = vadd.f32 %v4989, %v5402
      %v5439 = vadd.f32 %v4990, %v5403
      %v5440 = vadd.f32 %v4991, %v5404
      %v5441 = vadd.f32 %v4992, %v5405
      %v5442 = vadd.f32 %v4993, %v5406
      %v5443 = vadd.f32 %v4994, %v5407
      %v5444 = vadd.f32 %v4995, %v5408
      %v5445 = vadd.f32 %v4996, %v5409
      %v5446 = vadd.f32 %v4997, %v5410
      %v5447 = vadd.f32 %v4998, %v5411
      %v5448 = vadd.f32 %v4999, %v5412
      %v5449 = vadd.f32 %v5000, %v5413
      %v5450 = vld [vmem:[#allocation4 + $0x1] sm:$0xff]
      %v5451 = vld [vmem:[#allocation4 + $0x9] sm:$0xff]
      %v5452 = vld [vmem:[#allocation4 + $0x11] sm:$0xff]
      %v5453 = vld [vmem:[#allocation4 + $0x19] sm:$0xff]
      %v5454 = vld [vmem:[#allocation4 + $0x21] sm:$0xff]
      %v5455 = vld [vmem:[#allocation4 + $0x29] sm:$0xff]
      %v5456 = vld [vmem:[#allocation4 + $0x31] sm:$0xff]
      %v5457 = vld [vmem:[#allocation4 + $0x39] sm:$0xff]
      %v5458 = vld [vmem:[#allocation4 + $0x41] sm:$0xff]
      %v5459 = vld [vmem:[#allocation4 + $0x49] sm:$0xff]
      %v5460 = vld [vmem:[#allocation4 + $0x51] sm:$0xff]
      %v5461 = vld [vmem:[#allocation4 + $0x59] sm:$0xff]
      %v5462 = vld [vmem:[#allocation4 + $0x61] sm:$0xff]
      %v5463 = vld [vmem:[#allocation4 + $0x69] sm:$0xff]
      %v5464 = vld [vmem:[#allocation4 + $0x71] sm:$0xff]
      %v5465 = vld [vmem:[#allocation4 + $0x79] sm:$0xff]
      %v5466 = vld [vmem:[#allocation4 + $0x81] sm:$0xff]
      %v5467 = vld [vmem:[#allocation4 + $0x89] sm:$0xff]
      %v5468 = vld [vmem:[#allocation4 + $0x91] sm:$0xff]
      %v5469 = vld [vmem:[#allocation4 + $0x99] sm:$0xff]
      %v5470 = vld [vmem:[#allocation4 + $0xa1] sm:$0xff]
      %v5471 = vld [vmem:[#allocation4 + $0xa9] sm:$0xff]
      %v5472 = vld [vmem:[#allocation4 + $0xb1] sm:$0xff]
      %v5473 = vld [vmem:[#allocation4 + $0xb9] sm:$0xff]
      %v5474 = vld [vmem:[#allocation4 + $0xc1] sm:$0xff]
      %v5475 = vld [vmem:[#allocation4 + $0xc9] sm:$0xff]
      %v5476 = vld [vmem:[#allocation4 + $0xd1] sm:$0xff]
      %v5477 = vld [vmem:[#allocation4 + $0xd9] sm:$0xff]
      %v5478 = vld [vmem:[#allocation4 + $0xe1] sm:$0xff]
      %v5479 = vld [vmem:[#allocation4 + $0xe9] sm:$0xff]
      %v5480 = vld [vmem:[#allocation4 + $0xf1] sm:$0xff]
      %v5481 = vld [vmem:[#allocation4 + $0xf9] sm:$0xff]
      %v5482 = vld [vmem:[#allocation4 + $0x101] sm:$0xff]
      %v5483 = vld [vmem:[#allocation4 + $0x109] sm:$0xff]
      %v5484 = vld [vmem:[#allocation4 + $0x111] sm:$0xff]
      %v5485 = vld [vmem:[#allocation4 + $0x119] sm:$0xff]
      %5522 = vrot.lane.b32.xlu0 %v5450, 120
      %v5523 = vpop.permute.xlu0 %5522
      %5524 = vrot.lane.b32.xlu0 %v5451, 120
      %v5525 = vpop.permute.xlu0 %5524
      %5526 = vrot.lane.b32.xlu0 %v5452, 120
      %v5527 = vpop.permute.xlu0 %5526
      %5528 = vrot.lane.b32.xlu0 %v5453, 120
      %v5529 = vpop.permute.xlu0 %5528
      %5530 = vrot.lane.b32.xlu0 %v5454, 120
      %v5531 = vpop.permute.xlu0 %5530
      %5532 = vrot.lane.b32.xlu0 %v5455, 120
      %v5533 = vpop.permute.xlu0 %5532
      %5534 = vrot.lane.b32.xlu0 %v5456, 120
      %v5535 = vpop.permute.xlu0 %5534
      %5536 = vrot.lane.b32.xlu0 %v5457, 120
      %v5537 = vpop.permute.xlu0 %5536
      %5538 = vrot.lane.b32.xlu0 %v5458, 120
      %v5539 = vpop.permute.xlu0 %5538
      %5540 = vrot.lane.b32.xlu0 %v5459, 120
      %v5541 = vpop.permute.xlu0 %5540
      %5542 = vrot.lane.b32.xlu0 %v5460, 120
      %v5543 = vpop.permute.xlu0 %5542
      %5544 = vrot.lane.b32.xlu0 %v5461, 120
      %v5545 = vpop.permute.xlu0 %5544
      %5546 = vrot.lane.b32.xlu0 %v5462, 120
      %v5547 = vpop.permute.xlu0 %5546
      %5548 = vrot.lane.b32.xlu0 %v5463, 120
      %v5549 = vpop.permute.xlu0 %5548
      %5550 = vrot.lane.b32.xlu0 %v5464, 120
      %v5551 = vpop.permute.xlu0 %5550
      %5552 = vrot.lane.b32.xlu0 %v5465, 120
      %v5553 = vpop.permute.xlu0 %5552
      %5554 = vrot.lane.b32.xlu0 %v5466, 120
      %v5555 = vpop.permute.xlu0 %5554
      %5556 = vrot.lane.b32.xlu0 %v5467, 120
      %v5557 = vpop.permute.xlu0 %5556
      %5558 = vrot.lane.b32.xlu0 %v5468, 120
      %v5559 = vpop.permute.xlu0 %5558
      %5560 = vrot.lane.b32.xlu0 %v5469, 120
      %v5561 = vpop.permute.xlu0 %5560
      %5562 = vrot.lane.b32.xlu0 %v5470, 120
      %v5563 = vpop.permute.xlu0 %5562
      %5564 = vrot.lane.b32.xlu0 %v5471, 120
      %v5565 = vpop.permute.xlu0 %5564
      %5566 = vrot.lane.b32.xlu0 %v5472, 120
      %v5567 = vpop.permute.xlu0 %5566
      %5568 = vrot.lane.b32.xlu0 %v5473, 120
      %v5569 = vpop.permute.xlu0 %5568
      %5570 = vrot.lane.b32.xlu0 %v5474, 120
      %v5571 = vpop.permute.xlu0 %5570
      %5572 = vrot.lane.b32.xlu0 %v5475, 120
      %v5573 = vpop.permute.xlu0 %5572
      %5574 = vrot.lane.b32.xlu0 %v5476, 120
      %v5575 = vpop.permute.xlu0 %5574
      %5576 = vrot.lane.b32.xlu0 %v5477, 120
      %v5577 = vpop.permute.xlu0 %5576
      %5578 = vrot.lane.b32.xlu0 %v5478, 120
      %v5579 = vpop.permute.xlu0 %5578
      %5580 = vrot.lane.b32.xlu0 %v5479, 120
      %v5581 = vpop.permute.xlu0 %5580
      %5582 = vrot.lane.b32.xlu0 %v5480, 120
      %v5583 = vpop.permute.xlu0 %5582
      %5584 = vrot.lane.b32.xlu0 %v5481, 120
      %v5585 = vpop.permute.xlu0 %5584
      %5586 = vrot.lane.b32.xlu0 %v5482, 120
      %v5587 = vpop.permute.xlu0 %5586
      %5588 = vrot.lane.b32.xlu0 %v5483, 120
      %v5589 = vpop.permute.xlu0 %5588
      %5590 = vrot.lane.b32.xlu0 %v5484, 120
      %v5591 = vpop.permute.xlu0 %5590
      %5592 = vrot.lane.b32.xlu0 %v5485, 120
      %v5593 = vpop.permute.xlu0 %5592
      %v5630 = vadd.f32 %v5414, %v5523
      %v5631 = vadd.f32 %v5415, %v5525
      %v5632 = vadd.f32 %v5416, %v5527
      %v5633 = vadd.f32 %v5417, %v5529
      %v5634 = vadd.f32 %v5418, %v5531
      %v5635 = vadd.f32 %v5419, %v5533
      %v5636 = vadd.f32 %v5420, %v5535
      %v5637 = vadd.f32 %v5421, %v5537
      %v5638 = vadd.f32 %v5422, %v5539
      %v5639 = vadd.f32 %v5423, %v5541
      %v5640 = vadd.f32 %v5424, %v5543
      %v5641 = vadd.f32 %v5425, %v5545
      %v5642 = vadd.f32 %v5426, %v5547
      %v5643 = vadd.f32 %v5427, %v5549
      %v5644 = vadd.f32 %v5428, %v5551
      %v5645 = vadd.f32 %v5429, %v5553
      %v5646 = vadd.f32 %v5430, %v5555
      %v5647 = vadd.f32 %v5431, %v5557
      %v5648 = vadd.f32 %v5432, %v5559
      %v5649 = vadd.f32 %v5433, %v5561
      %v5650 = vadd.f32 %v5434, %v5563
      %v5651 = vadd.f32 %v5435, %v5565
      %v5652 = vadd.f32 %v5436, %v5567
      %v5653 = vadd.f32 %v5437, %v5569
      %v5654 = vadd.f32 %v5438, %v5571
      %v5655 = vadd.f32 %v5439, %v5573
      %v5656 = vadd.f32 %v5440, %v5575
      %v5657 = vadd.f32 %v5441, %v5577
      %v5658 = vadd.f32 %v5442, %v5579
      %v5659 = vadd.f32 %v5443, %v5581
      %v5660 = vadd.f32 %v5444, %v5583
      %v5661 = vadd.f32 %v5445, %v5585
      %v5662 = vadd.f32 %v5446, %v5587
      %v5663 = vadd.f32 %v5447, %v5589
      %v5664 = vadd.f32 %v5448, %v5591
      %v5665 = vadd.f32 %v5449, %v5593
      %v5666 = vld [vmem:[#allocation4 + $0x2] sm:$0xff]
      %v5667 = vld [vmem:[#allocation4 + $0xa] sm:$0xff]
      %v5668 = vld [vmem:[#allocation4 + $0x12] sm:$0xff]
      %v5669 = vld [vmem:[#allocation4 + $0x1a] sm:$0xff]
      %v5670 = vld [vmem:[#allocation4 + $0x22] sm:$0xff]
      %v5671 = vld [vmem:[#allocation4 + $0x2a] sm:$0xff]
      %v5672 = vld [vmem:[#allocation4 + $0x32] sm:$0xff]
      %v5673 = vld [vmem:[#allocation4 + $0x3a] sm:$0xff]
      %v5674 = vld [vmem:[#allocation4 + $0x42] sm:$0xff]
      %v5675 = vld [vmem:[#allocation4 + $0x4a] sm:$0xff]
      %v5676 = vld [vmem:[#allocation4 + $0x52] sm:$0xff]
      %v5677 = vld [vmem:[#allocation4 + $0x5a] sm:$0xff]
      %v5678 = vld [vmem:[#allocation4 + $0x62] sm:$0xff]
      %v5679 = vld [vmem:[#allocation4 + $0x6a] sm:$0xff]
      %v5680 = vld [vmem:[#allocation4 + $0x72] sm:$0xff]
      %v5681 = vld [vmem:[#allocation4 + $0x7a] sm:$0xff]
      %v5682 = vld [vmem:[#allocation4 + $0x82] sm:$0xff]
      %v5683 = vld [vmem:[#allocation4 + $0x8a] sm:$0xff]
      %v5684 = vld [vmem:[#allocation4 + $0x92] sm:$0xff]
      %v5685 = vld [vmem:[#allocation4 + $0x9a] sm:$0xff]
      %v5686 = vld [vmem:[#allocation4 + $0xa2] sm:$0xff]
      %v5687 = vld [vmem:[#allocation4 + $0xaa] sm:$0xff]
      %v5688 = vld [vmem:[#allocation4 + $0xb2] sm:$0xff]
      %v5689 = vld [vmem:[#allocation4 + $0xba] sm:$0xff]
      %v5690 = vld [vmem:[#allocation4 + $0xc2] sm:$0xff]
      %v5691 = vld [vmem:[#allocation4 + $0xca] sm:$0xff]
      %v5692 = vld [vmem:[#allocation4 + $0xd2] sm:$0xff]
      %v5693 = vld [vmem:[#allocation4 + $0xda] sm:$0xff]
      %v5694 = vld [vmem:[#allocation4 + $0xe2] sm:$0xff]
      %v5695 = vld [vmem:[#allocation4 + $0xea] sm:$0xff]
      %v5696 = vld [vmem:[#allocation4 + $0xf2] sm:$0xff]
      %v5697 = vld [vmem:[#allocation4 + $0xfa] sm:$0xff]
      %v5698 = vld [vmem:[#allocation4 + $0x102] sm:$0xff]
      %v5699 = vld [vmem:[#allocation4 + $0x10a] sm:$0xff]
      %v5700 = vld [vmem:[#allocation4 + $0x112] sm:$0xff]
      %v5701 = vld [vmem:[#allocation4 + $0x11a] sm:$0xff]
      %5738 = vrot.lane.b32.xlu0 %v5666, 112
      %v5739 = vpop.permute.xlu0 %5738
      %5740 = vrot.lane.b32.xlu0 %v5667, 112
      %v5741 = vpop.permute.xlu0 %5740
      %5742 = vrot.lane.b32.xlu0 %v5668, 112
      %v5743 = vpop.permute.xlu0 %5742
      %5744 = vrot.lane.b32.xlu0 %v5669, 112
      %v5745 = vpop.permute.xlu0 %5744
      %5746 = vrot.lane.b32.xlu0 %v5670, 112
      %v5747 = vpop.permute.xlu0 %5746
      %5748 = vrot.lane.b32.xlu0 %v5671, 112
      %v5749 = vpop.permute.xlu0 %5748
      %5750 = vrot.lane.b32.xlu0 %v5672, 112
      %v5751 = vpop.permute.xlu0 %5750
      %5752 = vrot.lane.b32.xlu0 %v5673, 112
      %v5753 = vpop.permute.xlu0 %5752
      %5754 = vrot.lane.b32.xlu0 %v5674, 112
      %v5755 = vpop.permute.xlu0 %5754
      %5756 = vrot.lane.b32.xlu0 %v5675, 112
      %v5757 = vpop.permute.xlu0 %5756
      %5758 = vrot.lane.b32.xlu0 %v5676, 112
      %v5759 = vpop.permute.xlu0 %5758
      %5760 = vrot.lane.b32.xlu0 %v5677, 112
      %v5761 = vpop.permute.xlu0 %5760
      %5762 = vrot.lane.b32.xlu0 %v5678, 112
      %v5763 = vpop.permute.xlu0 %5762
      %5764 = vrot.lane.b32.xlu0 %v5679, 112
      %v5765 = vpop.permute.xlu0 %5764
      %5766 = vrot.lane.b32.xlu0 %v5680, 112
      %v5767 = vpop.permute.xlu0 %5766
      %5768 = vrot.lane.b32.xlu0 %v5681, 112
      %v5769 = vpop.permute.xlu0 %5768
      %5770 = vrot.lane.b32.xlu0 %v5682, 112
      %v5771 = vpop.permute.xlu0 %5770
      %5772 = vrot.lane.b32.xlu0 %v5683, 112
      %v5773 = vpop.permute.xlu0 %5772
      %5774 = vrot.lane.b32.xlu0 %v5684, 112
      %v5775 = vpop.permute.xlu0 %5774
      %5776 = vrot.lane.b32.xlu0 %v5685, 112
      %v5777 = vpop.permute.xlu0 %5776
      %5778 = vrot.lane.b32.xlu0 %v5686, 112
      %v5779 = vpop.permute.xlu0 %5778
      %5780 = vrot.lane.b32.xlu0 %v5687, 112
      %v5781 = vpop.permute.xlu0 %5780
      %5782 = vrot.lane.b32.xlu0 %v5688, 112
      %v5783 = vpop.permute.xlu0 %5782
      %5784 = vrot.lane.b32.xlu0 %v5689, 112
      %v5785 = vpop.permute.xlu0 %5784
      %5786 = vrot.lane.b32.xlu0 %v5690, 112
      %v5787 = vpop.permute.xlu0 %5786
      %5788 = vrot.lane.b32.xlu0 %v5691, 112
      %v5789 = vpop.permute.xlu0 %5788
      %5790 = vrot.lane.b32.xlu0 %v5692, 112
      %v5791 = vpop.permute.xlu0 %5790
      %5792 = vrot.lane.b32.xlu0 %v5693, 112
      %v5793 = vpop.permute.xlu0 %5792
      %5794 = vrot.lane.b32.xlu0 %v5694, 112
      %v5795 = vpop.permute.xlu0 %5794
      %5796 = vrot.lane.b32.xlu0 %v5695, 112
      %v5797 = vpop.permute.xlu0 %5796
      %5798 = vrot.lane.b32.xlu0 %v5696, 112
      %v5799 = vpop.permute.xlu0 %5798
      %5800 = vrot.lane.b32.xlu0 %v5697, 112
      %v5801 = vpop.permute.xlu0 %5800
      %5802 = vrot.lane.b32.xlu0 %v5698, 112
      %v5803 = vpop.permute.xlu0 %5802
      %5804 = vrot.lane.b32.xlu0 %v5699, 112
      %v5805 = vpop.permute.xlu0 %5804
      %5806 = vrot.lane.b32.xlu0 %v5700, 112
      %v5807 = vpop.permute.xlu0 %5806
      %5808 = vrot.lane.b32.xlu0 %v5701, 112
      %v5809 = vpop.permute.xlu0 %5808
      %v5846 = vadd.f32 %v5630, %v5739
      %v5847 = vadd.f32 %v5631, %v5741
      %v5848 = vadd.f32 %v5632, %v5743
      %v5849 = vadd.f32 %v5633, %v5745
      %v5850 = vadd.f32 %v5634, %v5747
      %v5851 = vadd.f32 %v5635, %v5749
      %v5852 = vadd.f32 %v5636, %v5751
      %v5853 = vadd.f32 %v5637, %v5753
      %v5854 = vadd.f32 %v5638, %v5755
      %v5855 = vadd.f32 %v5639, %v5757
      %v5856 = vadd.f32 %v5640, %v5759
      %v5857 = vadd.f32 %v5641, %v5761
      %v5858 = vadd.f32 %v5642, %v5763
      %v5859 = vadd.f32 %v5643, %v5765
      %v5860 = vadd.f32 %v5644, %v5767
      %v5861 = vadd.f32 %v5645, %v5769
      %v5862 = vadd.f32 %v5646, %v5771
      %v5863 = vadd.f32 %v5647, %v5773
      %v5864 = vadd.f32 %v5648, %v5775
      %v5865 = vadd.f32 %v5649, %v5777
      %v5866 = vadd.f32 %v5650, %v5779
      %v5867 = vadd.f32 %v5651, %v5781
      %v5868 = vadd.f32 %v5652, %v5783
      %v5869 = vadd.f32 %v5653, %v5785
      %v5870 = vadd.f32 %v5654, %v5787
      %v5871 = vadd.f32 %v5655, %v5789
      %v5872 = vadd.f32 %v5656, %v5791
      %v5873 = vadd.f32 %v5657, %v5793
      %v5874 = vadd.f32 %v5658, %v5795
      %v5875 = vadd.f32 %v5659, %v5797
      %v5876 = vadd.f32 %v5660, %v5799
      %v5877 = vadd.f32 %v5661, %v5801
      %v5878 = vadd.f32 %v5662, %v5803
      %v5879 = vadd.f32 %v5663, %v5805
      %v5880 = vadd.f32 %v5664, %v5807
      %v5881 = vadd.f32 %v5665, %v5809
      %v5882 = vld [vmem:[%s2] sm:$0x1]
      %v5884 = vperm.slane %v5882, 0
      %v5886 = vadd.f32 %v5846, %v5884
      %v5887 = vadd.f32 %v5847, %v5884
      %v5888 = vadd.f32 %v5848, %v5884
      %v5889 = vadd.f32 %v5849, %v5884
      %v5890 = vadd.f32 %v5850, %v5884
      %v5891 = vadd.f32 %v5851, %v5884
      %v5892 = vadd.f32 %v5852, %v5884
      %v5893 = vadd.f32 %v5853, %v5884
      %v5894 = vadd.f32 %v5854, %v5884
      %v5895 = vadd.f32 %v5855, %v5884
      %v5896 = vadd.f32 %v5856, %v5884
      %v5897 = vadd.f32 %v5857, %v5884
      %v5898 = vadd.f32 %v5858, %v5884
      %v5899 = vadd.f32 %v5859, %v5884
      %v5900 = vadd.f32 %v5860, %v5884
      %v5901 = vadd.f32 %v5861, %v5884
      %v5902 = vadd.f32 %v5862, %v5884
      %v5903 = vadd.f32 %v5863, %v5884
      %v5904 = vadd.f32 %v5864, %v5884
      %v5905 = vadd.f32 %v5865, %v5884
      %v5906 = vadd.f32 %v5866, %v5884
      %v5907 = vadd.f32 %v5867, %v5884
      %v5908 = vadd.f32 %v5868, %v5884
      %v5909 = vadd.f32 %v5869, %v5884
      %v5910 = vadd.f32 %v5870, %v5884
      %v5911 = vadd.f32 %v5871, %v5884
      %v5912 = vadd.f32 %v5872, %v5884
      %v5913 = vadd.f32 %v5873, %v5884
      %v5914 = vadd.f32 %v5874, %v5884
      %v5915 = vadd.f32 %v5875, %v5884
      %v5916 = vadd.f32 %v5876, %v5884
      %v5917 = vadd.f32 %v5877, %v5884
      %v5918 = vadd.f32 %v5878, %v5884
      %v5919 = vadd.f32 %v5879, %v5884
      %v5920 = vadd.f32 %v5880, %v5884
      %v5921 = vadd.f32 %v5881, %v5884
      %v5922 = vmax.f32 %v5886, 0.0
      %v5923 = vmax.f32 %v5887, 0.0
      %v5924 = vmax.f32 %v5888, 0.0
      %v5925 = vmax.f32 %v5889, 0.0
      %v5926 = vmax.f32 %v5890, 0.0
      %v5927 = vmax.f32 %v5891, 0.0
      %v5928 = vmax.f32 %v5892, 0.0
      %v5929 = vmax.f32 %v5893, 0.0
      %v5930 = vmax.f32 %v5894, 0.0
      %v5931 = vmax.f32 %v5895, 0.0
      %v5932 = vmax.f32 %v5896, 0.0
      %v5933 = vmax.f32 %v5897, 0.0
      %v5934 = vmax.f32 %v5898, 0.0
      %v5935 = vmax.f32 %v5899, 0.0
      %v5936 = vmax.f32 %v5900, 0.0
      %v5937 = vmax.f32 %v5901, 0.0
      %v5938 = vmax.f32 %v5902, 0.0
      %v5939 = vmax.f32 %v5903, 0.0
      %v5940 = vmax.f32 %v5904, 0.0
      %v5941 = vmax.f32 %v5905, 0.0
      %v5942 = vmax.f32 %v5906, 0.0
      %v5943 = vmax.f32 %v5907, 0.0
      %v5944 = vmax.f32 %v5908, 0.0
      %v5945 = vmax.f32 %v5909, 0.0
      %v5946 = vmax.f32 %v5910, 0.0
      %v5947 = vmax.f32 %v5911, 0.0
      %v5948 = vmax.f32 %v5912, 0.0
      %v5949 = vmax.f32 %v5913, 0.0
      %v5950 = vmax.f32 %v5914, 0.0
      %v5951 = vmax.f32 %v5915, 0.0
      %v5952 = vmax.f32 %v5916, 0.0
      %v5953 = vmax.f32 %v5917, 0.0
      %v5954 = vmax.f32 %v5918, 0.0
      %v5955 = vmax.f32 %v5919, 0.0
      %v5956 = vmax.f32 %v5920, 0.0
      %v5957 = vmax.f32 %v5921, 0.0
      %v5958 = vmul.f32 %v5922, %v3243
      %v5959 = vmul.f32 %v5923, %v3244
      %v5960 = vmul.f32 %v5924, %v3245
      %v5961 = vmul.f32 %v5925, %v3246
      %v5962 = vmul.f32 %v5926, %v3247
      %v5963 = vmul.f32 %v5927, %v3248
      %v5964 = vmul.f32 %v5928, %v3249
      %v5965 = vmul.f32 %v5929, %v3250
      %v5966 = vmul.f32 %v5930, %v3251
      %v5967 = vmul.f32 %v5931, %v3252
      %v5968 = vmul.f32 %v5932, %v3253
      %v5969 = vmul.f32 %v5933, %v3254
      %v5970 = vmul.f32 %v5934, %v3255
      %v5971 = vmul.f32 %v5935, %v3256
      %v5972 = vmul.f32 %v5936, %v3257
      %v5973 = vmul.f32 %v5937, %v3258
      %v5974 = vmul.f32 %v5938, %v3259
      %v5975 = vmul.f32 %v5939, %v3260
      %v5976 = vmul.f32 %v5940, %v3261
      %v5977 = vmul.f32 %v5941, %v3262
      %v5978 = vmul.f32 %v5942, %v3263
      %v5979 = vmul.f32 %v5943, %v3264
      %v5980 = vmul.f32 %v5944, %v3265
      %v5981 = vmul.f32 %v5945, %v3266
      %v5982 = vmul.f32 %v5946, %v3267
      %v5983 = vmul.f32 %v5947, %v3268
      %v5984 = vmul.f32 %v5948, %v3269
      %v5985 = vmul.f32 %v5949, %v3270
      %v5986 = vmul.f32 %v5950, %v3271
      %v5987 = vmul.f32 %v5951, %v3272
      %v5988 = vmul.f32 %v5952, %v3273
      %v5989 = vmul.f32 %v5953, %v3274
      %v5990 = vmul.f32 %v5954, %v3275
      %v5991 = vmul.f32 %v5955, %v3276
      %v5992 = vmul.f32 %v5956, %v3277
      %v5993 = vmul.f32 %v5957, %v3278
      %v5994 = vpack.c.bf16 %v5958, %v5958
      %v5995 = vpack.c.bf16 %v5959, %v5959
      %v5996 = vpack.c.bf16 %v5960, %v5960
      %v5997 = vpack.c.bf16 %v5961, %v5961
      %v5998 = vpack.c.bf16 %v5962, %v5962
      %v5999 = vpack.c.bf16 %v5963, %v5963
      %v6000 = vpack.c.bf16 %v5964, %v5964
      %v6001 = vpack.c.bf16 %v5965, %v5965
      %v6002 = vpack.c.bf16 %v5966, %v5966
      %v6003 = vpack.c.bf16 %v5967, %v5967
      %v6004 = vpack.c.bf16 %v5968, %v5968
      %v6005 = vpack.c.bf16 %v5969, %v5969
      %v6006 = vpack.c.bf16 %v5970, %v5970
      %v6007 = vpack.c.bf16 %v5971, %v5971
      %v6008 = vpack.c.bf16 %v5972, %v5972
      %v6009 = vpack.c.bf16 %v5973, %v5973
      %v6010 = vpack.c.bf16 %v5974, %v5974
      %v6011 = vpack.c.bf16 %v5975, %v5975
      %v6012 = vpack.c.bf16 %v5976, %v5976
      %v6013 = vpack.c.bf16 %v5977, %v5977
      %v6014 = vpack.c.bf16 %v5978, %v5978
      %v6015 = vpack.c.bf16 %v5979, %v5979
      %v6016 = vpack.c.bf16 %v5980, %v5980
      %v6017 = vpack.c.bf16 %v5981, %v5981
      %v6018 = vpack.c.bf16 %v5982, %v5982
      %v6019 = vpack.c.bf16 %v5983, %v5983
      %v6020 = vpack.c.bf16 %v5984, %v5984
      %v6021 = vpack.c.bf16 %v5985, %v5985
      %v6022 = vpack.c.bf16 %v5986, %v5986
      %v6023 = vpack.c.bf16 %v5987, %v5987
      %v6024 = vpack.c.bf16 %v5988, %v5988
      %v6025 = vpack.c.bf16 %v5989, %v5989
      %v6026 = vpack.c.bf16 %v5990, %v5990
      %v6027 = vpack.c.bf16 %v5991, %v5991
      %v6028 = vpack.c.bf16 %v5992, %v5992
      %v6029 = vpack.c.bf16 %v5993, %v5993
      %vm6030 = vcmask 60416
      %6031 = vst.msk [vmem:[#allocation3] sm:$0xf] %vm6030, 0
      %6032 = vst.msk [vmem:[#allocation3 + $0x4] sm:$0xf] %vm6030, 0
      %vm6033 = vcmask 58368
      %vm6034 = vsmask.f32 1280
      %vm6035 = vmand %vm6033, %vm6034
      %v6036 = vld [vmem:[#allocation3 + $0x8] sm:$0x3]
      %v6037 = vsel %vm6035, 0, %v6036
      %6038 = vst [vmem:[#allocation3 + $0x8] sm:$0x3] %v6037
      %vm6039 = vcmask 60417
      %vm6040 = vsmask.f32 7942
      %vm6041 = vmand %vm6039, %vm6040
      %v6042 = vld [vmem:[#allocation3 + $0x98] sm:$0xe]
      %v6043 = vsel %vm6041, 0, %v6042
      %6044 = vst [vmem:[#allocation3 + $0x98] sm:$0xe] %v6043
      %6045 = vst.msk [vmem:[#allocation3 + $0x9c] sm:$0xf] %vm6030, 0
      %6046 = vst.msk [vmem:[#allocation3 + $0xa0] sm:$0xf] %vm6030, 0
      %6047 = vst.msk [vmem:[#allocation3 + $0xa4] sm:$0xf] %vm6030, 0
      %vm6048 = vsmask.f32 5392
      %vm6049 = vmor %vm6034, %vm6048
      %v6051 = vshrl.u32 %v5994, 16
      %v6053 = vrot.slane %v6051, 6
      %v6054 = vshll.u32 %v5994, 16
      %v6056 = vrot.slane %v6054, 7
      %v6057 = vor.u32 %v6053, %v6056
      %v6058 = vrot.slane %v6057, 4
      %v6060 = vshrl.u32 %v5995, 16
      %v6062 = vrot.slane %v6060, 6
      %v6063 = vshll.u32 %v5995, 16
      %v6065 = vrot.slane %v6063, 7
      %v6066 = vor.u32 %v6062, %v6065
      %v6067 = vsel %vm6049, %v6058, %v6066
      %v6068 = vrot.slane %v6066, 4
      %v6070 = vshrl.u32 %v5996, 16
      %v6072 = vrot.slane %v6070, 6
      %v6073 = vshll.u32 %v5996, 16
      %v6075 = vrot.slane %v6073, 7
      %v6076 = vor.u32 %v6072, %v6075
      %v6077 = vsel %vm6049, %v6068, %v6076
      %v6078 = vrot.slane %v6076, 4
      %v6080 = vshrl.u32 %v5997, 16
      %v6082 = vrot.slane %v6080, 6
      %v6083 = vshll.u32 %v5997, 16
      %v6085 = vrot.slane %v6083, 7
      %v6086 = vor.u32 %v6082, %v6085
      %v6087 = vsel %vm6049, %v6078, %v6086
      %v6088 = vrot.slane %v6086, 4
      %v6090 = vshrl.u32 %v5998, 16
      %v6092 = vrot.slane %v6090, 6
      %v6093 = vshll.u32 %v5998, 16
      %v6095 = vrot.slane %v6093, 7
      %v6096 = vor.u32 %v6092, %v6095
      %v6097 = vsel %vm6049, %v6088, %v6096
      %v6098 = vrot.slane %v6096, 4
      %v6100 = vshrl.u32 %v5999, 16
      %v6102 = vrot.slane %v6100, 6
      %v6103 = vshll.u32 %v5999, 16
      %v6105 = vrot.slane %v6103, 7
      %v6106 = vor.u32 %v6102, %v6105
      %v6107 = vsel %vm6049, %v6098, %v6106
      %v6108 = vrot.slane %v6106, 4
      %v6110 = vshrl.u32 %v6000, 16
      %v6112 = vrot.slane %v6110, 6
      %v6113 = vshll.u32 %v6000, 16
      %v6115 = vrot.slane %v6113, 7
      %v6116 = vor.u32 %v6112, %v6115
      %v6117 = vsel %vm6049, %v6108, %v6116
      %v6118 = vrot.slane %v6116, 4
      %v6120 = vshrl.u32 %v6001, 16
      %v6122 = vrot.slane %v6120, 6
      %v6123 = vshll.u32 %v6001, 16
      %v6125 = vrot.slane %v6123, 7
      %v6126 = vor.u32 %v6122, %v6125
      %v6127 = vsel %vm6049, %v6118, %v6126
      %v6128 = vrot.slane %v6126, 4
      %v6130 = vshrl.u32 %v6002, 16
      %v6132 = vrot.slane %v6130, 6
      %v6133 = vshll.u32 %v6002, 16
      %v6135 = vrot.slane %v6133, 7
      %v6136 = vor.u32 %v6132, %v6135
      %v6137 = vsel %vm6049, %v6128, %v6136
      %v6138 = vrot.slane %v6136, 4
      %v6140 = vshrl.u32 %v6003, 16
      %v6142 = vrot.slane %v6140, 6
      %v6143 = vshll.u32 %v6003, 16
      %v6145 = vrot.slane %v6143, 7
      %v6146 = vor.u32 %v6142, %v6145
      %v6147 = vsel %vm6049, %v6138, %v6146
      %v6148 = vrot.slane %v6146, 4
      %v6150 = vshrl.u32 %v6004, 16
      %v6152 = vrot.slane %v6150, 6
      %v6153 = vshll.u32 %v6004, 16
      %v6155 = vrot.slane %v6153, 7
      %v6156 = vor.u32 %v6152, %v6155
      %v6157 = vsel %vm6049, %v6148, %v6156
      %v6158 = vrot.slane %v6156, 4
      %v6160 = vshrl.u32 %v6005, 16
      %v6162 = vrot.slane %v6160, 6
      %v6163 = vshll.u32 %v6005, 16
      %v6165 = vrot.slane %v6163, 7
      %v6166 = vor.u32 %v6162, %v6165
      %v6167 = vsel %vm6049, %v6158, %v6166
      %v6168 = vrot.slane %v6166, 4
      %v6170 = vshrl.u32 %v6006, 16
      %v6172 = vrot.slane %v6170, 6
      %v6173 = vshll.u32 %v6006, 16
      %v6175 = vrot.slane %v6173, 7
      %v6176 = vor.u32 %v6172, %v6175
      %v6177 = vsel %vm6049, %v6168, %v6176
      %v6178 = vrot.slane %v6176, 4
      %v6180 = vshrl.u32 %v6007, 16
      %v6182 = vrot.slane %v6180, 6
      %v6183 = vshll.u32 %v6007, 16
      %v6185 = vrot.slane %v6183, 7
      %v6186 = vor.u32 %v6182, %v6185
      %v6187 = vsel %vm6049, %v6178, %v6186
      %v6188 = vrot.slane %v6186, 4
      %v6190 = vshrl.u32 %v6008, 16
      %v6192 = vrot.slane %v6190, 6
      %v6193 = vshll.u32 %v6008, 16
      %v6195 = vrot.slane %v6193, 7
      %v6196 = vor.u32 %v6192, %v6195
      %v6197 = vsel %vm6049, %v6188, %v6196
      %v6198 = vrot.slane %v6196, 4
      %v6200 = vshrl.u32 %v6009, 16
      %v6202 = vrot.slane %v6200, 6
      %v6203 = vshll.u32 %v6009, 16
      %v6205 = vrot.slane %v6203, 7
      %v6206 = vor.u32 %v6202, %v6205
      %v6207 = vsel %vm6049, %v6198, %v6206
      %v6208 = vrot.slane %v6206, 4
      %v6210 = vshrl.u32 %v6010, 16
      %v6212 = vrot.slane %v6210, 6
      %v6213 = vshll.u32 %v6010, 16
      %v6215 = vrot.slane %v6213, 7
      %v6216 = vor.u32 %v6212, %v6215
      %v6217 = vsel %vm6049, %v6208, %v6216
      %v6218 = vrot.slane %v6216, 4
      %v6220 = vshrl.u32 %v6011, 16
      %v6222 = vrot.slane %v6220, 6
      %v6223 = vshll.u32 %v6011, 16
      %v6225 = vrot.slane %v6223, 7
      %v6226 = vor.u32 %v6222, %v6225
      %v6227 = vsel %vm6049, %v6218, %v6226
      %v6228 = vrot.slane %v6226, 4
      %v6230 = vshrl.u32 %v6012, 16
      %v6232 = vrot.slane %v6230, 6
      %v6233 = vshll.u32 %v6012, 16
      %v6235 = vrot.slane %v6233, 7
      %v6236 = vor.u32 %v6232, %v6235
      %v6237 = vsel %vm6049, %v6228, %v6236
      %v6238 = vrot.slane %v6236, 4
      %v6240 = vshrl.u32 %v6013, 16
      %v6242 = vrot.slane %v6240, 6
      %v6243 = vshll.u32 %v6013, 16
      %v6245 = vrot.slane %v6243, 7
      %v6246 = vor.u32 %v6242, %v6245
      %v6247 = vsel %vm6049, %v6238, %v6246
      %v6248 = vrot.slane %v6246, 4
      %v6250 = vshrl.u32 %v6014, 16
      %v6252 = vrot.slane %v6250, 6
      %v6253 = vshll.u32 %v6014, 16
      %v6255 = vrot.slane %v6253, 7
      %v6256 = vor.u32 %v6252, %v6255
      %v6257 = vsel %vm6049, %v6248, %v6256
      %v6258 = vrot.slane %v6256, 4
      %v6260 = vshrl.u32 %v6015, 16
      %v6262 = vrot.slane %v6260, 6
      %v6263 = vshll.u32 %v6015, 16
      %v6265 = vrot.slane %v6263, 7
      %v6266 = vor.u32 %v6262, %v6265
      %v6267 = vsel %vm6049, %v6258, %v6266
      %v6268 = vrot.slane %v6266, 4
      %v6270 = vshrl.u32 %v6016, 16
      %v6272 = vrot.slane %v6270, 6
      %v6273 = vshll.u32 %v6016, 16
      %v6275 = vrot.slane %v6273, 7
      %v6276 = vor.u32 %v6272, %v6275
      %v6277 = vsel %vm6049, %v6268, %v6276
      %v6278 = vrot.slane %v6276, 4
      %v6280 = vshrl.u32 %v6017, 16
      %v6282 = vrot.slane %v6280, 6
      %v6283 = vshll.u32 %v6017, 16
      %v6285 = vrot.slane %v6283, 7
      %v6286 = vor.u32 %v6282, %v6285
      %v6287 = vsel %vm6049, %v6278, %v6286
      %v6288 = vrot.slane %v6286, 4
      %v6290 = vshrl.u32 %v6018, 16
      %v6292 = vrot.slane %v6290, 6
      %v6293 = vshll.u32 %v6018, 16
      %v6295 = vrot.slane %v6293, 7
      %v6296 = vor.u32 %v6292, %v6295
      %v6297 = vsel %vm6049, %v6288, %v6296
      %v6298 = vrot.slane %v6296, 4
      %v6300 = vshrl.u32 %v6019, 16
      %v6302 = vrot.slane %v6300, 6
      %v6303 = vshll.u32 %v6019, 16
      %v6305 = vrot.slane %v6303, 7
      %v6306 = vor.u32 %v6302, %v6305
      %v6307 = vsel %vm6049, %v6298, %v6306
      %v6308 = vrot.slane %v6306, 4
      %v6310 = vshrl.u32 %v6020, 16
      %v6312 = vrot.slane %v6310, 6
      %v6313 = vshll.u32 %v6020, 16
      %v6315 = vrot.slane %v6313, 7
      %v6316 = vor.u32 %v6312, %v6315
      %v6317 = vsel %vm6049, %v6308, %v6316
      %v6318 = vrot.slane %v6316, 4
      %v6320 = vshrl.u32 %v6021, 16
      %v6322 = vrot.slane %v6320, 6
      %v6323 = vshll.u32 %v6021, 16
      %v6325 = vrot.slane %v6323, 7
      %v6326 = vor.u32 %v6322, %v6325
      %v6327 = vsel %vm6049, %v6318, %v6326
      %v6328 = vrot.slane %v6326, 4
      %v6330 = vshrl.u32 %v6022, 16
      %v6332 = vrot.slane %v6330, 6
      %v6333 = vshll.u32 %v6022, 16
      %v6335 = vrot.slane %v6333, 7
      %v6336 = vor.u32 %v6332, %v6335
      %v6337 = vsel %vm6049, %v6328, %v6336
      %v6338 = vrot.slane %v6336, 4
      %v6340 = vshrl.u32 %v6023, 16
      %v6342 = vrot.slane %v6340, 6
      %v6343 = vshll.u32 %v6023, 16
      %v6345 = vrot.slane %v6343, 7
      %v6346 = vor.u32 %v6342, %v6345
      %v6347 = vsel %vm6049, %v6338, %v6346
      %v6348 = vrot.slane %v6346, 4
      %v6350 = vshrl.u32 %v6024, 16
      %v6352 = vrot.slane %v6350, 6
      %v6353 = vshll.u32 %v6024, 16
      %v6355 = vrot.slane %v6353, 7
      %v6356 = vor.u32 %v6352, %v6355
      %v6357 = vsel %vm6049, %v6348, %v6356
      %v6358 = vrot.slane %v6356, 4
      %v6360 = vshrl.u32 %v6025, 16
      %v6362 = vrot.slane %v6360, 6
      %v6363 = vshll.u32 %v6025, 16
      %v6365 = vrot.slane %v6363, 7
      %v6366 = vor.u32 %v6362, %v6365
      %v6367 = vsel %vm6049, %v6358, %v6366
      %v6368 = vrot.slane %v6366, 4
      %v6370 = vshrl.u32 %v6026, 16
      %v6372 = vrot.slane %v6370, 6
      %v6373 = vshll.u32 %v6026, 16
      %v6375 = vrot.slane %v6373, 7
      %v6376 = vor.u32 %v6372, %v6375
      %v6377 = vsel %vm6049, %v6368, %v6376
      %v6378 = vrot.slane %v6376, 4
      %v6380 = vshrl.u32 %v6027, 16
      %v6382 = vrot.slane %v6380, 6
      %v6383 = vshll.u32 %v6027, 16
      %v6385 = vrot.slane %v6383, 7
      %v6386 = vor.u32 %v6382, %v6385
      %v6387 = vsel %vm6049, %v6378, %v6386
      %v6388 = vrot.slane %v6386, 4
      %v6390 = vshrl.u32 %v6028, 16
      %v6392 = vrot.slane %v6390, 6
      %v6393 = vshll.u32 %v6028, 16
      %v6395 = vrot.slane %v6393, 7
      %v6396 = vor.u32 %v6392, %v6395
      %v6397 = vsel %vm6049, %v6388, %v6396
      %v6398 = vrot.slane %v6396, 4
      %v6400 = vshrl.u32 %v6029, 16
      %v6402 = vrot.slane %v6400, 6
      %v6403 = vshll.u32 %v6029, 16
      %v6405 = vrot.slane %v6403, 7
      %v6406 = vor.u32 %v6402, %v6405
      %v6407 = vsel %vm6049, %v6398, %v6406
      %v6408 = vrot.slane %v6406, 4
      %v6446 = vld [vmem:[#allocation3 + $0x8] sm:$0xe]
      %v6447 = vsel %vm6041, %v6057, %v6446
      %6448 = vst [vmem:[#allocation3 + $0x8] sm:$0xe] %v6447
      %6449 = vst.msk [vmem:[#allocation3 + $0xc] sm:$0xf] %vm6030, %v6067
      %6450 = vst.msk [vmem:[#allocation3 + $0x10] sm:$0xf] %vm6030, %v6077
      %6451 = vst.msk [vmem:[#allocation3 + $0x14] sm:$0xf] %vm6030, %v6087
      %6452 = vst.msk [vmem:[#allocation3 + $0x18] sm:$0xf] %vm6030, %v6097
      %6453 = vst.msk [vmem:[#allocation3 + $0x1c] sm:$0xf] %vm6030, %v6107
      %6454 = vst.msk [vmem:[#allocation3 + $0x20] sm:$0xf] %vm6030, %v6117
      %6455 = vst.msk [vmem:[#allocation3 + $0x24] sm:$0xf] %vm6030, %v6127
      %6456 = vst.msk [vmem:[#allocation3 + $0x28] sm:$0xf] %vm6030, %v6137
      %6457 = vst.msk [vmem:[#allocation3 + $0x2c] sm:$0xf] %vm6030, %v6147
      %6458 = vst.msk [vmem:[#allocation3 + $0x30] sm:$0xf] %vm6030, %v6157
      %6459 = vst.msk [vmem:[#allocation3 + $0x34] sm:$0xf] %vm6030, %v6167
      %6460 = vst.msk [vmem:[#allocation3 + $0x38] sm:$0xf] %vm6030, %v6177
      %6461 = vst.msk [vmem:[#allocation3 + $0x3c] sm:$0xf] %vm6030, %v6187
      %6462 = vst.msk [vmem:[#allocation3 + $0x40] sm:$0xf] %vm6030, %v6197
      %6463 = vst.msk [vmem:[#allocation3 + $0x44] sm:$0xf] %vm6030, %v6207
      %6464 = vst.msk [vmem:[#allocation3 + $0x48] sm:$0xf] %vm6030, %v6217
      %6465 = vst.msk [vmem:[#allocation3 + $0x4c] sm:$0xf] %vm6030, %v6227
      %6466 = vst.msk [vmem:[#allocation3 + $0x50] sm:$0xf] %vm6030, %v6237
      %6467 = vst.msk [vmem:[#allocation3 + $0x54] sm:$0xf] %vm6030, %v6247
      %6468 = vst.msk [vmem:[#allocation3 + $0x58] sm:$0xf] %vm6030, %v6257
      %6469 = vst.msk [vmem:[#allocation3 + $0x5c] sm:$0xf] %vm6030, %v6267
      %6470 = vst.msk [vmem:[#allocation3 + $0x60] sm:$0xf] %vm6030, %v6277
      %6471 = vst.msk [vmem:[#allocation3 + $0x64] sm:$0xf] %vm6030, %v6287
      %6472 = vst.msk [vmem:[#allocation3 + $0x68] sm:$0xf] %vm6030, %v6297
      %6473 = vst.msk [vmem:[#allocation3 + $0x6c] sm:$0xf] %vm6030, %v6307
      %6474 = vst.msk [vmem:[#allocation3 + $0x70] sm:$0xf] %vm6030, %v6317
      %6475 = vst.msk [vmem:[#allocation3 + $0x74] sm:$0xf] %vm6030, %v6327
      %6476 = vst.msk [vmem:[#allocation3 + $0x78] sm:$0xf] %vm6030, %v6337
      %6477 = vst.msk [vmem:[#allocation3 + $0x7c] sm:$0xf] %vm6030, %v6347
      %6478 = vst.msk [vmem:[#allocation3 + $0x80] sm:$0xf] %vm6030, %v6357
      %6479 = vst.msk [vmem:[#allocation3 + $0x84] sm:$0xf] %vm6030, %v6367
      %6480 = vst.msk [vmem:[#allocation3 + $0x88] sm:$0xf] %vm6030, %v6377
      %6481 = vst.msk [vmem:[#allocation3 + $0x8c] sm:$0xf] %vm6030, %v6387
      %6482 = vst.msk [vmem:[#allocation3 + $0x90] sm:$0xf] %vm6030, %v6397
      %6483 = vst.msk [vmem:[#allocation3 + $0x94] sm:$0xf] %vm6030, %v6407
      %v6484 = vld [vmem:[#allocation3 + $0x98] sm:$0x3]
      %v6485 = vsel %vm6035, %v6408, %v6484
      %6486 = vst [vmem:[#allocation3 + $0x98] sm:$0x3] %v6485
      %v6487 = vld [vmem:[#allocation3] sm:$0xf]
      %v6488 = vld [vmem:[#allocation3 + $0x4] sm:$0xf]
      %v6489 = vld [vmem:[#allocation3 + $0x8] sm:$0xf]
      %v6490 = vld [vmem:[#allocation3 + $0xc] sm:$0xf]
      %v6491 = vld [vmem:[#allocation3 + $0x10] sm:$0xf]
      %v6492 = vld [vmem:[#allocation3 + $0x14] sm:$0xf]
      %v6493 = vld [vmem:[#allocation3 + $0x18] sm:$0xf]
      %v6494 = vld [vmem:[#allocation3 + $0x1c] sm:$0xf]
      %v6495 = vld [vmem:[#allocation3 + $0x20] sm:$0xf]
      %v6496 = vld [vmem:[#allocation3 + $0x24] sm:$0xf]
      %v6497 = vld [vmem:[#allocation3 + $0x28] sm:$0xf]
      %v6498 = vld [vmem:[#allocation3 + $0x2c] sm:$0xf]
      %v6499 = vld [vmem:[#allocation3 + $0x30] sm:$0xf]
      %v6500 = vld [vmem:[#allocation3 + $0x34] sm:$0xf]
      %v6501 = vld [vmem:[#allocation3 + $0x38] sm:$0xf]
      %v6502 = vld [vmem:[#allocation3 + $0x3c] sm:$0xf]
      %v6503 = vld [vmem:[#allocation3 + $0x40] sm:$0xf]
      %v6504 = vld [vmem:[#allocation3 + $0x44] sm:$0xf]
      %v6505 = vld [vmem:[#allocation3 + $0x48] sm:$0xf]
      %v6506 = vld [vmem:[#allocation3 + $0x4c] sm:$0xf]
      %v6507 = vld [vmem:[#allocation3 + $0x50] sm:$0xf]
      %v6508 = vld [vmem:[#allocation3 + $0x54] sm:$0xf]
      %v6509 = vld [vmem:[#allocation3 + $0x58] sm:$0xf]
      %v6510 = vld [vmem:[#allocation3 + $0x5c] sm:$0xf]
      %v6511 = vld [vmem:[#allocation3 + $0x60] sm:$0xf]
      %v6512 = vld [vmem:[#allocation3 + $0x64] sm:$0xf]
      %v6513 = vld [vmem:[#allocation3 + $0x68] sm:$0xf]
      %v6514 = vld [vmem:[#allocation3 + $0x6c] sm:$0xf]
      %v6515 = vld [vmem:[#allocation3 + $0x70] sm:$0xf]
      %v6516 = vld [vmem:[#allocation3 + $0x74] sm:$0xf]
      %v6517 = vld [vmem:[#allocation3 + $0x78] sm:$0xf]
      %v6518 = vld [vmem:[#allocation3 + $0x7c] sm:$0xf]
      %v6519 = vld [vmem:[#allocation3 + $0x80] sm:$0xf]
      %v6520 = vld [vmem:[#allocation3 + $0x84] sm:$0xf]
      %v6521 = vld [vmem:[#allocation3 + $0x88] sm:$0xf]
      %v6522 = vld [vmem:[#allocation3 + $0x8c] sm:$0xf]
      %v6523 = vld [vmem:[#allocation3 + $0x90] sm:$0xf]
      %v6524 = vld [vmem:[%s3] sm:$0xf]
      %v6562 = vunpack.c.l.b16 %v6487
      %v6563 = vunpack.c.l.b16 %v6488
      %v6564 = vunpack.c.l.b16 %v6489
      %v6565 = vunpack.c.l.b16 %v6490
      %v6566 = vunpack.c.l.b16 %v6491
      %v6567 = vunpack.c.l.b16 %v6492
      %v6568 = vunpack.c.l.b16 %v6493
      %v6569 = vunpack.c.l.b16 %v6494
      %v6570 = vunpack.c.l.b16 %v6495
      %v6571 = vunpack.c.l.b16 %v6496
      %v6572 = vunpack.c.l.b16 %v6497
      %v6573 = vunpack.c.l.b16 %v6498
      %v6574 = vunpack.c.l.b16 %v6499
      %v6575 = vunpack.c.l.b16 %v6500
      %v6576 = vunpack.c.l.b16 %v6501
      %v6577 = vunpack.c.l.b16 %v6502
      %v6578 = vunpack.c.l.b16 %v6503
      %v6579 = vunpack.c.l.b16 %v6504
      %v6580 = vunpack.c.l.b16 %v6505
      %v6581 = vunpack.c.l.b16 %v6506
      %v6582 = vunpack.c.l.b16 %v6507
      %v6583 = vunpack.c.l.b16 %v6508
      %v6584 = vunpack.c.l.b16 %v6509
      %v6585 = vunpack.c.l.b16 %v6510
      %v6586 = vunpack.c.l.b16 %v6511
      %v6587 = vunpack.c.l.b16 %v6512
      %v6588 = vunpack.c.l.b16 %v6513
      %v6589 = vunpack.c.l.b16 %v6514
      %v6590 = vunpack.c.l.b16 %v6515
      %v6591 = vunpack.c.l.b16 %v6516
      %v6592 = vunpack.c.l.b16 %v6517
      %v6593 = vunpack.c.l.b16 %v6518
      %v6594 = vunpack.c.l.b16 %v6519
      %v6595 = vunpack.c.l.b16 %v6520
      %v6596 = vunpack.c.l.b16 %v6521
      %v6597 = vunpack.c.l.b16 %v6522
      %v6598 = vunpack.c.l.b16 %v6523
      %v6599 = vpack.c.b16 %v6563, %v6562
      %v6600 = vpack.c.b16 %v6565, %v6564
      %v6601 = vpack.c.b16 %v6567, %v6566
      %v6602 = vpack.c.b16 %v6569, %v6568
      %v6603 = vpack.c.b16 %v6571, %v6570
      %v6604 = vpack.c.b16 %v6573, %v6572
      %v6605 = vpack.c.b16 %v6575, %v6574
      %v6606 = vpack.c.b16 %v6577, %v6576
      %v6607 = vpack.c.b16 %v6579, %v6578
      %v6608 = vpack.c.b16 %v6581, %v6580
      %v6609 = vpack.c.b16 %v6583, %v6582
      %v6610 = vpack.c.b16 %v6585, %v6584
      %v6611 = vpack.c.b16 %v6587, %v6586
      %v6612 = vpack.c.b16 %v6589, %v6588
      %v6613 = vpack.c.b16 %v6591, %v6590
      %v6614 = vpack.c.b16 %v6593, %v6592
      %v6615 = vpack.c.b16 %v6595, %v6594
      %v6616 = vpack.c.b16 %v6597, %v6596
      %v6617 = vpack.c.b16 %v6598, %v6598
      %vm6618 = vcmask 64512
      %v6620 = vsel %vm6618, %v6599, 0
      %v6623 = vsel %vm6618, %v6600, 0
      %v6626 = vsel %vm6618, %v6601, 0
      %v6629 = vsel %vm6618, %v6602, 0
      %v6632 = vsel %vm6618, %v6603, 0
      %v6635 = vsel %vm6618, %v6604, 0
      %v6638 = vsel %vm6618, %v6605, 0
      %v6641 = vsel %vm6618, %v6606, 0
      %v6644 = vsel %vm6618, %v6607, 0
      %v6647 = vsel %vm6618, %v6608, 0
      %v6650 = vsel %vm6618, %v6609, 0
      %v6653 = vsel %vm6618, %v6610, 0
      %v6656 = vsel %vm6618, %v6611, 0
      %v6659 = vsel %vm6618, %v6612, 0
      %v6662 = vsel %vm6618, %v6613, 0
      %v6665 = vsel %vm6618, %v6614, 0
      %v6668 = vsel %vm6618, %v6615, 0
      %v6671 = vsel %vm6618, %v6616, 0
      %v6674 = vsel %vm6618, %v6617, 0
      %vm6676 = vcmask 1043456
      %v6678 = vsel %vm6676, %v6524, 0
      %6680 = vmatpush.bf16.msra.mxu0 0
      %6681 = vmatpush.bf16.msra.mxu0 0
      %6682 = vmatpush.bf16.msra.mxu0 0
      %6683 = vmatpush.bf16.msra.mxu0 0
      %6684 = vmatpush.bf16.msra.mxu0 0
      %6685 = vmatpush.bf16.msra.mxu0 0
      %6686 = vmatpush.bf16.msra.mxu0 0
      %6687 = vmatpush.bf16.msra.mxu0 %v6678
      %6688 = vmatmul.bf16.gmra.mxu0 %v6620
      %v6689 = vpop.f32.mrf.mxu0
      %v6690 = vadd.f32 0.0, %v6689
      %v6691 = vpop.f32.mrf.mxu0
      %v6692 = vadd.f32 0.0, %v6691
      %6693 = vmatmul.bf16.gmra.mxu0 %v6623
      %v6694 = vpop.f32.mrf.mxu0
      %v6695 = vadd.f32 0.0, %v6694
      %v6696 = vpop.f32.mrf.mxu0
      %v6697 = vadd.f32 0.0, %v6696
      %6698 = vmatmul.bf16.gmra.mxu0 %v6626
      %v6699 = vpop.f32.mrf.mxu0
      %v6700 = vadd.f32 0.0, %v6699
      %v6701 = vpop.f32.mrf.mxu0
      %v6702 = vadd.f32 0.0, %v6701
      %6703 = vmatmul.bf16.gmra.mxu0 %v6629
      %v6704 = vpop.f32.mrf.mxu0
      %v6705 = vadd.f32 0.0, %v6704
      %v6706 = vpop.f32.mrf.mxu0
      %v6707 = vadd.f32 0.0, %v6706
      %6708 = vmatmul.bf16.gmra.mxu0 %v6632
      %v6709 = vpop.f32.mrf.mxu0
      %v6710 = vadd.f32 0.0, %v6709
      %v6711 = vpop.f32.mrf.mxu0
      %v6712 = vadd.f32 0.0, %v6711
      %6713 = vmatmul.bf16.gmra.mxu0 %v6635
      %v6714 = vpop.f32.mrf.mxu0
      %v6715 = vadd.f32 0.0, %v6714
      %v6716 = vpop.f32.mrf.mxu0
      %v6717 = vadd.f32 0.0, %v6716
      %6718 = vmatmul.bf16.gmra.mxu0 %v6638
      %v6719 = vpop.f32.mrf.mxu0
      %v6720 = vadd.f32 0.0, %v6719
      %v6721 = vpop.f32.mrf.mxu0
      %v6722 = vadd.f32 0.0, %v6721
      %6723 = vmatmul.bf16.gmra.mxu0 %v6641
      %v6724 = vpop.f32.mrf.mxu0
      %v6725 = vadd.f32 0.0, %v6724
      %v6726 = vpop.f32.mrf.mxu0
      %v6727 = vadd.f32 0.0, %v6726
      %6728 = vmatmul.bf16.gmra.mxu0 %v6644
      %v6729 = vpop.f32.mrf.mxu0
      %v6730 = vadd.f32 0.0, %v6729
      %v6731 = vpop.f32.mrf.mxu0
      %v6732 = vadd.f32 0.0, %v6731
      %6733 = vmatmul.bf16.gmra.mxu0 %v6647
      %v6734 = vpop.f32.mrf.mxu0
      %v6735 = vadd.f32 0.0, %v6734
      %v6736 = vpop.f32.mrf.mxu0
      %v6737 = vadd.f32 0.0, %v6736
      %6738 = vmatmul.bf16.gmra.mxu0 %v6650
      %v6739 = vpop.f32.mrf.mxu0
      %v6740 = vadd.f32 0.0, %v6739
      %v6741 = vpop.f32.mrf.mxu0
      %v6742 = vadd.f32 0.0, %v6741
      %6743 = vmatmul.bf16.gmra.mxu0 %v6653
      %v6744 = vpop.f32.mrf.mxu0
      %v6745 = vadd.f32 0.0, %v6744
      %v6746 = vpop.f32.mrf.mxu0
      %v6747 = vadd.f32 0.0, %v6746
      %6748 = vmatmul.bf16.gmra.mxu0 %v6656
      %v6749 = vpop.f32.mrf.mxu0
      %v6750 = vadd.f32 0.0, %v6749
      %v6751 = vpop.f32.mrf.mxu0
      %v6752 = vadd.f32 0.0, %v6751
      %6753 = vmatmul.bf16.gmra.mxu0 %v6659
      %v6754 = vpop.f32.mrf.mxu0
      %v6755 = vadd.f32 0.0, %v6754
      %v6756 = vpop.f32.mrf.mxu0
      %v6757 = vadd.f32 0.0, %v6756
      %6758 = vmatmul.bf16.gmra.mxu0 %v6662
      %v6759 = vpop.f32.mrf.mxu0
      %v6760 = vadd.f32 0.0, %v6759
      %v6761 = vpop.f32.mrf.mxu0
      %v6762 = vadd.f32 0.0, %v6761
      %6763 = vmatmul.bf16.gmra.mxu0 %v6665
      %v6764 = vpop.f32.mrf.mxu0
      %v6765 = vadd.f32 0.0, %v6764
      %v6766 = vpop.f32.mrf.mxu0
      %v6767 = vadd.f32 0.0, %v6766
      %6768 = vmatmul.bf16.gmra.mxu0 %v6668
      %v6769 = vpop.f32.mrf.mxu0
      %v6770 = vadd.f32 0.0, %v6769
      %v6771 = vpop.f32.mrf.mxu0
      %v6772 = vadd.f32 0.0, %v6771
      %6773 = vmatmul.bf16.gmra.mxu0 %v6671
      %v6774 = vpop.f32.mrf.mxu0
      %v6775 = vadd.f32 0.0, %v6774
      %v6776 = vpop.f32.mrf.mxu0
      %v6777 = vadd.f32 0.0, %v6776
      %6778 = vmatmul.bf16.gmra.mxu0 %v6674
      %v6779 = vpop.f32.mrf.mxu0
      %v6780 = vadd.f32 0.0, %v6779
      %v6781 = vpop.f32.mrf.mxu0
      %6782 = vdwg.mxu0
      %vm6783 = vcmask 97280
      %6784 = vst.msk [vmem:[#allocation4] sm:$0xff] %vm6783, %v6690
      %6785 = vst.msk [vmem:[#allocation4 + $0x8] sm:$0xff] %vm6783, %v6692
      %6786 = vst.msk [vmem:[#allocation4 + $0x10] sm:$0xff] %vm6783, %v6695
      %6787 = vst.msk [vmem:[#allocation4 + $0x18] sm:$0xff] %vm6783, %v6697
      %6788 = vst.msk [vmem:[#allocation4 + $0x20] sm:$0xff] %vm6783, %v6700
      %6789 = vst.msk [vmem:[#allocation4 + $0x28] sm:$0xff] %vm6783, %v6702
      %6790 = vst.msk [vmem:[#allocation4 + $0x30] sm:$0xff] %vm6783, %v6705
      %6791 = vst.msk [vmem:[#allocation4 + $0x38] sm:$0xff] %vm6783, %v6707
      %6792 = vst.msk [vmem:[#allocation4 + $0x40] sm:$0xff] %vm6783, %v6710
      %6793 = vst.msk [vmem:[#allocation4 + $0x48] sm:$0xff] %vm6783, %v6712
      %6794 = vst.msk [vmem:[#allocation4 + $0x50] sm:$0xff] %vm6783, %v6715
      %6795 = vst.msk [vmem:[#allocation4 + $0x58] sm:$0xff] %vm6783, %v6717
      %6796 = vst.msk [vmem:[#allocation4 + $0x60] sm:$0xff] %vm6783, %v6720
      %6797 = vst.msk [vmem:[#allocation4 + $0x68] sm:$0xff] %vm6783, %v6722
      %6798 = vst.msk [vmem:[#allocation4 + $0x70] sm:$0xff] %vm6783, %v6725
      %6799 = vst.msk [vmem:[#allocation4 + $0x78] sm:$0xff] %vm6783, %v6727
      %6800 = vst.msk [vmem:[#allocation4 + $0x80] sm:$0xff] %vm6783, %v6730
      %6801 = vst.msk [vmem:[#allocation4 + $0x88] sm:$0xff] %vm6783, %v6732
      %6802 = vst.msk [vmem:[#allocation4 + $0x90] sm:$0xff] %vm6783, %v6735
      %6803 = vst.msk [vmem:[#allocation4 + $0x98] sm:$0xff] %vm6783, %v6737
      %6804 = vst.msk [vmem:[#allocation4 + $0xa0] sm:$0xff] %vm6783, %v6740
      %6805 = vst.msk [vmem:[#allocation4 + $0xa8] sm:$0xff] %vm6783, %v6742
      %6806 = vst.msk [vmem:[#allocation4 + $0xb0] sm:$0xff] %vm6783, %v6745
      %6807 = vst.msk [vmem:[#allocation4 + $0xb8] sm:$0xff] %vm6783, %v6747
      %6808 = vst.msk [vmem:[#allocation4 + $0xc0] sm:$0xff] %vm6783, %v6750
      %6809 = vst.msk [vmem:[#allocation4 + $0xc8] sm:$0xff] %vm6783, %v6752
      %6810 = vst.msk [vmem:[#allocation4 + $0xd0] sm:$0xff] %vm6783, %v6755
      %6811 = vst.msk [vmem:[#allocation4 + $0xd8] sm:$0xff] %vm6783, %v6757
      %6812 = vst.msk [vmem:[#allocation4 + $0xe0] sm:$0xff] %vm6783, %v6760
      %6813 = vst.msk [vmem:[#allocation4 + $0xe8] sm:$0xff] %vm6783, %v6762
      %6814 = vst.msk [vmem:[#allocation4 + $0xf0] sm:$0xff] %vm6783, %v6765
      %6815 = vst.msk [vmem:[#allocation4 + $0xf8] sm:$0xff] %vm6783, %v6767
      %6816 = vst.msk [vmem:[#allocation4 + $0x100] sm:$0xff] %vm6783, %v6770
      %6817 = vst.msk [vmem:[#allocation4 + $0x108] sm:$0xff] %vm6783, %v6772
      %6818 = vst.msk [vmem:[#allocation4 + $0x110] sm:$0xff] %vm6783, %v6775
      %6819 = vst.msk [vmem:[#allocation4 + $0x118] sm:$0xff] %vm6783, %v6777
      %6820 = vst.msk [vmem:[#allocation4 + $0x120] sm:$0xff] %vm6783, %v6780
      %v6821 = vld [vmem:[#allocation4] sm:$0xff]
      %v6822 = vld [vmem:[#allocation4 + $0x8] sm:$0xff]
      %v6823 = vld [vmem:[#allocation4 + $0x10] sm:$0xff]
      %v6824 = vld [vmem:[#allocation4 + $0x18] sm:$0xff]
      %v6825 = vld [vmem:[#allocation4 + $0x20] sm:$0xff]
      %v6826 = vld [vmem:[#allocation4 + $0x28] sm:$0xff]
      %v6827 = vld [vmem:[#allocation4 + $0x30] sm:$0xff]
      %v6828 = vld [vmem:[#allocation4 + $0x38] sm:$0xff]
      %v6829 = vld [vmem:[#allocation4 + $0x40] sm:$0xff]
      %v6830 = vld [vmem:[#allocation4 + $0x48] sm:$0xff]
      %v6831 = vld [vmem:[#allocation4 + $0x50] sm:$0xff]
      %v6832 = vld [vmem:[#allocation4 + $0x58] sm:$0xff]
      %v6833 = vld [vmem:[#allocation4 + $0x60] sm:$0xff]
      %v6834 = vld [vmem:[#allocation4 + $0x68] sm:$0xff]
      %v6835 = vld [vmem:[#allocation4 + $0x70] sm:$0xff]
      %v6836 = vld [vmem:[#allocation4 + $0x78] sm:$0xff]
      %v6837 = vld [vmem:[#allocation4 + $0x80] sm:$0xff]
      %v6838 = vld [vmem:[#allocation4 + $0x88] sm:$0xff]
      %v6839 = vld [vmem:[#allocation4 + $0x90] sm:$0xff]
      %v6840 = vld [vmem:[#allocation4 + $0x98] sm:$0xff]
      %v6841 = vld [vmem:[#allocation4 + $0xa0] sm:$0xff]
      %v6842 = vld [vmem:[#allocation4 + $0xa8] sm:$0xff]
      %v6843 = vld [vmem:[#allocation4 + $0xb0] sm:$0xff]
      %v6844 = vld [vmem:[#allocation4 + $0xb8] sm:$0xff]
      %v6845 = vld [vmem:[#allocation4 + $0xc0] sm:$0xff]
      %v6846 = vld [vmem:[#allocation4 + $0xc8] sm:$0xff]
      %v6847 = vld [vmem:[#allocation4 + $0xd0] sm:$0xff]
      %v6848 = vld [vmem:[#allocation4 + $0xd8] sm:$0xff]
      %v6849 = vld [vmem:[#allocation4 + $0xe0] sm:$0xff]
      %v6850 = vld [vmem:[#allocation4 + $0xe8] sm:$0xff]
      %v6851 = vld [vmem:[#allocation4 + $0xf0] sm:$0xff]
      %v6852 = vld [vmem:[#allocation4 + $0xf8] sm:$0xff]
      %v6853 = vld [vmem:[#allocation4 + $0x100] sm:$0xff]
      %v6854 = vld [vmem:[#allocation4 + $0x108] sm:$0xff]
      %v6855 = vld [vmem:[#allocation4 + $0x110] sm:$0xff]
      %v6856 = vld [vmem:[#allocation4 + $0x118] sm:$0xff]
      %v6857 = vadd.f32 %v6821, 0.0
      %v6858 = vadd.f32 %v6822, 0.0
      %v6859 = vadd.f32 %v6823, 0.0
      %v6860 = vadd.f32 %v6824, 0.0
      %v6861 = vadd.f32 %v6825, 0.0
      %v6862 = vadd.f32 %v6826, 0.0
      %v6863 = vadd.f32 %v6827, 0.0
      %v6864 = vadd.f32 %v6828, 0.0
      %v6865 = vadd.f32 %v6829, 0.0
      %v6866 = vadd.f32 %v6830, 0.0
      %v6867 = vadd.f32 %v6831, 0.0
      %v6868 = vadd.f32 %v6832, 0.0
      %v6869 = vadd.f32 %v6833, 0.0
      %v6870 = vadd.f32 %v6834, 0.0
      %v6871 = vadd.f32 %v6835, 0.0
      %v6872 = vadd.f32 %v6836, 0.0
      %v6873 = vadd.f32 %v6837, 0.0
      %v6874 = vadd.f32 %v6838, 0.0
      %v6875 = vadd.f32 %v6839, 0.0
      %v6876 = vadd.f32 %v6840, 0.0
      %v6877 = vadd.f32 %v6841, 0.0
      %v6878 = vadd.f32 %v6842, 0.0
      %v6879 = vadd.f32 %v6843, 0.0
      %v6880 = vadd.f32 %v6844, 0.0
      %v6881 = vadd.f32 %v6845, 0.0
      %v6882 = vadd.f32 %v6846, 0.0
      %v6883 = vadd.f32 %v6847, 0.0
      %v6884 = vadd.f32 %v6848, 0.0
      %v6885 = vadd.f32 %v6849, 0.0
      %v6886 = vadd.f32 %v6850, 0.0
      %v6887 = vadd.f32 %v6851, 0.0
      %v6888 = vadd.f32 %v6852, 0.0
      %v6889 = vadd.f32 %v6853, 0.0
      %v6890 = vadd.f32 %v6854, 0.0
      %v6891 = vadd.f32 %v6855, 0.0
      %v6892 = vadd.f32 %v6856, 0.0
      %v6893 = vld [vmem:[#allocation4 + $0x1] sm:$0xff]
      %v6894 = vld [vmem:[#allocation4 + $0x9] sm:$0xff]
      %v6895 = vld [vmem:[#allocation4 + $0x11] sm:$0xff]
      %v6896 = vld [vmem:[#allocation4 + $0x19] sm:$0xff]
      %v6897 = vld [vmem:[#allocation4 + $0x21] sm:$0xff]
      %v6898 = vld [vmem:[#allocation4 + $0x29] sm:$0xff]
      %v6899 = vld [vmem:[#allocation4 + $0x31] sm:$0xff]
      %v6900 = vld [vmem:[#allocation4 + $0x39] sm:$0xff]
      %v6901 = vld [vmem:[#allocation4 + $0x41] sm:$0xff]
      %v6902 = vld [vmem:[#allocation4 + $0x49] sm:$0xff]
      %v6903 = vld [vmem:[#allocation4 + $0x51] sm:$0xff]
      %v6904 = vld [vmem:[#allocation4 + $0x59] sm:$0xff]
      %v6905 = vld [vmem:[#allocation4 + $0x61] sm:$0xff]
      %v6906 = vld [vmem:[#allocation4 + $0x69] sm:$0xff]
      %v6907 = vld [vmem:[#allocation4 + $0x71] sm:$0xff]
      %v6908 = vld [vmem:[#allocation4 + $0x79] sm:$0xff]
      %v6909 = vld [vmem:[#allocation4 + $0x81] sm:$0xff]
      %v6910 = vld [vmem:[#allocation4 + $0x89] sm:$0xff]
      %v6911 = vld [vmem:[#allocation4 + $0x91] sm:$0xff]
      %v6912 = vld [vmem:[#allocation4 + $0x99] sm:$0xff]
      %v6913 = vld [vmem:[#allocation4 + $0xa1] sm:$0xff]
      %v6914 = vld [vmem:[#allocation4 + $0xa9] sm:$0xff]
      %v6915 = vld [vmem:[#allocation4 + $0xb1] sm:$0xff]
      %v6916 = vld [vmem:[#allocation4 + $0xb9] sm:$0xff]
      %v6917 = vld [vmem:[#allocation4 + $0xc1] sm:$0xff]
      %v6918 = vld [vmem:[#allocation4 + $0xc9] sm:$0xff]
      %v6919 = vld [vmem:[#allocation4 + $0xd1] sm:$0xff]
      %v6920 = vld [vmem:[#allocation4 + $0xd9] sm:$0xff]
      %v6921 = vld [vmem:[#allocation4 + $0xe1] sm:$0xff]
      %v6922 = vld [vmem:[#allocation4 + $0xe9] sm:$0xff]
      %v6923 = vld [vmem:[#allocation4 + $0xf1] sm:$0xff]
      %v6924 = vld [vmem:[#allocation4 + $0xf9] sm:$0xff]
      %v6925 = vld [vmem:[#allocation4 + $0x101] sm:$0xff]
      %v6926 = vld [vmem:[#allocation4 + $0x109] sm:$0xff]
      %v6927 = vld [vmem:[#allocation4 + $0x111] sm:$0xff]
      %v6928 = vld [vmem:[#allocation4 + $0x119] sm:$0xff]
      %6965 = vrot.lane.b32.xlu0 %v6893, 124
      %v6966 = vpop.permute.xlu0 %6965
      %6967 = vrot.lane.b32.xlu0 %v6894, 124
      %v6968 = vpop.permute.xlu0 %6967
      %6969 = vrot.lane.b32.xlu0 %v6895, 124
      %v6970 = vpop.permute.xlu0 %6969
      %6971 = vrot.lane.b32.xlu0 %v6896, 124
      %v6972 = vpop.permute.xlu0 %6971
      %6973 = vrot.lane.b32.xlu0 %v6897, 124
      %v6974 = vpop.permute.xlu0 %6973
      %6975 = vrot.lane.b32.xlu0 %v6898, 124
      %v6976 = vpop.permute.xlu0 %6975
      %6977 = vrot.lane.b32.xlu0 %v6899, 124
      %v6978 = vpop.permute.xlu0 %6977
      %6979 = vrot.lane.b32.xlu0 %v6900, 124
      %v6980 = vpop.permute.xlu0 %6979
      %6981 = vrot.lane.b32.xlu0 %v6901, 124
      %v6982 = vpop.permute.xlu0 %6981
      %6983 = vrot.lane.b32.xlu0 %v6902, 124
      %v6984 = vpop.permute.xlu0 %6983
      %6985 = vrot.lane.b32.xlu0 %v6903, 124
      %v6986 = vpop.permute.xlu0 %6985
      %6987 = vrot.lane.b32.xlu0 %v6904, 124
      %v6988 = vpop.permute.xlu0 %6987
      %6989 = vrot.lane.b32.xlu0 %v6905, 124
      %v6990 = vpop.permute.xlu0 %6989
      %6991 = vrot.lane.b32.xlu0 %v6906, 124
      %v6992 = vpop.permute.xlu0 %6991
      %6993 = vrot.lane.b32.xlu0 %v6907, 124
      %v6994 = vpop.permute.xlu0 %6993
      %6995 = vrot.lane.b32.xlu0 %v6908, 124
      %v6996 = vpop.permute.xlu0 %6995
      %6997 = vrot.lane.b32.xlu0 %v6909, 124
      %v6998 = vpop.permute.xlu0 %6997
      %6999 = vrot.lane.b32.xlu0 %v6910, 124
      %v7000 = vpop.permute.xlu0 %6999
      %7001 = vrot.lane.b32.xlu0 %v6911, 124
      %v7002 = vpop.permute.xlu0 %7001
      %7003 = vrot.lane.b32.xlu0 %v6912, 124
      %v7004 = vpop.permute.xlu0 %7003
      %7005 = vrot.lane.b32.xlu0 %v6913, 124
      %v7006 = vpop.permute.xlu0 %7005
      %7007 = vrot.lane.b32.xlu0 %v6914, 124
      %v7008 = vpop.permute.xlu0 %7007
      %7009 = vrot.lane.b32.xlu0 %v6915, 124
      %v7010 = vpop.permute.xlu0 %7009
      %7011 = vrot.lane.b32.xlu0 %v6916, 124
      %v7012 = vpop.permute.xlu0 %7011
      %7013 = vrot.lane.b32.xlu0 %v6917, 124
      %v7014 = vpop.permute.xlu0 %7013
      %7015 = vrot.lane.b32.xlu0 %v6918, 124
      %v7016 = vpop.permute.xlu0 %7015
      %7017 = vrot.lane.b32.xlu0 %v6919, 124
      %v7018 = vpop.permute.xlu0 %7017
      %7019 = vrot.lane.b32.xlu0 %v6920, 124
      %v7020 = vpop.permute.xlu0 %7019
      %7021 = vrot.lane.b32.xlu0 %v6921, 124
      %v7022 = vpop.permute.xlu0 %7021
      %7023 = vrot.lane.b32.xlu0 %v6922, 124
      %v7024 = vpop.permute.xlu0 %7023
      %7025 = vrot.lane.b32.xlu0 %v6923, 124
      %v7026 = vpop.permute.xlu0 %7025
      %7027 = vrot.lane.b32.xlu0 %v6924, 124
      %v7028 = vpop.permute.xlu0 %7027
      %7029 = vrot.lane.b32.xlu0 %v6925, 124
      %v7030 = vpop.permute.xlu0 %7029
      %7031 = vrot.lane.b32.xlu0 %v6926, 124
      %v7032 = vpop.permute.xlu0 %7031
      %7033 = vrot.lane.b32.xlu0 %v6927, 124
      %v7034 = vpop.permute.xlu0 %7033
      %7035 = vrot.lane.b32.xlu0 %v6928, 124
      %v7036 = vpop.permute.xlu0 %7035
      %v7073 = vadd.f32 %v6857, %v6966
      %v7074 = vadd.f32 %v6858, %v6968
      %v7075 = vadd.f32 %v6859, %v6970
      %v7076 = vadd.f32 %v6860, %v6972
      %v7077 = vadd.f32 %v6861, %v6974
      %v7078 = vadd.f32 %v6862, %v6976
      %v7079 = vadd.f32 %v6863, %v6978
      %v7080 = vadd.f32 %v6864, %v6980
      %v7081 = vadd.f32 %v6865, %v6982
      %v7082 = vadd.f32 %v6866, %v6984
      %v7083 = vadd.f32 %v6867, %v6986
      %v7084 = vadd.f32 %v6868, %v6988
      %v7085 = vadd.f32 %v6869, %v6990
      %v7086 = vadd.f32 %v6870, %v6992
      %v7087 = vadd.f32 %v6871, %v6994
      %v7088 = vadd.f32 %v6872, %v6996
      %v7089 = vadd.f32 %v6873, %v6998
      %v7090 = vadd.f32 %v6874, %v7000
      %v7091 = vadd.f32 %v6875, %v7002
      %v7092 = vadd.f32 %v6876, %v7004
      %v7093 = vadd.f32 %v6877, %v7006
      %v7094 = vadd.f32 %v6878, %v7008
      %v7095 = vadd.f32 %v6879, %v7010
      %v7096 = vadd.f32 %v6880, %v7012
      %v7097 = vadd.f32 %v6881, %v7014
      %v7098 = vadd.f32 %v6882, %v7016
      %v7099 = vadd.f32 %v6883, %v7018
      %v7100 = vadd.f32 %v6884, %v7020
      %v7101 = vadd.f32 %v6885, %v7022
      %v7102 = vadd.f32 %v6886, %v7024
      %v7103 = vadd.f32 %v6887, %v7026
      %v7104 = vadd.f32 %v6888, %v7028
      %v7105 = vadd.f32 %v6889, %v7030
      %v7106 = vadd.f32 %v6890, %v7032
      %v7107 = vadd.f32 %v6891, %v7034
      %v7108 = vadd.f32 %v6892, %v7036
      %v7109 = vld [vmem:[#allocation4 + $0x2] sm:$0xff]
      %v7110 = vld [vmem:[#allocation4 + $0xa] sm:$0xff]
      %v7111 = vld [vmem:[#allocation4 + $0x12] sm:$0xff]
      %v7112 = vld [vmem:[#allocation4 + $0x1a] sm:$0xff]
      %v7113 = vld [vmem:[#allocation4 + $0x22] sm:$0xff]
      %v7114 = vld [vmem:[#allocation4 + $0x2a] sm:$0xff]
      %v7115 = vld [vmem:[#allocation4 + $0x32] sm:$0xff]
      %v7116 = vld [vmem:[#allocation4 + $0x3a] sm:$0xff]
      %v7117 = vld [vmem:[#allocation4 + $0x42] sm:$0xff]
      %v7118 = vld [vmem:[#allocation4 + $0x4a] sm:$0xff]
      %v7119 = vld [vmem:[#allocation4 + $0x52] sm:$0xff]
      %v7120 = vld [vmem:[#allocation4 + $0x5a] sm:$0xff]
      %v7121 = vld [vmem:[#allocation4 + $0x62] sm:$0xff]
      %v7122 = vld [vmem:[#allocation4 + $0x6a] sm:$0xff]
      %v7123 = vld [vmem:[#allocation4 + $0x72] sm:$0xff]
      %v7124 = vld [vmem:[#allocation4 + $0x7a] sm:$0xff]
      %v7125 = vld [vmem:[#allocation4 + $0x82] sm:$0xff]
      %v7126 = vld [vmem:[#allocation4 + $0x8a] sm:$0xff]
      %v7127 = vld [vmem:[#allocation4 + $0x92] sm:$0xff]
      %v7128 = vld [vmem:[#allocation4 + $0x9a] sm:$0xff]
      %v7129 = vld [vmem:[#allocation4 + $0xa2] sm:$0xff]
      %v7130 = vld [vmem:[#allocation4 + $0xaa] sm:$0xff]
      %v7131 = vld [vmem:[#allocation4 + $0xb2] sm:$0xff]
      %v7132 = vld [vmem:[#allocation4 + $0xba] sm:$0xff]
      %v7133 = vld [vmem:[#allocation4 + $0xc2] sm:$0xff]
      %v7134 = vld [vmem:[#allocation4 + $0xca] sm:$0xff]
      %v7135 = vld [vmem:[#allocation4 + $0xd2] sm:$0xff]
      %v7136 = vld [vmem:[#allocation4 + $0xda] sm:$0xff]
      %v7137 = vld [vmem:[#allocation4 + $0xe2] sm:$0xff]
      %v7138 = vld [vmem:[#allocation4 + $0xea] sm:$0xff]
      %v7139 = vld [vmem:[#allocation4 + $0xf2] sm:$0xff]
      %v7140 = vld [vmem:[#allocation4 + $0xfa] sm:$0xff]
      %v7141 = vld [vmem:[#allocation4 + $0x102] sm:$0xff]
      %v7142 = vld [vmem:[#allocation4 + $0x10a] sm:$0xff]
      %v7143 = vld [vmem:[#allocation4 + $0x112] sm:$0xff]
      %v7144 = vld [vmem:[#allocation4 + $0x11a] sm:$0xff]
      %7181 = vrot.lane.b32.xlu0 %v7109, 120
      %v7182 = vpop.permute.xlu0 %7181
      %7183 = vrot.lane.b32.xlu0 %v7110, 120
      %v7184 = vpop.permute.xlu0 %7183
      %7185 = vrot.lane.b32.xlu0 %v7111, 120
      %v7186 = vpop.permute.xlu0 %7185
      %7187 = vrot.lane.b32.xlu0 %v7112, 120
      %v7188 = vpop.permute.xlu0 %7187
      %7189 = vrot.lane.b32.xlu0 %v7113, 120
      %v7190 = vpop.permute.xlu0 %7189
      %7191 = vrot.lane.b32.xlu0 %v7114, 120
      %v7192 = vpop.permute.xlu0 %7191
      %7193 = vrot.lane.b32.xlu0 %v7115, 120
      %v7194 = vpop.permute.xlu0 %7193
      %7195 = vrot.lane.b32.xlu0 %v7116, 120
      %v7196 = vpop.permute.xlu0 %7195
      %7197 = vrot.lane.b32.xlu0 %v7117, 120
      %v7198 = vpop.permute.xlu0 %7197
      %7199 = vrot.lane.b32.xlu0 %v7118, 120
      %v7200 = vpop.permute.xlu0 %7199
      %7201 = vrot.lane.b32.xlu0 %v7119, 120
      %v7202 = vpop.permute.xlu0 %7201
      %7203 = vrot.lane.b32.xlu0 %v7120, 120
      %v7204 = vpop.permute.xlu0 %7203
      %7205 = vrot.lane.b32.xlu0 %v7121, 120
      %v7206 = vpop.permute.xlu0 %7205
      %7207 = vrot.lane.b32.xlu0 %v7122, 120
      %v7208 = vpop.permute.xlu0 %7207
      %7209 = vrot.lane.b32.xlu0 %v7123, 120
      %v7210 = vpop.permute.xlu0 %7209
      %7211 = vrot.lane.b32.xlu0 %v7124, 120
      %v7212 = vpop.permute.xlu0 %7211
      %7213 = vrot.lane.b32.xlu0 %v7125, 120
      %v7214 = vpop.permute.xlu0 %7213
      %7215 = vrot.lane.b32.xlu0 %v7126, 120
      %v7216 = vpop.permute.xlu0 %7215
      %7217 = vrot.lane.b32.xlu0 %v7127, 120
      %v7218 = vpop.permute.xlu0 %7217
      %7219 = vrot.lane.b32.xlu0 %v7128, 120
      %v7220 = vpop.permute.xlu0 %7219
      %7221 = vrot.lane.b32.xlu0 %v7129, 120
      %v7222 = vpop.permute.xlu0 %7221
      %7223 = vrot.lane.b32.xlu0 %v7130, 120
      %v7224 = vpop.permute.xlu0 %7223
      %7225 = vrot.lane.b32.xlu0 %v7131, 120
      %v7226 = vpop.permute.xlu0 %7225
      %7227 = vrot.lane.b32.xlu0 %v7132, 120
      %v7228 = vpop.permute.xlu0 %7227
      %7229 = vrot.lane.b32.xlu0 %v7133, 120
      %v7230 = vpop.permute.xlu0 %7229
      %7231 = vrot.lane.b32.xlu0 %v7134, 120
      %v7232 = vpop.permute.xlu0 %7231
      %7233 = vrot.lane.b32.xlu0 %v7135, 120
      %v7234 = vpop.permute.xlu0 %7233
      %7235 = vrot.lane.b32.xlu0 %v7136, 120
      %v7236 = vpop.permute.xlu0 %7235
      %7237 = vrot.lane.b32.xlu0 %v7137, 120
      %v7238 = vpop.permute.xlu0 %7237
      %7239 = vrot.lane.b32.xlu0 %v7138, 120
      %v7240 = vpop.permute.xlu0 %7239
      %7241 = vrot.lane.b32.xlu0 %v7139, 120
      %v7242 = vpop.permute.xlu0 %7241
      %7243 = vrot.lane.b32.xlu0 %v7140, 120
      %v7244 = vpop.permute.xlu0 %7243
      %7245 = vrot.lane.b32.xlu0 %v7141, 120
      %v7246 = vpop.permute.xlu0 %7245
      %7247 = vrot.lane.b32.xlu0 %v7142, 120
      %v7248 = vpop.permute.xlu0 %7247
      %7249 = vrot.lane.b32.xlu0 %v7143, 120
      %v7250 = vpop.permute.xlu0 %7249
      %7251 = vrot.lane.b32.xlu0 %v7144, 120
      %v7252 = vpop.permute.xlu0 %7251
      %v7289 = vadd.f32 %v7073, %v7182
      %v7290 = vadd.f32 %v7074, %v7184
      %v7291 = vadd.f32 %v7075, %v7186
      %v7292 = vadd.f32 %v7076, %v7188
      %v7293 = vadd.f32 %v7077, %v7190
      %v7294 = vadd.f32 %v7078, %v7192
      %v7295 = vadd.f32 %v7079, %v7194
      %v7296 = vadd.f32 %v7080, %v7196
      %v7297 = vadd.f32 %v7081, %v7198
      %v7298 = vadd.f32 %v7082, %v7200
      %v7299 = vadd.f32 %v7083, %v7202
      %v7300 = vadd.f32 %v7084, %v7204
      %v7301 = vadd.f32 %v7085, %v7206
      %v7302 = vadd.f32 %v7086, %v7208
      %v7303 = vadd.f32 %v7087, %v7210
      %v7304 = vadd.f32 %v7088, %v7212
      %v7305 = vadd.f32 %v7089, %v7214
      %v7306 = vadd.f32 %v7090, %v7216
      %v7307 = vadd.f32 %v7091, %v7218
      %v7308 = vadd.f32 %v7092, %v7220
      %v7309 = vadd.f32 %v7093, %v7222
      %v7310 = vadd.f32 %v7094, %v7224
      %v7311 = vadd.f32 %v7095, %v7226
      %v7312 = vadd.f32 %v7096, %v7228
      %v7313 = vadd.f32 %v7097, %v7230
      %v7314 = vadd.f32 %v7098, %v7232
      %v7315 = vadd.f32 %v7099, %v7234
      %v7316 = vadd.f32 %v7100, %v7236
      %v7317 = vadd.f32 %v7101, %v7238
      %v7318 = vadd.f32 %v7102, %v7240
      %v7319 = vadd.f32 %v7103, %v7242
      %v7320 = vadd.f32 %v7104, %v7244
      %v7321 = vadd.f32 %v7105, %v7246
      %v7322 = vadd.f32 %v7106, %v7248
      %v7323 = vadd.f32 %v7107, %v7250
      %v7324 = vadd.f32 %v7108, %v7252
      %v7325 = vld [vmem:[#allocation3 + $0x8] sm:$0xe]
      %v7326 = vld [vmem:[#allocation3 + $0xc] sm:$0xf]
      %v7327 = vld [vmem:[#allocation3 + $0x10] sm:$0xf]
      %v7328 = vld [vmem:[#allocation3 + $0x14] sm:$0xf]
      %v7329 = vld [vmem:[#allocation3 + $0x18] sm:$0xf]
      %v7330 = vld [vmem:[#allocation3 + $0x1c] sm:$0xf]
      %v7331 = vld [vmem:[#allocation3 + $0x20] sm:$0xf]
      %v7332 = vld [vmem:[#allocation3 + $0x24] sm:$0xf]
      %v7333 = vld [vmem:[#allocation3 + $0x28] sm:$0xf]
      %v7334 = vld [vmem:[#allocation3 + $0x2c] sm:$0xf]
      %v7335 = vld [vmem:[#allocation3 + $0x30] sm:$0xf]
      %v7336 = vld [vmem:[#allocation3 + $0x34] sm:$0xf]
      %v7337 = vld [vmem:[#allocation3 + $0x38] sm:$0xf]
      %v7338 = vld [vmem:[#allocation3 + $0x3c] sm:$0xf]
      %v7339 = vld [vmem:[#allocation3 + $0x40] sm:$0xf]
      %v7340 = vld [vmem:[#allocation3 + $0x44] sm:$0xf]
      %v7341 = vld [vmem:[#allocation3 + $0x48] sm:$0xf]
      %v7342 = vld [vmem:[#allocation3 + $0x4c] sm:$0xf]
      %v7343 = vld [vmem:[#allocation3 + $0x50] sm:$0xf]
      %v7344 = vld [vmem:[#allocation3 + $0x54] sm:$0xf]
      %v7345 = vld [vmem:[#allocation3 + $0x58] sm:$0xf]
      %v7346 = vld [vmem:[#allocation3 + $0x5c] sm:$0xf]
      %v7347 = vld [vmem:[#allocation3 + $0x60] sm:$0xf]
      %v7348 = vld [vmem:[#allocation3 + $0x64] sm:$0xf]
      %v7349 = vld [vmem:[#allocation3 + $0x68] sm:$0xf]
      %v7350 = vld [vmem:[#allocation3 + $0x6c] sm:$0xf]
      %v7351 = vld [vmem:[#allocation3 + $0x70] sm:$0xf]
      %v7352 = vld [vmem:[#allocation3 + $0x74] sm:$0xf]
      %v7353 = vld [vmem:[#allocation3 + $0x78] sm:$0xf]
      %v7354 = vld [vmem:[#allocation3 + $0x7c] sm:$0xf]
      %v7355 = vld [vmem:[#allocation3 + $0x80] sm:$0xf]
      %v7356 = vld [vmem:[#allocation3 + $0x84] sm:$0xf]
      %v7357 = vld [vmem:[#allocation3 + $0x88] sm:$0xf]
      %v7358 = vld [vmem:[#allocation3 + $0x8c] sm:$0xf]
      %v7359 = vld [vmem:[#allocation3 + $0x90] sm:$0xf]
      %v7360 = vld [vmem:[#allocation3 + $0x94] sm:$0xf]
      %v7361 = vld [vmem:[#allocation3 + $0x98] sm:$0xf]
      %v7362 = vld [vmem:[#allocation3 + $0x9c] sm:$0x1]
      %s7363 = scalar_lea.vmem %s3, 4
      %v7364 = vld [vmem:[%s7363] sm:$0xf]
      %v7403 = vunpack.c.l.b16 %v7325
      %v7404 = vunpack.c.l.b16 %v7326
      %v7405 = vunpack.c.l.b16 %v7327
      %v7406 = vunpack.c.l.b16 %v7328
      %v7407 = vunpack.c.l.b16 %v7329
      %v7408 = vunpack.c.l.b16 %v7330
      %v7409 = vunpack.c.l.b16 %v7331
      %v7410 = vunpack.c.l.b16 %v7332
      %v7411 = vunpack.c.l.b16 %v7333
      %v7412 = vunpack.c.l.b16 %v7334
      %v7413 = vunpack.c.l.b16 %v7335
      %v7414 = vunpack.c.l.b16 %v7336
      %v7415 = vunpack.c.l.b16 %v7337
      %v7416 = vunpack.c.l.b16 %v7338
      %v7417 = vunpack.c.l.b16 %v7339
      %v7418 = vunpack.c.l.b16 %v7340
      %v7419 = vunpack.c.l.b16 %v7341
      %v7420 = vunpack.c.l.b16 %v7342
      %v7421 = vunpack.c.l.b16 %v7343
      %v7422 = vunpack.c.l.b16 %v7344
      %v7423 = vunpack.c.l.b16 %v7345
      %v7424 = vunpack.c.l.b16 %v7346
      %v7425 = vunpack.c.l.b16 %v7347
      %v7426 = vunpack.c.l.b16 %v7348
      %v7427 = vunpack.c.l.b16 %v7349
      %v7428 = vunpack.c.l.b16 %v7350
      %v7429 = vunpack.c.l.b16 %v7351
      %v7430 = vunpack.c.l.b16 %v7352
      %v7431 = vunpack.c.l.b16 %v7353
      %v7432 = vunpack.c.l.b16 %v7354
      %v7433 = vunpack.c.l.b16 %v7355
      %v7434 = vunpack.c.l.b16 %v7356
      %v7435 = vunpack.c.l.b16 %v7357
      %v7436 = vunpack.c.l.b16 %v7358
      %v7437 = vunpack.c.l.b16 %v7359
      %v7438 = vunpack.c.l.b16 %v7360
      %v7439 = vunpack.c.l.b16 %v7361
      %v7440 = vunpack.c.l.b16 %v7362
      %v7441 = vpack.c.b16 %v7404, %v7403
      %v7442 = vpack.c.b16 %v7406, %v7405
      %v7443 = vpack.c.b16 %v7408, %v7407
      %v7444 = vpack.c.b16 %v7410, %v7409
      %v7445 = vpack.c.b16 %v7412, %v7411
      %v7446 = vpack.c.b16 %v7414, %v7413
      %v7447 = vpack.c.b16 %v7416, %v7415
      %v7448 = vpack.c.b16 %v7418, %v7417
      %v7449 = vpack.c.b16 %v7420, %v7419
      %v7450 = vpack.c.b16 %v7422, %v7421
      %v7451 = vpack.c.b16 %v7424, %v7423
      %v7452 = vpack.c.b16 %v7426, %v7425
      %v7453 = vpack.c.b16 %v7428, %v7427
      %v7454 = vpack.c.b16 %v7430, %v7429
      %v7455 = vpack.c.b16 %v7432, %v7431
      %v7456 = vpack.c.b16 %v7434, %v7433
      %v7457 = vpack.c.b16 %v7436, %v7435
      %v7458 = vpack.c.b16 %v7438, %v7437
      %v7459 = vpack.c.b16 %v7440, %v7439
      %v7460 = vrot.slane %v7441, 1
      %v7461 = vrot.slane %v7442, 1
      %v7462 = vsel %vm4256, %v7460, %v7461
      %v7463 = vrot.slane %v7443, 1
      %v7464 = vsel %vm4256, %v7461, %v7463
      %v7465 = vrot.slane %v7444, 1
      %v7466 = vsel %vm4256, %v7463, %v7465
      %v7467 = vrot.slane %v7445, 1
      %v7468 = vsel %vm4256, %v7465, %v7467
      %v7469 = vrot.slane %v7446, 1
      %v7470 = vsel %vm4256, %v7467, %v7469
      %v7471 = vrot.slane %v7447, 1
      %v7472 = vsel %vm4256, %v7469, %v7471
      %v7473 = vrot.slane %v7448, 1
      %v7474 = vsel %vm4256, %v7471, %v7473
      %v7475 = vrot.slane %v7449, 1
      %v7476 = vsel %vm4256, %v7473, %v7475
      %v7477 = vrot.slane %v7450, 1
      %v7478 = vsel %vm4256, %v7475, %v7477
      %v7479 = vrot.slane %v7451, 1
      %v7480 = vsel %vm4256, %v7477, %v7479
      %v7481 = vrot.slane %v7452, 1
      %v7482 = vsel %vm4256, %v7479, %v7481
      %v7483 = vrot.slane %v7453, 1
      %v7484 = vsel %vm4256, %v7481, %v7483
      %v7485 = vrot.slane %v7454, 1
      %v7486 = vsel %vm4256, %v7483, %v7485
      %v7487 = vrot.slane %v7455, 1
      %v7488 = vsel %vm4256, %v7485, %v7487
      %v7489 = vrot.slane %v7456, 1
      %v7490 = vsel %vm4256, %v7487, %v7489
      %v7491 = vrot.slane %v7457, 1
      %v7492 = vsel %vm4256, %v7489, %v7491
      %v7493 = vrot.slane %v7458, 1
      %v7494 = vsel %vm4256, %v7491, %v7493
      %v7495 = vrot.slane %v7459, 1
      %v7496 = vsel %vm4256, %v7493, %v7495
      %v7498 = vsel %vm6618, %v7462, 0
      %v7501 = vsel %vm6618, %v7464, 0
      %v7504 = vsel %vm6618, %v7466, 0
      %v7507 = vsel %vm6618, %v7468, 0
      %v7510 = vsel %vm6618, %v7470, 0
      %v7513 = vsel %vm6618, %v7472, 0
      %v7516 = vsel %vm6618, %v7474, 0
      %v7519 = vsel %vm6618, %v7476, 0
      %v7522 = vsel %vm6618, %v7478, 0
      %v7525 = vsel %vm6618, %v7480, 0
      %v7528 = vsel %vm6618, %v7482, 0
      %v7531 = vsel %vm6618, %v7484, 0
      %v7534 = vsel %vm6618, %v7486, 0
      %v7537 = vsel %vm6618, %v7488, 0
      %v7540 = vsel %vm6618, %v7490, 0
      %v7543 = vsel %vm6618, %v7492, 0
      %v7546 = vsel %vm6618, %v7494, 0
      %v7549 = vsel %vm6618, %v7496, 0
      %v7552 = vsel %vm6618, %v7495, 0
      %v7555 = vsel %vm6676, %v7364, 0
      %7557 = vmatpush.bf16.msra.mxu0 0
      %7558 = vmatpush.bf16.msra.mxu0 0
      %7559 = vmatpush.bf16.msra.mxu0 0
      %7560 = vmatpush.bf16.msra.mxu0 0
      %7561 = vmatpush.bf16.msra.mxu0 0
      %7562 = vmatpush.bf16.msra.mxu0 0
      %7563 = vmatpush.bf16.msra.mxu0 0
      %7564 = vmatpush.bf16.msra.mxu0 %v7555
      %7565 = vmatmul.bf16.gmra.mxu0 %v7498
      %v7566 = vpop.f32.mrf.mxu0
      %v7567 = vadd.f32 0.0, %v7566
      %v7568 = vpop.f32.mrf.mxu0
      %v7569 = vadd.f32 0.0, %v7568
      %7570 = vmatmul.bf16.gmra.mxu0 %v7501
      %v7571 = vpop.f32.mrf.mxu0
      %v7572 = vadd.f32 0.0, %v7571
      %v7573 = vpop.f32.mrf.mxu0
      %v7574 = vadd.f32 0.0, %v7573
      %7575 = vmatmul.bf16.gmra.mxu0 %v7504
      %v7576 = vpop.f32.mrf.mxu0
      %v7577 = vadd.f32 0.0, %v7576
      %v7578 = vpop.f32.mrf.mxu0
      %v7579 = vadd.f32 0.0, %v7578
      %7580 = vmatmul.bf16.gmra.mxu0 %v7507
      %v7581 = vpop.f32.mrf.mxu0
      %v7582 = vadd.f32 0.0, %v7581
      %v7583 = vpop.f32.mrf.mxu0
      %v7584 = vadd.f32 0.0, %v7583
      %7585 = vmatmul.bf16.gmra.mxu0 %v7510
      %v7586 = vpop.f32.mrf.mxu0
      %v7587 = vadd.f32 0.0, %v7586
      %v7588 = vpop.f32.mrf.mxu0
      %v7589 = vadd.f32 0.0, %v7588
      %7590 = vmatmul.bf16.gmra.mxu0 %v7513
      %v7591 = vpop.f32.mrf.mxu0
      %v7592 = vadd.f32 0.0, %v7591
      %v7593 = vpop.f32.mrf.mxu0
      %v7594 = vadd.f32 0.0, %v7593
      %7595 = vmatmul.bf16.gmra.mxu0 %v7516
      %v7596 = vpop.f32.mrf.mxu0
      %v7597 = vadd.f32 0.0, %v7596
      %v7598 = vpop.f32.mrf.mxu0
      %v7599 = vadd.f32 0.0, %v7598
      %7600 = vmatmul.bf16.gmra.mxu0 %v7519
      %v7601 = vpop.f32.mrf.mxu0
      %v7602 = vadd.f32 0.0, %v7601
      %v7603 = vpop.f32.mrf.mxu0
      %v7604 = vadd.f32 0.0, %v7603
      %7605 = vmatmul.bf16.gmra.mxu0 %v7522
      %v7606 = vpop.f32.mrf.mxu0
      %v7607 = vadd.f32 0.0, %v7606
      %v7608 = vpop.f32.mrf.mxu0
      %v7609 = vadd.f32 0.0, %v7608
      %7610 = vmatmul.bf16.gmra.mxu0 %v7525
      %v7611 = vpop.f32.mrf.mxu0
      %v7612 = vadd.f32 0.0, %v7611
      %v7613 = vpop.f32.mrf.mxu0
      %v7614 = vadd.f32 0.0, %v7613
      %7615 = vmatmul.bf16.gmra.mxu0 %v7528
      %v7616 = vpop.f32.mrf.mxu0
      %v7617 = vadd.f32 0.0, %v7616
      %v7618 = vpop.f32.mrf.mxu0
      %v7619 = vadd.f32 0.0, %v7618
      %7620 = vmatmul.bf16.gmra.mxu0 %v7531
      %v7621 = vpop.f32.mrf.mxu0
      %v7622 = vadd.f32 0.0, %v7621
      %v7623 = vpop.f32.mrf.mxu0
      %v7624 = vadd.f32 0.0, %v7623
      %7625 = vmatmul.bf16.gmra.mxu0 %v7534
      %v7626 = vpop.f32.mrf.mxu0
      %v7627 = vadd.f32 0.0, %v7626
      %v7628 = vpop.f32.mrf.mxu0
      %v7629 = vadd.f32 0.0, %v7628
      %7630 = vmatmul.bf16.gmra.mxu0 %v7537
      %v7631 = vpop.f32.mrf.mxu0
      %v7632 = vadd.f32 0.0, %v7631
      %v7633 = vpop.f32.mrf.mxu0
      %v7634 = vadd.f32 0.0, %v7633
      %7635 = vmatmul.bf16.gmra.mxu0 %v7540
      %v7636 = vpop.f32.mrf.mxu0
      %v7637 = vadd.f32 0.0, %v7636
      %v7638 = vpop.f32.mrf.mxu0
      %v7639 = vadd.f32 0.0, %v7638
      %7640 = vmatmul.bf16.gmra.mxu0 %v7543
      %v7641 = vpop.f32.mrf.mxu0
      %v7642 = vadd.f32 0.0, %v7641
      %v7643 = vpop.f32.mrf.mxu0
      %v7644 = vadd.f32 0.0, %v7643
      %7645 = vmatmul.bf16.gmra.mxu0 %v7546
      %v7646 = vpop.f32.mrf.mxu0
      %v7647 = vadd.f32 0.0, %v7646
      %v7648 = vpop.f32.mrf.mxu0
      %v7649 = vadd.f32 0.0, %v7648
      %7650 = vmatmul.bf16.gmra.mxu0 %v7549
      %v7651 = vpop.f32.mrf.mxu0
      %v7652 = vadd.f32 0.0, %v7651
      %v7653 = vpop.f32.mrf.mxu0
      %v7654 = vadd.f32 0.0, %v7653
      %7655 = vmatmul.bf16.gmra.mxu0 %v7552
      %v7656 = vpop.f32.mrf.mxu0
      %v7657 = vadd.f32 0.0, %v7656
      %v7658 = vpop.f32.mrf.mxu0
      %7659 = vdwg.mxu0
      %7660 = vst.msk [vmem:[#allocation4] sm:$0xff] %vm6783, %v7567
      %7661 = vst.msk [vmem:[#allocation4 + $0x8] sm:$0xff] %vm6783, %v7569
      %7662 = vst.msk [vmem:[#allocation4 + $0x10] sm:$0xff] %vm6783, %v7572
      %7663 = vst.msk [vmem:[#allocation4 + $0x18] sm:$0xff] %vm6783, %v7574
      %7664 = vst.msk [vmem:[#allocation4 + $0x20] sm:$0xff] %vm6783, %v7577
      %7665 = vst.msk [vmem:[#allocation4 + $0x28] sm:$0xff] %vm6783, %v7579
      %7666 = vst.msk [vmem:[#allocation4 + $0x30] sm:$0xff] %vm6783, %v7582
      %7667 = vst.msk [vmem:[#allocation4 + $0x38] sm:$0xff] %vm6783, %v7584
      %7668 = vst.msk [vmem:[#allocation4 + $0x40] sm:$0xff] %vm6783, %v7587
      %7669 = vst.msk [vmem:[#allocation4 + $0x48] sm:$0xff] %vm6783, %v7589
      %7670 = vst.msk [vmem:[#allocation4 + $0x50] sm:$0xff] %vm6783, %v7592
      %7671 = vst.msk [vmem:[#allocation4 + $0x58] sm:$0xff] %vm6783, %v7594
      %7672 = vst.msk [vmem:[#allocation4 + $0x60] sm:$0xff] %vm6783, %v7597
      %7673 = vst.msk [vmem:[#allocation4 + $0x68] sm:$0xff] %vm6783, %v7599
      %7674 = vst.msk [vmem:[#allocation4 + $0x70] sm:$0xff] %vm6783, %v7602
      %7675 = vst.msk [vmem:[#allocation4 + $0x78] sm:$0xff] %vm6783, %v7604
      %7676 = vst.msk [vmem:[#allocation4 + $0x80] sm:$0xff] %vm6783, %v7607
      %7677 = vst.msk [vmem:[#allocation4 + $0x88] sm:$0xff] %vm6783, %v7609
      %7678 = vst.msk [vmem:[#allocation4 + $0x90] sm:$0xff] %vm6783, %v7612
      %7679 = vst.msk [vmem:[#allocation4 + $0x98] sm:$0xff] %vm6783, %v7614
      %7680 = vst.msk [vmem:[#allocation4 + $0xa0] sm:$0xff] %vm6783, %v7617
      %7681 = vst.msk [vmem:[#allocation4 + $0xa8] sm:$0xff] %vm6783, %v7619
      %7682 = vst.msk [vmem:[#allocation4 + $0xb0] sm:$0xff] %vm6783, %v7622
      %7683 = vst.msk [vmem:[#allocation4 + $0xb8] sm:$0xff] %vm6783, %v7624
      %7684 = vst.msk [vmem:[#allocation4 + $0xc0] sm:$0xff] %vm6783, %v7627
      %7685 = vst.msk [vmem:[#allocation4 + $0xc8] sm:$0xff] %vm6783, %v7629
      %7686 = vst.msk [vmem:[#allocation4 + $0xd0] sm:$0xff] %vm6783, %v7632
      %7687 = vst.msk [vmem:[#allocation4 + $0xd8] sm:$0xff] %vm6783, %v7634
      %7688 = vst.msk [vmem:[#allocation4 + $0xe0] sm:$0xff] %vm6783, %v7637
      %7689 = vst.msk [vmem:[#allocation4 + $0xe8] sm:$0xff] %vm6783, %v7639
      %7690 = vst.msk [vmem:[#allocation4 + $0xf0] sm:$0xff] %vm6783, %v7642
      %7691 = vst.msk [vmem:[#allocation4 + $0xf8] sm:$0xff] %vm6783, %v7644
      %7692 = vst.msk [vmem:[#allocation4 + $0x100] sm:$0xff] %vm6783, %v7647
      %7693 = vst.msk [vmem:[#allocation4 + $0x108] sm:$0xff] %vm6783, %v7649
      %7694 = vst.msk [vmem:[#allocation4 + $0x110] sm:$0xff] %vm6783, %v7652
      %7695 = vst.msk [vmem:[#allocation4 + $0x118] sm:$0xff] %vm6783, %v7654
      %7696 = vst.msk [vmem:[#allocation4 + $0x120] sm:$0xff] %vm6783, %v7657
      %v7697 = vld [vmem:[#allocation4] sm:$0xff]
      %v7698 = vld [vmem:[#allocation4 + $0x8] sm:$0xff]
      %v7699 = vld [vmem:[#allocation4 + $0x10] sm:$0xff]
      %v7700 = vld [vmem:[#allocation4 + $0x18] sm:$0xff]
      %v7701 = vld [vmem:[#allocation4 + $0x20] sm:$0xff]
      %v7702 = vld [vmem:[#allocation4 + $0x28] sm:$0xff]
      %v7703 = vld [vmem:[#allocation4 + $0x30] sm:$0xff]
      %v7704 = vld [vmem:[#allocation4 + $0x38] sm:$0xff]
      %v7705 = vld [vmem:[#allocation4 + $0x40] sm:$0xff]
      %v7706 = vld [vmem:[#allocation4 + $0x48] sm:$0xff]
      %v7707 = vld [vmem:[#allocation4 + $0x50] sm:$0xff]
      %v7708 = vld [vmem:[#allocation4 + $0x58] sm:$0xff]
      %v7709 = vld [vmem:[#allocation4 + $0x60] sm:$0xff]
      %v7710 = vld [vmem:[#allocation4 + $0x68] sm:$0xff]
      %v7711 = vld [vmem:[#allocation4 + $0x70] sm:$0xff]
      %v7712 = vld [vmem:[#allocation4 + $0x78] sm:$0xff]
      %v7713 = vld [vmem:[#allocation4 + $0x80] sm:$0xff]
      %v7714 = vld [vmem:[#allocation4 + $0x88] sm:$0xff]
      %v7715 = vld [vmem:[#allocation4 + $0x90] sm:$0xff]
      %v7716 = vld [vmem:[#allocation4 + $0x98] sm:$0xff]
      %v7717 = vld [vmem:[#allocation4 + $0xa0] sm:$0xff]
      %v7718 = vld [vmem:[#allocation4 + $0xa8] sm:$0xff]
      %v7719 = vld [vmem:[#allocation4 + $0xb0] sm:$0xff]
      %v7720 = vld [vmem:[#allocation4 + $0xb8] sm:$0xff]
      %v7721 = vld [vmem:[#allocation4 + $0xc0] sm:$0xff]
      %v7722 = vld [vmem:[#allocation4 + $0xc8] sm:$0xff]
      %v7723 = vld [vmem:[#allocation4 + $0xd0] sm:$0xff]
      %v7724 = vld [vmem:[#allocation4 + $0xd8] sm:$0xff]
      %v7725 = vld [vmem:[#allocation4 + $0xe0] sm:$0xff]
      %v7726 = vld [vmem:[#allocation4 + $0xe8] sm:$0xff]
      %v7727 = vld [vmem:[#allocation4 + $0xf0] sm:$0xff]
      %v7728 = vld [vmem:[#allocation4 + $0xf8] sm:$0xff]
      %v7729 = vld [vmem:[#allocation4 + $0x100] sm:$0xff]
      %v7730 = vld [vmem:[#allocation4 + $0x108] sm:$0xff]
      %v7731 = vld [vmem:[#allocation4 + $0x110] sm:$0xff]
      %v7732 = vld [vmem:[#allocation4 + $0x118] sm:$0xff]
      %v7733 = vadd.f32 %v7289, %v7697
      %v7734 = vadd.f32 %v7290, %v7698
      %v7735 = vadd.f32 %v7291, %v7699
      %v7736 = vadd.f32 %v7292, %v7700
      %v7737 = vadd.f32 %v7293, %v7701
      %v7738 = vadd.f32 %v7294, %v7702
      %v7739 = vadd.f32 %v7295, %v7703
      %v7740 = vadd.f32 %v7296, %v7704
      %v7741 = vadd.f32 %v7297, %v7705
      %v7742 = vadd.f32 %v7298, %v7706
      %v7743 = vadd.f32 %v7299, %v7707
      %v7744 = vadd.f32 %v7300, %v7708
      %v7745 = vadd.f32 %v7301, %v7709
      %v7746 = vadd.f32 %v7302, %v7710
      %v7747 = vadd.f32 %v7303, %v7711
      %v7748 = vadd.f32 %v7304, %v7712
      %v7749 = vadd.f32 %v7305, %v7713
      %v7750 = vadd.f32 %v7306, %v7714
      %v7751 = vadd.f32 %v7307, %v7715
      %v7752 = vadd.f32 %v7308, %v7716
      %v7753 = vadd.f32 %v7309, %v7717
      %v7754 = vadd.f32 %v7310, %v7718
      %v7755 = vadd.f32 %v7311, %v7719
      %v7756 = vadd.f32 %v7312, %v7720
      %v7757 = vadd.f32 %v7313, %v7721
      %v7758 = vadd.f32 %v7314, %v7722
      %v7759 = vadd.f32 %v7315, %v7723
      %v7760 = vadd.f32 %v7316, %v7724
      %v7761 = vadd.f32 %v7317, %v7725
      %v7762 = vadd.f32 %v7318, %v7726
      %v7763 = vadd.f32 %v7319, %v7727
      %v7764 = vadd.f32 %v7320, %v7728
      %v7765 = vadd.f32 %v7321, %v7729
      %v7766 = vadd.f32 %v7322, %v7730
      %v7767 = vadd.f32 %v7323, %v7731
      %v7768 = vadd.f32 %v7324, %v7732
      %v7769 = vld [vmem:[#allocation4 + $0x1] sm:$0xff]
      %v7770 = vld [vmem:[#allocation4 + $0x9] sm:$0xff]
      %v7771 = vld [vmem:[#allocation4 + $0x11] sm:$0xff]
      %v7772 = vld [vmem:[#allocation4 + $0x19] sm:$0xff]
      %v7773 = vld [vmem:[#allocation4 + $0x21] sm:$0xff]
      %v7774 = vld [vmem:[#allocation4 + $0x29] sm:$0xff]
      %v7775 = vld [vmem:[#allocation4 + $0x31] sm:$0xff]
      %v7776 = vld [vmem:[#allocation4 + $0x39] sm:$0xff]
      %v7777 = vld [vmem:[#allocation4 + $0x41] sm:$0xff]
      %v7778 = vld [vmem:[#allocation4 + $0x49] sm:$0xff]
      %v7779 = vld [vmem:[#allocation4 + $0x51] sm:$0xff]
      %v7780 = vld [vmem:[#allocation4 + $0x59] sm:$0xff]
      %v7781 = vld [vmem:[#allocation4 + $0x61] sm:$0xff]
      %v7782 = vld [vmem:[#allocation4 + $0x69] sm:$0xff]
      %v7783 = vld [vmem:[#allocation4 + $0x71] sm:$0xff]
      %v7784 = vld [vmem:[#allocation4 + $0x79] sm:$0xff]
      %v7785 = vld [vmem:[#allocation4 + $0x81] sm:$0xff]
      %v7786 = vld [vmem:[#allocation4 + $0x89] sm:$0xff]
      %v7787 = vld [vmem:[#allocation4 + $0x91] sm:$0xff]
      %v7788 = vld [vmem:[#allocation4 + $0x99] sm:$0xff]
      %v7789 = vld [vmem:[#allocation4 + $0xa1] sm:$0xff]
      %v7790 = vld [vmem:[#allocation4 + $0xa9] sm:$0xff]
      %v7791 = vld [vmem:[#allocation4 + $0xb1] sm:$0xff]
      %v7792 = vld [vmem:[#allocation4 + $0xb9] sm:$0xff]
      %v7793 = vld [vmem:[#allocation4 + $0xc1] sm:$0xff]
      %v7794 = vld [vmem:[#allocation4 + $0xc9] sm:$0xff]
      %v7795 = vld [vmem:[#allocation4 + $0xd1] sm:$0xff]
      %v7796 = vld [vmem:[#allocation4 + $0xd9] sm:$0xff]
      %v7797 = vld [vmem:[#allocation4 + $0xe1] sm:$0xff]
      %v7798 = vld [vmem:[#allocation4 + $0xe9] sm:$0xff]
      %v7799 = vld [vmem:[#allocation4 + $0xf1] sm:$0xff]
      %v7800 = vld [vmem:[#allocation4 + $0xf9] sm:$0xff]
      %v7801 = vld [vmem:[#allocation4 + $0x101] sm:$0xff]
      %v7802 = vld [vmem:[#allocation4 + $0x109] sm:$0xff]
      %v7803 = vld [vmem:[#allocation4 + $0x111] sm:$0xff]
      %v7804 = vld [vmem:[#allocation4 + $0x119] sm:$0xff]
      %7841 = vrot.lane.b32.xlu0 %v7769, 124
      %v7842 = vpop.permute.xlu0 %7841
      %7843 = vrot.lane.b32.xlu0 %v7770, 124
      %v7844 = vpop.permute.xlu0 %7843
      %7845 = vrot.lane.b32.xlu0 %v7771, 124
      %v7846 = vpop.permute.xlu0 %7845
      %7847 = vrot.lane.b32.xlu0 %v7772, 124
      %v7848 = vpop.permute.xlu0 %7847
      %7849 = vrot.lane.b32.xlu0 %v7773, 124
      %v7850 = vpop.permute.xlu0 %7849
      %7851 = vrot.lane.b32.xlu0 %v7774, 124
      %v7852 = vpop.permute.xlu0 %7851
      %7853 = vrot.lane.b32.xlu0 %v7775, 124
      %v7854 = vpop.permute.xlu0 %7853
      %7855 = vrot.lane.b32.xlu0 %v7776, 124
      %v7856 = vpop.permute.xlu0 %7855
      %7857 = vrot.lane.b32.xlu0 %v7777, 124
      %v7858 = vpop.permute.xlu0 %7857
      %7859 = vrot.lane.b32.xlu0 %v7778, 124
      %v7860 = vpop.permute.xlu0 %7859
      %7861 = vrot.lane.b32.xlu0 %v7779, 124
      %v7862 = vpop.permute.xlu0 %7861
      %7863 = vrot.lane.b32.xlu0 %v7780, 124
      %v7864 = vpop.permute.xlu0 %7863
      %7865 = vrot.lane.b32.xlu0 %v7781, 124
      %v7866 = vpop.permute.xlu0 %7865
      %7867 = vrot.lane.b32.xlu0 %v7782, 124
      %v7868 = vpop.permute.xlu0 %7867
      %7869 = vrot.lane.b32.xlu0 %v7783, 124
      %v7870 = vpop.permute.xlu0 %7869
      %7871 = vrot.lane.b32.xlu0 %v7784, 124
      %v7872 = vpop.permute.xlu0 %7871
      %7873 = vrot.lane.b32.xlu0 %v7785, 124
      %v7874 = vpop.permute.xlu0 %7873
      %7875 = vrot.lane.b32.xlu0 %v7786, 124
      %v7876 = vpop.permute.xlu0 %7875
      %7877 = vrot.lane.b32.xlu0 %v7787, 124
      %v7878 = vpop.permute.xlu0 %7877
      %7879 = vrot.lane.b32.xlu0 %v7788, 124
      %v7880 = vpop.permute.xlu0 %7879
      %7881 = vrot.lane.b32.xlu0 %v7789, 124
      %v7882 = vpop.permute.xlu0 %7881
      %7883 = vrot.lane.b32.xlu0 %v7790, 124
      %v7884 = vpop.permute.xlu0 %7883
      %7885 = vrot.lane.b32.xlu0 %v7791, 124
      %v7886 = vpop.permute.xlu0 %7885
      %7887 = vrot.lane.b32.xlu0 %v7792, 124
      %v7888 = vpop.permute.xlu0 %7887
      %7889 = vrot.lane.b32.xlu0 %v7793, 124
      %v7890 = vpop.permute.xlu0 %7889
      %7891 = vrot.lane.b32.xlu0 %v7794, 124
      %v7892 = vpop.permute.xlu0 %7891
      %7893 = vrot.lane.b32.xlu0 %v7795, 124
      %v7894 = vpop.permute.xlu0 %7893
      %7895 = vrot.lane.b32.xlu0 %v7796, 124
      %v7896 = vpop.permute.xlu0 %7895
      %7897 = vrot.lane.b32.xlu0 %v7797, 124
      %v7898 = vpop.permute.xlu0 %7897
      %7899 = vrot.lane.b32.xlu0 %v7798, 124
      %v7900 = vpop.permute.xlu0 %7899
      %7901 = vrot.lane.b32.xlu0 %v7799, 124
      %v7902 = vpop.permute.xlu0 %7901
      %7903 = vrot.lane.b32.xlu0 %v7800, 124
      %v7904 = vpop.permute.xlu0 %7903
      %7905 = vrot.lane.b32.xlu0 %v7801, 124
      %v7906 = vpop.permute.xlu0 %7905
      %7907 = vrot.lane.b32.xlu0 %v7802, 124
      %v7908 = vpop.permute.xlu0 %7907
      %7909 = vrot.lane.b32.xlu0 %v7803, 124
      %v7910 = vpop.permute.xlu0 %7909
      %7911 = vrot.lane.b32.xlu0 %v7804, 124
      %v7912 = vpop.permute.xlu0 %7911
      %v7949 = vadd.f32 %v7733, %v7842
      %v7950 = vadd.f32 %v7734, %v7844
      %v7951 = vadd.f32 %v7735, %v7846
      %v7952 = vadd.f32 %v7736, %v7848
      %v7953 = vadd.f32 %v7737, %v7850
      %v7954 = vadd.f32 %v7738, %v7852
      %v7955 = vadd.f32 %v7739, %v7854
      %v7956 = vadd.f32 %v7740, %v7856
      %v7957 = vadd.f32 %v7741, %v7858
      %v7958 = vadd.f32 %v7742, %v7860
      %v7959 = vadd.f32 %v7743, %v7862
      %v7960 = vadd.f32 %v7744, %v7864
      %v7961 = vadd.f32 %v7745, %v7866
      %v7962 = vadd.f32 %v7746, %v7868
      %v7963 = vadd.f32 %v7747, %v7870
      %v7964 = vadd.f32 %v7748, %v7872
      %v7965 = vadd.f32 %v7749, %v7874
      %v7966 = vadd.f32 %v7750, %v7876
      %v7967 = vadd.f32 %v7751, %v7878
      %v7968 = vadd.f32 %v7752, %v7880
      %v7969 = vadd.f32 %v7753, %v7882
      %v7970 = vadd.f32 %v7754, %v7884
      %v7971 = vadd.f32 %v7755, %v7886
      %v7972 = vadd.f32 %v7756, %v7888
      %v7973 = vadd.f32 %v7757, %v7890
      %v7974 = vadd.f32 %v7758, %v7892
      %v7975 = vadd.f32 %v7759, %v7894
      %v7976 = vadd.f32 %v7760, %v7896
      %v7977 = vadd.f32 %v7761, %v7898
      %v7978 = vadd.f32 %v7762, %v7900
      %v7979 = vadd.f32 %v7763, %v7902
      %v7980 = vadd.f32 %v7764, %v7904
      %v7981 = vadd.f32 %v7765, %v7906
      %v7982 = vadd.f32 %v7766, %v7908
      %v7983 = vadd.f32 %v7767, %v7910
      %v7984 = vadd.f32 %v7768, %v7912
      %v7985 = vld [vmem:[#allocation4 + $0x2] sm:$0xff]
      %v7986 = vld [vmem:[#allocation4 + $0xa] sm:$0xff]
      %v7987 = vld [vmem:[#allocation4 + $0x12] sm:$0xff]
      %v7988 = vld [vmem:[#allocation4 + $0x1a] sm:$0xff]
      %v7989 = vld [vmem:[#allocation4 + $0x22] sm:$0xff]
      %v7990 = vld [vmem:[#allocation4 + $0x2a] sm:$0xff]
      %v7991 = vld [vmem:[#allocation4 + $0x32] sm:$0xff]
      %v7992 = vld [vmem:[#allocation4 + $0x3a] sm:$0xff]
      %v7993 = vld [vmem:[#allocation4 + $0x42] sm:$0xff]
      %v7994 = vld [vmem:[#allocation4 + $0x4a] sm:$0xff]
      %v7995 = vld [vmem:[#allocation4 + $0x52] sm:$0xff]
      %v7996 = vld [vmem:[#allocation4 + $0x5a] sm:$0xff]
      %v7997 = vld [vmem:[#allocation4 + $0x62] sm:$0xff]
      %v7998 = vld [vmem:[#allocation4 + $0x6a] sm:$0xff]
      %v7999 = vld [vmem:[#allocation4 + $0x72] sm:$0xff]
      %v8000 = vld [vmem:[#allocation4 + $0x7a] sm:$0xff]
      %v8001 = vld [vmem:[#allocation4 + $0x82] sm:$0xff]
      %v8002 = vld [vmem:[#allocation4 + $0x8a] sm:$0xff]
      %v8003 = vld [vmem:[#allocation4 + $0x92] sm:$0xff]
      %v8004 = vld [vmem:[#allocation4 + $0x9a] sm:$0xff]
      %v8005 = vld [vmem:[#allocation4 + $0xa2] sm:$0xff]
      %v8006 = vld [vmem:[#allocation4 + $0xaa] sm:$0xff]
      %v8007 = vld [vmem:[#allocation4 + $0xb2] sm:$0xff]
      %v8008 = vld [vmem:[#allocation4 + $0xba] sm:$0xff]
      %v8009 = vld [vmem:[#allocation4 + $0xc2] sm:$0xff]
      %v8010 = vld [vmem:[#allocation4 + $0xca] sm:$0xff]
      %v8011 = vld [vmem:[#allocation4 + $0xd2] sm:$0xff]
      %v8012 = vld [vmem:[#allocation4 + $0xda] sm:$0xff]
      %v8013 = vld [vmem:[#allocation4 + $0xe2] sm:$0xff]
      %v8014 = vld [vmem:[#allocation4 + $0xea] sm:$0xff]
      %v8015 = vld [vmem:[#allocation4 + $0xf2] sm:$0xff]
      %v8016 = vld [vmem:[#allocation4 + $0xfa] sm:$0xff]
      %v8017 = vld [vmem:[#allocation4 + $0x102] sm:$0xff]
      %v8018 = vld [vmem:[#allocation4 + $0x10a] sm:$0xff]
      %v8019 = vld [vmem:[#allocation4 + $0x112] sm:$0xff]
      %v8020 = vld [vmem:[#allocation4 + $0x11a] sm:$0xff]
      %8057 = vrot.lane.b32.xlu0 %v7985, 120
      %v8058 = vpop.permute.xlu0 %8057
      %8059 = vrot.lane.b32.xlu0 %v7986, 120
      %v8060 = vpop.permute.xlu0 %8059
      %8061 = vrot.lane.b32.xlu0 %v7987, 120
      %v8062 = vpop.permute.xlu0 %8061
      %8063 = vrot.lane.b32.xlu0 %v7988, 120
      %v8064 = vpop.permute.xlu0 %8063
      %8065 = vrot.lane.b32.xlu0 %v7989, 120
      %v8066 = vpop.permute.xlu0 %8065
      %8067 = vrot.lane.b32.xlu0 %v7990, 120
      %v8068 = vpop.permute.xlu0 %8067
      %8069 = vrot.lane.b32.xlu0 %v7991, 120
      %v8070 = vpop.permute.xlu0 %8069
      %8071 = vrot.lane.b32.xlu0 %v7992, 120
      %v8072 = vpop.permute.xlu0 %8071
      %8073 = vrot.lane.b32.xlu0 %v7993, 120
      %v8074 = vpop.permute.xlu0 %8073
      %8075 = vrot.lane.b32.xlu0 %v7994, 120
      %v8076 = vpop.permute.xlu0 %8075
      %8077 = vrot.lane.b32.xlu0 %v7995, 120
      %v8078 = vpop.permute.xlu0 %8077
      %8079 = vrot.lane.b32.xlu0 %v7996, 120
      %v8080 = vpop.permute.xlu0 %8079
      %8081 = vrot.lane.b32.xlu0 %v7997, 120
      %v8082 = vpop.permute.xlu0 %8081
      %8083 = vrot.lane.b32.xlu0 %v7998, 120
      %v8084 = vpop.permute.xlu0 %8083
      %8085 = vrot.lane.b32.xlu0 %v7999, 120
      %v8086 = vpop.permute.xlu0 %8085
      %8087 = vrot.lane.b32.xlu0 %v8000, 120
      %v8088 = vpop.permute.xlu0 %8087
      %8089 = vrot.lane.b32.xlu0 %v8001, 120
      %v8090 = vpop.permute.xlu0 %8089
      %8091 = vrot.lane.b32.xlu0 %v8002, 120
      %v8092 = vpop.permute.xlu0 %8091
      %8093 = vrot.lane.b32.xlu0 %v8003, 120
      %v8094 = vpop.permute.xlu0 %8093
      %8095 = vrot.lane.b32.xlu0 %v8004, 120
      %v8096 = vpop.permute.xlu0 %8095
      %8097 = vrot.lane.b32.xlu0 %v8005, 120
      %v8098 = vpop.permute.xlu0 %8097
      %8099 = vrot.lane.b32.xlu0 %v8006, 120
      %v8100 = vpop.permute.xlu0 %8099
      %8101 = vrot.lane.b32.xlu0 %v8007, 120
      %v8102 = vpop.permute.xlu0 %8101
      %8103 = vrot.lane.b32.xlu0 %v8008, 120
      %v8104 = vpop.permute.xlu0 %8103
      %8105 = vrot.lane.b32.xlu0 %v8009, 120
      %v8106 = vpop.permute.xlu0 %8105
      %8107 = vrot.lane.b32.xlu0 %v8010, 120
      %v8108 = vpop.permute.xlu0 %8107
      %8109 = vrot.lane.b32.xlu0 %v8011, 120
      %v8110 = vpop.permute.xlu0 %8109
      %8111 = vrot.lane.b32.xlu0 %v8012, 120
      %v8112 = vpop.permute.xlu0 %8111
      %8113 = vrot.lane.b32.xlu0 %v8013, 120
      %v8114 = vpop.permute.xlu0 %8113
      %8115 = vrot.lane.b32.xlu0 %v8014, 120
      %v8116 = vpop.permute.xlu0 %8115
      %8117 = vrot.lane.b32.xlu0 %v8015, 120
      %v8118 = vpop.permute.xlu0 %8117
      %8119 = vrot.lane.b32.xlu0 %v8016, 120
      %v8120 = vpop.permute.xlu0 %8119
      %8121 = vrot.lane.b32.xlu0 %v8017, 120
      %v8122 = vpop.permute.xlu0 %8121
      %8123 = vrot.lane.b32.xlu0 %v8018, 120
      %v8124 = vpop.permute.xlu0 %8123
      %8125 = vrot.lane.b32.xlu0 %v8019, 120
      %v8126 = vpop.permute.xlu0 %8125
      %8127 = vrot.lane.b32.xlu0 %v8020, 120
      %v8128 = vpop.permute.xlu0 %8127
      %v8165 = vadd.f32 %v7949, %v8058
      %v8166 = vadd.f32 %v7950, %v8060
      %v8167 = vadd.f32 %v7951, %v8062
      %v8168 = vadd.f32 %v7952, %v8064
      %v8169 = vadd.f32 %v7953, %v8066
      %v8170 = vadd.f32 %v7954, %v8068
      %v8171 = vadd.f32 %v7955, %v8070
      %v8172 = vadd.f32 %v7956, %v8072
      %v8173 = vadd.f32 %v7957, %v8074
      %v8174 = vadd.f32 %v7958, %v8076
      %v8175 = vadd.f32 %v7959, %v8078
      %v8176 = vadd.f32 %v7960, %v8080
      %v8177 = vadd.f32 %v7961, %v8082
      %v8178 = vadd.f32 %v7962, %v8084
      %v8179 = vadd.f32 %v7963, %v8086
      %v8180 = vadd.f32 %v7964, %v8088
      %v8181 = vadd.f32 %v7965, %v8090
      %v8182 = vadd.f32 %v7966, %v8092
      %v8183 = vadd.f32 %v7967, %v8094
      %v8184 = vadd.f32 %v7968, %v8096
      %v8185 = vadd.f32 %v7969, %v8098
      %v8186 = vadd.f32 %v7970, %v8100
      %v8187 = vadd.f32 %v7971, %v8102
      %v8188 = vadd.f32 %v7972, %v8104
      %v8189 = vadd.f32 %v7973, %v8106
      %v8190 = vadd.f32 %v7974, %v8108
      %v8191 = vadd.f32 %v7975, %v8110
      %v8192 = vadd.f32 %v7976, %v8112
      %v8193 = vadd.f32 %v7977, %v8114
      %v8194 = vadd.f32 %v7978, %v8116
      %v8195 = vadd.f32 %v7979, %v8118
      %v8196 = vadd.f32 %v7980, %v8120
      %v8197 = vadd.f32 %v7981, %v8122
      %v8198 = vadd.f32 %v7982, %v8124
      %v8199 = vadd.f32 %v7983, %v8126
      %v8200 = vadd.f32 %v7984, %v8128
      %v8201 = vld [vmem:[#allocation3 + $0x10] sm:$0xc]
      %v8202 = vld [vmem:[#allocation3 + $0x14] sm:$0xf]
      %v8203 = vld [vmem:[#allocation3 + $0x18] sm:$0xf]
      %v8204 = vld [vmem:[#allocation3 + $0x1c] sm:$0xf]
      %v8205 = vld [vmem:[#allocation3 + $0x20] sm:$0xf]
      %v8206 = vld [vmem:[#allocation3 + $0x24] sm:$0xf]
      %v8207 = vld [vmem:[#allocation3 + $0x28] sm:$0xf]
      %v8208 = vld [vmem:[#allocation3 + $0x2c] sm:$0xf]
      %v8209 = vld [vmem:[#allocation3 + $0x30] sm:$0xf]
      %v8210 = vld [vmem:[#allocation3 + $0x34] sm:$0xf]
      %v8211 = vld [vmem:[#allocation3 + $0x38] sm:$0xf]
      %v8212 = vld [vmem:[#allocation3 + $0x3c] sm:$0xf]
      %v8213 = vld [vmem:[#allocation3 + $0x40] sm:$0xf]
      %v8214 = vld [vmem:[#allocation3 + $0x44] sm:$0xf]
      %v8215 = vld [vmem:[#allocation3 + $0x48] sm:$0xf]
      %v8216 = vld [vmem:[#allocation3 + $0x4c] sm:$0xf]
      %v8217 = vld [vmem:[#allocation3 + $0x50] sm:$0xf]
      %v8218 = vld [vmem:[#allocation3 + $0x54] sm:$0xf]
      %v8219 = vld [vmem:[#allocation3 + $0x58] sm:$0xf]
      %v8220 = vld [vmem:[#allocation3 + $0x5c] sm:$0xf]
      %v8221 = vld [vmem:[#allocation3 + $0x60] sm:$0xf]
      %v8222 = vld [vmem:[#allocation3 + $0x64] sm:$0xf]
      %v8223 = vld [vmem:[#allocation3 + $0x68] sm:$0xf]
      %v8224 = vld [vmem:[#allocation3 + $0x6c] sm:$0xf]
      %v8225 = vld [vmem:[#allocation3 + $0x70] sm:$0xf]
      %v8226 = vld [vmem:[#allocation3 + $0x74] sm:$0xf]
      %v8227 = vld [vmem:[#allocation3 + $0x78] sm:$0xf]
      %v8228 = vld [vmem:[#allocation3 + $0x7c] sm:$0xf]
      %v8229 = vld [vmem:[#allocation3 + $0x80] sm:$0xf]
      %v8230 = vld [vmem:[#allocation3 + $0x84] sm:$0xf]
      %v8231 = vld [vmem:[#allocation3 + $0x88] sm:$0xf]
      %v8232 = vld [vmem:[#allocation3 + $0x8c] sm:$0xf]
      %v8233 = vld [vmem:[#allocation3 + $0x90] sm:$0xf]
      %v8234 = vld [vmem:[#allocation3 + $0x94] sm:$0xf]
      %v8235 = vld [vmem:[#allocation3 + $0x98] sm:$0xf]
      %v8236 = vld [vmem:[#allocation3 + $0x9c] sm:$0xf]
      %v8237 = vld [vmem:[#allocation3 + $0xa0] sm:$0xf]
      %v8238 = vld [vmem:[#allocation3 + $0xa4] sm:$0x3]
      %s8239 = scalar_lea.vmem %s3, 8
      %v8240 = vld [vmem:[%s8239] sm:$0xf]
      %v8279 = vunpack.c.l.b16 %v8201
      %v8280 = vunpack.c.l.b16 %v8202
      %v8281 = vunpack.c.l.b16 %v8203
      %v8282 = vunpack.c.l.b16 %v8204
      %v8283 = vunpack.c.l.b16 %v8205
      %v8284 = vunpack.c.l.b16 %v8206
      %v8285 = vunpack.c.l.b16 %v8207
      %v8286 = vunpack.c.l.b16 %v8208
      %v8287 = vunpack.c.l.b16 %v8209
      %v8288 = vunpack.c.l.b16 %v8210
      %v8289 = vunpack.c.l.b16 %v8211
      %v8290 = vunpack.c.l.b16 %v8212
      %v8291 = vunpack.c.l.b16 %v8213
      %v8292 = vunpack.c.l.b16 %v8214
      %v8293 = vunpack.c.l.b16 %v8215
      %v8294 = vunpack.c.l.b16 %v8216
      %v8295 = vunpack.c.l.b16 %v8217
      %v8296 = vunpack.c.l.b16 %v8218
      %v8297 = vunpack.c.l.b16 %v8219
      %v8298 = vunpack.c.l.b16 %v8220
      %v8299 = vunpack.c.l.b16 %v8221
      %v8300 = vunpack.c.l.b16 %v8222
      %v8301 = vunpack.c.l.b16 %v8223
      %v8302 = vunpack.c.l.b16 %v8224
      %v8303 = vunpack.c.l.b16 %v8225
      %v8304 = vunpack.c.l.b16 %v8226
      %v8305 = vunpack.c.l.b16 %v8227
      %v8306 = vunpack.c.l.b16 %v8228
      %v8307 = vunpack.c.l.b16 %v8229
      %v8308 = vunpack.c.l.b16 %v8230
      %v8309 = vunpack.c.l.b16 %v8231
      %v8310 = vunpack.c.l.b16 %v8232
      %v8311 = vunpack.c.l.b16 %v8233
      %v8312 = vunpack.c.l.b16 %v8234
      %v8313 = vunpack.c.l.b16 %v8235
      %v8314 = vunpack.c.l.b16 %v8236
      %v8315 = vunpack.c.l.b16 %v8237
      %v8316 = vunpack.c.l.b16 %v8238
      %v8317 = vpack.c.b16 %v8280, %v8279
      %v8318 = vpack.c.b16 %v8282, %v8281
      %v8319 = vpack.c.b16 %v8284, %v8283
      %v8320 = vpack.c.b16 %v8286, %v8285
      %v8321 = vpack.c.b16 %v8288, %v8287
      %v8322 = vpack.c.b16 %v8290, %v8289
      %v8323 = vpack.c.b16 %v8292, %v8291
      %v8324 = vpack.c.b16 %v8294, %v8293
      %v8325 = vpack.c.b16 %v8296, %v8295
      %v8326 = vpack.c.b16 %v8298, %v8297
      %v8327 = vpack.c.b16 %v8300, %v8299
      %v8328 = vpack.c.b16 %v8302, %v8301
      %v8329 = vpack.c.b16 %v8304, %v8303
      %v8330 = vpack.c.b16 %v8306, %v8305
      %v8331 = vpack.c.b16 %v8308, %v8307
      %v8332 = vpack.c.b16 %v8310, %v8309
      %v8333 = vpack.c.b16 %v8312, %v8311
      %v8334 = vpack.c.b16 %v8314, %v8313
      %v8335 = vpack.c.b16 %v8316, %v8315
      %v8336 = vrot.slane %v8317, 2
      %v8337 = vrot.slane %v8318, 2
      %v8338 = vsel %vm5137, %v8336, %v8337
      %v8339 = vrot.slane %v8319, 2
      %v8340 = vsel %vm5137, %v8337, %v8339
      %v8341 = vrot.slane %v8320, 2
      %v8342 = vsel %vm5137, %v8339, %v8341
      %v8343 = vrot.slane %v8321, 2
      %v8344 = vsel %vm5137, %v8341, %v8343
      %v8345 = vrot.slane %v8322, 2
      %v8346 = vsel %vm5137, %v8343, %v8345
      %v8347 = vrot.slane %v8323, 2
      %v8348 = vsel %vm5137, %v8345, %v8347
      %v8349 = vrot.slane %v8324, 2
      %v8350 = vsel %vm5137, %v8347, %v8349
      %v8351 = vrot.slane %v8325, 2
      %v8352 = vsel %vm5137, %v8349, %v8351
      %v8353 = vrot.slane %v8326, 2
      %v8354 = vsel %vm5137, %v8351, %v8353
      %v8355 = vrot.slane %v8327, 2
      %v8356 = vsel %vm5137, %v8353, %v8355
      %v8357 = vrot.slane %v8328, 2
      %v8358 = vsel %vm5137, %v8355, %v8357
      %v8359 = vrot.slane %v8329, 2
      %v8360 = vsel %vm5137, %v8357, %v8359
      %v8361 = vrot.slane %v8330, 2
      %v8362 = vsel %vm5137, %v8359, %v8361
      %v8363 = vrot.slane %v8331, 2
      %v8364 = vsel %vm5137, %v8361, %v8363
      %v8365 = vrot.slane %v8332, 2
      %v8366 = vsel %vm5137, %v8363, %v8365
      %v8367 = vrot.slane %v8333, 2
      %v8368 = vsel %vm5137, %v8365, %v8367
      %v8369 = vrot.slane %v8334, 2
      %v8370 = vsel %vm5137, %v8367, %v8369
      %v8371 = vrot.slane %v8335, 2
      %v8372 = vsel %vm5137, %v8369, %v8371
      %v8374 = vsel %vm6618, %v8338, 0
      %v8377 = vsel %vm6618, %v8340, 0
      %v8380 = vsel %vm6618, %v8342, 0
      %v8383 = vsel %vm6618, %v8344, 0
      %v8386 = vsel %vm6618, %v8346, 0
      %v8389 = vsel %vm6618, %v8348, 0
      %v8392 = vsel %vm6618, %v8350, 0
      %v8395 = vsel %vm6618, %v8352, 0
      %v8398 = vsel %vm6618, %v8354, 0
      %v8401 = vsel %vm6618, %v8356, 0
      %v8404 = vsel %vm6618, %v8358, 0
      %v8407 = vsel %vm6618, %v8360, 0
      %v8410 = vsel %vm6618, %v8362, 0
      %v8413 = vsel %vm6618, %v8364, 0
      %v8416 = vsel %vm6618, %v8366, 0
      %v8419 = vsel %vm6618, %v8368, 0
      %v8422 = vsel %vm6618, %v8370, 0
      %v8425 = vsel %vm6618, %v8372, 0
      %v8428 = vsel %vm6618, %v8371, 0
      %v8431 = vsel %vm6676, %v8240, 0
      %8433 = vmatpush.bf16.msra.mxu0 0
      %8434 = vmatpush.bf16.msra.mxu0 0
      %8435 = vmatpush.bf16.msra.mxu0 0
      %8436 = vmatpush.bf16.msra.mxu0 0
      %8437 = vmatpush.bf16.msra.mxu0 0
      %8438 = vmatpush.bf16.msra.mxu0 0
      %8439 = vmatpush.bf16.msra.mxu0 0
      %8440 = vmatpush.bf16.msra.mxu0 %v8431
      %8441 = vmatmul.bf16.gmra.mxu0 %v8374
      %v8442 = vpop.f32.mrf.mxu0
      %v8443 = vadd.f32 0.0, %v8442
      %v8444 = vpop.f32.mrf.mxu0
      %v8445 = vadd.f32 0.0, %v8444
      %8446 = vmatmul.bf16.gmra.mxu0 %v8377
      %v8447 = vpop.f32.mrf.mxu0
      %v8448 = vadd.f32 0.0, %v8447
      %v8449 = vpop.f32.mrf.mxu0
      %v8450 = vadd.f32 0.0, %v8449
      %8451 = vmatmul.bf16.gmra.mxu0 %v8380
      %v8452 = vpop.f32.mrf.mxu0
      %v8453 = vadd.f32 0.0, %v8452
      %v8454 = vpop.f32.mrf.mxu0
      %v8455 = vadd.f32 0.0, %v8454
      %8456 = vmatmul.bf16.gmra.mxu0 %v8383
      %v8457 = vpop.f32.mrf.mxu0
      %v8458 = vadd.f32 0.0, %v8457
      %v8459 = vpop.f32.mrf.mxu0
      %v8460 = vadd.f32 0.0, %v8459
      %8461 = vmatmul.bf16.gmra.mxu0 %v8386
      %v8462 = vpop.f32.mrf.mxu0
      %v8463 = vadd.f32 0.0, %v8462
      %v8464 = vpop.f32.mrf.mxu0
      %v8465 = vadd.f32 0.0, %v8464
      %8466 = vmatmul.bf16.gmra.mxu0 %v8389
      %v8467 = vpop.f32.mrf.mxu0
      %v8468 = vadd.f32 0.0, %v8467
      %v8469 = vpop.f32.mrf.mxu0
      %v8470 = vadd.f32 0.0, %v8469
      %8471 = vmatmul.bf16.gmra.mxu0 %v8392
      %v8472 = vpop.f32.mrf.mxu0
      %v8473 = vadd.f32 0.0, %v8472
      %v8474 = vpop.f32.mrf.mxu0
      %v8475 = vadd.f32 0.0, %v8474
      %8476 = vmatmul.bf16.gmra.mxu0 %v8395
      %v8477 = vpop.f32.mrf.mxu0
      %v8478 = vadd.f32 0.0, %v8477
      %v8479 = vpop.f32.mrf.mxu0
      %v8480 = vadd.f32 0.0, %v8479
      %8481 = vmatmul.bf16.gmra.mxu0 %v8398
      %v8482 = vpop.f32.mrf.mxu0
      %v8483 = vadd.f32 0.0, %v8482
      %v8484 = vpop.f32.mrf.mxu0
      %v8485 = vadd.f32 0.0, %v8484
      %8486 = vmatmul.bf16.gmra.mxu0 %v8401
      %v8487 = vpop.f32.mrf.mxu0
      %v8488 = vadd.f32 0.0, %v8487
      %v8489 = vpop.f32.mrf.mxu0
      %v8490 = vadd.f32 0.0, %v8489
      %8491 = vmatmul.bf16.gmra.mxu0 %v8404
      %v8492 = vpop.f32.mrf.mxu0
      %v8493 = vadd.f32 0.0, %v8492
      %v8494 = vpop.f32.mrf.mxu0
      %v8495 = vadd.f32 0.0, %v8494
      %8496 = vmatmul.bf16.gmra.mxu0 %v8407
      %v8497 = vpop.f32.mrf.mxu0
      %v8498 = vadd.f32 0.0, %v8497
      %v8499 = vpop.f32.mrf.mxu0
      %v8500 = vadd.f32 0.0, %v8499
      %8501 = vmatmul.bf16.gmra.mxu0 %v8410
      %v8502 = vpop.f32.mrf.mxu0
      %v8503 = vadd.f32 0.0, %v8502
      %v8504 = vpop.f32.mrf.mxu0
      %v8505 = vadd.f32 0.0, %v8504
      %8506 = vmatmul.bf16.gmra.mxu0 %v8413
      %v8507 = vpop.f32.mrf.mxu0
      %v8508 = vadd.f32 0.0, %v8507
      %v8509 = vpop.f32.mrf.mxu0
      %v8510 = vadd.f32 0.0, %v8509
      %8511 = vmatmul.bf16.gmra.mxu0 %v8416
      %v8512 = vpop.f32.mrf.mxu0
      %v8513 = vadd.f32 0.0, %v8512
      %v8514 = vpop.f32.mrf.mxu0
      %v8515 = vadd.f32 0.0, %v8514
      %8516 = vmatmul.bf16.gmra.mxu0 %v8419
      %v8517 = vpop.f32.mrf.mxu0
      %v8518 = vadd.f32 0.0, %v8517
      %v8519 = vpop.f32.mrf.mxu0
      %v8520 = vadd.f32 0.0, %v8519
      %8521 = vmatmul.bf16.gmra.mxu0 %v8422
      %v8522 = vpop.f32.mrf.mxu0
      %v8523 = vadd.f32 0.0, %v8522
      %v8524 = vpop.f32.mrf.mxu0
      %v8525 = vadd.f32 0.0, %v8524
      %8526 = vmatmul.bf16.gmra.mxu0 %v8425
      %v8527 = vpop.f32.mrf.mxu0
      %v8528 = vadd.f32 0.0, %v8527
      %v8529 = vpop.f32.mrf.mxu0
      %v8530 = vadd.f32 0.0, %v8529
      %8531 = vmatmul.bf16.gmra.mxu0 %v8428
      %v8532 = vpop.f32.mrf.mxu0
      %v8533 = vadd.f32 0.0, %v8532
      %v8534 = vpop.f32.mrf.mxu0
      %8535 = vdwg.mxu0
      %8536 = vst.msk [vmem:[#allocation4] sm:$0xff] %vm6783, %v8443
      %8537 = vst.msk [vmem:[#allocation4 + $0x8] sm:$0xff] %vm6783, %v8445
      %8538 = vst.msk [vmem:[#allocation4 + $0x10] sm:$0xff] %vm6783, %v8448
      %8539 = vst.msk [vmem:[#allocation4 + $0x18] sm:$0xff] %vm6783, %v8450
      %8540 = vst.msk [vmem:[#allocation4 + $0x20] sm:$0xff] %vm6783, %v8453
      %8541 = vst.msk [vmem:[#allocation4 + $0x28] sm:$0xff] %vm6783, %v8455
      %8542 = vst.msk [vmem:[#allocation4 + $0x30] sm:$0xff] %vm6783, %v8458
      %8543 = vst.msk [vmem:[#allocation4 + $0x38] sm:$0xff] %vm6783, %v8460
      %8544 = vst.msk [vmem:[#allocation4 + $0x40] sm:$0xff] %vm6783, %v8463
      %8545 = vst.msk [vmem:[#allocation4 + $0x48] sm:$0xff] %vm6783, %v8465
      %8546 = vst.msk [vmem:[#allocation4 + $0x50] sm:$0xff] %vm6783, %v8468
      %8547 = vst.msk [vmem:[#allocation4 + $0x58] sm:$0xff] %vm6783, %v8470
      %8548 = vst.msk [vmem:[#allocation4 + $0x60] sm:$0xff] %vm6783, %v8473
      %8549 = vst.msk [vmem:[#allocation4 + $0x68] sm:$0xff] %vm6783, %v8475
      %8550 = vst.msk [vmem:[#allocation4 + $0x70] sm:$0xff] %vm6783, %v8478
      %8551 = vst.msk [vmem:[#allocation4 + $0x78] sm:$0xff] %vm6783, %v8480
      %8552 = vst.msk [vmem:[#allocation4 + $0x80] sm:$0xff] %vm6783, %v8483
      %8553 = vst.msk [vmem:[#allocation4 + $0x88] sm:$0xff] %vm6783, %v8485
      %8554 = vst.msk [vmem:[#allocation4 + $0x90] sm:$0xff] %vm6783, %v8488
      %8555 = vst.msk [vmem:[#allocation4 + $0x98] sm:$0xff] %vm6783, %v8490
      %8556 = vst.msk [vmem:[#allocation4 + $0xa0] sm:$0xff] %vm6783, %v8493
      %8557 = vst.msk [vmem:[#allocation4 + $0xa8] sm:$0xff] %vm6783, %v8495
      %8558 = vst.msk [vmem:[#allocation4 + $0xb0] sm:$0xff] %vm6783, %v8498
      %8559 = vst.msk [vmem:[#allocation4 + $0xb8] sm:$0xff] %vm6783, %v8500
      %8560 = vst.msk [vmem:[#allocation4 + $0xc0] sm:$0xff] %vm6783, %v8503
      %8561 = vst.msk [vmem:[#allocation4 + $0xc8] sm:$0xff] %vm6783, %v8505
      %8562 = vst.msk [vmem:[#allocation4 + $0xd0] sm:$0xff] %vm6783, %v8508
      %8563 = vst.msk [vmem:[#allocation4 + $0xd8] sm:$0xff] %vm6783, %v8510
      %8564 = vst.msk [vmem:[#allocation4 + $0xe0] sm:$0xff] %vm6783, %v8513
      %8565 = vst.msk [vmem:[#allocation4 + $0xe8] sm:$0xff] %vm6783, %v8515
      %8566 = vst.msk [vmem:[#allocation4 + $0xf0] sm:$0xff] %vm6783, %v8518
      %8567 = vst.msk [vmem:[#allocation4 + $0xf8] sm:$0xff] %vm6783, %v8520
      %8568 = vst.msk [vmem:[#allocation4 + $0x100] sm:$0xff] %vm6783, %v8523
      %8569 = vst.msk [vmem:[#allocation4 + $0x108] sm:$0xff] %vm6783, %v8525
      %8570 = vst.msk [vmem:[#allocation4 + $0x110] sm:$0xff] %vm6783, %v8528
      %8571 = vst.msk [vmem:[#allocation4 + $0x118] sm:$0xff] %vm6783, %v8530
      %8572 = vst.msk [vmem:[#allocation4 + $0x120] sm:$0xff] %vm6783, %v8533
      %v8573 = vld [vmem:[#allocation4] sm:$0xff]
      %v8574 = vld [vmem:[#allocation4 + $0x8] sm:$0xff]
      %v8575 = vld [vmem:[#allocation4 + $0x10] sm:$0xff]
      %v8576 = vld [vmem:[#allocation4 + $0x18] sm:$0xff]
      %v8577 = vld [vmem:[#allocation4 + $0x20] sm:$0xff]
      %v8578 = vld [vmem:[#allocation4 + $0x28] sm:$0xff]
      %v8579 = vld [vmem:[#allocation4 + $0x30] sm:$0xff]
      %v8580 = vld [vmem:[#allocation4 + $0x38] sm:$0xff]
      %v8581 = vld [vmem:[#allocation4 + $0x40] sm:$0xff]
      %v8582 = vld [vmem:[#allocation4 + $0x48] sm:$0xff]
      %v8583 = vld [vmem:[#allocation4 + $0x50] sm:$0xff]
      %v8584 = vld [vmem:[#allocation4 + $0x58] sm:$0xff]
      %v8585 = vld [vmem:[#allocation4 + $0x60] sm:$0xff]
      %v8586 = vld [vmem:[#allocation4 + $0x68] sm:$0xff]
      %v8587 = vld [vmem:[#allocation4 + $0x70] sm:$0xff]
      %v8588 = vld [vmem:[#allocation4 + $0x78] sm:$0xff]
      %v8589 = vld [vmem:[#allocation4 + $0x80] sm:$0xff]
      %v8590 = vld [vmem:[#allocation4 + $0x88] sm:$0xff]
      %v8591 = vld [vmem:[#allocation4 + $0x90] sm:$0xff]
      %v8592 = vld [vmem:[#allocation4 + $0x98] sm:$0xff]
      %v8593 = vld [vmem:[#allocation4 + $0xa0] sm:$0xff]
      %v8594 = vld [vmem:[#allocation4 + $0xa8] sm:$0xff]
      %v8595 = vld [vmem:[#allocation4 + $0xb0] sm:$0xff]
      %v8596 = vld [vmem:[#allocation4 + $0xb8] sm:$0xff]
      %v8597 = vld [vmem:[#allocation4 + $0xc0] sm:$0xff]
      %v8598 = vld [vmem:[#allocation4 + $0xc8] sm:$0xff]
      %v8599 = vld [vmem:[#allocation4 + $0xd0] sm:$0xff]
      %v8600 = vld [vmem:[#allocation4 + $0xd8] sm:$0xff]
      %v8601 = vld [vmem:[#allocation4 + $0xe0] sm:$0xff]
      %v8602 = vld [vmem:[#allocation4 + $0xe8] sm:$0xff]
      %v8603 = vld [vmem:[#allocation4 + $0xf0] sm:$0xff]
      %v8604 = vld [vmem:[#allocation4 + $0xf8] sm:$0xff]
      %v8605 = vld [vmem:[#allocation4 + $0x100] sm:$0xff]
      %v8606 = vld [vmem:[#allocation4 + $0x108] sm:$0xff]
      %v8607 = vld [vmem:[#allocation4 + $0x110] sm:$0xff]
      %v8608 = vld [vmem:[#allocation4 + $0x118] sm:$0xff]
      %v8609 = vadd.f32 %v8165, %v8573
      %v8610 = vadd.f32 %v8166, %v8574
      %v8611 = vadd.f32 %v8167, %v8575
      %v8612 = vadd.f32 %v8168, %v8576
      %v8613 = vadd.f32 %v8169, %v8577
      %v8614 = vadd.f32 %v8170, %v8578
      %v8615 = vadd.f32 %v8171, %v8579
      %v8616 = vadd.f32 %v8172, %v8580
      %v8617 = vadd.f32 %v8173, %v8581
      %v8618 = vadd.f32 %v8174, %v8582
      %v8619 = vadd.f32 %v8175, %v8583
      %v8620 = vadd.f32 %v8176, %v8584
      %v8621 = vadd.f32 %v8177, %v8585
      %v8622 = vadd.f32 %v8178, %v8586
      %v8623 = vadd.f32 %v8179, %v8587
      %v8624 = vadd.f32 %v8180, %v8588
      %v8625 = vadd.f32 %v8181, %v8589
      %v8626 = vadd.f32 %v8182, %v8590
      %v8627 = vadd.f32 %v8183, %v8591
      %v8628 = vadd.f32 %v8184, %v8592
      %v8629 = vadd.f32 %v8185, %v8593
      %v8630 = vadd.f32 %v8186, %v8594
      %v8631 = vadd.f32 %v8187, %v8595
      %v8632 = vadd.f32 %v8188, %v8596
      %v8633 = vadd.f32 %v8189, %v8597
      %v8634 = vadd.f32 %v8190, %v8598
      %v8635 = vadd.f32 %v8191, %v8599
      %v8636 = vadd.f32 %v8192, %v8600
      %v8637 = vadd.f32 %v8193, %v8601
      %v8638 = vadd.f32 %v8194, %v8602
      %v8639 = vadd.f32 %v8195, %v8603
      %v8640 = vadd.f32 %v8196, %v8604
      %v8641 = vadd.f32 %v8197, %v8605
      %v8642 = vadd.f32 %v8198, %v8606
      %v8643 = vadd.f32 %v8199, %v8607
      %v8644 = vadd.f32 %v8200, %v8608
      %v8645 = vld [vmem:[#allocation4 + $0x1] sm:$0xff]
      %v8646 = vld [vmem:[#allocation4 + $0x9] sm:$0xff]
      %v8647 = vld [vmem:[#allocation4 + $0x11] sm:$0xff]
      %v8648 = vld [vmem:[#allocation4 + $0x19] sm:$0xff]
      %v8649 = vld [vmem:[#allocation4 + $0x21] sm:$0xff]
      %v8650 = vld [vmem:[#allocation4 + $0x29] sm:$0xff]
      %v8651 = vld [vmem:[#allocation4 + $0x31] sm:$0xff]
      %v8652 = vld [vmem:[#allocation4 + $0x39] sm:$0xff]
      %v8653 = vld [vmem:[#allocation4 + $0x41] sm:$0xff]
      %v8654 = vld [vmem:[#allocation4 + $0x49] sm:$0xff]
      %v8655 = vld [vmem:[#allocation4 + $0x51] sm:$0xff]
      %v8656 = vld [vmem:[#allocation4 + $0x59] sm:$0xff]
      %v8657 = vld [vmem:[#allocation4 + $0x61] sm:$0xff]
      %v8658 = vld [vmem:[#allocation4 + $0x69] sm:$0xff]
      %v8659 = vld [vmem:[#allocation4 + $0x71] sm:$0xff]
      %v8660 = vld [vmem:[#allocation4 + $0x79] sm:$0xff]
      %v8661 = vld [vmem:[#allocation4 + $0x81] sm:$0xff]
      %v8662 = vld [vmem:[#allocation4 + $0x89] sm:$0xff]
      %v8663 = vld [vmem:[#allocation4 + $0x91] sm:$0xff]
      %v8664 = vld [vmem:[#allocation4 + $0x99] sm:$0xff]
      %v8665 = vld [vmem:[#allocation4 + $0xa1] sm:$0xff]
      %v8666 = vld [vmem:[#allocation4 + $0xa9] sm:$0xff]
      %v8667 = vld [vmem:[#allocation4 + $0xb1] sm:$0xff]
      %v8668 = vld [vmem:[#allocation4 + $0xb9] sm:$0xff]
      %v8669 = vld [vmem:[#allocation4 + $0xc1] sm:$0xff]
      %v8670 = vld [vmem:[#allocation4 + $0xc9] sm:$0xff]
      %v8671 = vld [vmem:[#allocation4 + $0xd1] sm:$0xff]
      %v8672 = vld [vmem:[#allocation4 + $0xd9] sm:$0xff]
      %v8673 = vld [vmem:[#allocation4 + $0xe1] sm:$0xff]
      %v8674 = vld [vmem:[#allocation4 + $0xe9] sm:$0xff]
      %v8675 = vld [vmem:[#allocation4 + $0xf1] sm:$0xff]
      %v8676 = vld [vmem:[#allocation4 + $0xf9] sm:$0xff]
      %v8677 = vld [vmem:[#allocation4 + $0x101] sm:$0xff]
      %v8678 = vld [vmem:[#allocation4 + $0x109] sm:$0xff]
      %v8679 = vld [vmem:[#allocation4 + $0x111] sm:$0xff]
      %v8680 = vld [vmem:[#allocation4 + $0x119] sm:$0xff]
      %8717 = vrot.lane.b32.xlu0 %v8645, 124
      %v8718 = vpop.permute.xlu0 %8717
      %8719 = vrot.lane.b32.xlu0 %v8646, 124
      %v8720 = vpop.permute.xlu0 %8719
      %8721 = vrot.lane.b32.xlu0 %v8647, 124
      %v8722 = vpop.permute.xlu0 %8721
      %8723 = vrot.lane.b32.xlu0 %v8648, 124
      %v8724 = vpop.permute.xlu0 %8723
      %8725 = vrot.lane.b32.xlu0 %v8649, 124
      %v8726 = vpop.permute.xlu0 %8725
      %8727 = vrot.lane.b32.xlu0 %v8650, 124
      %v8728 = vpop.permute.xlu0 %8727
      %8729 = vrot.lane.b32.xlu0 %v8651, 124
      %v8730 = vpop.permute.xlu0 %8729
      %8731 = vrot.lane.b32.xlu0 %v8652, 124
      %v8732 = vpop.permute.xlu0 %8731
      %8733 = vrot.lane.b32.xlu0 %v8653, 124
      %v8734 = vpop.permute.xlu0 %8733
      %8735 = vrot.lane.b32.xlu0 %v8654, 124
      %v8736 = vpop.permute.xlu0 %8735
      %8737 = vrot.lane.b32.xlu0 %v8655, 124
      %v8738 = vpop.permute.xlu0 %8737
      %8739 = vrot.lane.b32.xlu0 %v8656, 124
      %v8740 = vpop.permute.xlu0 %8739
      %8741 = vrot.lane.b32.xlu0 %v8657, 124
      %v8742 = vpop.permute.xlu0 %8741
      %8743 = vrot.lane.b32.xlu0 %v8658, 124
      %v8744 = vpop.permute.xlu0 %8743
      %8745 = vrot.lane.b32.xlu0 %v8659, 124
      %v8746 = vpop.permute.xlu0 %8745
      %8747 = vrot.lane.b32.xlu0 %v8660, 124
      %v8748 = vpop.permute.xlu0 %8747
      %8749 = vrot.lane.b32.xlu0 %v8661, 124
      %v8750 = vpop.permute.xlu0 %8749
      %8751 = vrot.lane.b32.xlu0 %v8662, 124
      %v8752 = vpop.permute.xlu0 %8751
      %8753 = vrot.lane.b32.xlu0 %v8663, 124
      %v8754 = vpop.permute.xlu0 %8753
      %8755 = vrot.lane.b32.xlu0 %v8664, 124
      %v8756 = vpop.permute.xlu0 %8755
      %8757 = vrot.lane.b32.xlu0 %v8665, 124
      %v8758 = vpop.permute.xlu0 %8757
      %8759 = vrot.lane.b32.xlu0 %v8666, 124
      %v8760 = vpop.permute.xlu0 %8759
      %8761 = vrot.lane.b32.xlu0 %v8667, 124
      %v8762 = vpop.permute.xlu0 %8761
      %8763 = vrot.lane.b32.xlu0 %v8668, 124
      %v8764 = vpop.permute.xlu0 %8763
      %8765 = vrot.lane.b32.xlu0 %v8669, 124
      %v8766 = vpop.permute.xlu0 %8765
      %8767 = vrot.lane.b32.xlu0 %v8670, 124
      %v8768 = vpop.permute.xlu0 %8767
      %8769 = vrot.lane.b32.xlu0 %v8671, 124
      %v8770 = vpop.permute.xlu0 %8769
      %8771 = vrot.lane.b32.xlu0 %v8672, 124
      %v8772 = vpop.permute.xlu0 %8771
      %8773 = vrot.lane.b32.xlu0 %v8673, 124
      %v8774 = vpop.permute.xlu0 %8773
      %8775 = vrot.lane.b32.xlu0 %v8674, 124
      %v8776 = vpop.permute.xlu0 %8775
      %8777 = vrot.lane.b32.xlu0 %v8675, 124
      %v8778 = vpop.permute.xlu0 %8777
      %8779 = vrot.lane.b32.xlu0 %v8676, 124
      %v8780 = vpop.permute.xlu0 %8779
      %8781 = vrot.lane.b32.xlu0 %v8677, 124
      %v8782 = vpop.permute.xlu0 %8781
      %8783 = vrot.lane.b32.xlu0 %v8678, 124
      %v8784 = vpop.permute.xlu0 %8783
      %8785 = vrot.lane.b32.xlu0 %v8679, 124
      %v8786 = vpop.permute.xlu0 %8785
      %8787 = vrot.lane.b32.xlu0 %v8680, 124
      %v8788 = vpop.permute.xlu0 %8787
      %v8825 = vadd.f32 %v8609, %v8718
      %v8826 = vadd.f32 %v8610, %v8720
      %v8827 = vadd.f32 %v8611, %v8722
      %v8828 = vadd.f32 %v8612, %v8724
      %v8829 = vadd.f32 %v8613, %v8726
      %v8830 = vadd.f32 %v8614, %v8728
      %v8831 = vadd.f32 %v8615, %v8730
      %v8832 = vadd.f32 %v8616, %v8732
      %v8833 = vadd.f32 %v8617, %v8734
      %v8834 = vadd.f32 %v8618, %v8736
      %v8835 = vadd.f32 %v8619, %v8738
      %v8836 = vadd.f32 %v8620, %v8740
      %v8837 = vadd.f32 %v8621, %v8742
      %v8838 = vadd.f32 %v8622, %v8744
      %v8839 = vadd.f32 %v8623, %v8746
      %v8840 = vadd.f32 %v8624, %v8748
      %v8841 = vadd.f32 %v8625, %v8750
      %v8842 = vadd.f32 %v8626, %v8752
      %v8843 = vadd.f32 %v8627, %v8754
      %v8844 = vadd.f32 %v8628, %v8756
      %v8845 = vadd.f32 %v8629, %v8758
      %v8846 = vadd.f32 %v8630, %v8760
      %v8847 = vadd.f32 %v8631, %v8762
      %v8848 = vadd.f32 %v8632, %v8764
      %v8849 = vadd.f32 %v8633, %v8766
      %v8850 = vadd.f32 %v8634, %v8768
      %v8851 = vadd.f32 %v8635, %v8770
      %v8852 = vadd.f32 %v8636, %v8772
      %v8853 = vadd.f32 %v8637, %v8774
      %v8854 = vadd.f32 %v8638, %v8776
      %v8855 = vadd.f32 %v8639, %v8778
      %v8856 = vadd.f32 %v8640, %v8780
      %v8857 = vadd.f32 %v8641, %v8782
      %v8858 = vadd.f32 %v8642, %v8784
      %v8859 = vadd.f32 %v8643, %v8786
      %v8860 = vadd.f32 %v8644, %v8788
      %v8861 = vld [vmem:[#allocation4 + $0x2] sm:$0xff]
      %v8862 = vld [vmem:[#allocation4 + $0xa] sm:$0xff]
      %v8863 = vld [vmem:[#allocation4 + $0x12] sm:$0xff]
      %v8864 = vld [vmem:[#allocation4 + $0x1a] sm:$0xff]
      %v8865 = vld [vmem:[#allocation4 + $0x22] sm:$0xff]
      %v8866 = vld [vmem:[#allocation4 + $0x2a] sm:$0xff]
      %v8867 = vld [vmem:[#allocation4 + $0x32] sm:$0xff]
      %v8868 = vld [vmem:[#allocation4 + $0x3a] sm:$0xff]
      %v8869 = vld [vmem:[#allocation4 + $0x42] sm:$0xff]
      %v8870 = vld [vmem:[#allocation4 + $0x4a] sm:$0xff]
      %v8871 = vld [vmem:[#allocation4 + $0x52] sm:$0xff]
      %v8872 = vld [vmem:[#allocation4 + $0x5a] sm:$0xff]
      %v8873 = vld [vmem:[#allocation4 + $0x62] sm:$0xff]
      %v8874 = vld [vmem:[#allocation4 + $0x6a] sm:$0xff]
      %v8875 = vld [vmem:[#allocation4 + $0x72] sm:$0xff]
      %v8876 = vld [vmem:[#allocation4 + $0x7a] sm:$0xff]
      %v8877 = vld [vmem:[#allocation4 + $0x82] sm:$0xff]
      %v8878 = vld [vmem:[#allocation4 + $0x8a] sm:$0xff]
      %v8879 = vld [vmem:[#allocation4 + $0x92] sm:$0xff]
      %v8880 = vld [vmem:[#allocation4 + $0x9a] sm:$0xff]
      %v8881 = vld [vmem:[#allocation4 + $0xa2] sm:$0xff]
      %v8882 = vld [vmem:[#allocation4 + $0xaa] sm:$0xff]
      %v8883 = vld [vmem:[#allocation4 + $0xb2] sm:$0xff]
      %v8884 = vld [vmem:[#allocation4 + $0xba] sm:$0xff]
      %v8885 = vld [vmem:[#allocation4 + $0xc2] sm:$0xff]
      %v8886 = vld [vmem:[#allocation4 + $0xca] sm:$0xff]
      %v8887 = vld [vmem:[#allocation4 + $0xd2] sm:$0xff]
      %v8888 = vld [vmem:[#allocation4 + $0xda] sm:$0xff]
      %v8889 = vld [vmem:[#allocation4 + $0xe2] sm:$0xff]
      %v8890 = vld [vmem:[#allocation4 + $0xea] sm:$0xff]
      %v8891 = vld [vmem:[#allocation4 + $0xf2] sm:$0xff]
      %v8892 = vld [vmem:[#allocation4 + $0xfa] sm:$0xff]
      %v8893 = vld [vmem:[#allocation4 + $0x102] sm:$0xff]
      %v8894 = vld [vmem:[#allocation4 + $0x10a] sm:$0xff]
      %v8895 = vld [vmem:[#allocation4 + $0x112] sm:$0xff]
      %v8896 = vld [vmem:[#allocation4 + $0x11a] sm:$0xff]
      %8933 = vrot.lane.b32.xlu0 %v8861, 120
      %v8934 = vpop.permute.xlu0 %8933
      %8935 = vrot.lane.b32.xlu0 %v8862, 120
      %v8936 = vpop.permute.xlu0 %8935
      %8937 = vrot.lane.b32.xlu0 %v8863, 120
      %v8938 = vpop.permute.xlu0 %8937
      %8939 = vrot.lane.b32.xlu0 %v8864, 120
      %v8940 = vpop.permute.xlu0 %8939
      %8941 = vrot.lane.b32.xlu0 %v8865, 120
      %v8942 = vpop.permute.xlu0 %8941
      %8943 = vrot.lane.b32.xlu0 %v8866, 120
      %v8944 = vpop.permute.xlu0 %8943
      %8945 = vrot.lane.b32.xlu0 %v8867, 120
      %v8946 = vpop.permute.xlu0 %8945
      %8947 = vrot.lane.b32.xlu0 %v8868, 120
      %v8948 = vpop.permute.xlu0 %8947
      %8949 = vrot.lane.b32.xlu0 %v8869, 120
      %v8950 = vpop.permute.xlu0 %8949
      %8951 = vrot.lane.b32.xlu0 %v8870, 120
      %v8952 = vpop.permute.xlu0 %8951
      %8953 = vrot.lane.b32.xlu0 %v8871, 120
      %v8954 = vpop.permute.xlu0 %8953
      %8955 = vrot.lane.b32.xlu0 %v8872, 120
      %v8956 = vpop.permute.xlu0 %8955
      %8957 = vrot.lane.b32.xlu0 %v8873, 120
      %v8958 = vpop.permute.xlu0 %8957
      %8959 = vrot.lane.b32.xlu0 %v8874, 120
      %v8960 = vpop.permute.xlu0 %8959
      %8961 = vrot.lane.b32.xlu0 %v8875, 120
      %v8962 = vpop.permute.xlu0 %8961
      %8963 = vrot.lane.b32.xlu0 %v8876, 120
      %v8964 = vpop.permute.xlu0 %8963
      %8965 = vrot.lane.b32.xlu0 %v8877, 120
      %v8966 = vpop.permute.xlu0 %8965
      %8967 = vrot.lane.b32.xlu0 %v8878, 120
      %v8968 = vpop.permute.xlu0 %8967
      %8969 = vrot.lane.b32.xlu0 %v8879, 120
      %v8970 = vpop.permute.xlu0 %8969
      %8971 = vrot.lane.b32.xlu0 %v8880, 120
      %v8972 = vpop.permute.xlu0 %8971
      %8973 = vrot.lane.b32.xlu0 %v8881, 120
      %v8974 = vpop.permute.xlu0 %8973
      %8975 = vrot.lane.b32.xlu0 %v8882, 120
      %v8976 = vpop.permute.xlu0 %8975
      %8977 = vrot.lane.b32.xlu0 %v8883, 120
      %v8978 = vpop.permute.xlu0 %8977
      %8979 = vrot.lane.b32.xlu0 %v8884, 120
      %v8980 = vpop.permute.xlu0 %8979
      %8981 = vrot.lane.b32.xlu0 %v8885, 120
      %v8982 = vpop.permute.xlu0 %8981
      %8983 = vrot.lane.b32.xlu0 %v8886, 120
      %v8984 = vpop.permute.xlu0 %8983
      %8985 = vrot.lane.b32.xlu0 %v8887, 120
      %v8986 = vpop.permute.xlu0 %8985
      %8987 = vrot.lane.b32.xlu0 %v8888, 120
      %v8988 = vpop.permute.xlu0 %8987
      %8989 = vrot.lane.b32.xlu0 %v8889, 120
      %v8990 = vpop.permute.xlu0 %8989
      %8991 = vrot.lane.b32.xlu0 %v8890, 120
      %v8992 = vpop.permute.xlu0 %8991
      %8993 = vrot.lane.b32.xlu0 %v8891, 120
      %v8994 = vpop.permute.xlu0 %8993
      %8995 = vrot.lane.b32.xlu0 %v8892, 120
      %v8996 = vpop.permute.xlu0 %8995
      %8997 = vrot.lane.b32.xlu0 %v8893, 120
      %v8998 = vpop.permute.xlu0 %8997
      %8999 = vrot.lane.b32.xlu0 %v8894, 120
      %v9000 = vpop.permute.xlu0 %8999
      %9001 = vrot.lane.b32.xlu0 %v8895, 120
      %v9002 = vpop.permute.xlu0 %9001
      %9003 = vrot.lane.b32.xlu0 %v8896, 120
      %v9004 = vpop.permute.xlu0 %9003
      %v9041 = vadd.f32 %v8825, %v8934
      %v9042 = vadd.f32 %v8826, %v8936
      %v9043 = vadd.f32 %v8827, %v8938
      %v9044 = vadd.f32 %v8828, %v8940
      %v9045 = vadd.f32 %v8829, %v8942
      %v9046 = vadd.f32 %v8830, %v8944
      %v9047 = vadd.f32 %v8831, %v8946
      %v9048 = vadd.f32 %v8832, %v8948
      %v9049 = vadd.f32 %v8833, %v8950
      %v9050 = vadd.f32 %v8834, %v8952
      %v9051 = vadd.f32 %v8835, %v8954
      %v9052 = vadd.f32 %v8836, %v8956
      %v9053 = vadd.f32 %v8837, %v8958
      %v9054 = vadd.f32 %v8838, %v8960
      %v9055 = vadd.f32 %v8839, %v8962
      %v9056 = vadd.f32 %v8840, %v8964
      %v9057 = vadd.f32 %v8841, %v8966
      %v9058 = vadd.f32 %v8842, %v8968
      %v9059 = vadd.f32 %v8843, %v8970
      %v9060 = vadd.f32 %v8844, %v8972
      %v9061 = vadd.f32 %v8845, %v8974
      %v9062 = vadd.f32 %v8846, %v8976
      %v9063 = vadd.f32 %v8847, %v8978
      %v9064 = vadd.f32 %v8848, %v8980
      %v9065 = vadd.f32 %v8849, %v8982
      %v9066 = vadd.f32 %v8850, %v8984
      %v9067 = vadd.f32 %v8851, %v8986
      %v9068 = vadd.f32 %v8852, %v8988
      %v9069 = vadd.f32 %v8853, %v8990
      %v9070 = vadd.f32 %v8854, %v8992
      %v9071 = vadd.f32 %v8855, %v8994
      %v9072 = vadd.f32 %v8856, %v8996
      %v9073 = vadd.f32 %v8857, %v8998
      %v9074 = vadd.f32 %v8858, %v9000
      %v9075 = vadd.f32 %v8859, %v9002
      %v9076 = vadd.f32 %v8860, %v9004
      %v9077 = vld [vmem:[%s4] sm:$0x1]
      %v9079 = vperm.slane %v9077, 0
      %v9081 = vadd.f32 %v9041, %v9079
      %v9082 = vadd.f32 %v9042, %v9079
      %v9083 = vadd.f32 %v9043, %v9079
      %v9084 = vadd.f32 %v9044, %v9079
      %v9085 = vadd.f32 %v9045, %v9079
      %v9086 = vadd.f32 %v9046, %v9079
      %v9087 = vadd.f32 %v9047, %v9079
      %v9088 = vadd.f32 %v9048, %v9079
      %v9089 = vadd.f32 %v9049, %v9079
      %v9090 = vadd.f32 %v9050, %v9079
      %v9091 = vadd.f32 %v9051, %v9079
      %v9092 = vadd.f32 %v9052, %v9079
      %v9093 = vadd.f32 %v9053, %v9079
      %v9094 = vadd.f32 %v9054, %v9079
      %v9095 = vadd.f32 %v9055, %v9079
      %v9096 = vadd.f32 %v9056, %v9079
      %v9097 = vadd.f32 %v9057, %v9079
      %v9098 = vadd.f32 %v9058, %v9079
      %v9099 = vadd.f32 %v9059, %v9079
      %v9100 = vadd.f32 %v9060, %v9079
      %v9101 = vadd.f32 %v9061, %v9079
      %v9102 = vadd.f32 %v9062, %v9079
      %v9103 = vadd.f32 %v9063, %v9079
      %v9104 = vadd.f32 %v9064, %v9079
      %v9105 = vadd.f32 %v9065, %v9079
      %v9106 = vadd.f32 %v9066, %v9079
      %v9107 = vadd.f32 %v9067, %v9079
      %v9108 = vadd.f32 %v9068, %v9079
      %v9109 = vadd.f32 %v9069, %v9079
      %v9110 = vadd.f32 %v9070, %v9079
      %v9111 = vadd.f32 %v9071, %v9079
      %v9112 = vadd.f32 %v9072, %v9079
      %v9113 = vadd.f32 %v9073, %v9079
      %v9114 = vadd.f32 %v9074, %v9079
      %v9115 = vadd.f32 %v9075, %v9079
      %v9116 = vadd.f32 %v9076, %v9079
      %v9117 = vmax.f32 %v9081, 0.0
      %v9118 = vmax.f32 %v9082, 0.0
      %v9119 = vmax.f32 %v9083, 0.0
      %v9120 = vmax.f32 %v9084, 0.0
      %v9121 = vmax.f32 %v9085, 0.0
      %v9122 = vmax.f32 %v9086, 0.0
      %v9123 = vmax.f32 %v9087, 0.0
      %v9124 = vmax.f32 %v9088, 0.0
      %v9125 = vmax.f32 %v9089, 0.0
      %v9126 = vmax.f32 %v9090, 0.0
      %v9127 = vmax.f32 %v9091, 0.0
      %v9128 = vmax.f32 %v9092, 0.0
      %v9129 = vmax.f32 %v9093, 0.0
      %v9130 = vmax.f32 %v9094, 0.0
      %v9131 = vmax.f32 %v9095, 0.0
      %v9132 = vmax.f32 %v9096, 0.0
      %v9133 = vmax.f32 %v9097, 0.0
      %v9134 = vmax.f32 %v9098, 0.0
      %v9135 = vmax.f32 %v9099, 0.0
      %v9136 = vmax.f32 %v9100, 0.0
      %v9137 = vmax.f32 %v9101, 0.0
      %v9138 = vmax.f32 %v9102, 0.0
      %v9139 = vmax.f32 %v9103, 0.0
      %v9140 = vmax.f32 %v9104, 0.0
      %v9141 = vmax.f32 %v9105, 0.0
      %v9142 = vmax.f32 %v9106, 0.0
      %v9143 = vmax.f32 %v9107, 0.0
      %v9144 = vmax.f32 %v9108, 0.0
      %v9145 = vmax.f32 %v9109, 0.0
      %v9146 = vmax.f32 %v9110, 0.0
      %v9147 = vmax.f32 %v9111, 0.0
      %v9148 = vmax.f32 %v9112, 0.0
      %v9149 = vmax.f32 %v9113, 0.0
      %v9150 = vmax.f32 %v9114, 0.0
      %v9151 = vmax.f32 %v9115, 0.0
      %v9152 = vmax.f32 %v9116, 0.0
      %vm9153 = vcmask 31744
      %9154 = vst.msk [vmem:[%s224] sm:$0xff] %vm9153, %v9117
      %9155 = vst.msk [vmem:[%s224 + $0x8] sm:$0xff] %vm9153, %v9118
      %9156 = vst.msk [vmem:[%s224 + $0x10] sm:$0xff] %vm9153, %v9119
      %9157 = vst.msk [vmem:[%s224 + $0x18] sm:$0xff] %vm9153, %v9120
      %9158 = vst.msk [vmem:[%s224 + $0x20] sm:$0xff] %vm9153, %v9121
      %9159 = vst.msk [vmem:[%s224 + $0x28] sm:$0xff] %vm9153, %v9122
      %9160 = vst.msk [vmem:[%s224 + $0x30] sm:$0xff] %vm9153, %v9123
      %9161 = vst.msk [vmem:[%s224 + $0x38] sm:$0xff] %vm9153, %v9124
      %9162 = vst.msk [vmem:[%s224 + $0x40] sm:$0xff] %vm9153, %v9125
      %9163 = vst.msk [vmem:[%s224 + $0x48] sm:$0xff] %vm9153, %v9126
      %9164 = vst.msk [vmem:[%s224 + $0x50] sm:$0xff] %vm9153, %v9127
      %9165 = vst.msk [vmem:[%s224 + $0x58] sm:$0xff] %vm9153, %v9128
      %9166 = vst.msk [vmem:[%s224 + $0x60] sm:$0xff] %vm9153, %v9129
      %9167 = vst.msk [vmem:[%s224 + $0x68] sm:$0xff] %vm9153, %v9130
      %9168 = vst.msk [vmem:[%s224 + $0x70] sm:$0xff] %vm9153, %v9131
      %9169 = vst.msk [vmem:[%s224 + $0x78] sm:$0xff] %vm9153, %v9132
      %9170 = vst.msk [vmem:[%s224 + $0x80] sm:$0xff] %vm9153, %v9133
      %9171 = vst.msk [vmem:[%s224 + $0x88] sm:$0xff] %vm9153, %v9134
      %9172 = vst.msk [vmem:[%s224 + $0x90] sm:$0xff] %vm9153, %v9135
      %9173 = vst.msk [vmem:[%s224 + $0x98] sm:$0xff] %vm9153, %v9136
      %9174 = vst.msk [vmem:[%s224 + $0xa0] sm:$0xff] %vm9153, %v9137
      %9175 = vst.msk [vmem:[%s224 + $0xa8] sm:$0xff] %vm9153, %v9138
      %9176 = vst.msk [vmem:[%s224 + $0xb0] sm:$0xff] %vm9153, %v9139
      %9177 = vst.msk [vmem:[%s224 + $0xb8] sm:$0xff] %vm9153, %v9140
      %9178 = vst.msk [vmem:[%s224 + $0xc0] sm:$0xff] %vm9153, %v9141
      %9179 = vst.msk [vmem:[%s224 + $0xc8] sm:$0xff] %vm9153, %v9142
      %9180 = vst.msk [vmem:[%s224 + $0xd0] sm:$0xff] %vm9153, %v9143
      %9181 = vst.msk [vmem:[%s224 + $0xd8] sm:$0xff] %vm9153, %v9144
      %9182 = vst.msk [vmem:[%s224 + $0xe0] sm:$0xff] %vm9153, %v9145
      %9183 = vst.msk [vmem:[%s224 + $0xe8] sm:$0xff] %vm9153, %v9146
      %9184 = vst.msk [vmem:[%s224 + $0xf0] sm:$0xff] %vm9153, %v9147
      %9185 = vst.msk [vmem:[%s224 + $0xf8] sm:$0xff] %vm9153, %v9148
      %9186 = vst.msk [vmem:[%s224 + $0x100] sm:$0xff] %vm9153, %v9149
      %9187 = vst.msk [vmem:[%s224 + $0x108] sm:$0xff] %vm9153, %v9150
      %9188 = vst.msk [vmem:[%s224 + $0x110] sm:$0xff] %vm9153, %v9151
      %9189 = vst.msk [vmem:[%s224 + $0x118] sm:$0xff] %vm9153, %v9152
      %p9190 = scmp.lt.s32.totalorder %s16, 1
      %s9191 = scalar_select %p9190, %s16, 1
      %s9192 = smul.addr %s9191, 36
      %s9193 = smul.addr %s9192, 8
      %s9194 = scalar_lea.vmem %s5, %s9193
      // Predicated region
      $region41: #{view_pooling_forward.1} parent=39 // pred_check
        %p9195 = pneg %p144
      $region42: #{view_pooling_forward.1} parent=39 // pred_check_branch
        %9197 = sbr.rel (%p9195) target = $region44
      $region43: #{view_pooling_forward.1} parent=39 // pred_region
        _
      $region44: #{view_pooling_forward.1} parent=39 // pred_fallthru
        _
    $region40: #{view_pooling_forward.1} parent=5 // pred_fallthru
      _
    %p9198 = scmp.le.s32.totalorder 2, %s11
    // Predicated region
    $region45: #{view_pooling_forward.1} parent=5 // pred_check
      %p9199 = pneg %p9198
    $region46: #{view_pooling_forward.1} parent=5 // pred_check_branch
      %9201 = sbr.rel (%p9199) target = $region48
    $region47: #{view_pooling_forward.1} parent=5 // pred_region
      %s9202 = ssub.s32 %s11, 2
      // Predicated region
      $region49: #{view_pooling_forward.1} parent=47 // pred_check
        %p9203 = pneg %p150
      $region50: #{view_pooling_forward.1} parent=47 // pred_check_branch
        %9205 = sbr.rel (%p9203) target = $region52
      $region51: #{view_pooling_forward.1} parent=47 // pred_region
        %p9206 = scmp.lt.s32.totalorder %s17, 1
        %s9207 = scalar_select %p9206, %s17, 1
        %s9208 = smul.addr %s9207, 36
        %s9209 = smul.addr %s9208, 8
        %s9210 = scalar_lea.vmem %s5, %s9209
      $region52: #{view_pooling_forward.1} parent=47 // pred_fallthru
        _
    $region48: #{view_pooling_forward.1} parent=5 // pred_fallthru
      _
  $region6: #{view_pooling_forward.1} parent=0 // loop_footer
    %s15 = sadd.s32 1, %s11
  $region7: #{view_pooling_forward.1} parent=0 // loop_footer_branch
    %10 = sbr.rel target = $region3
  $region8: #{view_pooling_forward.1} parent=0 // loop_exit
    _

</llo_original>
